<compile_context>
chip_gen: v6e
topology: v6e:2x2x1
jax: 0.10.0
libtpu: 0.0.40
codegen_flags: <defaults>
</compile_context>

<pallas_src>
import jax
import jax.numpy as jnp
import numpy as np
from jax.experimental import pallas as pl
from jax.experimental.pallas import tpu as pltpu

V_SPARSE = 431      # coarse mesh vertices (SMPL downsampled)
V_FULL = 6890       # full SMPL mesh vertices
V_FULL_PAD = 6912   # 54 * 128: lane-aligned full-vertex axis inside the kernel
OUT_DIM = 3         # xyz


def _cdiv(a, b):
    return -(-a // b)


def _rup(a, m):
    return _cdiv(a, m) * m


def _vmem_capacity_bytes():
    try:
        return int(pltpu.get_tpu_info().vmem_capacity_bytes)
    except Exception:
        return 64 * 1024 * 1024  # conservative fallback (v7x per-TC VMEM)


def _choose_config(n, d, u_itemsize):
    """Pick (blk, n_blocks, vmem_limit_bytes) for this chip generation."""
    cap = _vmem_capacity_bytes()
    vmem_limit = int(cap * 0.75)              # ~96 MiB on v5e/v6e, ~48 MiB on v7x
    budget = vmem_limit - 6 * 1024 * 1024     # headroom for Mosaic internal scratch

    def est(blk):
        lane = lambda x: _rup(x, 128)
        sub = lambda x: _rup(x, 8)
        b = 0
        b += sub(blk * d) * lane(V_SPARSE) * 4 * 2                 # x slab (dbl-buffered)
        b += sub(blk * OUT_DIM) * lane(V_FULL_PAD) * 4 * 2         # full output
        b += sub(blk * OUT_DIM) * lane(V_SPARSE) * 4 * 2           # sparse output
        b += sub(blk * OUT_DIM) * lane(blk * d) * 4 * 2            # W_bd (resident)
        b += sub(blk * OUT_DIM) * 128 * 4 * 2                      # bias (resident)
        b += sub(V_SPARSE) * lane(V_FULL_PAD) * u_itemsize * 2     # U (resident)
        return b

    # Target blk*3 >= ~256 rows so the 431x6912 RHS weight load is amortized
    # over a full MXU pass; shrink (multiples of 8) until it fits the budget.
    target = 88
    while target > 8 and est(target) > budget:
        target -= 8
    target = max(target, 8)

    if n <= target:
        if n >= 64:
            # Keep >= 2 grid steps so the "parallel" axis can split across
            # v7x's two TensorCores; irrelevant on v5e/v6e (1 TC).
            nb = 2
            blk = min(_rup(_cdiv(n, nb), 8), target)
        else:
            nb, blk = 1, n            # single step: block == full array, no (8,128) constraint
    else:
        nb = _cdiv(n, target)
        blk = min(_rup(_cdiv(n, nb), 8), target)
    return blk, nb, vmem_limit


def _mesh_upsampler_kernel(x_ref, wbd_ref, b_ref, u_ref, full_ref, sparse_ref):
    # x_ref     : (blk*D, 431)     batch block of tokens, transposed & flattened
    # wbd_ref   : (blk*3, blk*D)   block-diagonal fc_D weight (resident)
    # b_ref     : (blk*3, 1)       fc_D bias tiled per item (resident)
    # u_ref     : (431, 6912)      upsampling matrix, lane-padded (resident)
    # full_ref  : (blk*3, 6912)    full mesh, transposed / batch-flattened
    # sparse_ref: (blk*3, 431)     coarse mesh, transposed / batch-flattened
    s_all = jnp.dot(wbd_ref[...], x_ref[...],
                    preferred_element_type=jnp.float32) + b_ref[...]
    sparse_ref[...] = s_all
    # One batch-fused, lane-dense MXU matmul: (blk*3, 431) @ (431, 6912).
    # s_all stays in registers (no sparse_ref reload); cast to U's dtype (bf16
    # by default), accumulate in f32.
    full_ref[...] = jnp.dot(s_all.astype(u_ref.dtype), u_ref[...],
                            preferred_element_type=jnp.float32)


def mesh_upsampler_static_pallas(x, w_d, b_d, u, *, block_n=None):
    """x: (N, 431, D) f32; w_d: (D, 3) f32; b_d: (3,) f32; u: (431, 6890) f32/bf16."""
    N, V, D = x.shape
    assert V == V_SPARSE and u.shape == (V_SPARSE, V_FULL)

    if block_n is None:
        blk, n_blocks, vmem_limit = _choose_config(N, D, u.dtype.itemsize)
    else:
        blk = min(block_n, N)
        n_blocks = _cdiv(N, blk)
        assert n_blocks == 1 or blk % 8 == 0, "multi-block blk must be a multiple of 8"
        vmem_limit = int(_vmem_capacity_bytes() * 0.75)
    n_pad = n_blocks * blk
    if n_pad != N:
        x = jnp.pad(x, ((0, n_pad - N), (0, 0), (0, 0)))

    # Lane-dense transposed input slab: (n_pad, 431, D) -> (n_pad*D, 431).
    # TODO(synk): this transpose (and the output transposes below) cost an extra
    # HBM round trip; if xprof shows them dominating, keep x resident upstream in
    # (N, D, 431) layout and/or let consumers accept the (N, 3, V) layout.
    x_t = jnp.swapaxes(x, 1, 2).reshape(n_pad * D, V_SPARSE)

    # Block-diagonal fc_D weight: W_bd[3i+o, i*D+d] = w_d[d, o].
    w_bd = jnp.kron(jnp.eye(blk, dtype=w_d.dtype), jnp.swapaxes(w_d, 0, 1))
    b_tile = jnp.tile(b_d.reshape(OUT_DIM, 1), (blk, 1))             # (blk*3, 1)
    u_pad = jnp.pad(u, ((0, 0), (0, V_FULL_PAD - V_FULL)))           # (431, 6912)

    grid_spec = pltpu.PrefetchScalarGridSpec(
        num_scalar_prefetch=0,
        grid=(n_blocks,),
        in_specs=[
            pl.BlockSpec((blk * D, V_SPARSE), lambda g: (g, 0)),         # x^T slab
            pl.BlockSpec((blk * OUT_DIM, blk * D), lambda g: (0, 0)),    # W_bd (resident)
            pl.BlockSpec((blk * OUT_DIM, 1), lambda g: (0, 0)),          # bias (resident)
            pl.BlockSpec((V_SPARSE, V_FULL_PAD), lambda g: (0, 0)),      # U    (resident)
        ],
        out_specs=[
            pl.BlockSpec((blk * OUT_DIM, V_FULL_PAD), lambda g: (g, 0)),
            pl.BlockSpec((blk * OUT_DIM, V_SPARSE), lambda g: (g, 0)),
        ],
    )

    cost = pl.CostEstimate(
        flops=(2 * n_blocks * (blk * OUT_DIM) * (blk * D) * V_SPARSE
               + 2 * n_pad * OUT_DIM * V_SPARSE * V_FULL_PAD),
        transcendentals=0,
        bytes_accessed=(x_t.size * 4 + w_bd.size * 4 + b_tile.size * 4
                        + u_pad.size * u.dtype.itemsize
                        + n_pad * OUT_DIM * (V_FULL_PAD + V_SPARSE) * 4),
    )

    full_t, sparse_t = pl.pallas_call(
        _mesh_upsampler_kernel,
        grid_spec=grid_spec,
        out_shape=(
            jax.ShapeDtypeStruct((n_pad * OUT_DIM, V_FULL_PAD), jnp.float32),
            jax.ShapeDtypeStruct((n_pad * OUT_DIM, V_SPARSE), jnp.float32),
        ),
        compiler_params=pltpu.CompilerParams(
            dimension_semantics=("parallel",),
            vmem_limit_bytes=vmem_limit,      # generation-aware (v5e/v6e/v7x)
        ),
        cost_estimate=cost,
    )(x_t, w_bd, b_tile, u_pad)

    # Lane-dense (N*3, V) -> module layout (N, V, 3); cheap XLA transposes.
    full = jnp.swapaxes(
        full_t.reshape(n_pad, OUT_DIM, V_FULL_PAD)[:N, :, :V_FULL], 1, 2)
    sparse = jnp.swapaxes(sparse_t.reshape(n_pad, OUT_DIM, V_SPARSE)[:N], 1, 2)
    return full, sparse


class MeshUpsamplerPallas:
    """Pallas port of MeshUpsampler(D_vtx, mesh_up_type='static', given_D_down=False)."""

    def __init__(self, d_vtx, key, u_dtype=jnp.bfloat16, block_n=None):
        self.d_vtx = d_vtx
        self.block_n = block_n  # None -> auto-pick per chip generation
        k1, k2, k3 = jax.random.split(key, 3)
        # fc_D: nn.Linear(D_vtx, 3)  (Kaiming-uniform-like deterministic init)
        bound = 1.0 / np.sqrt(d_vtx)
        self.w_d = jax.random.uniform(k1, (d_vtx, OUT_DIM), jnp.float32, -bound, bound)
        self.b_d = jax.random.uniform(k2, (OUT_DIM,), jnp.float32, -bound, bound)
        # U stored transposed as (431, 6890) (== (upsample_transforms[0] @ upsample_transforms[1]).T)
        # TODO(synk): the real SMPL upsample transform is a precomputed, very sparse
        #             asset; synthesized densely here as a deterministic stand-in.
        self.u = jax.random.uniform(k3, (V_SPARSE, V_FULL), jnp.float32,
                                    0.0, 2.0 / V_SPARSE).astype(u_dtype)

    def _flatten(self, multi_layer_tokens):
        L = len(multi_layer_tokens)
        B = multi_layer_tokens[0].shape[0]
        x = jnp.stack(multi_layer_tokens, axis=1).reshape(B * L, V_SPARSE, self.d_vtx)
        return x, B, L

    def __call__(self, multi_layer_tokens):
        # multi_layer_tokens: list of L arrays, each (B, 431, D_vtx)
        x, B, L = self._flatten(multi_layer_tokens)
        full, sparse = mesh_upsampler_static_pallas(
            x, self.w_d, self.b_d, self.u, block_n=self.block_n)
        return [full.reshape(B, L, -1, OUT_DIM),
                sparse.reshape(B, L, -1, OUT_DIM)]

    def reference(self, multi_layer_tokens):
        x, B, L = self._flatten(multi_layer_tokens)
        u = self.u.astype(jnp.float32)
        sparse = jnp.einsum("nvd,do->nvo", x, self.w_d) + self.b_d
        full = jnp.einsum("nvo,vf->nfo", sparse, u)
        return [full.reshape(B, L, -1, OUT_DIM),
                sparse.reshape(B, L, -1, OUT_DIM)]


if __name__ == "__main__":
    key = jax.random.PRNGKey(0)
    k_mod, k_tok, k_big = jax.random.split(key, 3)

    B, L, D_VTX = 2, 2, 32
    tok_keys = jax.random.split(k_tok, L)
    multi_layer_tokens = [
        jax.random.normal(tok_keys[l], (B, V_SPARSE, D_VTX), jnp.float32)
        for l in range(L)
    ]

    # Default path: bf16 resident U (native MXU dtype), auto block sizing.
    model = MeshUpsamplerPallas(D_VTX, k_mod)
    outs = jax.block_until_ready(model(multi_layer_tokens))
    refs = model.reference(multi_layer_tokens)
    assert outs[0].shape == (B, L, V_FULL, OUT_DIM)
    assert outs[1].shape == (B, L, V_SPARSE, OUT_DIM)
    np.testing.assert_allclose(np.asarray(outs[0]), np.asarray(refs[0]), rtol=2e-2, atol=2e-2)
    np.testing.assert_allclose(np.asarray(outs[1]), np.asarray(refs[1]), rtol=1e-5, atol=1e-5)

    # f32 resident-U variant (tighter check of the exact math path).
    model_f32 = MeshUpsamplerPallas(D_VTX, k_mod, u_dtype=jnp.float32)
    outs_f32 = jax.block_until_ready(model_f32(multi_layer_tokens))
    refs_f32 = model_f32.reference(multi_layer_tokens)
    np.testing.assert_allclose(np.asarray(outs_f32[0]), np.asarray(refs_f32[0]),
                               rtol=1e-4, atol=1e-4)
    np.testing.assert_allclose(np.asarray(outs_f32[1]), np.asarray(refs_f32[1]),
                               rtol=1e-5, atol=1e-5)

    # Multi-block / padded-batch path (N=20, blk=8 -> grid of 3 steps, 4 pad rows).
    xb = jax.random.normal(k_big, (20, V_SPARSE, D_VTX), jnp.float32)
    full_b, sparse_b = jax.block_until_ready(
        mesh_upsampler_static_pallas(xb, model.w_d, model.b_d, model.u, block_n=8))
    sp_ref = jnp.einsum("nvd,do->nvo", xb, model.w_d) + model.b_d
    fu_ref = jnp.einsum("nvo,vf->nfo", sp_ref, model.u.astype(jnp.float32))
    np.testing.assert_allclose(np.asarray(full_b), np.asarray(fu_ref), rtol=2e-2, atol=2e-2)
    np.testing.assert_allclose(np.asarray(sparse_b), np.asarray(sp_ref), rtol=1e-5, atol=1e-5)

    print("KERNEL_OK")
</pallas_src>

<mosaic_0001>
module attributes {stable_mosaic.version = 11 : i64} {
  func.func @_mesh_upsampler_kernel(%arg0: i32, %arg1: memref<128x431xf32, #tpu.memory_space<vmem>>, %arg2: memref<12x128xf32, #tpu.memory_space<vmem>>, %arg3: memref<12x1xf32, #tpu.memory_space<vmem>>, %arg4: memref<431x6912xbf16, #tpu.memory_space<vmem>>, %arg5: memref<12x6912xf32, #tpu.memory_space<vmem>>, %arg6: memref<12x431xf32, #tpu.memory_space<vmem>>) attributes {dimension_semantics = [#tpu.dimension_semantics<parallel>], iteration_bounds = array<i64: 1>, scalar_prefetch = 0 : i64, scratch_operands = 0 : i64, tpu.core_type = #tpu.core_type<tc>, window_params = [{transform_indices = @transform_0, window_bounds = array<i64: 128, 431>}, {pipeline_mode = #tpu.pipeline_mode<synchronous>, transform_indices = @transform_1, window_bounds = array<i64: 12, 128>}, {pipeline_mode = #tpu.pipeline_mode<synchronous>, transform_indices = @transform_2, window_bounds = array<i64: 12, 1>}, {pipeline_mode = #tpu.pipeline_mode<synchronous>, transform_indices = @transform_3, window_bounds = array<i64: 431, 6912>}, {transform_indices = @transform_4, window_bounds = array<i64: 12, 6912>}, {transform_indices = @transform_5, window_bounds = array<i64: 12, 431>}]} {
    %c0 = arith.constant 0 : index
    %c0_0 = arith.constant 0 : index
    %0 = vector.load %arg2[%c0, %c0_0] : memref<12x128xf32, #tpu.memory_space<vmem>>, vector<12x128xf32>
    %c0_1 = arith.constant 0 : index
    %c0_2 = arith.constant 0 : index
    %1 = vector.load %arg1[%c0_1, %c0_2] : memref<128x431xf32, #tpu.memory_space<vmem>>, vector<128x431xf32>
    %cst = arith.constant dense<0.000000e+00> : vector<12x431xf32>
    %2 = tpu.matmul %0, %1, %cst {dimension_numbers = #tpu.dot_dimension_numbers<[1], [0], [0], [1], [0, 0, 1, 1], [], []>} : vector<12x128xf32>, vector<128x431xf32>, vector<12x431xf32> -> vector<12x431xf32>
    %c0_3 = arith.constant 0 : index
    %c0_4 = arith.constant 0 : index
    %3 = vector.load %arg3[%c0_3, %c0_4] : memref<12x1xf32, #tpu.memory_space<vmem>>, vector<12x1xf32>
    %4 = vector.broadcast %3 : vector<12x1xf32> to vector<12x431xf32>
    %5 = arith.addf %2, %4 : vector<12x431xf32>
    %c0_5 = arith.constant 0 : index
    %c0_6 = arith.constant 0 : index
    %6 = vector.load %arg6[%c0_5, %c0_6] : memref<12x431xf32, #tpu.memory_space<vmem>>, vector<12x431xf32>
    tpu.vector_store %arg6[%c0_5, %c0_6], %5 {strides = array<i32>} : memref<12x431xf32, #tpu.memory_space<vmem>>, vector<12x431xf32>,
    %7 = arith.truncf %5 : vector<12x431xf32> to vector<12x431xbf16>
    %c0_7 = arith.constant 0 : index
    %c0_8 = arith.constant 0 : index
    %8 = vector.load %arg4[%c0_7, %c0_8] : memref<431x6912xbf16, #tpu.memory_space<vmem>>, vector<431x6912xbf16>
    %cst_9 = arith.constant dense<0.000000e+00> : vector<12x6912xf32>
    %9 = tpu.matmul %7, %8, %cst_9 {dimension_numbers = #tpu.dot_dimension_numbers<[1], [0], [0], [1], [0, 0, 1, 1], [], []>} : vector<12x431xbf16>, vector<431x6912xbf16>, vector<12x6912xf32> -> vector<12x6912xf32>
    %c0_10 = arith.constant 0 : index
    %c0_11 = arith.constant 0 : index
    %10 = vector.load %arg5[%c0_10, %c0_11] : memref<12x6912xf32, #tpu.memory_space<vmem>>, vector<12x6912xf32>
    tpu.vector_store %arg5[%c0_10, %c0_11], %9 {strides = array<i32>} : memref<12x6912xf32, #tpu.memory_space<vmem>>, vector<12x6912xf32>,
    return
  }
  func.func @transform_0(%arg0: i32) -> (i32, i32) {
    %c0_i32 = arith.constant 0 : i32
    %c0_i32_0 = arith.constant 0 : i32
    return %arg0, %c0_i32 : i32, i32
  }
  func.func @transform_1(%arg0: i32) -> (i32, i32) {
    %c0_i32 = arith.constant 0 : i32
    %c0_i32_0 = arith.constant 0 : i32
    %c0_i32_1 = arith.constant 0 : i32
    return %c0_i32, %c0_i32_0 : i32, i32
  }
  func.func @transform_2(%arg0: i32) -> (i32, i32) {
    %c0_i32 = arith.constant 0 : i32
    %c0_i32_0 = arith.constant 0 : i32
    %c0_i32_1 = arith.constant 0 : i32
    return %c0_i32, %c0_i32_0 : i32, i32
  }
  func.func @transform_3(%arg0: i32) -> (i32, i32) {
    %c0_i32 = arith.constant 0 : i32
    %c0_i32_0 = arith.constant 0 : i32
    %c0_i32_1 = arith.constant 0 : i32
    return %c0_i32, %c0_i32_0 : i32, i32
  }
  func.func @transform_4(%arg0: i32) -> (i32, i32) {
    %c0_i32 = arith.constant 0 : i32
    %c0_i32_0 = arith.constant 0 : i32
    return %arg0, %c0_i32 : i32, i32
  }
  func.func @transform_5(%arg0: i32) -> (i32, i32) {
    %c0_i32 = arith.constant 0 : i32
    %c0_i32_0 = arith.constant 0 : i32
    return %arg0, %c0_i32 : i32, i32
  }
}

</mosaic_0001>

<llo_original>
// kernel: tpu_custom_call.1
$region0: #{tpu_custom_call.1}
  #allocation0 [shape = 'u32[]', space=smem, size = 0x4, offset = 0x4, fixed_abs, tag = 'smem constant byte address 0x4 - core index']
  #allocation1 [shape = 'u32[144,128]{1,0:T(1,128)}', space=vmem, size = 0x12000, scoped, tag = 'internal scratch']
  %s0 = inlined_call_operand.vmem [shape: f32[128,431], index: 0, kind: input, shape index: {}]
  %s1 = inlined_call_operand.hbm [shape: f32[12,128], index: 1, kind: input, shape index: {}]
  %s2 = inlined_call_operand.vmem [shape: f32[12,1], index: 2, kind: input, shape index: {}]
  %s3 = inlined_call_operand.hbm [shape: bf16[431,6912], index: 3, kind: input, shape index: {}]
  %s4 = inlined_call_operand.hbm [shape: f32[12,6912], index: 4, kind: output, shape index: {0}]
  %s5 = inlined_call_operand.hbm [shape: f32[12,431], index: 5, kind: output, shape index: {1}]
  %6 = xla_tuple %s4, %s5
  %s7 = sld [smem:[#allocation0]]
  $region42: #{tpu_custom_call.1} parent=0
    _
  %s9 = ssub.s32 1, %s7
  %s10 = scalar_select 0, %s9, %s7
  $region1: #{tpu_custom_call.1} parent=0
    #allocation2 [shape = 'u8[8192]{0}', space=vmem, size = 0x2000, scoped, tag = 'input window, operand 1, single buffered']
    #allocation3 [shape = 's32[1]{0}', space=sflag, size = 0x4, scoped, tag = 'scoped memory for tpu_custom_call.1']
    #allocation4 [shape = 's32[1]{0}', space=sflag, size = 0x4, scoped, tag = 'scoped memory for tpu_custom_call.1']
    #allocation5 [shape = 'u8[5971968]{0}', space=vmem, size = 0x5b2000, scoped, tag = 'input window, operand 3, single buffered']
    #allocation6 [shape = 's32[1]{0}', space=sflag, size = 0x4, scoped, tag = 'scoped memory for tpu_custom_call.1']
    #allocation7 [shape = 'u8[442368]{0}', space=vmem, size = 0x6c000, scoped, tag = 'output window, operand 0, single buffered']
    #allocation8 [shape = 'u8[32768]{0}', space=vmem, size = 0x8000, scoped, tag = 'output window, operand 1, single buffered']
    #allocation9 [shape = 's32[1]{0}', space=sflag, size = 0x4, scoped, tag = 'scoped memory for tpu_custom_call.1']
    %11 = vsyncpa [#allocation3], 0
    %12 = vsyncpa [#allocation6], 0
    %13 = vsyncpa [#allocation4], 0
    %14 = vsyncpa [#allocation9], 0
    // Predicated region
    $region2: #{tpu_custom_call.1} parent=1 // pred_check
      _
    $region3: #{tpu_custom_call.1} parent=1 // pred_check_branch
      %16 = sbr.rel (0) target = $region5
    $region4: #{tpu_custom_call.1} parent=1 // pred_region
      _
    $region5: #{tpu_custom_call.1} parent=1 // pred_fallthru
      _
    // Predicated region
    $region6: #{tpu_custom_call.1} parent=1 // pred_check
      _
    $region7: #{tpu_custom_call.1} parent=1 // pred_check_branch
      %18 = sbr.rel (0) target = $region9
    $region8: #{tpu_custom_call.1} parent=1 // pred_region
      %s20 = ssub.s32 256, 256
      %21 = vsyncadd [#allocation3], %s20
      %s22 = sshll.u32 [#allocation2], 4
      %s23 = int_to_ptr.vmem [resolvable:$true] %s22
      %28 = dma.hbm_to_vmem [thread:$0]  %s1, 256, %s23, [#allocation3], 128, 128, 8
    $region9: #{tpu_custom_call.1} parent=1 // pred_fallthru
      _
    // Predicated region
    $region10: #{tpu_custom_call.1} parent=1 // pred_check
      _
    $region11: #{tpu_custom_call.1} parent=1 // pred_check_branch
      %30 = sbr.rel (0) target = $region13
    $region12: #{tpu_custom_call.1} parent=1 // pred_region
      _
    $region13: #{tpu_custom_call.1} parent=1 // pred_fallthru
      _
    // Predicated region
    $region14: #{tpu_custom_call.1} parent=1 // pred_check
      _
    $region15: #{tpu_custom_call.1} parent=1 // pred_check_branch
      %32 = sbr.rel (0) target = $region17
    $region16: #{tpu_custom_call.1} parent=1 // pred_region
      %s34 = ssub.s32 186624, 186624
      %35 = vsyncadd [#allocation6], %s34
      %s36 = sshll.u32 [#allocation5], 4
      %s37 = int_to_ptr.vmem [resolvable:$true] %s36
      %42 = dma.hbm_to_vmem [thread:$0]  %s3, 186624, %s37, [#allocation6], 3456, 3456, 216
    $region17: #{tpu_custom_call.1} parent=1 // pred_fallthru
      _
    // Predicated region
    $region18: #{tpu_custom_call.1} parent=1 // pred_check
      _
    $region19: #{tpu_custom_call.1} parent=1 // pred_check_branch
      %44 = sbr.rel (0) target = $region21
    $region20: #{tpu_custom_call.1} parent=1 // pred_region
      %45 = dma.done [#allocation3], 256
    $region21: #{tpu_custom_call.1} parent=1 // pred_fallthru
      _
    // Predicated region
    $region22: #{tpu_custom_call.1} parent=1 // pred_check
      _
    $region23: #{tpu_custom_call.1} parent=1 // pred_check_branch
      %47 = sbr.rel (0) target = $region25
    $region24: #{tpu_custom_call.1} parent=1 // pred_region
      %48 = dma.done [#allocation6], 186624
    $region25: #{tpu_custom_call.1} parent=1 // pred_fallthru
      _
    %v50 = vld [vmem:[#allocation2] sm:$0xff]
    %v51 = vld [vmem:[#allocation2 + $0x8] sm:$0xf]
    %v52 = vld [vmem:[%s0] sm:$0xff]
    %v53 = vld [vmem:[%s0 + $0x8] sm:$0xff]
    %v54 = vld [vmem:[%s0 + $0x10] sm:$0xff]
    %v55 = vld [vmem:[%s0 + $0x18] sm:$0xff]
    %v56 = vld [vmem:[%s0 + $0x20] sm:$0xff]
    %v57 = vld [vmem:[%s0 + $0x28] sm:$0xff]
    %v58 = vld [vmem:[%s0 + $0x30] sm:$0xff]
    %v59 = vld [vmem:[%s0 + $0x38] sm:$0xff]
    %v60 = vld [vmem:[%s0 + $0x40] sm:$0xff]
    %v61 = vld [vmem:[%s0 + $0x48] sm:$0xff]
    %v62 = vld [vmem:[%s0 + $0x50] sm:$0xff]
    %v63 = vld [vmem:[%s0 + $0x58] sm:$0xff]
    %v64 = vld [vmem:[%s0 + $0x60] sm:$0xff]
    %v65 = vld [vmem:[%s0 + $0x68] sm:$0xff]
    %v66 = vld [vmem:[%s0 + $0x70] sm:$0xff]
    %v67 = vld [vmem:[%s0 + $0x78] sm:$0xff]
    %v68 = vld [vmem:[%s0 + $0x80] sm:$0xff]
    %v69 = vld [vmem:[%s0 + $0x88] sm:$0xff]
    %v70 = vld [vmem:[%s0 + $0x90] sm:$0xff]
    %v71 = vld [vmem:[%s0 + $0x98] sm:$0xff]
    %v72 = vld [vmem:[%s0 + $0xa0] sm:$0xff]
    %v73 = vld [vmem:[%s0 + $0xa8] sm:$0xff]
    %v74 = vld [vmem:[%s0 + $0xb0] sm:$0xff]
    %v75 = vld [vmem:[%s0 + $0xb8] sm:$0xff]
    %v76 = vld [vmem:[%s0 + $0xc0] sm:$0xff]
    %v77 = vld [vmem:[%s0 + $0xc8] sm:$0xff]
    %v78 = vld [vmem:[%s0 + $0xd0] sm:$0xff]
    %v79 = vld [vmem:[%s0 + $0xd8] sm:$0xff]
    %v80 = vld [vmem:[%s0 + $0xe0] sm:$0xff]
    %v81 = vld [vmem:[%s0 + $0xe8] sm:$0xff]
    %v82 = vld [vmem:[%s0 + $0xf0] sm:$0xff]
    %v83 = vld [vmem:[%s0 + $0xf8] sm:$0xff]
    %v84 = vld [vmem:[%s0 + $0x100] sm:$0xff]
    %v85 = vld [vmem:[%s0 + $0x108] sm:$0xff]
    %v86 = vld [vmem:[%s0 + $0x110] sm:$0xff]
    %v87 = vld [vmem:[%s0 + $0x118] sm:$0xff]
    %v88 = vld [vmem:[%s0 + $0x120] sm:$0xff]
    %v89 = vld [vmem:[%s0 + $0x128] sm:$0xff]
    %v90 = vld [vmem:[%s0 + $0x130] sm:$0xff]
    %v91 = vld [vmem:[%s0 + $0x138] sm:$0xff]
    %v92 = vld [vmem:[%s0 + $0x140] sm:$0xff]
    %v93 = vld [vmem:[%s0 + $0x148] sm:$0xff]
    %v94 = vld [vmem:[%s0 + $0x150] sm:$0xff]
    %v95 = vld [vmem:[%s0 + $0x158] sm:$0xff]
    %v96 = vld [vmem:[%s0 + $0x160] sm:$0xff]
    %v97 = vld [vmem:[%s0 + $0x168] sm:$0xff]
    %v98 = vld [vmem:[%s0 + $0x170] sm:$0xff]
    %v99 = vld [vmem:[%s0 + $0x178] sm:$0xff]
    %v100 = vld [vmem:[%s0 + $0x180] sm:$0xff]
    %v101 = vld [vmem:[%s0 + $0x188] sm:$0xff]
    %v102 = vld [vmem:[%s0 + $0x190] sm:$0xff]
    %v103 = vld [vmem:[%s0 + $0x198] sm:$0xff]
    %v104 = vld [vmem:[%s0 + $0x1a0] sm:$0xff]
    %v105 = vld [vmem:[%s0 + $0x1a8] sm:$0xff]
    %v106 = vld [vmem:[%s0 + $0x1b0] sm:$0xff]
    %v107 = vld [vmem:[%s0 + $0x1b8] sm:$0xff]
    %v108 = vld [vmem:[%s0 + $0x1c0] sm:$0xff]
    %v109 = vld [vmem:[%s0 + $0x1c8] sm:$0xff]
    %v110 = vld [vmem:[%s0 + $0x1d0] sm:$0xff]
    %v111 = vld [vmem:[%s0 + $0x1d8] sm:$0xff]
    %v112 = vld [vmem:[%s0 + $0x1e0] sm:$0xff]
    %v113 = vld [vmem:[%s0 + $0x1e8] sm:$0xff]
    %v114 = vld [vmem:[%s0 + $0x1f0] sm:$0xff]
    %v115 = vld [vmem:[%s0 + $0x1f8] sm:$0xff]
    %v116 = vld [vmem:[%s2] sm:$0xff]
    %v117 = vld [vmem:[%s2 + $0x8] sm:$0xf]
    %119 = vset.pattern.permute.xlu0 0
    %120 = vperm.xlu0 %119, %v116
    %v121 = vpop.permute.xlu0 %120
    %124 = vset.pattern.permute.xlu0 0
    %125 = vperm.xlu0 %124, %v117
    %v126 = vpop.permute.xlu0 %125
    %128 = vmatprep.subr.mxu0 %v113
    %129 = vmatpush1.msra.mxu0 %v112
    %130 = vmatprep.subr.mxu0 %v109
    %131 = vmatpush1.msra.mxu0 %v108
    %132 = vmatprep.subr.mxu0 %v105
    %133 = vmatpush1.msra.mxu0 %v104
    %134 = vmatprep.subr.mxu0 %v101
    %135 = vmatpush1.msra.mxu0 %v100
    %136 = vmatprep.subr.mxu0 %v97
    %137 = vmatpush1.msra.mxu0 %v96
    %138 = vmatprep.subr.mxu0 %v93
    %139 = vmatpush1.msra.mxu0 %v92
    %140 = vmatprep.subr.mxu0 %v89
    %141 = vmatpush1.msra.mxu0 %v88
    %142 = vmatprep.subr.mxu0 %v85
    %143 = vmatpush1.msra.mxu0 %v84
    %144 = vmatprep.subr.mxu0 %v81
    %145 = vmatpush1.msra.mxu0 %v80
    %146 = vmatprep.subr.mxu0 %v77
    %147 = vmatpush1.msra.mxu0 %v76
    %148 = vmatprep.subr.mxu0 %v73
    %149 = vmatpush1.msra.mxu0 %v72
    %150 = vmatprep.subr.mxu0 %v69
    %151 = vmatpush1.msra.mxu0 %v68
    %152 = vmatprep.subr.mxu0 %v65
    %153 = vmatpush1.msra.mxu0 %v64
    %154 = vmatprep.subr.mxu0 %v61
    %155 = vmatpush1.msra.mxu0 %v60
    %156 = vmatprep.subr.mxu0 %v57
    %157 = vmatpush1.msra.mxu0 %v56
    %158 = vmatprep.subr.mxu0 %v53
    %159 = vmatpush1.msra.mxu0 %v52
    %160 = vmatprep.subr.mxu0 0.0
    %161 = vmatpush2.msra.mxu0 0.0
    %162 = vmatprep.subr.mxu0 0.0
    %163 = vmatpush2.msra.mxu0 0.0
    %164 = vmatprep.subr.mxu0 0.0
    %165 = vmatpush2.msra.mxu0 0.0
    %166 = vmatprep.subr.mxu0 0.0
    %167 = vmatpush2.msra.mxu0 0.0
    %168 = vmatprep.subr.mxu0 0.0
    %169 = vmatpush2.msra.mxu0 0.0
    %170 = vmatprep.subr.mxu0 0.0
    %171 = vmatpush2.msra.mxu0 0.0
    %172 = vmatprep.subr.mxu0 0.0
    %173 = vmatpush2.msra.mxu0 0.0
    %174 = vmatprep.subr.mxu0 0.0
    %175 = vmatpush2.msra.mxu0 0.0
    %176 = vmatprep.subr.mxu0 0.0
    %177 = vmatpush2.msra.mxu0 0.0
    %178 = vmatprep.subr.mxu0 0.0
    %179 = vmatpush2.msra.mxu0 0.0
    %180 = vmatprep.subr.mxu0 0.0
    %181 = vmatpush2.msra.mxu0 0.0
    %182 = vmatprep.subr.mxu0 0.0
    %183 = vmatpush2.msra.mxu0 0.0
    %184 = vmatprep.subr.mxu0 0.0
    %185 = vmatpush2.msra.mxu0 0.0
    %186 = vmatprep.subr.mxu0 0.0
    %187 = vmatpush2.msra.mxu0 0.0
    %188 = vmatprep.subr.mxu0 0.0
    %189 = vmatpush2.msra.mxu0 0.0
    %190 = vmatprep.subr.mxu0 0.0
    %191 = vmatpush2.msra.mxu0 0.0
    %192 = vmatprep.mubr.f32.mxu0 0.0
    %193 = vmatmul.mubr.f32.gmra.mxu0 %v50
    %v194 = vpop.f32.mrf.mxu0
    %v195 = vadd.f32 %v121, %v194
    %v196 = vpop.f32.mrf.mxu0
    %v197 = vadd.f32 %v121, %v196
    %198 = vmatprep.mubr.f32.mxu0 0.0
    %199 = vmatmul.mubr.f32.gmra.mxu0 %v51
    %v200 = vpop.f32.mrf.mxu0
    %v201 = vadd.f32 %v126, %v200
    %v202 = vpop.f32.mrf.mxu0
    %v203 = vadd.f32 %v126, %v202
    %204 = vdwg.mxu0
    %205 = vmatprep.subr.mxu0 %v115
    %206 = vmatpush1.msra.mxu0 %v114
    %207 = vmatprep.subr.mxu0 %v111
    %208 = vmatpush1.msra.mxu0 %v110
    %209 = vmatprep.subr.mxu0 %v107
    %210 = vmatpush1.msra.mxu0 %v106
    %211 = vmatprep.subr.mxu0 %v103
    %212 = vmatpush1.msra.mxu0 %v102
    %213 = vmatprep.subr.mxu0 %v99
    %214 = vmatpush1.msra.mxu0 %v98
    %215 = vmatprep.subr.mxu0 %v95
    %216 = vmatpush1.msra.mxu0 %v94
    %217 = vmatprep.subr.mxu0 %v91
    %218 = vmatpush1.msra.mxu0 %v90
    %219 = vmatprep.subr.mxu0 %v87
    %220 = vmatpush1.msra.mxu0 %v86
    %221 = vmatprep.subr.mxu0 %v83
    %222 = vmatpush1.msra.mxu0 %v82
    %223 = vmatprep.subr.mxu0 %v79
    %224 = vmatpush1.msra.mxu0 %v78
    %225 = vmatprep.subr.mxu0 %v75
    %226 = vmatpush1.msra.mxu0 %v74
    %227 = vmatprep.subr.mxu0 %v71
    %228 = vmatpush1.msra.mxu0 %v70
    %229 = vmatprep.subr.mxu0 %v67
    %230 = vmatpush1.msra.mxu0 %v66
    %231 = vmatprep.subr.mxu0 %v63
    %232 = vmatpush1.msra.mxu0 %v62
    %233 = vmatprep.subr.mxu0 %v59
    %234 = vmatpush1.msra.mxu0 %v58
    %235 = vmatprep.subr.mxu0 %v55
    %236 = vmatpush1.msra.mxu0 %v54
    %237 = vmatprep.subr.mxu0 0.0
    %238 = vmatpush2.msra.mxu0 0.0
    %239 = vmatprep.subr.mxu0 0.0
    %240 = vmatpush2.msra.mxu0 0.0
    %241 = vmatprep.subr.mxu0 0.0
    %242 = vmatpush2.msra.mxu0 0.0
    %243 = vmatprep.subr.mxu0 0.0
    %244 = vmatpush2.msra.mxu0 0.0
    %245 = vmatprep.subr.mxu0 0.0
    %246 = vmatpush2.msra.mxu0 0.0
    %247 = vmatprep.subr.mxu0 0.0
    %248 = vmatpush2.msra.mxu0 0.0
    %249 = vmatprep.subr.mxu0 0.0
    %250 = vmatpush2.msra.mxu0 0.0
    %251 = vmatprep.subr.mxu0 0.0
    %252 = vmatpush2.msra.mxu0 0.0
    %253 = vmatprep.subr.mxu0 0.0
    %254 = vmatpush2.msra.mxu0 0.0
    %255 = vmatprep.subr.mxu0 0.0
    %256 = vmatpush2.msra.mxu0 0.0
    %257 = vmatprep.subr.mxu0 0.0
    %258 = vmatpush2.msra.mxu0 0.0
    %259 = vmatprep.subr.mxu0 0.0
    %260 = vmatpush2.msra.mxu0 0.0
    %261 = vmatprep.subr.mxu0 0.0
    %262 = vmatpush2.msra.mxu0 0.0
    %263 = vmatprep.subr.mxu0 0.0
    %264 = vmatpush2.msra.mxu0 0.0
    %265 = vmatprep.subr.mxu0 0.0
    %266 = vmatpush2.msra.mxu0 0.0
    %267 = vmatprep.subr.mxu0 0.0
    %268 = vmatpush2.msra.mxu0 0.0
    %269 = vmatprep.mubr.f32.mxu0 0.0
    %270 = vmatmul.mubr.f32.gmra.mxu0 %v50
    %v271 = vpop.f32.mrf.mxu0
    %v272 = vadd.f32 %v121, %v271
    %v273 = vpop.f32.mrf.mxu0
    %v274 = vadd.f32 %v121, %v273
    %275 = vmatprep.mubr.f32.mxu0 0.0
    %276 = vmatmul.mubr.f32.gmra.mxu0 %v51
    %v277 = vpop.f32.mrf.mxu0
    %v278 = vadd.f32 %v126, %v277
    %v279 = vpop.f32.mrf.mxu0
    %v280 = vadd.f32 %v126, %v279
    %281 = vdwg.mxu0
    %282 = vst [vmem:[#allocation8] sm:$0xff] %v195
    %283 = vst [vmem:[#allocation8 + $0x8] sm:$0xff] %v197
    %284 = vst [vmem:[#allocation8 + $0x10] sm:$0xff] %v272
    %vm285 = vcmask 384000
    %286 = vst.msk [vmem:[#allocation8 + $0x18] sm:$0xff] %vm285, %v274
    %287 = vst [vmem:[#allocation8 + $0x20] sm:$0xf] %v201
    %288 = vst [vmem:[#allocation8 + $0x28] sm:$0xf] %v203
    %289 = vst [vmem:[#allocation8 + $0x30] sm:$0xf] %v278
    %vm290 = vcmask 379904
    %291 = vst.msk [vmem:[#allocation8 + $0x38] sm:$0xf] %vm290, %v280
    %v292 = vpack.c.bf16 %v201, %v195
    %v293 = vpack.c.bf16 %v203, %v197
    %v294 = vpack.c.bf16 %v278, %v272
    %v295 = vpack.c.bf16 %v280, %v274
    %v296 = vld [vmem:[#allocation5] sm:$0xff]
    %v297 = vld [vmem:[#allocation5 + $0x8] sm:$0xff]
    %v298 = vld [vmem:[#allocation5 + $0x10] sm:$0xff]
    %v299 = vld [vmem:[#allocation5 + $0x18] sm:$0xff]
    %v300 = vld [vmem:[#allocation5 + $0x20] sm:$0xff]
    %v301 = vld [vmem:[#allocation5 + $0x28] sm:$0xff]
    %v302 = vld [vmem:[#allocation5 + $0x30] sm:$0xff]
    %v303 = vld [vmem:[#allocation5 + $0x38] sm:$0xff]
    %v304 = vld [vmem:[#allocation5 + $0x40] sm:$0xff]
    %v305 = vld [vmem:[#allocation5 + $0x48] sm:$0xff]
    %v306 = vld [vmem:[#allocation5 + $0x50] sm:$0xff]
    %v307 = vld [vmem:[#allocation5 + $0x58] sm:$0xff]
    %v308 = vld [vmem:[#allocation5 + $0x60] sm:$0xff]
    %v309 = vld [vmem:[#allocation5 + $0x68] sm:$0xff]
    %v310 = vld [vmem:[#allocation5 + $0x70] sm:$0xff]
    %v311 = vld [vmem:[#allocation5 + $0x78] sm:$0xff]
    %v312 = vld [vmem:[#allocation5 + $0x80] sm:$0xff]
    %v313 = vld [vmem:[#allocation5 + $0x88] sm:$0xff]
    %v314 = vld [vmem:[#allocation5 + $0x90] sm:$0xff]
    %v315 = vld [vmem:[#allocation5 + $0x98] sm:$0xff]
    %v316 = vld [vmem:[#allocation5 + $0xa0] sm:$0xff]
    %v317 = vld [vmem:[#allocation5 + $0xa8] sm:$0xff]
    %v318 = vld [vmem:[#allocation5 + $0xb0] sm:$0xff]
    %v319 = vld [vmem:[#allocation5 + $0xb8] sm:$0xff]
    %v320 = vld [vmem:[#allocation5 + $0xc0] sm:$0xff]
    %v321 = vld [vmem:[#allocation5 + $0xc8] sm:$0xff]
    %v322 = vld [vmem:[#allocation5 + $0xd0] sm:$0xff]
    %v323 = vld [vmem:[#allocation5 + $0xd8] sm:$0xff]
    %v324 = vld [vmem:[#allocation5 + $0xe0] sm:$0xff]
    %v325 = vld [vmem:[#allocation5 + $0xe8] sm:$0xff]
    %v326 = vld [vmem:[#allocation5 + $0xf0] sm:$0xff]
    %v327 = vld [vmem:[#allocation5 + $0xf8] sm:$0xff]
    %v328 = vld [vmem:[#allocation5 + $0x100] sm:$0xff]
    %v329 = vld [vmem:[#allocation5 + $0x108] sm:$0xff]
    %v330 = vld [vmem:[#allocation5 + $0x110] sm:$0xff]
    %v331 = vld [vmem:[#allocation5 + $0x118] sm:$0xff]
    %v332 = vld [vmem:[#allocation5 + $0x120] sm:$0xff]
    %v333 = vld [vmem:[#allocation5 + $0x128] sm:$0xff]
    %v334 = vld [vmem:[#allocation5 + $0x130] sm:$0xff]
    %v335 = vld [vmem:[#allocation5 + $0x138] sm:$0xff]
    %v336 = vld [vmem:[#allocation5 + $0x140] sm:$0xff]
    %v337 = vld [vmem:[#allocation5 + $0x148] sm:$0xff]
    %v338 = vld [vmem:[#allocation5 + $0x150] sm:$0xff]
    %v339 = vld [vmem:[#allocation5 + $0x158] sm:$0xff]
    %v340 = vld [vmem:[#allocation5 + $0x160] sm:$0xff]
    %v341 = vld [vmem:[#allocation5 + $0x168] sm:$0xff]
    %v342 = vld [vmem:[#allocation5 + $0x170] sm:$0xff]
    %v343 = vld [vmem:[#allocation5 + $0x178] sm:$0xff]
    %v344 = vld [vmem:[#allocation5 + $0x180] sm:$0xff]
    %v345 = vld [vmem:[#allocation5 + $0x188] sm:$0xff]
    %v346 = vld [vmem:[#allocation5 + $0x190] sm:$0xff]
    %v347 = vld [vmem:[#allocation5 + $0x198] sm:$0xff]
    %v348 = vld [vmem:[#allocation5 + $0x1a0] sm:$0xff]
    %v349 = vld [vmem:[#allocation5 + $0x1a8] sm:$0xff]
    %v350 = vld [vmem:[#allocation5 + $0x1b0] sm:$0xff]
    %v351 = vld [vmem:[#allocation5 + $0x1b8] sm:$0xff]
    %v352 = vld [vmem:[#allocation5 + $0x1c0] sm:$0xff]
    %v353 = vld [vmem:[#allocation5 + $0x1c8] sm:$0xff]
    %v354 = vld [vmem:[#allocation5 + $0x1d0] sm:$0xff]
    %v355 = vld [vmem:[#allocation5 + $0x1d8] sm:$0xff]
    %v356 = vld [vmem:[#allocation5 + $0x1e0] sm:$0xff]
    %v357 = vld [vmem:[#allocation5 + $0x1e8] sm:$0xff]
    %v358 = vld [vmem:[#allocation5 + $0x1f0] sm:$0xff]
    %v359 = vld [vmem:[#allocation5 + $0x1f8] sm:$0xff]
    %v360 = vld [vmem:[#allocation5 + $0x200] sm:$0xff]
    %v361 = vld [vmem:[#allocation5 + $0x208] sm:$0xff]
    %v362 = vld [vmem:[#allocation5 + $0x210] sm:$0xff]
    %v363 = vld [vmem:[#allocation5 + $0x218] sm:$0xff]
    %v364 = vld [vmem:[#allocation5 + $0x220] sm:$0xff]
    %v365 = vld [vmem:[#allocation5 + $0x228] sm:$0xff]
    %v366 = vld [vmem:[#allocation5 + $0x230] sm:$0xff]
    %v367 = vld [vmem:[#allocation5 + $0x238] sm:$0xff]
    %v368 = vld [vmem:[#allocation5 + $0x240] sm:$0xff]
    %v369 = vld [vmem:[#allocation5 + $0x248] sm:$0xff]
    %v370 = vld [vmem:[#allocation5 + $0x250] sm:$0xff]
    %v371 = vld [vmem:[#allocation5 + $0x258] sm:$0xff]
    %v372 = vld [vmem:[#allocation5 + $0x260] sm:$0xff]
    %v373 = vld [vmem:[#allocation5 + $0x268] sm:$0xff]
    %v374 = vld [vmem:[#allocation5 + $0x270] sm:$0xff]
    %v375 = vld [vmem:[#allocation5 + $0x278] sm:$0xff]
    %v376 = vld [vmem:[#allocation5 + $0x280] sm:$0xff]
    %v377 = vld [vmem:[#allocation5 + $0x288] sm:$0xff]
    %v378 = vld [vmem:[#allocation5 + $0x290] sm:$0xff]
    %v379 = vld [vmem:[#allocation5 + $0x298] sm:$0xff]
    %v380 = vld [vmem:[#allocation5 + $0x2a0] sm:$0xff]
    %v381 = vld [vmem:[#allocation5 + $0x2a8] sm:$0xff]
    %v382 = vld [vmem:[#allocation5 + $0x2b0] sm:$0xff]
    %v383 = vld [vmem:[#allocation5 + $0x2b8] sm:$0xff]
    %v384 = vld [vmem:[#allocation5 + $0x2c0] sm:$0xff]
    %v385 = vld [vmem:[#allocation5 + $0x2c8] sm:$0xff]
    %v386 = vld [vmem:[#allocation5 + $0x2d0] sm:$0xff]
    %v387 = vld [vmem:[#allocation5 + $0x2d8] sm:$0xff]
    %v388 = vld [vmem:[#allocation5 + $0x2e0] sm:$0xff]
    %v389 = vld [vmem:[#allocation5 + $0x2e8] sm:$0xff]
    %v390 = vld [vmem:[#allocation5 + $0x2f0] sm:$0xff]
    %v391 = vld [vmem:[#allocation5 + $0x2f8] sm:$0xff]
    %v392 = vld [vmem:[#allocation5 + $0x300] sm:$0xff]
    %v393 = vld [vmem:[#allocation5 + $0x308] sm:$0xff]
    %v394 = vld [vmem:[#allocation5 + $0x310] sm:$0xff]
    %v395 = vld [vmem:[#allocation5 + $0x318] sm:$0xff]
    %v396 = vld [vmem:[#allocation5 + $0x320] sm:$0xff]
    %v397 = vld [vmem:[#allocation5 + $0x328] sm:$0xff]
    %v398 = vld [vmem:[#allocation5 + $0x330] sm:$0xff]
    %v399 = vld [vmem:[#allocation5 + $0x338] sm:$0xff]
    %v400 = vld [vmem:[#allocation5 + $0x340] sm:$0xff]
    %v401 = vld [vmem:[#allocation5 + $0x348] sm:$0xff]
    %v402 = vld [vmem:[#allocation5 + $0x350] sm:$0xff]
    %v403 = vld [vmem:[#allocation5 + $0x358] sm:$0xff]
    %v404 = vld [vmem:[#allocation5 + $0x360] sm:$0xff]
    %v405 = vld [vmem:[#allocation5 + $0x368] sm:$0xff]
    %v406 = vld [vmem:[#allocation5 + $0x370] sm:$0xff]
    %v407 = vld [vmem:[#allocation5 + $0x378] sm:$0xff]
    %v408 = vld [vmem:[#allocation5 + $0x380] sm:$0xff]
    %v409 = vld [vmem:[#allocation5 + $0x388] sm:$0xff]
    %v410 = vld [vmem:[#allocation5 + $0x390] sm:$0xff]
    %v411 = vld [vmem:[#allocation5 + $0x398] sm:$0xff]
    %v412 = vld [vmem:[#allocation5 + $0x3a0] sm:$0xff]
    %v413 = vld [vmem:[#allocation5 + $0x3a8] sm:$0xff]
    %v414 = vld [vmem:[#allocation5 + $0x3b0] sm:$0xff]
    %v415 = vld [vmem:[#allocation5 + $0x3b8] sm:$0xff]
    %v416 = vld [vmem:[#allocation5 + $0x3c0] sm:$0xff]
    %v417 = vld [vmem:[#allocation5 + $0x3c8] sm:$0xff]
    %v418 = vld [vmem:[#allocation5 + $0x3d0] sm:$0xff]
    %v419 = vld [vmem:[#allocation5 + $0x3d8] sm:$0xff]
    %v420 = vld [vmem:[#allocation5 + $0x3e0] sm:$0xff]
    %v421 = vld [vmem:[#allocation5 + $0x3e8] sm:$0xff]
    %v422 = vld [vmem:[#allocation5 + $0x3f0] sm:$0xff]
    %v423 = vld [vmem:[#allocation5 + $0x3f8] sm:$0xff]
    %v424 = vld [vmem:[#allocation5 + $0x400] sm:$0xff]
    %v425 = vld [vmem:[#allocation5 + $0x408] sm:$0xff]
    %v426 = vld [vmem:[#allocation5 + $0x410] sm:$0xff]
    %v427 = vld [vmem:[#allocation5 + $0x418] sm:$0xff]
    %v428 = vld [vmem:[#allocation5 + $0x420] sm:$0xff]
    %v429 = vld [vmem:[#allocation5 + $0x428] sm:$0xff]
    %v430 = vld [vmem:[#allocation5 + $0x430] sm:$0xff]
    %v431 = vld [vmem:[#allocation5 + $0x438] sm:$0xff]
    %v432 = vld [vmem:[#allocation5 + $0x440] sm:$0xff]
    %v433 = vld [vmem:[#allocation5 + $0x448] sm:$0xff]
    %v434 = vld [vmem:[#allocation5 + $0x450] sm:$0xff]
    %v435 = vld [vmem:[#allocation5 + $0x458] sm:$0xff]
    %v436 = vld [vmem:[#allocation5 + $0x460] sm:$0xff]
    %v437 = vld [vmem:[#allocation5 + $0x468] sm:$0xff]
    %v438 = vld [vmem:[#allocation5 + $0x470] sm:$0xff]
    %v439 = vld [vmem:[#allocation5 + $0x478] sm:$0xff]
    %v440 = vld [vmem:[#allocation5 + $0x480] sm:$0xff]
    %v441 = vld [vmem:[#allocation5 + $0x488] sm:$0xff]
    %v442 = vld [vmem:[#allocation5 + $0x490] sm:$0xff]
    %v443 = vld [vmem:[#allocation5 + $0x498] sm:$0xff]
    %v444 = vld [vmem:[#allocation5 + $0x4a0] sm:$0xff]
    %v445 = vld [vmem:[#allocation5 + $0x4a8] sm:$0xff]
    %v446 = vld [vmem:[#allocation5 + $0x4b0] sm:$0xff]
    %v447 = vld [vmem:[#allocation5 + $0x4b8] sm:$0xff]
    %v448 = vld [vmem:[#allocation5 + $0x4c0] sm:$0xff]
    %v449 = vld [vmem:[#allocation5 + $0x4c8] sm:$0xff]
    %v450 = vld [vmem:[#allocation5 + $0x4d0] sm:$0xff]
    %v451 = vld [vmem:[#allocation5 + $0x4d8] sm:$0xff]
    %v452 = vld [vmem:[#allocation5 + $0x4e0] sm:$0xff]
    %v453 = vld [vmem:[#allocation5 + $0x4e8] sm:$0xff]
    %v454 = vld [vmem:[#allocation5 + $0x4f0] sm:$0xff]
    %v455 = vld [vmem:[#allocation5 + $0x4f8] sm:$0xff]
    %v456 = vld [vmem:[#allocation5 + $0x500] sm:$0xff]
    %v457 = vld [vmem:[#allocation5 + $0x508] sm:$0xff]
    %v458 = vld [vmem:[#allocation5 + $0x510] sm:$0xff]
    %v459 = vld [vmem:[#allocation5 + $0x518] sm:$0xff]
    %v460 = vld [vmem:[#allocation5 + $0x520] sm:$0xff]
    %v461 = vld [vmem:[#allocation5 + $0x528] sm:$0xff]
    %v462 = vld [vmem:[#allocation5 + $0x530] sm:$0xff]
    %v463 = vld [vmem:[#allocation5 + $0x538] sm:$0xff]
    %v464 = vld [vmem:[#allocation5 + $0x540] sm:$0xff]
    %v465 = vld [vmem:[#allocation5 + $0x548] sm:$0xff]
    %v466 = vld [vmem:[#allocation5 + $0x550] sm:$0xff]
    %v467 = vld [vmem:[#allocation5 + $0x558] sm:$0xff]
    %v468 = vld [vmem:[#allocation5 + $0x560] sm:$0xff]
    %v469 = vld [vmem:[#allocation5 + $0x568] sm:$0xff]
    %v470 = vld [vmem:[#allocation5 + $0x570] sm:$0xff]
    %v471 = vld [vmem:[#allocation5 + $0x578] sm:$0xff]
    %v472 = vld [vmem:[#allocation5 + $0x580] sm:$0xff]
    %v473 = vld [vmem:[#allocation5 + $0x588] sm:$0xff]
    %v474 = vld [vmem:[#allocation5 + $0x590] sm:$0xff]
    %v475 = vld [vmem:[#allocation5 + $0x598] sm:$0xff]
    %v476 = vld [vmem:[#allocation5 + $0x5a0] sm:$0xff]
    %v477 = vld [vmem:[#allocation5 + $0x5a8] sm:$0xff]
    %v478 = vld [vmem:[#allocation5 + $0x5b0] sm:$0xff]
    %v479 = vld [vmem:[#allocation5 + $0x5b8] sm:$0xff]
    %v480 = vld [vmem:[#allocation5 + $0x5c0] sm:$0xff]
    %v481 = vld [vmem:[#allocation5 + $0x5c8] sm:$0xff]
    %v482 = vld [vmem:[#allocation5 + $0x5d0] sm:$0xff]
    %v483 = vld [vmem:[#allocation5 + $0x5d8] sm:$0xff]
    %v484 = vld [vmem:[#allocation5 + $0x5e0] sm:$0xff]
    %v485 = vld [vmem:[#allocation5 + $0x5e8] sm:$0xff]
    %v486 = vld [vmem:[#allocation5 + $0x5f0] sm:$0xff]
    %v487 = vld [vmem:[#allocation5 + $0x5f8] sm:$0xff]
    %v488 = vld [vmem:[#allocation5 + $0x600] sm:$0xff]
    %v489 = vld [vmem:[#allocation5 + $0x608] sm:$0xff]
    %v490 = vld [vmem:[#allocation5 + $0x610] sm:$0xff]
    %v491 = vld [vmem:[#allocation5 + $0x618] sm:$0xff]
    %v492 = vld [vmem:[#allocation5 + $0x620] sm:$0xff]
    %v493 = vld [vmem:[#allocation5 + $0x628] sm:$0xff]
    %v494 = vld [vmem:[#allocation5 + $0x630] sm:$0xff]
    %v495 = vld [vmem:[#allocation5 + $0x638] sm:$0xff]
    %v496 = vld [vmem:[#allocation5 + $0x640] sm:$0xff]
    %v497 = vld [vmem:[#allocation5 + $0x648] sm:$0xff]
    %v498 = vld [vmem:[#allocation5 + $0x650] sm:$0xff]
    %v499 = vld [vmem:[#allocation5 + $0x658] sm:$0xff]
    %v500 = vld [vmem:[#allocation5 + $0x660] sm:$0xff]
    %v501 = vld [vmem:[#allocation5 + $0x668] sm:$0xff]
    %v502 = vld [vmem:[#allocation5 + $0x670] sm:$0xff]
    %v503 = vld [vmem:[#allocation5 + $0x678] sm:$0xff]
    %v504 = vld [vmem:[#allocation5 + $0x680] sm:$0xff]
    %v505 = vld [vmem:[#allocation5 + $0x688] sm:$0xff]
    %v506 = vld [vmem:[#allocation5 + $0x690] sm:$0xff]
    %v507 = vld [vmem:[#allocation5 + $0x698] sm:$0xff]
    %v508 = vld [vmem:[#allocation5 + $0x6a0] sm:$0xff]
    %v509 = vld [vmem:[#allocation5 + $0x6a8] sm:$0xff]
    %v510 = vld [vmem:[#allocation5 + $0x6b0] sm:$0xff]
    %v511 = vld [vmem:[#allocation5 + $0x6b8] sm:$0xff]
    %v512 = vld [vmem:[#allocation5 + $0x6c0] sm:$0xff]
    %v513 = vld [vmem:[#allocation5 + $0x6c8] sm:$0xff]
    %v514 = vld [vmem:[#allocation5 + $0x6d0] sm:$0xff]
    %v515 = vld [vmem:[#allocation5 + $0x6d8] sm:$0xff]
    %v516 = vld [vmem:[#allocation5 + $0x6e0] sm:$0xff]
    %v517 = vld [vmem:[#allocation5 + $0x6e8] sm:$0xff]
    %v518 = vld [vmem:[#allocation5 + $0x6f0] sm:$0xff]
    %v519 = vld [vmem:[#allocation5 + $0x6f8] sm:$0xff]
    %v520 = vld [vmem:[#allocation5 + $0x700] sm:$0xff]
    %v521 = vld [vmem:[#allocation5 + $0x708] sm:$0xff]
    %v522 = vld [vmem:[#allocation5 + $0x710] sm:$0xff]
    %v523 = vld [vmem:[#allocation5 + $0x718] sm:$0xff]
    %v524 = vld [vmem:[#allocation5 + $0x720] sm:$0xff]
    %v525 = vld [vmem:[#allocation5 + $0x728] sm:$0xff]
    %v526 = vld [vmem:[#allocation5 + $0x730] sm:$0xff]
    %v527 = vld [vmem:[#allocation5 + $0x738] sm:$0xff]
    %v528 = vld [vmem:[#allocation5 + $0x740] sm:$0xff]
    %v529 = vld [vmem:[#allocation5 + $0x748] sm:$0xff]
    %v530 = vld [vmem:[#allocation5 + $0x750] sm:$0xff]
    %v531 = vld [vmem:[#allocation5 + $0x758] sm:$0xff]
    %v532 = vld [vmem:[#allocation5 + $0x760] sm:$0xff]
    %v533 = vld [vmem:[#allocation5 + $0x768] sm:$0xff]
    %v534 = vld [vmem:[#allocation5 + $0x770] sm:$0xff]
    %v535 = vld [vmem:[#allocation5 + $0x778] sm:$0xff]
    %v536 = vld [vmem:[#allocation5 + $0x780] sm:$0xff]
    %v537 = vld [vmem:[#allocation5 + $0x788] sm:$0xff]
    %v538 = vld [vmem:[#allocation5 + $0x790] sm:$0xff]
    %v539 = vld [vmem:[#allocation5 + $0x798] sm:$0xff]
    %v540 = vld [vmem:[#allocation5 + $0x7a0] sm:$0xff]
    %v541 = vld [vmem:[#allocation5 + $0x7a8] sm:$0xff]
    %v542 = vld [vmem:[#allocation5 + $0x7b0] sm:$0xff]
    %v543 = vld [vmem:[#allocation5 + $0x7b8] sm:$0xff]
    %v544 = vld [vmem:[#allocation5 + $0x7c0] sm:$0xff]
    %v545 = vld [vmem:[#allocation5 + $0x7c8] sm:$0xff]
    %v546 = vld [vmem:[#allocation5 + $0x7d0] sm:$0xff]
    %v547 = vld [vmem:[#allocation5 + $0x7d8] sm:$0xff]
    %v548 = vld [vmem:[#allocation5 + $0x7e0] sm:$0xff]
    %v549 = vld [vmem:[#allocation5 + $0x7e8] sm:$0xff]
    %v550 = vld [vmem:[#allocation5 + $0x7f0] sm:$0xff]
    %v551 = vld [vmem:[#allocation5 + $0x7f8] sm:$0xff]
    %v552 = vld [vmem:[#allocation5 + $0x800] sm:$0xff]
    %v553 = vld [vmem:[#allocation5 + $0x808] sm:$0xff]
    %v554 = vld [vmem:[#allocation5 + $0x810] sm:$0xff]
    %v555 = vld [vmem:[#allocation5 + $0x818] sm:$0xff]
    %v556 = vld [vmem:[#allocation5 + $0x820] sm:$0xff]
    %v557 = vld [vmem:[#allocation5 + $0x828] sm:$0xff]
    %v558 = vld [vmem:[#allocation5 + $0x830] sm:$0xff]
    %v559 = vld [vmem:[#allocation5 + $0x838] sm:$0xff]
    %v560 = vld [vmem:[#allocation5 + $0x840] sm:$0xff]
    %v561 = vld [vmem:[#allocation5 + $0x848] sm:$0xff]
    %v562 = vld [vmem:[#allocation5 + $0x850] sm:$0xff]
    %v563 = vld [vmem:[#allocation5 + $0x858] sm:$0xff]
    %v564 = vld [vmem:[#allocation5 + $0x860] sm:$0xff]
    %v565 = vld [vmem:[#allocation5 + $0x868] sm:$0xff]
    %v566 = vld [vmem:[#allocation5 + $0x870] sm:$0xff]
    %v567 = vld [vmem:[#allocation5 + $0x878] sm:$0xff]
    %v568 = vld [vmem:[#allocation5 + $0x880] sm:$0xff]
    %v569 = vld [vmem:[#allocation5 + $0x888] sm:$0xff]
    %v570 = vld [vmem:[#allocation5 + $0x890] sm:$0xff]
    %v571 = vld [vmem:[#allocation5 + $0x898] sm:$0xff]
    %v572 = vld [vmem:[#allocation5 + $0x8a0] sm:$0xff]
    %v573 = vld [vmem:[#allocation5 + $0x8a8] sm:$0xff]
    %v574 = vld [vmem:[#allocation5 + $0x8b0] sm:$0xff]
    %v575 = vld [vmem:[#allocation5 + $0x8b8] sm:$0xff]
    %v576 = vld [vmem:[#allocation5 + $0x8c0] sm:$0xff]
    %v577 = vld [vmem:[#allocation5 + $0x8c8] sm:$0xff]
    %v578 = vld [vmem:[#allocation5 + $0x8d0] sm:$0xff]
    %v579 = vld [vmem:[#allocation5 + $0x8d8] sm:$0xff]
    %v580 = vld [vmem:[#allocation5 + $0x8e0] sm:$0xff]
    %v581 = vld [vmem:[#allocation5 + $0x8e8] sm:$0xff]
    %v582 = vld [vmem:[#allocation5 + $0x8f0] sm:$0xff]
    %v583 = vld [vmem:[#allocation5 + $0x8f8] sm:$0xff]
    %v584 = vld [vmem:[#allocation5 + $0x900] sm:$0xff]
    %v585 = vld [vmem:[#allocation5 + $0x908] sm:$0xff]
    %v586 = vld [vmem:[#allocation5 + $0x910] sm:$0xff]
    %v587 = vld [vmem:[#allocation5 + $0x918] sm:$0xff]
    %v588 = vld [vmem:[#allocation5 + $0x920] sm:$0xff]
    %v589 = vld [vmem:[#allocation5 + $0x928] sm:$0xff]
    %v590 = vld [vmem:[#allocation5 + $0x930] sm:$0xff]
    %v591 = vld [vmem:[#allocation5 + $0x938] sm:$0xff]
    %v592 = vld [vmem:[#allocation5 + $0x940] sm:$0xff]
    %v593 = vld [vmem:[#allocation5 + $0x948] sm:$0xff]
    %v594 = vld [vmem:[#allocation5 + $0x950] sm:$0xff]
    %v595 = vld [vmem:[#allocation5 + $0x958] sm:$0xff]
    %v596 = vld [vmem:[#allocation5 + $0x960] sm:$0xff]
    %v597 = vld [vmem:[#allocation5 + $0x968] sm:$0xff]
    %v598 = vld [vmem:[#allocation5 + $0x970] sm:$0xff]
    %v599 = vld [vmem:[#allocation5 + $0x978] sm:$0xff]
    %v600 = vld [vmem:[#allocation5 + $0x980] sm:$0xff]
    %v601 = vld [vmem:[#allocation5 + $0x988] sm:$0xff]
    %v602 = vld [vmem:[#allocation5 + $0x990] sm:$0xff]
    %v603 = vld [vmem:[#allocation5 + $0x998] sm:$0xff]
    %v604 = vld [vmem:[#allocation5 + $0x9a0] sm:$0xff]
    %v605 = vld [vmem:[#allocation5 + $0x9a8] sm:$0xff]
    %v606 = vld [vmem:[#allocation5 + $0x9b0] sm:$0xff]
    %v607 = vld [vmem:[#allocation5 + $0x9b8] sm:$0xff]
    %v608 = vld [vmem:[#allocation5 + $0x9c0] sm:$0xff]
    %v609 = vld [vmem:[#allocation5 + $0x9c8] sm:$0xff]
    %v610 = vld [vmem:[#allocation5 + $0x9d0] sm:$0xff]
    %v611 = vld [vmem:[#allocation5 + $0x9d8] sm:$0xff]
    %v612 = vld [vmem:[#allocation5 + $0x9e0] sm:$0xff]
    %v613 = vld [vmem:[#allocation5 + $0x9e8] sm:$0xff]
    %v614 = vld [vmem:[#allocation5 + $0x9f0] sm:$0xff]
    %v615 = vld [vmem:[#allocation5 + $0x9f8] sm:$0xff]
    %v616 = vld [vmem:[#allocation5 + $0xa00] sm:$0xff]
    %v617 = vld [vmem:[#allocation5 + $0xa08] sm:$0xff]
    %v618 = vld [vmem:[#allocation5 + $0xa10] sm:$0xff]
    %v619 = vld [vmem:[#allocation5 + $0xa18] sm:$0xff]
    %v620 = vld [vmem:[#allocation5 + $0xa20] sm:$0xff]
    %v621 = vld [vmem:[#allocation5 + $0xa28] sm:$0xff]
    %v622 = vld [vmem:[#allocation5 + $0xa30] sm:$0xff]
    %v623 = vld [vmem:[#allocation5 + $0xa38] sm:$0xff]
    %v624 = vld [vmem:[#allocation5 + $0xa40] sm:$0xff]
    %v625 = vld [vmem:[#allocation5 + $0xa48] sm:$0xff]
    %v626 = vld [vmem:[#allocation5 + $0xa50] sm:$0xff]
    %v627 = vld [vmem:[#allocation5 + $0xa58] sm:$0xff]
    %v628 = vld [vmem:[#allocation5 + $0xa60] sm:$0xff]
    %v629 = vld [vmem:[#allocation5 + $0xa68] sm:$0xff]
    %v630 = vld [vmem:[#allocation5 + $0xa70] sm:$0xff]
    %v631 = vld [vmem:[#allocation5 + $0xa78] sm:$0xff]
    %v632 = vld [vmem:[#allocation5 + $0xa80] sm:$0xff]
    %v633 = vld [vmem:[#allocation5 + $0xa88] sm:$0xff]
    %v634 = vld [vmem:[#allocation5 + $0xa90] sm:$0xff]
    %v635 = vld [vmem:[#allocation5 + $0xa98] sm:$0xff]
    %v636 = vld [vmem:[#allocation5 + $0xaa0] sm:$0xff]
    %v637 = vld [vmem:[#allocation5 + $0xaa8] sm:$0xff]
    %v638 = vld [vmem:[#allocation5 + $0xab0] sm:$0xff]
    %v639 = vld [vmem:[#allocation5 + $0xab8] sm:$0xff]
    %v640 = vld [vmem:[#allocation5 + $0xac0] sm:$0xff]
    %v641 = vld [vmem:[#allocation5 + $0xac8] sm:$0xff]
    %v642 = vld [vmem:[#allocation5 + $0xad0] sm:$0xff]
    %v643 = vld [vmem:[#allocation5 + $0xad8] sm:$0xff]
    %v644 = vld [vmem:[#allocation5 + $0xae0] sm:$0xff]
    %v645 = vld [vmem:[#allocation5 + $0xae8] sm:$0xff]
    %v646 = vld [vmem:[#allocation5 + $0xaf0] sm:$0xff]
    %v647 = vld [vmem:[#allocation5 + $0xaf8] sm:$0xff]
    %v648 = vld [vmem:[#allocation5 + $0xb00] sm:$0xff]
    %v649 = vld [vmem:[#allocation5 + $0xb08] sm:$0xff]
    %v650 = vld [vmem:[#allocation5 + $0xb10] sm:$0xff]
    %v651 = vld [vmem:[#allocation5 + $0xb18] sm:$0xff]
    %v652 = vld [vmem:[#allocation5 + $0xb20] sm:$0xff]
    %v653 = vld [vmem:[#allocation5 + $0xb28] sm:$0xff]
    %v654 = vld [vmem:[#allocation5 + $0xb30] sm:$0xff]
    %v655 = vld [vmem:[#allocation5 + $0xb38] sm:$0xff]
    %v656 = vld [vmem:[#allocation5 + $0xb40] sm:$0xff]
    %v657 = vld [vmem:[#allocation5 + $0xb48] sm:$0xff]
    %v658 = vld [vmem:[#allocation5 + $0xb50] sm:$0xff]
    %v659 = vld [vmem:[#allocation5 + $0xb58] sm:$0xff]
    %v660 = vld [vmem:[#allocation5 + $0xb60] sm:$0xff]
    %v661 = vld [vmem:[#allocation5 + $0xb68] sm:$0xff]
    %v662 = vld [vmem:[#allocation5 + $0xb70] sm:$0xff]
    %v663 = vld [vmem:[#allocation5 + $0xb78] sm:$0xff]
    %v664 = vld [vmem:[#allocation5 + $0xb80] sm:$0xff]
    %v665 = vld [vmem:[#allocation5 + $0xb88] sm:$0xff]
    %v666 = vld [vmem:[#allocation5 + $0xb90] sm:$0xff]
    %v667 = vld [vmem:[#allocation5 + $0xb98] sm:$0xff]
    %v668 = vld [vmem:[#allocation5 + $0xba0] sm:$0xff]
    %v669 = vld [vmem:[#allocation5 + $0xba8] sm:$0xff]
    %v670 = vld [vmem:[#allocation5 + $0xbb0] sm:$0xff]
    %v671 = vld [vmem:[#allocation5 + $0xbb8] sm:$0xff]
    %v672 = vld [vmem:[#allocation5 + $0xbc0] sm:$0xff]
    %v673 = vld [vmem:[#allocation5 + $0xbc8] sm:$0xff]
    %v674 = vld [vmem:[#allocation5 + $0xbd0] sm:$0xff]
    %v675 = vld [vmem:[#allocation5 + $0xbd8] sm:$0xff]
    %v676 = vld [vmem:[#allocation5 + $0xbe0] sm:$0xff]
    %v677 = vld [vmem:[#allocation5 + $0xbe8] sm:$0xff]
    %v678 = vld [vmem:[#allocation5 + $0xbf0] sm:$0xff]
    %v679 = vld [vmem:[#allocation5 + $0xbf8] sm:$0xff]
    %v680 = vld [vmem:[#allocation5 + $0xc00] sm:$0xff]
    %v681 = vld [vmem:[#allocation5 + $0xc08] sm:$0xff]
    %v682 = vld [vmem:[#allocation5 + $0xc10] sm:$0xff]
    %v683 = vld [vmem:[#allocation5 + $0xc18] sm:$0xff]
    %v684 = vld [vmem:[#allocation5 + $0xc20] sm:$0xff]
    %v685 = vld [vmem:[#allocation5 + $0xc28] sm:$0xff]
    %v686 = vld [vmem:[#allocation5 + $0xc30] sm:$0xff]
    %v687 = vld [vmem:[#allocation5 + $0xc38] sm:$0xff]
    %v688 = vld [vmem:[#allocation5 + $0xc40] sm:$0xff]
    %v689 = vld [vmem:[#allocation5 + $0xc48] sm:$0xff]
    %v690 = vld [vmem:[#allocation5 + $0xc50] sm:$0xff]
    %v691 = vld [vmem:[#allocation5 + $0xc58] sm:$0xff]
    %v692 = vld [vmem:[#allocation5 + $0xc60] sm:$0xff]
    %v693 = vld [vmem:[#allocation5 + $0xc68] sm:$0xff]
    %v694 = vld [vmem:[#allocation5 + $0xc70] sm:$0xff]
    %v695 = vld [vmem:[#allocation5 + $0xc78] sm:$0xff]
    %v696 = vld [vmem:[#allocation5 + $0xc80] sm:$0xff]
    %v697 = vld [vmem:[#allocation5 + $0xc88] sm:$0xff]
    %v698 = vld [vmem:[#allocation5 + $0xc90] sm:$0xff]
    %v699 = vld [vmem:[#allocation5 + $0xc98] sm:$0xff]
    %v700 = vld [vmem:[#allocation5 + $0xca0] sm:$0xff]
    %v701 = vld [vmem:[#allocation5 + $0xca8] sm:$0xff]
    %v702 = vld [vmem:[#allocation5 + $0xcb0] sm:$0xff]
    %v703 = vld [vmem:[#allocation5 + $0xcb8] sm:$0xff]
    %v704 = vld [vmem:[#allocation5 + $0xcc0] sm:$0xff]
    %v705 = vld [vmem:[#allocation5 + $0xcc8] sm:$0xff]
    %v706 = vld [vmem:[#allocation5 + $0xcd0] sm:$0xff]
    %v707 = vld [vmem:[#allocation5 + $0xcd8] sm:$0xff]
    %v708 = vld [vmem:[#allocation5 + $0xce0] sm:$0xff]
    %v709 = vld [vmem:[#allocation5 + $0xce8] sm:$0xff]
    %v710 = vld [vmem:[#allocation5 + $0xcf0] sm:$0xff]
    %v711 = vld [vmem:[#allocation5 + $0xcf8] sm:$0xff]
    %v712 = vld [vmem:[#allocation5 + $0xd00] sm:$0xff]
    %v713 = vld [vmem:[#allocation5 + $0xd08] sm:$0xff]
    %v714 = vld [vmem:[#allocation5 + $0xd10] sm:$0xff]
    %v715 = vld [vmem:[#allocation5 + $0xd18] sm:$0xff]
    %v716 = vld [vmem:[#allocation5 + $0xd20] sm:$0xff]
    %v717 = vld [vmem:[#allocation5 + $0xd28] sm:$0xff]
    %v718 = vld [vmem:[#allocation5 + $0xd30] sm:$0xff]
    %v719 = vld [vmem:[#allocation5 + $0xd38] sm:$0xff]
    %v720 = vld [vmem:[#allocation5 + $0xd40] sm:$0xff]
    %v721 = vld [vmem:[#allocation5 + $0xd48] sm:$0xff]
    %v722 = vld [vmem:[#allocation5 + $0xd50] sm:$0xff]
    %v723 = vld [vmem:[#allocation5 + $0xd58] sm:$0xff]
    %v724 = vld [vmem:[#allocation5 + $0xd60] sm:$0xff]
    %v725 = vld [vmem:[#allocation5 + $0xd68] sm:$0xff]
    %v726 = vld [vmem:[#allocation5 + $0xd70] sm:$0xff]
    %v727 = vld [vmem:[#allocation5 + $0xd78] sm:$0xff]
    %v728 = vld [vmem:[#allocation5 + $0xd80] sm:$0xff]
    %v729 = vld [vmem:[#allocation5 + $0xd88] sm:$0xff]
    %v730 = vld [vmem:[#allocation5 + $0xd90] sm:$0xff]
    %v731 = vld [vmem:[#allocation5 + $0xd98] sm:$0xff]
    %v732 = vld [vmem:[#allocation5 + $0xda0] sm:$0xff]
    %v733 = vld [vmem:[#allocation5 + $0xda8] sm:$0xff]
    %v734 = vld [vmem:[#allocation5 + $0xdb0] sm:$0xff]
    %v735 = vld [vmem:[#allocation5 + $0xdb8] sm:$0xff]
    %v736 = vld [vmem:[#allocation5 + $0xdc0] sm:$0xff]
    %v737 = vld [vmem:[#allocation5 + $0xdc8] sm:$0xff]
    %v738 = vld [vmem:[#allocation5 + $0xdd0] sm:$0xff]
    %v739 = vld [vmem:[#allocation5 + $0xdd8] sm:$0xff]
    %v740 = vld [vmem:[#allocation5 + $0xde0] sm:$0xff]
    %v741 = vld [vmem:[#allocation5 + $0xde8] sm:$0xff]
    %v742 = vld [vmem:[#allocation5 + $0xdf0] sm:$0xff]
    %v743 = vld [vmem:[#allocation5 + $0xdf8] sm:$0xff]
    %v744 = vld [vmem:[#allocation5 + $0xe00] sm:$0xff]
    %v745 = vld [vmem:[#allocation5 + $0xe08] sm:$0xff]
    %v746 = vld [vmem:[#allocation5 + $0xe10] sm:$0xff]
    %v747 = vld [vmem:[#allocation5 + $0xe18] sm:$0xff]
    %v748 = vld [vmem:[#allocation5 + $0xe20] sm:$0xff]
    %v749 = vld [vmem:[#allocation5 + $0xe28] sm:$0xff]
    %v750 = vld [vmem:[#allocation5 + $0xe30] sm:$0xff]
    %v751 = vld [vmem:[#allocation5 + $0xe38] sm:$0xff]
    %v752 = vld [vmem:[#allocation5 + $0xe40] sm:$0xff]
    %v753 = vld [vmem:[#allocation5 + $0xe48] sm:$0xff]
    %v754 = vld [vmem:[#allocation5 + $0xe50] sm:$0xff]
    %v755 = vld [vmem:[#allocation5 + $0xe58] sm:$0xff]
    %v756 = vld [vmem:[#allocation5 + $0xe60] sm:$0xff]
    %v757 = vld [vmem:[#allocation5 + $0xe68] sm:$0xff]
    %v758 = vld [vmem:[#allocation5 + $0xe70] sm:$0xff]
    %v759 = vld [vmem:[#allocation5 + $0xe78] sm:$0xff]
    %v760 = vld [vmem:[#allocation5 + $0xe80] sm:$0xff]
    %v761 = vld [vmem:[#allocation5 + $0xe88] sm:$0xff]
    %v762 = vld [vmem:[#allocation5 + $0xe90] sm:$0xff]
    %v763 = vld [vmem:[#allocation5 + $0xe98] sm:$0xff]
    %v764 = vld [vmem:[#allocation5 + $0xea0] sm:$0xff]
    %v765 = vld [vmem:[#allocation5 + $0xea8] sm:$0xff]
    %v766 = vld [vmem:[#allocation5 + $0xeb0] sm:$0xff]
    %v767 = vld [vmem:[#allocation5 + $0xeb8] sm:$0xff]
    %v768 = vld [vmem:[#allocation5 + $0xec0] sm:$0xff]
    %v769 = vld [vmem:[#allocation5 + $0xec8] sm:$0xff]
    %v770 = vld [vmem:[#allocation5 + $0xed0] sm:$0xff]
    %v771 = vld [vmem:[#allocation5 + $0xed8] sm:$0xff]
    %v772 = vld [vmem:[#allocation5 + $0xee0] sm:$0xff]
    %v773 = vld [vmem:[#allocation5 + $0xee8] sm:$0xff]
    %v774 = vld [vmem:[#allocation5 + $0xef0] sm:$0xff]
    %v775 = vld [vmem:[#allocation5 + $0xef8] sm:$0xff]
    %v776 = vld [vmem:[#allocation5 + $0xf00] sm:$0xff]
    %v777 = vld [vmem:[#allocation5 + $0xf08] sm:$0xff]
    %v778 = vld [vmem:[#allocation5 + $0xf10] sm:$0xff]
    %v779 = vld [vmem:[#allocation5 + $0xf18] sm:$0xff]
    %v780 = vld [vmem:[#allocation5 + $0xf20] sm:$0xff]
    %v781 = vld [vmem:[#allocation5 + $0xf28] sm:$0xff]
    %v782 = vld [vmem:[#allocation5 + $0xf30] sm:$0xff]
    %v783 = vld [vmem:[#allocation5 + $0xf38] sm:$0xff]
    %v784 = vld [vmem:[#allocation5 + $0xf40] sm:$0xff]
    %v785 = vld [vmem:[#allocation5 + $0xf48] sm:$0xff]
    %v786 = vld [vmem:[#allocation5 + $0xf50] sm:$0xff]
    %v787 = vld [vmem:[#allocation5 + $0xf58] sm:$0xff]
    %v788 = vld [vmem:[#allocation5 + $0xf60] sm:$0xff]
    %v789 = vld [vmem:[#allocation5 + $0xf68] sm:$0xff]
    %v790 = vld [vmem:[#allocation5 + $0xf70] sm:$0xff]
    %v791 = vld [vmem:[#allocation5 + $0xf78] sm:$0xff]
    %v792 = vld [vmem:[#allocation5 + $0xf80] sm:$0xff]
    %v793 = vld [vmem:[#allocation5 + $0xf88] sm:$0xff]
    %v794 = vld [vmem:[#allocation5 + $0xf90] sm:$0xff]
    %v795 = vld [vmem:[#allocation5 + $0xf98] sm:$0xff]
    %v796 = vld [vmem:[#allocation5 + $0xfa0] sm:$0xff]
    %v797 = vld [vmem:[#allocation5 + $0xfa8] sm:$0xff]
    %v798 = vld [vmem:[#allocation5 + $0xfb0] sm:$0xff]
    %v799 = vld [vmem:[#allocation5 + $0xfb8] sm:$0xff]
    %v800 = vld [vmem:[#allocation5 + $0xfc0] sm:$0xff]
    %v801 = vld [vmem:[#allocation5 + $0xfc8] sm:$0xff]
    %v802 = vld [vmem:[#allocation5 + $0xfd0] sm:$0xff]
    %v803 = vld [vmem:[#allocation5 + $0xfd8] sm:$0xff]
    %v804 = vld [vmem:[#allocation5 + $0xfe0] sm:$0xff]
    %v805 = vld [vmem:[#allocation5 + $0xfe8] sm:$0xff]
    %v806 = vld [vmem:[#allocation5 + $0xff0] sm:$0xff]
    %v807 = vld [vmem:[#allocation5 + $0xff8] sm:$0xff]
    %v808 = vld [vmem:[#allocation5 + $0x1000] sm:$0xff]
    %v809 = vld [vmem:[#allocation5 + $0x1008] sm:$0xff]
    %v810 = vld [vmem:[#allocation5 + $0x1010] sm:$0xff]
    %v811 = vld [vmem:[#allocation5 + $0x1018] sm:$0xff]
    %v812 = vld [vmem:[#allocation5 + $0x1020] sm:$0xff]
    %v813 = vld [vmem:[#allocation5 + $0x1028] sm:$0xff]
    %v814 = vld [vmem:[#allocation5 + $0x1030] sm:$0xff]
    %v815 = vld [vmem:[#allocation5 + $0x1038] sm:$0xff]
    %v816 = vld [vmem:[#allocation5 + $0x1040] sm:$0xff]
    %v817 = vld [vmem:[#allocation5 + $0x1048] sm:$0xff]
    %v818 = vld [vmem:[#allocation5 + $0x1050] sm:$0xff]
    %v819 = vld [vmem:[#allocation5 + $0x1058] sm:$0xff]
    %v820 = vld [vmem:[#allocation5 + $0x1060] sm:$0xff]
    %v821 = vld [vmem:[#allocation5 + $0x1068] sm:$0xff]
    %v822 = vld [vmem:[#allocation5 + $0x1070] sm:$0xff]
    %v823 = vld [vmem:[#allocation5 + $0x1078] sm:$0xff]
    %v824 = vld [vmem:[#allocation5 + $0x1080] sm:$0xff]
    %v825 = vld [vmem:[#allocation5 + $0x1088] sm:$0xff]
    %v826 = vld [vmem:[#allocation5 + $0x1090] sm:$0xff]
    %v827 = vld [vmem:[#allocation5 + $0x1098] sm:$0xff]
    %v828 = vld [vmem:[#allocation5 + $0x10a0] sm:$0xff]
    %v829 = vld [vmem:[#allocation5 + $0x10a8] sm:$0xff]
    %v830 = vld [vmem:[#allocation5 + $0x10b0] sm:$0xff]
    %v831 = vld [vmem:[#allocation5 + $0x10b8] sm:$0xff]
    %v832 = vld [vmem:[#allocation5 + $0x10c0] sm:$0xff]
    %v833 = vld [vmem:[#allocation5 + $0x10c8] sm:$0xff]
    %v834 = vld [vmem:[#allocation5 + $0x10d0] sm:$0xff]
    %v835 = vld [vmem:[#allocation5 + $0x10d8] sm:$0xff]
    %v836 = vld [vmem:[#allocation5 + $0x10e0] sm:$0xff]
    %v837 = vld [vmem:[#allocation5 + $0x10e8] sm:$0xff]
    %v838 = vld [vmem:[#allocation5 + $0x10f0] sm:$0xff]
    %v839 = vld [vmem:[#allocation5 + $0x10f8] sm:$0xff]
    %v840 = vld [vmem:[#allocation5 + $0x1100] sm:$0xff]
    %v841 = vld [vmem:[#allocation5 + $0x1108] sm:$0xff]
    %v842 = vld [vmem:[#allocation5 + $0x1110] sm:$0xff]
    %v843 = vld [vmem:[#allocation5 + $0x1118] sm:$0xff]
    %v844 = vld [vmem:[#allocation5 + $0x1120] sm:$0xff]
    %v845 = vld [vmem:[#allocation5 + $0x1128] sm:$0xff]
    %v846 = vld [vmem:[#allocation5 + $0x1130] sm:$0xff]
    %v847 = vld [vmem:[#allocation5 + $0x1138] sm:$0xff]
    %v848 = vld [vmem:[#allocation5 + $0x1140] sm:$0xff]
    %v849 = vld [vmem:[#allocation5 + $0x1148] sm:$0xff]
    %v850 = vld [vmem:[#allocation5 + $0x1150] sm:$0xff]
    %v851 = vld [vmem:[#allocation5 + $0x1158] sm:$0xff]
    %v852 = vld [vmem:[#allocation5 + $0x1160] sm:$0xff]
    %v853 = vld [vmem:[#allocation5 + $0x1168] sm:$0xff]
    %v854 = vld [vmem:[#allocation5 + $0x1170] sm:$0xff]
    %v855 = vld [vmem:[#allocation5 + $0x1178] sm:$0xff]
    %v856 = vld [vmem:[#allocation5 + $0x1180] sm:$0xff]
    %v857 = vld [vmem:[#allocation5 + $0x1188] sm:$0xff]
    %v858 = vld [vmem:[#allocation5 + $0x1190] sm:$0xff]
    %v859 = vld [vmem:[#allocation5 + $0x1198] sm:$0xff]
    %v860 = vld [vmem:[#allocation5 + $0x11a0] sm:$0xff]
    %v861 = vld [vmem:[#allocation5 + $0x11a8] sm:$0xff]
    %v862 = vld [vmem:[#allocation5 + $0x11b0] sm:$0xff]
    %v863 = vld [vmem:[#allocation5 + $0x11b8] sm:$0xff]
    %v864 = vld [vmem:[#allocation5 + $0x11c0] sm:$0xff]
    %v865 = vld [vmem:[#allocation5 + $0x11c8] sm:$0xff]
    %v866 = vld [vmem:[#allocation5 + $0x11d0] sm:$0xff]
    %v867 = vld [vmem:[#allocation5 + $0x11d8] sm:$0xff]
    %v868 = vld [vmem:[#allocation5 + $0x11e0] sm:$0xff]
    %v869 = vld [vmem:[#allocation5 + $0x11e8] sm:$0xff]
    %v870 = vld [vmem:[#allocation5 + $0x11f0] sm:$0xff]
    %v871 = vld [vmem:[#allocation5 + $0x11f8] sm:$0xff]
    %v872 = vld [vmem:[#allocation5 + $0x1200] sm:$0xff]
    %v873 = vld [vmem:[#allocation5 + $0x1208] sm:$0xff]
    %v874 = vld [vmem:[#allocation5 + $0x1210] sm:$0xff]
    %v875 = vld [vmem:[#allocation5 + $0x1218] sm:$0xff]
    %v876 = vld [vmem:[#allocation5 + $0x1220] sm:$0xff]
    %v877 = vld [vmem:[#allocation5 + $0x1228] sm:$0xff]
    %v878 = vld [vmem:[#allocation5 + $0x1230] sm:$0xff]
    %v879 = vld [vmem:[#allocation5 + $0x1238] sm:$0xff]
    %v880 = vld [vmem:[#allocation5 + $0x1240] sm:$0xff]
    %v881 = vld [vmem:[#allocation5 + $0x1248] sm:$0xff]
    %v882 = vld [vmem:[#allocation5 + $0x1250] sm:$0xff]
    %v883 = vld [vmem:[#allocation5 + $0x1258] sm:$0xff]
    %v884 = vld [vmem:[#allocation5 + $0x1260] sm:$0xff]
    %v885 = vld [vmem:[#allocation5 + $0x1268] sm:$0xff]
    %v886 = vld [vmem:[#allocation5 + $0x1270] sm:$0xff]
    %v887 = vld [vmem:[#allocation5 + $0x1278] sm:$0xff]
    %v888 = vld [vmem:[#allocation5 + $0x1280] sm:$0xff]
    %v889 = vld [vmem:[#allocation5 + $0x1288] sm:$0xff]
    %v890 = vld [vmem:[#allocation5 + $0x1290] sm:$0xff]
    %v891 = vld [vmem:[#allocation5 + $0x1298] sm:$0xff]
    %v892 = vld [vmem:[#allocation5 + $0x12a0] sm:$0xff]
    %v893 = vld [vmem:[#allocation5 + $0x12a8] sm:$0xff]
    %v894 = vld [vmem:[#allocation5 + $0x12b0] sm:$0xff]
    %v895 = vld [vmem:[#allocation5 + $0x12b8] sm:$0xff]
    %v896 = vld [vmem:[#allocation5 + $0x12c0] sm:$0xff]
    %v897 = vld [vmem:[#allocation5 + $0x12c8] sm:$0xff]
    %v898 = vld [vmem:[#allocation5 + $0x12d0] sm:$0xff]
    %v899 = vld [vmem:[#allocation5 + $0x12d8] sm:$0xff]
    %v900 = vld [vmem:[#allocation5 + $0x12e0] sm:$0xff]
    %v901 = vld [vmem:[#allocation5 + $0x12e8] sm:$0xff]
    %v902 = vld [vmem:[#allocation5 + $0x12f0] sm:$0xff]
    %v903 = vld [vmem:[#allocation5 + $0x12f8] sm:$0xff]
    %v904 = vld [vmem:[#allocation5 + $0x1300] sm:$0xff]
    %v905 = vld [vmem:[#allocation5 + $0x1308] sm:$0xff]
    %v906 = vld [vmem:[#allocation5 + $0x1310] sm:$0xff]
    %v907 = vld [vmem:[#allocation5 + $0x1318] sm:$0xff]
    %v908 = vld [vmem:[#allocation5 + $0x1320] sm:$0xff]
    %v909 = vld [vmem:[#allocation5 + $0x1328] sm:$0xff]
    %v910 = vld [vmem:[#allocation5 + $0x1330] sm:$0xff]
    %v911 = vld [vmem:[#allocation5 + $0x1338] sm:$0xff]
    %v912 = vld [vmem:[#allocation5 + $0x1340] sm:$0xff]
    %v913 = vld [vmem:[#allocation5 + $0x1348] sm:$0xff]
    %v914 = vld [vmem:[#allocation5 + $0x1350] sm:$0xff]
    %v915 = vld [vmem:[#allocation5 + $0x1358] sm:$0xff]
    %v916 = vld [vmem:[#allocation5 + $0x1360] sm:$0xff]
    %v917 = vld [vmem:[#allocation5 + $0x1368] sm:$0xff]
    %v918 = vld [vmem:[#allocation5 + $0x1370] sm:$0xff]
    %v919 = vld [vmem:[#allocation5 + $0x1378] sm:$0xff]
    %v920 = vld [vmem:[#allocation5 + $0x1380] sm:$0xff]
    %v921 = vld [vmem:[#allocation5 + $0x1388] sm:$0xff]
    %v922 = vld [vmem:[#allocation5 + $0x1390] sm:$0xff]
    %v923 = vld [vmem:[#allocation5 + $0x1398] sm:$0xff]
    %v924 = vld [vmem:[#allocation5 + $0x13a0] sm:$0xff]
    %v925 = vld [vmem:[#allocation5 + $0x13a8] sm:$0xff]
    %v926 = vld [vmem:[#allocation5 + $0x13b0] sm:$0xff]
    %v927 = vld [vmem:[#allocation5 + $0x13b8] sm:$0xff]
    %v928 = vld [vmem:[#allocation5 + $0x13c0] sm:$0xff]
    %v929 = vld [vmem:[#allocation5 + $0x13c8] sm:$0xff]
    %v930 = vld [vmem:[#allocation5 + $0x13d0] sm:$0xff]
    %v931 = vld [vmem:[#allocation5 + $0x13d8] sm:$0xff]
    %v932 = vld [vmem:[#allocation5 + $0x13e0] sm:$0xff]
    %v933 = vld [vmem:[#allocation5 + $0x13e8] sm:$0xff]
    %v934 = vld [vmem:[#allocation5 + $0x13f0] sm:$0xff]
    %v935 = vld [vmem:[#allocation5 + $0x13f8] sm:$0xff]
    %v936 = vld [vmem:[#allocation5 + $0x1400] sm:$0xff]
    %v937 = vld [vmem:[#allocation5 + $0x1408] sm:$0xff]
    %v938 = vld [vmem:[#allocation5 + $0x1410] sm:$0xff]
    %v939 = vld [vmem:[#allocation5 + $0x1418] sm:$0xff]
    %v940 = vld [vmem:[#allocation5 + $0x1420] sm:$0xff]
    %v941 = vld [vmem:[#allocation5 + $0x1428] sm:$0xff]
    %v942 = vld [vmem:[#allocation5 + $0x1430] sm:$0xff]
    %v943 = vld [vmem:[#allocation5 + $0x1438] sm:$0xff]
    %v944 = vld [vmem:[#allocation5 + $0x1440] sm:$0xff]
    %v945 = vld [vmem:[#allocation5 + $0x1448] sm:$0xff]
    %v946 = vld [vmem:[#allocation5 + $0x1450] sm:$0xff]
    %v947 = vld [vmem:[#allocation5 + $0x1458] sm:$0xff]
    %v948 = vld [vmem:[#allocation5 + $0x1460] sm:$0xff]
    %v949 = vld [vmem:[#allocation5 + $0x1468] sm:$0xff]
    %v950 = vld [vmem:[#allocation5 + $0x1470] sm:$0xff]
    %v951 = vld [vmem:[#allocation5 + $0x1478] sm:$0xff]
    %v952 = vld [vmem:[#allocation5 + $0x1480] sm:$0xff]
    %v953 = vld [vmem:[#allocation5 + $0x1488] sm:$0xff]
    %v954 = vld [vmem:[#allocation5 + $0x1490] sm:$0xff]
    %v955 = vld [vmem:[#allocation5 + $0x1498] sm:$0xff]
    %v956 = vld [vmem:[#allocation5 + $0x14a0] sm:$0xff]
    %v957 = vld [vmem:[#allocation5 + $0x14a8] sm:$0xff]
    %v958 = vld [vmem:[#allocation5 + $0x14b0] sm:$0xff]
    %v959 = vld [vmem:[#allocation5 + $0x14b8] sm:$0xff]
    %v960 = vld [vmem:[#allocation5 + $0x14c0] sm:$0xff]
    %v961 = vld [vmem:[#allocation5 + $0x14c8] sm:$0xff]
    %v962 = vld [vmem:[#allocation5 + $0x14d0] sm:$0xff]
    %v963 = vld [vmem:[#allocation5 + $0x14d8] sm:$0xff]
    %v964 = vld [vmem:[#allocation5 + $0x14e0] sm:$0xff]
    %v965 = vld [vmem:[#allocation5 + $0x14e8] sm:$0xff]
    %v966 = vld [vmem:[#allocation5 + $0x14f0] sm:$0xff]
    %v967 = vld [vmem:[#allocation5 + $0x14f8] sm:$0xff]
    %v968 = vld [vmem:[#allocation5 + $0x1500] sm:$0xff]
    %v969 = vld [vmem:[#allocation5 + $0x1508] sm:$0xff]
    %v970 = vld [vmem:[#allocation5 + $0x1510] sm:$0xff]
    %v971 = vld [vmem:[#allocation5 + $0x1518] sm:$0xff]
    %v972 = vld [vmem:[#allocation5 + $0x1520] sm:$0xff]
    %v973 = vld [vmem:[#allocation5 + $0x1528] sm:$0xff]
    %v974 = vld [vmem:[#allocation5 + $0x1530] sm:$0xff]
    %v975 = vld [vmem:[#allocation5 + $0x1538] sm:$0xff]
    %v976 = vld [vmem:[#allocation5 + $0x1540] sm:$0xff]
    %v977 = vld [vmem:[#allocation5 + $0x1548] sm:$0xff]
    %v978 = vld [vmem:[#allocation5 + $0x1550] sm:$0xff]
    %v979 = vld [vmem:[#allocation5 + $0x1558] sm:$0xff]
    %v980 = vld [vmem:[#allocation5 + $0x1560] sm:$0xff]
    %v981 = vld [vmem:[#allocation5 + $0x1568] sm:$0xff]
    %v982 = vld [vmem:[#allocation5 + $0x1570] sm:$0xff]
    %v983 = vld [vmem:[#allocation5 + $0x1578] sm:$0xff]
    %v984 = vld [vmem:[#allocation5 + $0x1580] sm:$0xff]
    %v985 = vld [vmem:[#allocation5 + $0x1588] sm:$0xff]
    %v986 = vld [vmem:[#allocation5 + $0x1590] sm:$0xff]
    %v987 = vld [vmem:[#allocation5 + $0x1598] sm:$0xff]
    %v988 = vld [vmem:[#allocation5 + $0x15a0] sm:$0xff]
    %v989 = vld [vmem:[#allocation5 + $0x15a8] sm:$0xff]
    %v990 = vld [vmem:[#allocation5 + $0x15b0] sm:$0xff]
    %v991 = vld [vmem:[#allocation5 + $0x15b8] sm:$0xff]
    %v992 = vld [vmem:[#allocation5 + $0x15c0] sm:$0xff]
    %v993 = vld [vmem:[#allocation5 + $0x15c8] sm:$0xff]
    %v994 = vld [vmem:[#allocation5 + $0x15d0] sm:$0xff]
    %v995 = vld [vmem:[#allocation5 + $0x15d8] sm:$0xff]
    %v996 = vld [vmem:[#allocation5 + $0x15e0] sm:$0xff]
    %v997 = vld [vmem:[#allocation5 + $0x15e8] sm:$0xff]
    %v998 = vld [vmem:[#allocation5 + $0x15f0] sm:$0xff]
    %v999 = vld [vmem:[#allocation5 + $0x15f8] sm:$0xff]
    %v1000 = vld [vmem:[#allocation5 + $0x1600] sm:$0xff]
    %v1001 = vld [vmem:[#allocation5 + $0x1608] sm:$0xff]
    %v1002 = vld [vmem:[#allocation5 + $0x1610] sm:$0xff]
    %v1003 = vld [vmem:[#allocation5 + $0x1618] sm:$0xff]
    %v1004 = vld [vmem:[#allocation5 + $0x1620] sm:$0xff]
    %v1005 = vld [vmem:[#allocation5 + $0x1628] sm:$0xff]
    %v1006 = vld [vmem:[#allocation5 + $0x1630] sm:$0xff]
    %v1007 = vld [vmem:[#allocation5 + $0x1638] sm:$0xff]
    %v1008 = vld [vmem:[#allocation5 + $0x1640] sm:$0xff]
    %v1009 = vld [vmem:[#allocation5 + $0x1648] sm:$0xff]
    %v1010 = vld [vmem:[#allocation5 + $0x1650] sm:$0xff]
    %v1011 = vld [vmem:[#allocation5 + $0x1658] sm:$0xff]
    %v1012 = vld [vmem:[#allocation5 + $0x1660] sm:$0xff]
    %v1013 = vld [vmem:[#allocation5 + $0x1668] sm:$0xff]
    %v1014 = vld [vmem:[#allocation5 + $0x1670] sm:$0xff]
    %v1015 = vld [vmem:[#allocation5 + $0x1678] sm:$0xff]
    %v1016 = vld [vmem:[#allocation5 + $0x1680] sm:$0xff]
    %v1017 = vld [vmem:[#allocation5 + $0x1688] sm:$0xff]
    %v1018 = vld [vmem:[#allocation5 + $0x1690] sm:$0xff]
    %v1019 = vld [vmem:[#allocation5 + $0x1698] sm:$0xff]
    %v1020 = vld [vmem:[#allocation5 + $0x16a0] sm:$0xff]
    %v1021 = vld [vmem:[#allocation5 + $0x16a8] sm:$0xff]
    %v1022 = vld [vmem:[#allocation5 + $0x16b0] sm:$0xff]
    %v1023 = vld [vmem:[#allocation5 + $0x16b8] sm:$0xff]
    %v1024 = vld [vmem:[#allocation5 + $0x16c0] sm:$0xff]
    %v1025 = vld [vmem:[#allocation5 + $0x16c8] sm:$0xff]
    %v1026 = vld [vmem:[#allocation5 + $0x16d0] sm:$0xff]
    %v1027 = vld [vmem:[#allocation5 + $0x16d8] sm:$0xff]
    %v1028 = vld [vmem:[#allocation5 + $0x16e0] sm:$0xff]
    %v1029 = vld [vmem:[#allocation5 + $0x16e8] sm:$0xff]
    %v1030 = vld [vmem:[#allocation5 + $0x16f0] sm:$0xff]
    %v1031 = vld [vmem:[#allocation5 + $0x16f8] sm:$0xff]
    %v1032 = vld [vmem:[#allocation5 + $0x1700] sm:$0xff]
    %v1033 = vld [vmem:[#allocation5 + $0x1708] sm:$0xff]
    %v1034 = vld [vmem:[#allocation5 + $0x1710] sm:$0xff]
    %v1035 = vld [vmem:[#allocation5 + $0x1718] sm:$0xff]
    %v1036 = vld [vmem:[#allocation5 + $0x1720] sm:$0xff]
    %v1037 = vld [vmem:[#allocation5 + $0x1728] sm:$0xff]
    %v1038 = vld [vmem:[#allocation5 + $0x1730] sm:$0xff]
    %v1039 = vld [vmem:[#allocation5 + $0x1738] sm:$0xff]
    %v1040 = vld [vmem:[#allocation5 + $0x1740] sm:$0xff]
    %v1041 = vld [vmem:[#allocation5 + $0x1748] sm:$0xff]
    %v1042 = vld [vmem:[#allocation5 + $0x1750] sm:$0xff]
    %v1043 = vld [vmem:[#allocation5 + $0x1758] sm:$0xff]
    %v1044 = vld [vmem:[#allocation5 + $0x1760] sm:$0xff]
    %v1045 = vld [vmem:[#allocation5 + $0x1768] sm:$0xff]
    %v1046 = vld [vmem:[#allocation5 + $0x1770] sm:$0xff]
    %v1047 = vld [vmem:[#allocation5 + $0x1778] sm:$0xff]
    %v1048 = vld [vmem:[#allocation5 + $0x1780] sm:$0xff]
    %v1049 = vld [vmem:[#allocation5 + $0x1788] sm:$0xff]
    %v1050 = vld [vmem:[#allocation5 + $0x1790] sm:$0xff]
    %v1051 = vld [vmem:[#allocation5 + $0x1798] sm:$0xff]
    %v1052 = vld [vmem:[#allocation5 + $0x17a0] sm:$0xff]
    %v1053 = vld [vmem:[#allocation5 + $0x17a8] sm:$0xff]
    %v1054 = vld [vmem:[#allocation5 + $0x17b0] sm:$0xff]
    %v1055 = vld [vmem:[#allocation5 + $0x17b8] sm:$0xff]
    %v1056 = vld [vmem:[#allocation5 + $0x17c0] sm:$0xff]
    %v1057 = vld [vmem:[#allocation5 + $0x17c8] sm:$0xff]
    %v1058 = vld [vmem:[#allocation5 + $0x17d0] sm:$0xff]
    %v1059 = vld [vmem:[#allocation5 + $0x17d8] sm:$0xff]
    %v1060 = vld [vmem:[#allocation5 + $0x17e0] sm:$0xff]
    %v1061 = vld [vmem:[#allocation5 + $0x17e8] sm:$0xff]
    %v1062 = vld [vmem:[#allocation5 + $0x17f0] sm:$0xff]
    %v1063 = vld [vmem:[#allocation5 + $0x17f8] sm:$0xff]
    %v1064 = vld [vmem:[#allocation5 + $0x1800] sm:$0xff]
    %v1065 = vld [vmem:[#allocation5 + $0x1808] sm:$0xff]
    %v1066 = vld [vmem:[#allocation5 + $0x1810] sm:$0xff]
    %v1067 = vld [vmem:[#allocation5 + $0x1818] sm:$0xff]
    %v1068 = vld [vmem:[#allocation5 + $0x1820] sm:$0xff]
    %v1069 = vld [vmem:[#allocation5 + $0x1828] sm:$0xff]
    %v1070 = vld [vmem:[#allocation5 + $0x1830] sm:$0xff]
    %v1071 = vld [vmem:[#allocation5 + $0x1838] sm:$0xff]
    %v1072 = vld [vmem:[#allocation5 + $0x1840] sm:$0xff]
    %v1073 = vld [vmem:[#allocation5 + $0x1848] sm:$0xff]
    %v1074 = vld [vmem:[#allocation5 + $0x1850] sm:$0xff]
    %v1075 = vld [vmem:[#allocation5 + $0x1858] sm:$0xff]
    %v1076 = vld [vmem:[#allocation5 + $0x1860] sm:$0xff]
    %v1077 = vld [vmem:[#allocation5 + $0x1868] sm:$0xff]
    %v1078 = vld [vmem:[#allocation5 + $0x1870] sm:$0xff]
    %v1079 = vld [vmem:[#allocation5 + $0x1878] sm:$0xff]
    %v1080 = vld [vmem:[#allocation5 + $0x1880] sm:$0xff]
    %v1081 = vld [vmem:[#allocation5 + $0x1888] sm:$0xff]
    %v1082 = vld [vmem:[#allocation5 + $0x1890] sm:$0xff]
    %v1083 = vld [vmem:[#allocation5 + $0x1898] sm:$0xff]
    %v1084 = vld [vmem:[#allocation5 + $0x18a0] sm:$0xff]
    %v1085 = vld [vmem:[#allocation5 + $0x18a8] sm:$0xff]
    %v1086 = vld [vmem:[#allocation5 + $0x18b0] sm:$0xff]
    %v1087 = vld [vmem:[#allocation5 + $0x18b8] sm:$0xff]
    %v1088 = vld [vmem:[#allocation5 + $0x18c0] sm:$0xff]
    %v1089 = vld [vmem:[#allocation5 + $0x18c8] sm:$0xff]
    %v1090 = vld [vmem:[#allocation5 + $0x18d0] sm:$0xff]
    %v1091 = vld [vmem:[#allocation5 + $0x18d8] sm:$0xff]
    %v1092 = vld [vmem:[#allocation5 + $0x18e0] sm:$0xff]
    %v1093 = vld [vmem:[#allocation5 + $0x18e8] sm:$0xff]
    %v1094 = vld [vmem:[#allocation5 + $0x18f0] sm:$0xff]
    %v1095 = vld [vmem:[#allocation5 + $0x18f8] sm:$0xff]
    %v1096 = vld [vmem:[#allocation5 + $0x1900] sm:$0xff]
    %v1097 = vld [vmem:[#allocation5 + $0x1908] sm:$0xff]
    %v1098 = vld [vmem:[#allocation5 + $0x1910] sm:$0xff]
    %v1099 = vld [vmem:[#allocation5 + $0x1918] sm:$0xff]
    %v1100 = vld [vmem:[#allocation5 + $0x1920] sm:$0xff]
    %v1101 = vld [vmem:[#allocation5 + $0x1928] sm:$0xff]
    %v1102 = vld [vmem:[#allocation5 + $0x1930] sm:$0xff]
    %v1103 = vld [vmem:[#allocation5 + $0x1938] sm:$0xff]
    %v1104 = vld [vmem:[#allocation5 + $0x1940] sm:$0xff]
    %v1105 = vld [vmem:[#allocation5 + $0x1948] sm:$0xff]
    %v1106 = vld [vmem:[#allocation5 + $0x1950] sm:$0xff]
    %v1107 = vld [vmem:[#allocation5 + $0x1958] sm:$0xff]
    %v1108 = vld [vmem:[#allocation5 + $0x1960] sm:$0xff]
    %v1109 = vld [vmem:[#allocation5 + $0x1968] sm:$0xff]
    %v1110 = vld [vmem:[#allocation5 + $0x1970] sm:$0xff]
    %v1111 = vld [vmem:[#allocation5 + $0x1978] sm:$0xff]
    %v1112 = vld [vmem:[#allocation5 + $0x1980] sm:$0xff]
    %v1113 = vld [vmem:[#allocation5 + $0x1988] sm:$0xff]
    %v1114 = vld [vmem:[#allocation5 + $0x1990] sm:$0xff]
    %v1115 = vld [vmem:[#allocation5 + $0x1998] sm:$0xff]
    %v1116 = vld [vmem:[#allocation5 + $0x19a0] sm:$0xff]
    %v1117 = vld [vmem:[#allocation5 + $0x19a8] sm:$0xff]
    %v1118 = vld [vmem:[#allocation5 + $0x19b0] sm:$0xff]
    %v1119 = vld [vmem:[#allocation5 + $0x19b8] sm:$0xff]
    %v1120 = vld [vmem:[#allocation5 + $0x19c0] sm:$0xff]
    %v1121 = vld [vmem:[#allocation5 + $0x19c8] sm:$0xff]
    %v1122 = vld [vmem:[#allocation5 + $0x19d0] sm:$0xff]
    %v1123 = vld [vmem:[#allocation5 + $0x19d8] sm:$0xff]
    %v1124 = vld [vmem:[#allocation5 + $0x19e0] sm:$0xff]
    %v1125 = vld [vmem:[#allocation5 + $0x19e8] sm:$0xff]
    %v1126 = vld [vmem:[#allocation5 + $0x19f0] sm:$0xff]
    %v1127 = vld [vmem:[#allocation5 + $0x19f8] sm:$0xff]
    %v1128 = vld [vmem:[#allocation5 + $0x1a00] sm:$0xff]
    %v1129 = vld [vmem:[#allocation5 + $0x1a08] sm:$0xff]
    %v1130 = vld [vmem:[#allocation5 + $0x1a10] sm:$0xff]
    %v1131 = vld [vmem:[#allocation5 + $0x1a18] sm:$0xff]
    %v1132 = vld [vmem:[#allocation5 + $0x1a20] sm:$0xff]
    %v1133 = vld [vmem:[#allocation5 + $0x1a28] sm:$0xff]
    %v1134 = vld [vmem:[#allocation5 + $0x1a30] sm:$0xff]
    %v1135 = vld [vmem:[#allocation5 + $0x1a38] sm:$0xff]
    %v1136 = vld [vmem:[#allocation5 + $0x1a40] sm:$0xff]
    %v1137 = vld [vmem:[#allocation5 + $0x1a48] sm:$0xff]
    %v1138 = vld [vmem:[#allocation5 + $0x1a50] sm:$0xff]
    %v1139 = vld [vmem:[#allocation5 + $0x1a58] sm:$0xff]
    %v1140 = vld [vmem:[#allocation5 + $0x1a60] sm:$0xff]
    %v1141 = vld [vmem:[#allocation5 + $0x1a68] sm:$0xff]
    %v1142 = vld [vmem:[#allocation5 + $0x1a70] sm:$0xff]
    %v1143 = vld [vmem:[#allocation5 + $0x1a78] sm:$0xff]
    %v1144 = vld [vmem:[#allocation5 + $0x1a80] sm:$0xff]
    %v1145 = vld [vmem:[#allocation5 + $0x1a88] sm:$0xff]
    %v1146 = vld [vmem:[#allocation5 + $0x1a90] sm:$0xff]
    %v1147 = vld [vmem:[#allocation5 + $0x1a98] sm:$0xff]
    %v1148 = vld [vmem:[#allocation5 + $0x1aa0] sm:$0xff]
    %v1149 = vld [vmem:[#allocation5 + $0x1aa8] sm:$0xff]
    %v1150 = vld [vmem:[#allocation5 + $0x1ab0] sm:$0xff]
    %v1151 = vld [vmem:[#allocation5 + $0x1ab8] sm:$0xff]
    %v1152 = vld [vmem:[#allocation5 + $0x1ac0] sm:$0xff]
    %v1153 = vld [vmem:[#allocation5 + $0x1ac8] sm:$0xff]
    %v1154 = vld [vmem:[#allocation5 + $0x1ad0] sm:$0xff]
    %v1155 = vld [vmem:[#allocation5 + $0x1ad8] sm:$0xff]
    %v1156 = vld [vmem:[#allocation5 + $0x1ae0] sm:$0xff]
    %v1157 = vld [vmem:[#allocation5 + $0x1ae8] sm:$0xff]
    %v1158 = vld [vmem:[#allocation5 + $0x1af0] sm:$0xff]
    %v1159 = vld [vmem:[#allocation5 + $0x1af8] sm:$0xff]
    %v1160 = vld [vmem:[#allocation5 + $0x1b00] sm:$0xff]
    %v1161 = vld [vmem:[#allocation5 + $0x1b08] sm:$0xff]
    %v1162 = vld [vmem:[#allocation5 + $0x1b10] sm:$0xff]
    %v1163 = vld [vmem:[#allocation5 + $0x1b18] sm:$0xff]
    %v1164 = vld [vmem:[#allocation5 + $0x1b20] sm:$0xff]
    %v1165 = vld [vmem:[#allocation5 + $0x1b28] sm:$0xff]
    %v1166 = vld [vmem:[#allocation5 + $0x1b30] sm:$0xff]
    %v1167 = vld [vmem:[#allocation5 + $0x1b38] sm:$0xff]
    %v1168 = vld [vmem:[#allocation5 + $0x1b40] sm:$0xff]
    %v1169 = vld [vmem:[#allocation5 + $0x1b48] sm:$0xff]
    %v1170 = vld [vmem:[#allocation5 + $0x1b50] sm:$0xff]
    %v1171 = vld [vmem:[#allocation5 + $0x1b58] sm:$0xff]
    %v1172 = vld [vmem:[#allocation5 + $0x1b60] sm:$0xff]
    %v1173 = vld [vmem:[#allocation5 + $0x1b68] sm:$0xff]
    %v1174 = vld [vmem:[#allocation5 + $0x1b70] sm:$0xff]
    %v1175 = vld [vmem:[#allocation5 + $0x1b78] sm:$0xff]
    %v1176 = vld [vmem:[#allocation5 + $0x1b80] sm:$0xff]
    %v1177 = vld [vmem:[#allocation5 + $0x1b88] sm:$0xff]
    %v1178 = vld [vmem:[#allocation5 + $0x1b90] sm:$0xff]
    %v1179 = vld [vmem:[#allocation5 + $0x1b98] sm:$0xff]
    %v1180 = vld [vmem:[#allocation5 + $0x1ba0] sm:$0xff]
    %v1181 = vld [vmem:[#allocation5 + $0x1ba8] sm:$0xff]
    %v1182 = vld [vmem:[#allocation5 + $0x1bb0] sm:$0xff]
    %v1183 = vld [vmem:[#allocation5 + $0x1bb8] sm:$0xff]
    %v1184 = vld [vmem:[#allocation5 + $0x1bc0] sm:$0xff]
    %v1185 = vld [vmem:[#allocation5 + $0x1bc8] sm:$0xff]
    %v1186 = vld [vmem:[#allocation5 + $0x1bd0] sm:$0xff]
    %v1187 = vld [vmem:[#allocation5 + $0x1bd8] sm:$0xff]
    %v1188 = vld [vmem:[#allocation5 + $0x1be0] sm:$0xff]
    %v1189 = vld [vmem:[#allocation5 + $0x1be8] sm:$0xff]
    %v1190 = vld [vmem:[#allocation5 + $0x1bf0] sm:$0xff]
    %v1191 = vld [vmem:[#allocation5 + $0x1bf8] sm:$0xff]
    %v1192 = vld [vmem:[#allocation5 + $0x1c00] sm:$0xff]
    %v1193 = vld [vmem:[#allocation5 + $0x1c08] sm:$0xff]
    %v1194 = vld [vmem:[#allocation5 + $0x1c10] sm:$0xff]
    %v1195 = vld [vmem:[#allocation5 + $0x1c18] sm:$0xff]
    %v1196 = vld [vmem:[#allocation5 + $0x1c20] sm:$0xff]
    %v1197 = vld [vmem:[#allocation5 + $0x1c28] sm:$0xff]
    %v1198 = vld [vmem:[#allocation5 + $0x1c30] sm:$0xff]
    %v1199 = vld [vmem:[#allocation5 + $0x1c38] sm:$0xff]
    %v1200 = vld [vmem:[#allocation5 + $0x1c40] sm:$0xff]
    %v1201 = vld [vmem:[#allocation5 + $0x1c48] sm:$0xff]
    %v1202 = vld [vmem:[#allocation5 + $0x1c50] sm:$0xff]
    %v1203 = vld [vmem:[#allocation5 + $0x1c58] sm:$0xff]
    %v1204 = vld [vmem:[#allocation5 + $0x1c60] sm:$0xff]
    %v1205 = vld [vmem:[#allocation5 + $0x1c68] sm:$0xff]
    %v1206 = vld [vmem:[#allocation5 + $0x1c70] sm:$0xff]
    %v1207 = vld [vmem:[#allocation5 + $0x1c78] sm:$0xff]
    %v1208 = vld [vmem:[#allocation5 + $0x1c80] sm:$0xff]
    %v1209 = vld [vmem:[#allocation5 + $0x1c88] sm:$0xff]
    %v1210 = vld [vmem:[#allocation5 + $0x1c90] sm:$0xff]
    %v1211 = vld [vmem:[#allocation5 + $0x1c98] sm:$0xff]
    %v1212 = vld [vmem:[#allocation5 + $0x1ca0] sm:$0xff]
    %v1213 = vld [vmem:[#allocation5 + $0x1ca8] sm:$0xff]
    %v1214 = vld [vmem:[#allocation5 + $0x1cb0] sm:$0xff]
    %v1215 = vld [vmem:[#allocation5 + $0x1cb8] sm:$0xff]
    %v1216 = vld [vmem:[#allocation5 + $0x1cc0] sm:$0xff]
    %v1217 = vld [vmem:[#allocation5 + $0x1cc8] sm:$0xff]
    %v1218 = vld [vmem:[#allocation5 + $0x1cd0] sm:$0xff]
    %v1219 = vld [vmem:[#allocation5 + $0x1cd8] sm:$0xff]
    %v1220 = vld [vmem:[#allocation5 + $0x1ce0] sm:$0xff]
    %v1221 = vld [vmem:[#allocation5 + $0x1ce8] sm:$0xff]
    %v1222 = vld [vmem:[#allocation5 + $0x1cf0] sm:$0xff]
    %v1223 = vld [vmem:[#allocation5 + $0x1cf8] sm:$0xff]
    %v1224 = vld [vmem:[#allocation5 + $0x1d00] sm:$0xff]
    %v1225 = vld [vmem:[#allocation5 + $0x1d08] sm:$0xff]
    %v1226 = vld [vmem:[#allocation5 + $0x1d10] sm:$0xff]
    %v1227 = vld [vmem:[#allocation5 + $0x1d18] sm:$0xff]
    %v1228 = vld [vmem:[#allocation5 + $0x1d20] sm:$0xff]
    %v1229 = vld [vmem:[#allocation5 + $0x1d28] sm:$0xff]
    %v1230 = vld [vmem:[#allocation5 + $0x1d30] sm:$0xff]
    %v1231 = vld [vmem:[#allocation5 + $0x1d38] sm:$0xff]
    %v1232 = vld [vmem:[#allocation5 + $0x1d40] sm:$0xff]
    %v1233 = vld [vmem:[#allocation5 + $0x1d48] sm:$0xff]
    %v1234 = vld [vmem:[#allocation5 + $0x1d50] sm:$0xff]
    %v1235 = vld [vmem:[#allocation5 + $0x1d58] sm:$0xff]
    %v1236 = vld [vmem:[#allocation5 + $0x1d60] sm:$0xff]
    %v1237 = vld [vmem:[#allocation5 + $0x1d68] sm:$0xff]
    %v1238 = vld [vmem:[#allocation5 + $0x1d70] sm:$0xff]
    %v1239 = vld [vmem:[#allocation5 + $0x1d78] sm:$0xff]
    %v1240 = vld [vmem:[#allocation5 + $0x1d80] sm:$0xff]
    %v1241 = vld [vmem:[#allocation5 + $0x1d88] sm:$0xff]
    %v1242 = vld [vmem:[#allocation5 + $0x1d90] sm:$0xff]
    %v1243 = vld [vmem:[#allocation5 + $0x1d98] sm:$0xff]
    %v1244 = vld [vmem:[#allocation5 + $0x1da0] sm:$0xff]
    %v1245 = vld [vmem:[#allocation5 + $0x1da8] sm:$0xff]
    %v1246 = vld [vmem:[#allocation5 + $0x1db0] sm:$0xff]
    %v1247 = vld [vmem:[#allocation5 + $0x1db8] sm:$0xff]
    %v1248 = vld [vmem:[#allocation5 + $0x1dc0] sm:$0xff]
    %v1249 = vld [vmem:[#allocation5 + $0x1dc8] sm:$0xff]
    %v1250 = vld [vmem:[#allocation5 + $0x1dd0] sm:$0xff]
    %v1251 = vld [vmem:[#allocation5 + $0x1dd8] sm:$0xff]
    %v1252 = vld [vmem:[#allocation5 + $0x1de0] sm:$0xff]
    %v1253 = vld [vmem:[#allocation5 + $0x1de8] sm:$0xff]
    %v1254 = vld [vmem:[#allocation5 + $0x1df0] sm:$0xff]
    %v1255 = vld [vmem:[#allocation5 + $0x1df8] sm:$0xff]
    %v1256 = vld [vmem:[#allocation5 + $0x1e00] sm:$0xff]
    %v1257 = vld [vmem:[#allocation5 + $0x1e08] sm:$0xff]
    %v1258 = vld [vmem:[#allocation5 + $0x1e10] sm:$0xff]
    %v1259 = vld [vmem:[#allocation5 + $0x1e18] sm:$0xff]
    %v1260 = vld [vmem:[#allocation5 + $0x1e20] sm:$0xff]
    %v1261 = vld [vmem:[#allocation5 + $0x1e28] sm:$0xff]
    %v1262 = vld [vmem:[#allocation5 + $0x1e30] sm:$0xff]
    %v1263 = vld [vmem:[#allocation5 + $0x1e38] sm:$0xff]
    %v1264 = vld [vmem:[#allocation5 + $0x1e40] sm:$0xff]
    %v1265 = vld [vmem:[#allocation5 + $0x1e48] sm:$0xff]
    %v1266 = vld [vmem:[#allocation5 + $0x1e50] sm:$0xff]
    %v1267 = vld [vmem:[#allocation5 + $0x1e58] sm:$0xff]
    %v1268 = vld [vmem:[#allocation5 + $0x1e60] sm:$0xff]
    %v1269 = vld [vmem:[#allocation5 + $0x1e68] sm:$0xff]
    %v1270 = vld [vmem:[#allocation5 + $0x1e70] sm:$0xff]
    %v1271 = vld [vmem:[#allocation5 + $0x1e78] sm:$0xff]
    %v1272 = vld [vmem:[#allocation5 + $0x1e80] sm:$0xff]
    %v1273 = vld [vmem:[#allocation5 + $0x1e88] sm:$0xff]
    %v1274 = vld [vmem:[#allocation5 + $0x1e90] sm:$0xff]
    %v1275 = vld [vmem:[#allocation5 + $0x1e98] sm:$0xff]
    %v1276 = vld [vmem:[#allocation5 + $0x1ea0] sm:$0xff]
    %v1277 = vld [vmem:[#allocation5 + $0x1ea8] sm:$0xff]
    %v1278 = vld [vmem:[#allocation5 + $0x1eb0] sm:$0xff]
    %v1279 = vld [vmem:[#allocation5 + $0x1eb8] sm:$0xff]
    %v1280 = vld [vmem:[#allocation5 + $0x1ec0] sm:$0xff]
    %v1281 = vld [vmem:[#allocation5 + $0x1ec8] sm:$0xff]
    %v1282 = vld [vmem:[#allocation5 + $0x1ed0] sm:$0xff]
    %v1283 = vld [vmem:[#allocation5 + $0x1ed8] sm:$0xff]
    %v1284 = vld [vmem:[#allocation5 + $0x1ee0] sm:$0xff]
    %v1285 = vld [vmem:[#allocation5 + $0x1ee8] sm:$0xff]
    %v1286 = vld [vmem:[#allocation5 + $0x1ef0] sm:$0xff]
    %v1287 = vld [vmem:[#allocation5 + $0x1ef8] sm:$0xff]
    %v1288 = vld [vmem:[#allocation5 + $0x1f00] sm:$0xff]
    %v1289 = vld [vmem:[#allocation5 + $0x1f08] sm:$0xff]
    %v1290 = vld [vmem:[#allocation5 + $0x1f10] sm:$0xff]
    %v1291 = vld [vmem:[#allocation5 + $0x1f18] sm:$0xff]
    %v1292 = vld [vmem:[#allocation5 + $0x1f20] sm:$0xff]
    %v1293 = vld [vmem:[#allocation5 + $0x1f28] sm:$0xff]
    %v1294 = vld [vmem:[#allocation5 + $0x1f30] sm:$0xff]
    %v1295 = vld [vmem:[#allocation5 + $0x1f38] sm:$0xff]
    %v1296 = vld [vmem:[#allocation5 + $0x1f40] sm:$0xff]
    %v1297 = vld [vmem:[#allocation5 + $0x1f48] sm:$0xff]
    %v1298 = vld [vmem:[#allocation5 + $0x1f50] sm:$0xff]
    %v1299 = vld [vmem:[#allocation5 + $0x1f58] sm:$0xff]
    %v1300 = vld [vmem:[#allocation5 + $0x1f60] sm:$0xff]
    %v1301 = vld [vmem:[#allocation5 + $0x1f68] sm:$0xff]
    %v1302 = vld [vmem:[#allocation5 + $0x1f70] sm:$0xff]
    %v1303 = vld [vmem:[#allocation5 + $0x1f78] sm:$0xff]
    %v1304 = vld [vmem:[#allocation5 + $0x1f80] sm:$0xff]
    %v1305 = vld [vmem:[#allocation5 + $0x1f88] sm:$0xff]
    %v1306 = vld [vmem:[#allocation5 + $0x1f90] sm:$0xff]
    %v1307 = vld [vmem:[#allocation5 + $0x1f98] sm:$0xff]
    %v1308 = vld [vmem:[#allocation5 + $0x1fa0] sm:$0xff]
    %v1309 = vld [vmem:[#allocation5 + $0x1fa8] sm:$0xff]
    %v1310 = vld [vmem:[#allocation5 + $0x1fb0] sm:$0xff]
    %v1311 = vld [vmem:[#allocation5 + $0x1fb8] sm:$0xff]
    %v1312 = vld [vmem:[#allocation5 + $0x1fc0] sm:$0xff]
    %v1313 = vld [vmem:[#allocation5 + $0x1fc8] sm:$0xff]
    %v1314 = vld [vmem:[#allocation5 + $0x1fd0] sm:$0xff]
    %v1315 = vld [vmem:[#allocation5 + $0x1fd8] sm:$0xff]
    %v1316 = vld [vmem:[#allocation5 + $0x1fe0] sm:$0xff]
    %v1317 = vld [vmem:[#allocation5 + $0x1fe8] sm:$0xff]
    %v1318 = vld [vmem:[#allocation5 + $0x1ff0] sm:$0xff]
    %v1319 = vld [vmem:[#allocation5 + $0x1ff8] sm:$0xff]
    %v1320 = vld [vmem:[#allocation5 + $0x2000] sm:$0xff]
    %v1321 = vld [vmem:[#allocation5 + $0x2008] sm:$0xff]
    %v1322 = vld [vmem:[#allocation5 + $0x2010] sm:$0xff]
    %v1323 = vld [vmem:[#allocation5 + $0x2018] sm:$0xff]
    %v1324 = vld [vmem:[#allocation5 + $0x2020] sm:$0xff]
    %v1325 = vld [vmem:[#allocation5 + $0x2028] sm:$0xff]
    %v1326 = vld [vmem:[#allocation5 + $0x2030] sm:$0xff]
    %v1327 = vld [vmem:[#allocation5 + $0x2038] sm:$0xff]
    %v1328 = vld [vmem:[#allocation5 + $0x2040] sm:$0xff]
    %v1329 = vld [vmem:[#allocation5 + $0x2048] sm:$0xff]
    %v1330 = vld [vmem:[#allocation5 + $0x2050] sm:$0xff]
    %v1331 = vld [vmem:[#allocation5 + $0x2058] sm:$0xff]
    %v1332 = vld [vmem:[#allocation5 + $0x2060] sm:$0xff]
    %v1333 = vld [vmem:[#allocation5 + $0x2068] sm:$0xff]
    %v1334 = vld [vmem:[#allocation5 + $0x2070] sm:$0xff]
    %v1335 = vld [vmem:[#allocation5 + $0x2078] sm:$0xff]
    %v1336 = vld [vmem:[#allocation5 + $0x2080] sm:$0xff]
    %v1337 = vld [vmem:[#allocation5 + $0x2088] sm:$0xff]
    %v1338 = vld [vmem:[#allocation5 + $0x2090] sm:$0xff]
    %v1339 = vld [vmem:[#allocation5 + $0x2098] sm:$0xff]
    %v1340 = vld [vmem:[#allocation5 + $0x20a0] sm:$0xff]
    %v1341 = vld [vmem:[#allocation5 + $0x20a8] sm:$0xff]
    %v1342 = vld [vmem:[#allocation5 + $0x20b0] sm:$0xff]
    %v1343 = vld [vmem:[#allocation5 + $0x20b8] sm:$0xff]
    %v1344 = vld [vmem:[#allocation5 + $0x20c0] sm:$0xff]
    %v1345 = vld [vmem:[#allocation5 + $0x20c8] sm:$0xff]
    %v1346 = vld [vmem:[#allocation5 + $0x20d0] sm:$0xff]
    %v1347 = vld [vmem:[#allocation5 + $0x20d8] sm:$0xff]
    %v1348 = vld [vmem:[#allocation5 + $0x20e0] sm:$0xff]
    %v1349 = vld [vmem:[#allocation5 + $0x20e8] sm:$0xff]
    %v1350 = vld [vmem:[#allocation5 + $0x20f0] sm:$0xff]
    %v1351 = vld [vmem:[#allocation5 + $0x20f8] sm:$0xff]
    %v1352 = vld [vmem:[#allocation5 + $0x2100] sm:$0xff]
    %v1353 = vld [vmem:[#allocation5 + $0x2108] sm:$0xff]
    %v1354 = vld [vmem:[#allocation5 + $0x2110] sm:$0xff]
    %v1355 = vld [vmem:[#allocation5 + $0x2118] sm:$0xff]
    %v1356 = vld [vmem:[#allocation5 + $0x2120] sm:$0xff]
    %v1357 = vld [vmem:[#allocation5 + $0x2128] sm:$0xff]
    %v1358 = vld [vmem:[#allocation5 + $0x2130] sm:$0xff]
    %v1359 = vld [vmem:[#allocation5 + $0x2138] sm:$0xff]
    %v1360 = vld [vmem:[#allocation5 + $0x2140] sm:$0xff]
    %v1361 = vld [vmem:[#allocation5 + $0x2148] sm:$0xff]
    %v1362 = vld [vmem:[#allocation5 + $0x2150] sm:$0xff]
    %v1363 = vld [vmem:[#allocation5 + $0x2158] sm:$0xff]
    %v1364 = vld [vmem:[#allocation5 + $0x2160] sm:$0xff]
    %v1365 = vld [vmem:[#allocation5 + $0x2168] sm:$0xff]
    %v1366 = vld [vmem:[#allocation5 + $0x2170] sm:$0xff]
    %v1367 = vld [vmem:[#allocation5 + $0x2178] sm:$0xff]
    %v1368 = vld [vmem:[#allocation5 + $0x2180] sm:$0xff]
    %v1369 = vld [vmem:[#allocation5 + $0x2188] sm:$0xff]
    %v1370 = vld [vmem:[#allocation5 + $0x2190] sm:$0xff]
    %v1371 = vld [vmem:[#allocation5 + $0x2198] sm:$0xff]
    %v1372 = vld [vmem:[#allocation5 + $0x21a0] sm:$0xff]
    %v1373 = vld [vmem:[#allocation5 + $0x21a8] sm:$0xff]
    %v1374 = vld [vmem:[#allocation5 + $0x21b0] sm:$0xff]
    %v1375 = vld [vmem:[#allocation5 + $0x21b8] sm:$0xff]
    %v1376 = vld [vmem:[#allocation5 + $0x21c0] sm:$0xff]
    %v1377 = vld [vmem:[#allocation5 + $0x21c8] sm:$0xff]
    %v1378 = vld [vmem:[#allocation5 + $0x21d0] sm:$0xff]
    %v1379 = vld [vmem:[#allocation5 + $0x21d8] sm:$0xff]
    %v1380 = vld [vmem:[#allocation5 + $0x21e0] sm:$0xff]
    %v1381 = vld [vmem:[#allocation5 + $0x21e8] sm:$0xff]
    %v1382 = vld [vmem:[#allocation5 + $0x21f0] sm:$0xff]
    %v1383 = vld [vmem:[#allocation5 + $0x21f8] sm:$0xff]
    %v1384 = vld [vmem:[#allocation5 + $0x2200] sm:$0xff]
    %v1385 = vld [vmem:[#allocation5 + $0x2208] sm:$0xff]
    %v1386 = vld [vmem:[#allocation5 + $0x2210] sm:$0xff]
    %v1387 = vld [vmem:[#allocation5 + $0x2218] sm:$0xff]
    %v1388 = vld [vmem:[#allocation5 + $0x2220] sm:$0xff]
    %v1389 = vld [vmem:[#allocation5 + $0x2228] sm:$0xff]
    %v1390 = vld [vmem:[#allocation5 + $0x2230] sm:$0xff]
    %v1391 = vld [vmem:[#allocation5 + $0x2238] sm:$0xff]
    %v1392 = vld [vmem:[#allocation5 + $0x2240] sm:$0xff]
    %v1393 = vld [vmem:[#allocation5 + $0x2248] sm:$0xff]
    %v1394 = vld [vmem:[#allocation5 + $0x2250] sm:$0xff]
    %v1395 = vld [vmem:[#allocation5 + $0x2258] sm:$0xff]
    %v1396 = vld [vmem:[#allocation5 + $0x2260] sm:$0xff]
    %v1397 = vld [vmem:[#allocation5 + $0x2268] sm:$0xff]
    %v1398 = vld [vmem:[#allocation5 + $0x2270] sm:$0xff]
    %v1399 = vld [vmem:[#allocation5 + $0x2278] sm:$0xff]
    %v1400 = vld [vmem:[#allocation5 + $0x2280] sm:$0xff]
    %v1401 = vld [vmem:[#allocation5 + $0x2288] sm:$0xff]
    %v1402 = vld [vmem:[#allocation5 + $0x2290] sm:$0xff]
    %v1403 = vld [vmem:[#allocation5 + $0x2298] sm:$0xff]
    %v1404 = vld [vmem:[#allocation5 + $0x22a0] sm:$0xff]
    %v1405 = vld [vmem:[#allocation5 + $0x22a8] sm:$0xff]
    %v1406 = vld [vmem:[#allocation5 + $0x22b0] sm:$0xff]
    %v1407 = vld [vmem:[#allocation5 + $0x22b8] sm:$0xff]
    %v1408 = vld [vmem:[#allocation5 + $0x22c0] sm:$0xff]
    %v1409 = vld [vmem:[#allocation5 + $0x22c8] sm:$0xff]
    %v1410 = vld [vmem:[#allocation5 + $0x22d0] sm:$0xff]
    %v1411 = vld [vmem:[#allocation5 + $0x22d8] sm:$0xff]
    %v1412 = vld [vmem:[#allocation5 + $0x22e0] sm:$0xff]
    %v1413 = vld [vmem:[#allocation5 + $0x22e8] sm:$0xff]
    %v1414 = vld [vmem:[#allocation5 + $0x22f0] sm:$0xff]
    %v1415 = vld [vmem:[#allocation5 + $0x22f8] sm:$0xff]
    %v1416 = vld [vmem:[#allocation5 + $0x2300] sm:$0xff]
    %v1417 = vld [vmem:[#allocation5 + $0x2308] sm:$0xff]
    %v1418 = vld [vmem:[#allocation5 + $0x2310] sm:$0xff]
    %v1419 = vld [vmem:[#allocation5 + $0x2318] sm:$0xff]
    %v1420 = vld [vmem:[#allocation5 + $0x2320] sm:$0xff]
    %v1421 = vld [vmem:[#allocation5 + $0x2328] sm:$0xff]
    %v1422 = vld [vmem:[#allocation5 + $0x2330] sm:$0xff]
    %v1423 = vld [vmem:[#allocation5 + $0x2338] sm:$0xff]
    %v1424 = vld [vmem:[#allocation5 + $0x2340] sm:$0xff]
    %v1425 = vld [vmem:[#allocation5 + $0x2348] sm:$0xff]
    %v1426 = vld [vmem:[#allocation5 + $0x2350] sm:$0xff]
    %v1427 = vld [vmem:[#allocation5 + $0x2358] sm:$0xff]
    %v1428 = vld [vmem:[#allocation5 + $0x2360] sm:$0xff]
    %v1429 = vld [vmem:[#allocation5 + $0x2368] sm:$0xff]
    %v1430 = vld [vmem:[#allocation5 + $0x2370] sm:$0xff]
    %v1431 = vld [vmem:[#allocation5 + $0x2378] sm:$0xff]
    %v1432 = vld [vmem:[#allocation5 + $0x2380] sm:$0xff]
    %v1433 = vld [vmem:[#allocation5 + $0x2388] sm:$0xff]
    %v1434 = vld [vmem:[#allocation5 + $0x2390] sm:$0xff]
    %v1435 = vld [vmem:[#allocation5 + $0x2398] sm:$0xff]
    %v1436 = vld [vmem:[#allocation5 + $0x23a0] sm:$0xff]
    %v1437 = vld [vmem:[#allocation5 + $0x23a8] sm:$0xff]
    %v1438 = vld [vmem:[#allocation5 + $0x23b0] sm:$0xff]
    %v1439 = vld [vmem:[#allocation5 + $0x23b8] sm:$0xff]
    %v1440 = vld [vmem:[#allocation5 + $0x23c0] sm:$0xff]
    %v1441 = vld [vmem:[#allocation5 + $0x23c8] sm:$0xff]
    %v1442 = vld [vmem:[#allocation5 + $0x23d0] sm:$0xff]
    %v1443 = vld [vmem:[#allocation5 + $0x23d8] sm:$0xff]
    %v1444 = vld [vmem:[#allocation5 + $0x23e0] sm:$0xff]
    %v1445 = vld [vmem:[#allocation5 + $0x23e8] sm:$0xff]
    %v1446 = vld [vmem:[#allocation5 + $0x23f0] sm:$0xff]
    %v1447 = vld [vmem:[#allocation5 + $0x23f8] sm:$0xff]
    %v1448 = vld [vmem:[#allocation5 + $0x2400] sm:$0xff]
    %v1449 = vld [vmem:[#allocation5 + $0x2408] sm:$0xff]
    %v1450 = vld [vmem:[#allocation5 + $0x2410] sm:$0xff]
    %v1451 = vld [vmem:[#allocation5 + $0x2418] sm:$0xff]
    %v1452 = vld [vmem:[#allocation5 + $0x2420] sm:$0xff]
    %v1453 = vld [vmem:[#allocation5 + $0x2428] sm:$0xff]
    %v1454 = vld [vmem:[#allocation5 + $0x2430] sm:$0xff]
    %v1455 = vld [vmem:[#allocation5 + $0x2438] sm:$0xff]
    %v1456 = vld [vmem:[#allocation5 + $0x2440] sm:$0xff]
    %v1457 = vld [vmem:[#allocation5 + $0x2448] sm:$0xff]
    %v1458 = vld [vmem:[#allocation5 + $0x2450] sm:$0xff]
    %v1459 = vld [vmem:[#allocation5 + $0x2458] sm:$0xff]
    %v1460 = vld [vmem:[#allocation5 + $0x2460] sm:$0xff]
    %v1461 = vld [vmem:[#allocation5 + $0x2468] sm:$0xff]
    %v1462 = vld [vmem:[#allocation5 + $0x2470] sm:$0xff]
    %v1463 = vld [vmem:[#allocation5 + $0x2478] sm:$0xff]
    %v1464 = vld [vmem:[#allocation5 + $0x2480] sm:$0xff]
    %v1465 = vld [vmem:[#allocation5 + $0x2488] sm:$0xff]
    %v1466 = vld [vmem:[#allocation5 + $0x2490] sm:$0xff]
    %v1467 = vld [vmem:[#allocation5 + $0x2498] sm:$0xff]
    %v1468 = vld [vmem:[#allocation5 + $0x24a0] sm:$0xff]
    %v1469 = vld [vmem:[#allocation5 + $0x24a8] sm:$0xff]
    %v1470 = vld [vmem:[#allocation5 + $0x24b0] sm:$0xff]
    %v1471 = vld [vmem:[#allocation5 + $0x24b8] sm:$0xff]
    %v1472 = vld [vmem:[#allocation5 + $0x24c0] sm:$0xff]
    %v1473 = vld [vmem:[#allocation5 + $0x24c8] sm:$0xff]
    %v1474 = vld [vmem:[#allocation5 + $0x24d0] sm:$0xff]
    %v1475 = vld [vmem:[#allocation5 + $0x24d8] sm:$0xff]
    %v1476 = vld [vmem:[#allocation5 + $0x24e0] sm:$0xff]
    %v1477 = vld [vmem:[#allocation5 + $0x24e8] sm:$0xff]
    %v1478 = vld [vmem:[#allocation5 + $0x24f0] sm:$0xff]
    %v1479 = vld [vmem:[#allocation5 + $0x24f8] sm:$0xff]
    %v1480 = vld [vmem:[#allocation5 + $0x2500] sm:$0xff]
    %v1481 = vld [vmem:[#allocation5 + $0x2508] sm:$0xff]
    %v1482 = vld [vmem:[#allocation5 + $0x2510] sm:$0xff]
    %v1483 = vld [vmem:[#allocation5 + $0x2518] sm:$0xff]
    %v1484 = vld [vmem:[#allocation5 + $0x2520] sm:$0xff]
    %v1485 = vld [vmem:[#allocation5 + $0x2528] sm:$0xff]
    %v1486 = vld [vmem:[#allocation5 + $0x2530] sm:$0xff]
    %v1487 = vld [vmem:[#allocation5 + $0x2538] sm:$0xff]
    %v1488 = vld [vmem:[#allocation5 + $0x2540] sm:$0xff]
    %v1489 = vld [vmem:[#allocation5 + $0x2548] sm:$0xff]
    %v1490 = vld [vmem:[#allocation5 + $0x2550] sm:$0xff]
    %v1491 = vld [vmem:[#allocation5 + $0x2558] sm:$0xff]
    %v1492 = vld [vmem:[#allocation5 + $0x2560] sm:$0xff]
    %v1493 = vld [vmem:[#allocation5 + $0x2568] sm:$0xff]
    %v1494 = vld [vmem:[#allocation5 + $0x2570] sm:$0xff]
    %v1495 = vld [vmem:[#allocation5 + $0x2578] sm:$0xff]
    %v1496 = vld [vmem:[#allocation5 + $0x2580] sm:$0xff]
    %v1497 = vld [vmem:[#allocation5 + $0x2588] sm:$0xff]
    %v1498 = vld [vmem:[#allocation5 + $0x2590] sm:$0xff]
    %v1499 = vld [vmem:[#allocation5 + $0x2598] sm:$0xff]
    %v1500 = vld [vmem:[#allocation5 + $0x25a0] sm:$0xff]
    %v1501 = vld [vmem:[#allocation5 + $0x25a8] sm:$0xff]
    %v1502 = vld [vmem:[#allocation5 + $0x25b0] sm:$0xff]
    %v1503 = vld [vmem:[#allocation5 + $0x25b8] sm:$0xff]
    %v1504 = vld [vmem:[#allocation5 + $0x25c0] sm:$0xff]
    %v1505 = vld [vmem:[#allocation5 + $0x25c8] sm:$0xff]
    %v1506 = vld [vmem:[#allocation5 + $0x25d0] sm:$0xff]
    %v1507 = vld [vmem:[#allocation5 + $0x25d8] sm:$0xff]
    %v1508 = vld [vmem:[#allocation5 + $0x25e0] sm:$0xff]
    %v1509 = vld [vmem:[#allocation5 + $0x25e8] sm:$0xff]
    %v1510 = vld [vmem:[#allocation5 + $0x25f0] sm:$0xff]
    %v1511 = vld [vmem:[#allocation5 + $0x25f8] sm:$0xff]
    %v1512 = vld [vmem:[#allocation5 + $0x2600] sm:$0xff]
    %v1513 = vld [vmem:[#allocation5 + $0x2608] sm:$0xff]
    %v1514 = vld [vmem:[#allocation5 + $0x2610] sm:$0xff]
    %v1515 = vld [vmem:[#allocation5 + $0x2618] sm:$0xff]
    %v1516 = vld [vmem:[#allocation5 + $0x2620] sm:$0xff]
    %v1517 = vld [vmem:[#allocation5 + $0x2628] sm:$0xff]
    %v1518 = vld [vmem:[#allocation5 + $0x2630] sm:$0xff]
    %v1519 = vld [vmem:[#allocation5 + $0x2638] sm:$0xff]
    %v1520 = vld [vmem:[#allocation5 + $0x2640] sm:$0xff]
    %v1521 = vld [vmem:[#allocation5 + $0x2648] sm:$0xff]
    %v1522 = vld [vmem:[#allocation5 + $0x2650] sm:$0xff]
    %v1523 = vld [vmem:[#allocation5 + $0x2658] sm:$0xff]
    %v1524 = vld [vmem:[#allocation5 + $0x2660] sm:$0xff]
    %v1525 = vld [vmem:[#allocation5 + $0x2668] sm:$0xff]
    %v1526 = vld [vmem:[#allocation5 + $0x2670] sm:$0xff]
    %v1527 = vld [vmem:[#allocation5 + $0x2678] sm:$0xff]
    %v1528 = vld [vmem:[#allocation5 + $0x2680] sm:$0xff]
    %v1529 = vld [vmem:[#allocation5 + $0x2688] sm:$0xff]
    %v1530 = vld [vmem:[#allocation5 + $0x2690] sm:$0xff]
    %v1531 = vld [vmem:[#allocation5 + $0x2698] sm:$0xff]
    %v1532 = vld [vmem:[#allocation5 + $0x26a0] sm:$0xff]
    %v1533 = vld [vmem:[#allocation5 + $0x26a8] sm:$0xff]
    %v1534 = vld [vmem:[#allocation5 + $0x26b0] sm:$0xff]
    %v1535 = vld [vmem:[#allocation5 + $0x26b8] sm:$0xff]
    %v1536 = vld [vmem:[#allocation5 + $0x26c0] sm:$0xff]
    %v1537 = vld [vmem:[#allocation5 + $0x26c8] sm:$0xff]
    %v1538 = vld [vmem:[#allocation5 + $0x26d0] sm:$0xff]
    %v1539 = vld [vmem:[#allocation5 + $0x26d8] sm:$0xff]
    %v1540 = vld [vmem:[#allocation5 + $0x26e0] sm:$0xff]
    %v1541 = vld [vmem:[#allocation5 + $0x26e8] sm:$0xff]
    %v1542 = vld [vmem:[#allocation5 + $0x26f0] sm:$0xff]
    %v1543 = vld [vmem:[#allocation5 + $0x26f8] sm:$0xff]
    %v1544 = vld [vmem:[#allocation5 + $0x2700] sm:$0xff]
    %v1545 = vld [vmem:[#allocation5 + $0x2708] sm:$0xff]
    %v1546 = vld [vmem:[#allocation5 + $0x2710] sm:$0xff]
    %v1547 = vld [vmem:[#allocation5 + $0x2718] sm:$0xff]
    %v1548 = vld [vmem:[#allocation5 + $0x2720] sm:$0xff]
    %v1549 = vld [vmem:[#allocation5 + $0x2728] sm:$0xff]
    %v1550 = vld [vmem:[#allocation5 + $0x2730] sm:$0xff]
    %v1551 = vld [vmem:[#allocation5 + $0x2738] sm:$0xff]
    %v1552 = vld [vmem:[#allocation5 + $0x2740] sm:$0xff]
    %v1553 = vld [vmem:[#allocation5 + $0x2748] sm:$0xff]
    %v1554 = vld [vmem:[#allocation5 + $0x2750] sm:$0xff]
    %v1555 = vld [vmem:[#allocation5 + $0x2758] sm:$0xff]
    %v1556 = vld [vmem:[#allocation5 + $0x2760] sm:$0xff]
    %v1557 = vld [vmem:[#allocation5 + $0x2768] sm:$0xff]
    %v1558 = vld [vmem:[#allocation5 + $0x2770] sm:$0xff]
    %v1559 = vld [vmem:[#allocation5 + $0x2778] sm:$0xff]
    %v1560 = vld [vmem:[#allocation5 + $0x2780] sm:$0xff]
    %v1561 = vld [vmem:[#allocation5 + $0x2788] sm:$0xff]
    %v1562 = vld [vmem:[#allocation5 + $0x2790] sm:$0xff]
    %v1563 = vld [vmem:[#allocation5 + $0x2798] sm:$0xff]
    %v1564 = vld [vmem:[#allocation5 + $0x27a0] sm:$0xff]
    %v1565 = vld [vmem:[#allocation5 + $0x27a8] sm:$0xff]
    %v1566 = vld [vmem:[#allocation5 + $0x27b0] sm:$0xff]
    %v1567 = vld [vmem:[#allocation5 + $0x27b8] sm:$0xff]
    %v1568 = vld [vmem:[#allocation5 + $0x27c0] sm:$0xff]
    %v1569 = vld [vmem:[#allocation5 + $0x27c8] sm:$0xff]
    %v1570 = vld [vmem:[#allocation5 + $0x27d0] sm:$0xff]
    %v1571 = vld [vmem:[#allocation5 + $0x27d8] sm:$0xff]
    %v1572 = vld [vmem:[#allocation5 + $0x27e0] sm:$0xff]
    %v1573 = vld [vmem:[#allocation5 + $0x27e8] sm:$0xff]
    %v1574 = vld [vmem:[#allocation5 + $0x27f0] sm:$0xff]
    %v1575 = vld [vmem:[#allocation5 + $0x27f8] sm:$0xff]
    %v1576 = vld [vmem:[#allocation5 + $0x2800] sm:$0xff]
    %v1577 = vld [vmem:[#allocation5 + $0x2808] sm:$0xff]
    %v1578 = vld [vmem:[#allocation5 + $0x2810] sm:$0xff]
    %v1579 = vld [vmem:[#allocation5 + $0x2818] sm:$0xff]
    %v1580 = vld [vmem:[#allocation5 + $0x2820] sm:$0xff]
    %v1581 = vld [vmem:[#allocation5 + $0x2828] sm:$0xff]
    %v1582 = vld [vmem:[#allocation5 + $0x2830] sm:$0xff]
    %v1583 = vld [vmem:[#allocation5 + $0x2838] sm:$0xff]
    %v1584 = vld [vmem:[#allocation5 + $0x2840] sm:$0xff]
    %v1585 = vld [vmem:[#allocation5 + $0x2848] sm:$0xff]
    %v1586 = vld [vmem:[#allocation5 + $0x2850] sm:$0xff]
    %v1587 = vld [vmem:[#allocation5 + $0x2858] sm:$0xff]
    %v1588 = vld [vmem:[#allocation5 + $0x2860] sm:$0xff]
    %v1589 = vld [vmem:[#allocation5 + $0x2868] sm:$0xff]
    %v1590 = vld [vmem:[#allocation5 + $0x2870] sm:$0xff]
    %v1591 = vld [vmem:[#allocation5 + $0x2878] sm:$0xff]
    %v1592 = vld [vmem:[#allocation5 + $0x2880] sm:$0xff]
    %v1593 = vld [vmem:[#allocation5 + $0x2888] sm:$0xff]
    %v1594 = vld [vmem:[#allocation5 + $0x2890] sm:$0xff]
    %v1595 = vld [vmem:[#allocation5 + $0x2898] sm:$0xff]
    %v1596 = vld [vmem:[#allocation5 + $0x28a0] sm:$0xff]
    %v1597 = vld [vmem:[#allocation5 + $0x28a8] sm:$0xff]
    %v1598 = vld [vmem:[#allocation5 + $0x28b0] sm:$0xff]
    %v1599 = vld [vmem:[#allocation5 + $0x28b8] sm:$0xff]
    %v1600 = vld [vmem:[#allocation5 + $0x28c0] sm:$0xff]
    %v1601 = vld [vmem:[#allocation5 + $0x28c8] sm:$0xff]
    %v1602 = vld [vmem:[#allocation5 + $0x28d0] sm:$0xff]
    %v1603 = vld [vmem:[#allocation5 + $0x28d8] sm:$0xff]
    %v1604 = vld [vmem:[#allocation5 + $0x28e0] sm:$0xff]
    %v1605 = vld [vmem:[#allocation5 + $0x28e8] sm:$0xff]
    %v1606 = vld [vmem:[#allocation5 + $0x28f0] sm:$0xff]
    %v1607 = vld [vmem:[#allocation5 + $0x28f8] sm:$0xff]
    %v1608 = vld [vmem:[#allocation5 + $0x2900] sm:$0xff]
    %v1609 = vld [vmem:[#allocation5 + $0x2908] sm:$0xff]
    %v1610 = vld [vmem:[#allocation5 + $0x2910] sm:$0xff]
    %v1611 = vld [vmem:[#allocation5 + $0x2918] sm:$0xff]
    %v1612 = vld [vmem:[#allocation5 + $0x2920] sm:$0xff]
    %v1613 = vld [vmem:[#allocation5 + $0x2928] sm:$0xff]
    %v1614 = vld [vmem:[#allocation5 + $0x2930] sm:$0xff]
    %v1615 = vld [vmem:[#allocation5 + $0x2938] sm:$0xff]
    %v1616 = vld [vmem:[#allocation5 + $0x2940] sm:$0xff]
    %v1617 = vld [vmem:[#allocation5 + $0x2948] sm:$0xff]
    %v1618 = vld [vmem:[#allocation5 + $0x2950] sm:$0xff]
    %v1619 = vld [vmem:[#allocation5 + $0x2958] sm:$0xff]
    %v1620 = vld [vmem:[#allocation5 + $0x2960] sm:$0xff]
    %v1621 = vld [vmem:[#allocation5 + $0x2968] sm:$0xff]
    %v1622 = vld [vmem:[#allocation5 + $0x2970] sm:$0xff]
    %v1623 = vld [vmem:[#allocation5 + $0x2978] sm:$0xff]
    %v1624 = vld [vmem:[#allocation5 + $0x2980] sm:$0xff]
    %v1625 = vld [vmem:[#allocation5 + $0x2988] sm:$0xff]
    %v1626 = vld [vmem:[#allocation5 + $0x2990] sm:$0xff]
    %v1627 = vld [vmem:[#allocation5 + $0x2998] sm:$0xff]
    %v1628 = vld [vmem:[#allocation5 + $0x29a0] sm:$0xff]
    %v1629 = vld [vmem:[#allocation5 + $0x29a8] sm:$0xff]
    %v1630 = vld [vmem:[#allocation5 + $0x29b0] sm:$0xff]
    %v1631 = vld [vmem:[#allocation5 + $0x29b8] sm:$0xff]
    %v1632 = vld [vmem:[#allocation5 + $0x29c0] sm:$0xff]
    %v1633 = vld [vmem:[#allocation5 + $0x29c8] sm:$0xff]
    %v1634 = vld [vmem:[#allocation5 + $0x29d0] sm:$0xff]
    %v1635 = vld [vmem:[#allocation5 + $0x29d8] sm:$0xff]
    %v1636 = vld [vmem:[#allocation5 + $0x29e0] sm:$0xff]
    %v1637 = vld [vmem:[#allocation5 + $0x29e8] sm:$0xff]
    %v1638 = vld [vmem:[#allocation5 + $0x29f0] sm:$0xff]
    %v1639 = vld [vmem:[#allocation5 + $0x29f8] sm:$0xff]
    %v1640 = vld [vmem:[#allocation5 + $0x2a00] sm:$0xff]
    %v1641 = vld [vmem:[#allocation5 + $0x2a08] sm:$0xff]
    %v1642 = vld [vmem:[#allocation5 + $0x2a10] sm:$0xff]
    %v1643 = vld [vmem:[#allocation5 + $0x2a18] sm:$0xff]
    %v1644 = vld [vmem:[#allocation5 + $0x2a20] sm:$0xff]
    %v1645 = vld [vmem:[#allocation5 + $0x2a28] sm:$0xff]
    %v1646 = vld [vmem:[#allocation5 + $0x2a30] sm:$0xff]
    %v1647 = vld [vmem:[#allocation5 + $0x2a38] sm:$0xff]
    %v1648 = vld [vmem:[#allocation5 + $0x2a40] sm:$0xff]
    %v1649 = vld [vmem:[#allocation5 + $0x2a48] sm:$0xff]
    %v1650 = vld [vmem:[#allocation5 + $0x2a50] sm:$0xff]
    %v1651 = vld [vmem:[#allocation5 + $0x2a58] sm:$0xff]
    %v1652 = vld [vmem:[#allocation5 + $0x2a60] sm:$0xff]
    %v1653 = vld [vmem:[#allocation5 + $0x2a68] sm:$0xff]
    %v1654 = vld [vmem:[#allocation5 + $0x2a70] sm:$0xff]
    %v1655 = vld [vmem:[#allocation5 + $0x2a78] sm:$0xff]
    %v1656 = vld [vmem:[#allocation5 + $0x2a80] sm:$0xff]
    %v1657 = vld [vmem:[#allocation5 + $0x2a88] sm:$0xff]
    %v1658 = vld [vmem:[#allocation5 + $0x2a90] sm:$0xff]
    %v1659 = vld [vmem:[#allocation5 + $0x2a98] sm:$0xff]
    %v1660 = vld [vmem:[#allocation5 + $0x2aa0] sm:$0xff]
    %v1661 = vld [vmem:[#allocation5 + $0x2aa8] sm:$0xff]
    %v1662 = vld [vmem:[#allocation5 + $0x2ab0] sm:$0xff]
    %v1663 = vld [vmem:[#allocation5 + $0x2ab8] sm:$0xff]
    %v1664 = vld [vmem:[#allocation5 + $0x2ac0] sm:$0xff]
    %v1665 = vld [vmem:[#allocation5 + $0x2ac8] sm:$0xff]
    %v1666 = vld [vmem:[#allocation5 + $0x2ad0] sm:$0xff]
    %v1667 = vld [vmem:[#allocation5 + $0x2ad8] sm:$0xff]
    %v1668 = vld [vmem:[#allocation5 + $0x2ae0] sm:$0xff]
    %v1669 = vld [vmem:[#allocation5 + $0x2ae8] sm:$0xff]
    %v1670 = vld [vmem:[#allocation5 + $0x2af0] sm:$0xff]
    %v1671 = vld [vmem:[#allocation5 + $0x2af8] sm:$0xff]
    %v1672 = vld [vmem:[#allocation5 + $0x2b00] sm:$0xff]
    %v1673 = vld [vmem:[#allocation5 + $0x2b08] sm:$0xff]
    %v1674 = vld [vmem:[#allocation5 + $0x2b10] sm:$0xff]
    %v1675 = vld [vmem:[#allocation5 + $0x2b18] sm:$0xff]
    %v1676 = vld [vmem:[#allocation5 + $0x2b20] sm:$0xff]
    %v1677 = vld [vmem:[#allocation5 + $0x2b28] sm:$0xff]
    %v1678 = vld [vmem:[#allocation5 + $0x2b30] sm:$0xff]
    %v1679 = vld [vmem:[#allocation5 + $0x2b38] sm:$0xff]
    %v1680 = vld [vmem:[#allocation5 + $0x2b40] sm:$0xff]
    %v1681 = vld [vmem:[#allocation5 + $0x2b48] sm:$0xff]
    %v1682 = vld [vmem:[#allocation5 + $0x2b50] sm:$0xff]
    %v1683 = vld [vmem:[#allocation5 + $0x2b58] sm:$0xff]
    %v1684 = vld [vmem:[#allocation5 + $0x2b60] sm:$0xff]
    %v1685 = vld [vmem:[#allocation5 + $0x2b68] sm:$0xff]
    %v1686 = vld [vmem:[#allocation5 + $0x2b70] sm:$0xff]
    %v1687 = vld [vmem:[#allocation5 + $0x2b78] sm:$0xff]
    %v1688 = vld [vmem:[#allocation5 + $0x2b80] sm:$0xff]
    %v1689 = vld [vmem:[#allocation5 + $0x2b88] sm:$0xff]
    %v1690 = vld [vmem:[#allocation5 + $0x2b90] sm:$0xff]
    %v1691 = vld [vmem:[#allocation5 + $0x2b98] sm:$0xff]
    %v1692 = vld [vmem:[#allocation5 + $0x2ba0] sm:$0xff]
    %v1693 = vld [vmem:[#allocation5 + $0x2ba8] sm:$0xff]
    %v1694 = vld [vmem:[#allocation5 + $0x2bb0] sm:$0xff]
    %v1695 = vld [vmem:[#allocation5 + $0x2bb8] sm:$0xff]
    %v1696 = vld [vmem:[#allocation5 + $0x2bc0] sm:$0xff]
    %v1697 = vld [vmem:[#allocation5 + $0x2bc8] sm:$0xff]
    %v1698 = vld [vmem:[#allocation5 + $0x2bd0] sm:$0xff]
    %v1699 = vld [vmem:[#allocation5 + $0x2bd8] sm:$0xff]
    %v1700 = vld [vmem:[#allocation5 + $0x2be0] sm:$0xff]
    %v1701 = vld [vmem:[#allocation5 + $0x2be8] sm:$0xff]
    %v1702 = vld [vmem:[#allocation5 + $0x2bf0] sm:$0xff]
    %v1703 = vld [vmem:[#allocation5 + $0x2bf8] sm:$0xff]
    %v1704 = vld [vmem:[#allocation5 + $0x2c00] sm:$0xff]
    %v1705 = vld [vmem:[#allocation5 + $0x2c08] sm:$0xff]
    %v1706 = vld [vmem:[#allocation5 + $0x2c10] sm:$0xff]
    %v1707 = vld [vmem:[#allocation5 + $0x2c18] sm:$0xff]
    %v1708 = vld [vmem:[#allocation5 + $0x2c20] sm:$0xff]
    %v1709 = vld [vmem:[#allocation5 + $0x2c28] sm:$0xff]
    %v1710 = vld [vmem:[#allocation5 + $0x2c30] sm:$0xff]
    %v1711 = vld [vmem:[#allocation5 + $0x2c38] sm:$0xff]
    %v1712 = vld [vmem:[#allocation5 + $0x2c40] sm:$0xff]
    %v1713 = vld [vmem:[#allocation5 + $0x2c48] sm:$0xff]
    %v1714 = vld [vmem:[#allocation5 + $0x2c50] sm:$0xff]
    %v1715 = vld [vmem:[#allocation5 + $0x2c58] sm:$0xff]
    %v1716 = vld [vmem:[#allocation5 + $0x2c60] sm:$0xff]
    %v1717 = vld [vmem:[#allocation5 + $0x2c68] sm:$0xff]
    %v1718 = vld [vmem:[#allocation5 + $0x2c70] sm:$0xff]
    %v1719 = vld [vmem:[#allocation5 + $0x2c78] sm:$0xff]
    %v1720 = vld [vmem:[#allocation5 + $0x2c80] sm:$0xff]
    %v1721 = vld [vmem:[#allocation5 + $0x2c88] sm:$0xff]
    %v1722 = vld [vmem:[#allocation5 + $0x2c90] sm:$0xff]
    %v1723 = vld [vmem:[#allocation5 + $0x2c98] sm:$0xff]
    %v1724 = vld [vmem:[#allocation5 + $0x2ca0] sm:$0xff]
    %v1725 = vld [vmem:[#allocation5 + $0x2ca8] sm:$0xff]
    %v1726 = vld [vmem:[#allocation5 + $0x2cb0] sm:$0xff]
    %v1727 = vld [vmem:[#allocation5 + $0x2cb8] sm:$0xff]
    %v1728 = vld [vmem:[#allocation5 + $0x2cc0] sm:$0xff]
    %v1729 = vld [vmem:[#allocation5 + $0x2cc8] sm:$0xff]
    %v1730 = vld [vmem:[#allocation5 + $0x2cd0] sm:$0xff]
    %v1731 = vld [vmem:[#allocation5 + $0x2cd8] sm:$0xff]
    %v1732 = vld [vmem:[#allocation5 + $0x2ce0] sm:$0xff]
    %v1733 = vld [vmem:[#allocation5 + $0x2ce8] sm:$0xff]
    %v1734 = vld [vmem:[#allocation5 + $0x2cf0] sm:$0xff]
    %v1735 = vld [vmem:[#allocation5 + $0x2cf8] sm:$0xff]
    %v1736 = vld [vmem:[#allocation5 + $0x2d00] sm:$0xff]
    %v1737 = vld [vmem:[#allocation5 + $0x2d08] sm:$0xff]
    %v1738 = vld [vmem:[#allocation5 + $0x2d10] sm:$0xff]
    %v1739 = vld [vmem:[#allocation5 + $0x2d18] sm:$0xff]
    %v1740 = vld [vmem:[#allocation5 + $0x2d20] sm:$0xff]
    %v1741 = vld [vmem:[#allocation5 + $0x2d28] sm:$0xff]
    %v1742 = vld [vmem:[#allocation5 + $0x2d30] sm:$0xff]
    %v1743 = vld [vmem:[#allocation5 + $0x2d38] sm:$0xff]
    %v1744 = vld [vmem:[#allocation5 + $0x2d40] sm:$0xff]
    %v1745 = vld [vmem:[#allocation5 + $0x2d48] sm:$0xff]
    %v1746 = vld [vmem:[#allocation5 + $0x2d50] sm:$0xff]
    %v1747 = vld [vmem:[#allocation5 + $0x2d58] sm:$0xff]
    %v1748 = vld [vmem:[#allocation5 + $0x2d60] sm:$0xff]
    %v1749 = vld [vmem:[#allocation5 + $0x2d68] sm:$0xff]
    %v1750 = vld [vmem:[#allocation5 + $0x2d70] sm:$0xff]
    %v1751 = vld [vmem:[#allocation5 + $0x2d78] sm:$0xff]
    %v1752 = vld [vmem:[#allocation5 + $0x2d80] sm:$0xff]
    %v1753 = vld [vmem:[#allocation5 + $0x2d88] sm:$0xff]
    %v3212 = vunpack.c.l.b16 %v296
    %v3213 = vunpack.c.h.b16 %v296
    %v3214 = vunpack.c.l.b16 %v297
    %v3215 = vunpack.c.h.b16 %v297
    %v3216 = vunpack.c.l.b16 %v298
    %v3217 = vunpack.c.h.b16 %v298
    %v3218 = vunpack.c.l.b16 %v299
    %v3219 = vunpack.c.h.b16 %v299
    %v3220 = vunpack.c.l.b16 %v300
    %v3221 = vunpack.c.h.b16 %v300
    %v3222 = vunpack.c.l.b16 %v301
    %v3223 = vunpack.c.h.b16 %v301
    %v3224 = vunpack.c.l.b16 %v302
    %v3225 = vunpack.c.h.b16 %v302
    %v3226 = vunpack.c.l.b16 %v303
    %v3227 = vunpack.c.h.b16 %v303
    %v3228 = vunpack.c.l.b16 %v304
    %v3229 = vunpack.c.h.b16 %v304
    %v3230 = vunpack.c.l.b16 %v305
    %v3231 = vunpack.c.h.b16 %v305
    %v3232 = vunpack.c.l.b16 %v306
    %v3233 = vunpack.c.h.b16 %v306
    %v3234 = vunpack.c.l.b16 %v307
    %v3235 = vunpack.c.h.b16 %v307
    %v3236 = vunpack.c.l.b16 %v308
    %v3237 = vunpack.c.h.b16 %v308
    %v3238 = vunpack.c.l.b16 %v309
    %v3239 = vunpack.c.h.b16 %v309
    %v3240 = vunpack.c.l.b16 %v310
    %v3241 = vunpack.c.h.b16 %v310
    %v3242 = vunpack.c.l.b16 %v311
    %v3243 = vunpack.c.h.b16 %v311
    %v3244 = vunpack.c.l.b16 %v312
    %v3245 = vunpack.c.h.b16 %v312
    %v3246 = vunpack.c.l.b16 %v313
    %v3247 = vunpack.c.h.b16 %v313
    %v3248 = vunpack.c.l.b16 %v314
    %v3249 = vunpack.c.h.b16 %v314
    %v3250 = vunpack.c.l.b16 %v315
    %v3251 = vunpack.c.h.b16 %v315
    %v3252 = vunpack.c.l.b16 %v316
    %v3253 = vunpack.c.h.b16 %v316
    %v3254 = vunpack.c.l.b16 %v317
    %v3255 = vunpack.c.h.b16 %v317
    %v3256 = vunpack.c.l.b16 %v318
    %v3257 = vunpack.c.h.b16 %v318
    %v3258 = vunpack.c.l.b16 %v319
    %v3259 = vunpack.c.h.b16 %v319
    %v3260 = vunpack.c.l.b16 %v320
    %v3261 = vunpack.c.h.b16 %v320
    %v3262 = vunpack.c.l.b16 %v321
    %v3263 = vunpack.c.h.b16 %v321
    %v3264 = vunpack.c.l.b16 %v322
    %v3265 = vunpack.c.h.b16 %v322
    %v3266 = vunpack.c.l.b16 %v323
    %v3267 = vunpack.c.h.b16 %v323
    %v3268 = vunpack.c.l.b16 %v324
    %v3269 = vunpack.c.h.b16 %v324
    %v3270 = vunpack.c.l.b16 %v325
    %v3271 = vunpack.c.h.b16 %v325
    %v3272 = vunpack.c.l.b16 %v326
    %v3273 = vunpack.c.h.b16 %v326
    %v3274 = vunpack.c.l.b16 %v327
    %v3275 = vunpack.c.h.b16 %v327
    %v3276 = vunpack.c.l.b16 %v328
    %v3277 = vunpack.c.h.b16 %v328
    %v3278 = vunpack.c.l.b16 %v329
    %v3279 = vunpack.c.h.b16 %v329
    %v3280 = vunpack.c.l.b16 %v330
    %v3281 = vunpack.c.h.b16 %v330
    %v3282 = vunpack.c.l.b16 %v331
    %v3283 = vunpack.c.h.b16 %v331
    %v3284 = vunpack.c.l.b16 %v332
    %v3285 = vunpack.c.h.b16 %v332
    %v3286 = vunpack.c.l.b16 %v333
    %v3287 = vunpack.c.h.b16 %v333
    %v3288 = vunpack.c.l.b16 %v334
    %v3289 = vunpack.c.h.b16 %v334
    %v3290 = vunpack.c.l.b16 %v335
    %v3291 = vunpack.c.h.b16 %v335
    %v3292 = vunpack.c.l.b16 %v336
    %v3293 = vunpack.c.h.b16 %v336
    %v3294 = vunpack.c.l.b16 %v337
    %v3295 = vunpack.c.h.b16 %v337
    %v3296 = vunpack.c.l.b16 %v338
    %v3297 = vunpack.c.h.b16 %v338
    %v3298 = vunpack.c.l.b16 %v339
    %v3299 = vunpack.c.h.b16 %v339
    %v3300 = vunpack.c.l.b16 %v340
    %v3301 = vunpack.c.h.b16 %v340
    %v3302 = vunpack.c.l.b16 %v341
    %v3303 = vunpack.c.h.b16 %v341
    %v3304 = vunpack.c.l.b16 %v342
    %v3305 = vunpack.c.h.b16 %v342
    %v3306 = vunpack.c.l.b16 %v343
    %v3307 = vunpack.c.h.b16 %v343
    %v3308 = vunpack.c.l.b16 %v344
    %v3309 = vunpack.c.h.b16 %v344
    %v3310 = vunpack.c.l.b16 %v345
    %v3311 = vunpack.c.h.b16 %v345
    %v3312 = vunpack.c.l.b16 %v346
    %v3313 = vunpack.c.h.b16 %v346
    %v3314 = vunpack.c.l.b16 %v347
    %v3315 = vunpack.c.h.b16 %v347
    %v3316 = vunpack.c.l.b16 %v348
    %v3317 = vunpack.c.h.b16 %v348
    %v3318 = vunpack.c.l.b16 %v349
    %v3319 = vunpack.c.h.b16 %v349
    %v3320 = vunpack.c.l.b16 %v350
    %v3321 = vunpack.c.h.b16 %v350
    %v3322 = vunpack.c.l.b16 %v351
    %v3323 = vunpack.c.h.b16 %v351
    %v3324 = vunpack.c.l.b16 %v352
    %v3325 = vunpack.c.h.b16 %v352
    %v3326 = vunpack.c.l.b16 %v353
    %v3327 = vunpack.c.h.b16 %v353
    %v3328 = vunpack.c.l.b16 %v354
    %v3329 = vunpack.c.h.b16 %v354
    %v3330 = vunpack.c.l.b16 %v355
    %v3331 = vunpack.c.h.b16 %v355
    %v3332 = vunpack.c.l.b16 %v356
    %v3333 = vunpack.c.h.b16 %v356
    %v3334 = vunpack.c.l.b16 %v357
    %v3335 = vunpack.c.h.b16 %v357
    %v3336 = vunpack.c.l.b16 %v358
    %v3337 = vunpack.c.h.b16 %v358
    %v3338 = vunpack.c.l.b16 %v359
    %v3339 = vunpack.c.h.b16 %v359
    %v3340 = vunpack.c.l.b16 %v360
    %v3341 = vunpack.c.h.b16 %v360
    %v3342 = vunpack.c.l.b16 %v361
    %v3343 = vunpack.c.h.b16 %v361
    %v3344 = vunpack.c.l.b16 %v362
    %v3345 = vunpack.c.h.b16 %v362
    %v3346 = vunpack.c.l.b16 %v363
    %v3347 = vunpack.c.h.b16 %v363
    %v3348 = vunpack.c.l.b16 %v364
    %v3349 = vunpack.c.h.b16 %v364
    %v3350 = vunpack.c.l.b16 %v365
    %v3351 = vunpack.c.h.b16 %v365
    %v3352 = vunpack.c.l.b16 %v366
    %v3353 = vunpack.c.h.b16 %v366
    %v3354 = vunpack.c.l.b16 %v367
    %v3355 = vunpack.c.h.b16 %v367
    %v3356 = vunpack.c.l.b16 %v368
    %v3357 = vunpack.c.h.b16 %v368
    %v3358 = vunpack.c.l.b16 %v369
    %v3359 = vunpack.c.h.b16 %v369
    %v3360 = vunpack.c.l.b16 %v370
    %v3361 = vunpack.c.h.b16 %v370
    %v3362 = vunpack.c.l.b16 %v371
    %v3363 = vunpack.c.h.b16 %v371
    %v3364 = vunpack.c.l.b16 %v372
    %v3365 = vunpack.c.h.b16 %v372
    %v3366 = vunpack.c.l.b16 %v373
    %v3367 = vunpack.c.h.b16 %v373
    %v3368 = vunpack.c.l.b16 %v374
    %v3369 = vunpack.c.h.b16 %v374
    %v3370 = vunpack.c.l.b16 %v375
    %v3371 = vunpack.c.h.b16 %v375
    %v3372 = vunpack.c.l.b16 %v376
    %v3373 = vunpack.c.h.b16 %v376
    %v3374 = vunpack.c.l.b16 %v377
    %v3375 = vunpack.c.h.b16 %v377
    %v3376 = vunpack.c.l.b16 %v378
    %v3377 = vunpack.c.h.b16 %v378
    %v3378 = vunpack.c.l.b16 %v379
    %v3379 = vunpack.c.h.b16 %v379
    %v3380 = vunpack.c.l.b16 %v380
    %v3381 = vunpack.c.h.b16 %v380
    %v3382 = vunpack.c.l.b16 %v381
    %v3383 = vunpack.c.h.b16 %v381
    %v3384 = vunpack.c.l.b16 %v382
    %v3385 = vunpack.c.h.b16 %v382
    %v3386 = vunpack.c.l.b16 %v383
    %v3387 = vunpack.c.h.b16 %v383
    %v3388 = vunpack.c.l.b16 %v384
    %v3389 = vunpack.c.h.b16 %v384
    %v3390 = vunpack.c.l.b16 %v385
    %v3391 = vunpack.c.h.b16 %v385
    %v3392 = vunpack.c.l.b16 %v386
    %v3393 = vunpack.c.h.b16 %v386
    %v3394 = vunpack.c.l.b16 %v387
    %v3395 = vunpack.c.h.b16 %v387
    %v3396 = vunpack.c.l.b16 %v388
    %v3397 = vunpack.c.h.b16 %v388
    %v3398 = vunpack.c.l.b16 %v389
    %v3399 = vunpack.c.h.b16 %v389
    %v3400 = vunpack.c.l.b16 %v390
    %v3401 = vunpack.c.h.b16 %v390
    %v3402 = vunpack.c.l.b16 %v391
    %v3403 = vunpack.c.h.b16 %v391
    %v3404 = vunpack.c.l.b16 %v392
    %v3405 = vunpack.c.h.b16 %v392
    %v3406 = vunpack.c.l.b16 %v393
    %v3407 = vunpack.c.h.b16 %v393
    %v3408 = vunpack.c.l.b16 %v394
    %v3409 = vunpack.c.h.b16 %v394
    %v3410 = vunpack.c.l.b16 %v395
    %v3411 = vunpack.c.h.b16 %v395
    %v3412 = vunpack.c.l.b16 %v396
    %v3413 = vunpack.c.h.b16 %v396
    %v3414 = vunpack.c.l.b16 %v397
    %v3415 = vunpack.c.h.b16 %v397
    %v3416 = vunpack.c.l.b16 %v398
    %v3417 = vunpack.c.h.b16 %v398
    %v3418 = vunpack.c.l.b16 %v399
    %v3419 = vunpack.c.h.b16 %v399
    %v3420 = vunpack.c.l.b16 %v400
    %v3421 = vunpack.c.h.b16 %v400
    %v3422 = vunpack.c.l.b16 %v401
    %v3423 = vunpack.c.h.b16 %v401
    %v3424 = vunpack.c.l.b16 %v402
    %v3425 = vunpack.c.h.b16 %v402
    %v3426 = vunpack.c.l.b16 %v403
    %v3427 = vunpack.c.h.b16 %v403
    %v3428 = vunpack.c.l.b16 %v404
    %v3429 = vunpack.c.h.b16 %v404
    %v3430 = vunpack.c.l.b16 %v405
    %v3431 = vunpack.c.h.b16 %v405
    %v3432 = vunpack.c.l.b16 %v406
    %v3433 = vunpack.c.h.b16 %v406
    %v3434 = vunpack.c.l.b16 %v407
    %v3435 = vunpack.c.h.b16 %v407
    %v3436 = vunpack.c.l.b16 %v408
    %v3437 = vunpack.c.h.b16 %v408
    %v3438 = vunpack.c.l.b16 %v409
    %v3439 = vunpack.c.h.b16 %v409
    %v3440 = vunpack.c.l.b16 %v410
    %v3441 = vunpack.c.h.b16 %v410
    %v3442 = vunpack.c.l.b16 %v411
    %v3443 = vunpack.c.h.b16 %v411
    %v3444 = vunpack.c.l.b16 %v412
    %v3445 = vunpack.c.h.b16 %v412
    %v3446 = vunpack.c.l.b16 %v413
    %v3447 = vunpack.c.h.b16 %v413
    %v3448 = vunpack.c.l.b16 %v414
    %v3449 = vunpack.c.h.b16 %v414
    %v3450 = vunpack.c.l.b16 %v415
    %v3451 = vunpack.c.h.b16 %v415
    %v3452 = vunpack.c.l.b16 %v416
    %v3453 = vunpack.c.h.b16 %v416
    %v3454 = vunpack.c.l.b16 %v417
    %v3455 = vunpack.c.h.b16 %v417
    %v3456 = vunpack.c.l.b16 %v418
    %v3457 = vunpack.c.h.b16 %v418
    %v3458 = vunpack.c.l.b16 %v419
    %v3459 = vunpack.c.h.b16 %v419
    %v3460 = vunpack.c.l.b16 %v420
    %v3461 = vunpack.c.h.b16 %v420
    %v3462 = vunpack.c.l.b16 %v421
    %v3463 = vunpack.c.h.b16 %v421
    %v3464 = vunpack.c.l.b16 %v422
    %v3465 = vunpack.c.h.b16 %v422
    %v3466 = vunpack.c.l.b16 %v423
    %v3467 = vunpack.c.h.b16 %v423
    %v3468 = vunpack.c.l.b16 %v424
    %v3469 = vunpack.c.h.b16 %v424
    %v3470 = vunpack.c.l.b16 %v425
    %v3471 = vunpack.c.h.b16 %v425
    %v3472 = vunpack.c.l.b16 %v426
    %v3473 = vunpack.c.h.b16 %v426
    %v3474 = vunpack.c.l.b16 %v427
    %v3475 = vunpack.c.h.b16 %v427
    %v3476 = vunpack.c.l.b16 %v428
    %v3477 = vunpack.c.h.b16 %v428
    %v3478 = vunpack.c.l.b16 %v429
    %v3479 = vunpack.c.h.b16 %v429
    %v3480 = vunpack.c.l.b16 %v430
    %v3481 = vunpack.c.h.b16 %v430
    %v3482 = vunpack.c.l.b16 %v431
    %v3483 = vunpack.c.h.b16 %v431
    %v3484 = vunpack.c.l.b16 %v432
    %v3485 = vunpack.c.h.b16 %v432
    %v3486 = vunpack.c.l.b16 %v433
    %v3487 = vunpack.c.h.b16 %v433
    %v3488 = vunpack.c.l.b16 %v434
    %v3489 = vunpack.c.h.b16 %v434
    %v3490 = vunpack.c.l.b16 %v435
    %v3491 = vunpack.c.h.b16 %v435
    %v3492 = vunpack.c.l.b16 %v436
    %v3493 = vunpack.c.h.b16 %v436
    %v3494 = vunpack.c.l.b16 %v437
    %v3495 = vunpack.c.h.b16 %v437
    %v3496 = vunpack.c.l.b16 %v438
    %v3497 = vunpack.c.h.b16 %v438
    %v3498 = vunpack.c.l.b16 %v439
    %v3499 = vunpack.c.h.b16 %v439
    %v3500 = vunpack.c.l.b16 %v440
    %v3501 = vunpack.c.h.b16 %v440
    %v3502 = vunpack.c.l.b16 %v441
    %v3503 = vunpack.c.h.b16 %v441
    %v3504 = vunpack.c.l.b16 %v442
    %v3505 = vunpack.c.h.b16 %v442
    %v3506 = vunpack.c.l.b16 %v443
    %v3507 = vunpack.c.h.b16 %v443
    %v3508 = vunpack.c.l.b16 %v444
    %v3509 = vunpack.c.h.b16 %v444
    %v3510 = vunpack.c.l.b16 %v445
    %v3511 = vunpack.c.h.b16 %v445
    %v3512 = vunpack.c.l.b16 %v446
    %v3513 = vunpack.c.h.b16 %v446
    %v3514 = vunpack.c.l.b16 %v447
    %v3515 = vunpack.c.h.b16 %v447
    %v3516 = vunpack.c.l.b16 %v448
    %v3517 = vunpack.c.h.b16 %v448
    %v3518 = vunpack.c.l.b16 %v449
    %v3519 = vunpack.c.h.b16 %v449
    %v3520 = vunpack.c.l.b16 %v450
    %v3521 = vunpack.c.h.b16 %v450
    %v3522 = vunpack.c.l.b16 %v451
    %v3523 = vunpack.c.h.b16 %v451
    %v3524 = vunpack.c.l.b16 %v452
    %v3525 = vunpack.c.h.b16 %v452
    %v3526 = vunpack.c.l.b16 %v453
    %v3527 = vunpack.c.h.b16 %v453
    %v3528 = vunpack.c.l.b16 %v454
    %v3529 = vunpack.c.h.b16 %v454
    %v3530 = vunpack.c.l.b16 %v455
    %v3531 = vunpack.c.h.b16 %v455
    %v3532 = vunpack.c.l.b16 %v456
    %v3533 = vunpack.c.h.b16 %v456
    %v3534 = vunpack.c.l.b16 %v457
    %v3535 = vunpack.c.h.b16 %v457
    %v3536 = vunpack.c.l.b16 %v458
    %v3537 = vunpack.c.h.b16 %v458
    %v3538 = vunpack.c.l.b16 %v459
    %v3539 = vunpack.c.h.b16 %v459
    %v3540 = vunpack.c.l.b16 %v460
    %v3541 = vunpack.c.h.b16 %v460
    %v3542 = vunpack.c.l.b16 %v461
    %v3543 = vunpack.c.h.b16 %v461
    %v3544 = vunpack.c.l.b16 %v462
    %v3545 = vunpack.c.h.b16 %v462
    %v3546 = vunpack.c.l.b16 %v463
    %v3547 = vunpack.c.h.b16 %v463
    %v3548 = vunpack.c.l.b16 %v464
    %v3549 = vunpack.c.h.b16 %v464
    %v3550 = vunpack.c.l.b16 %v465
    %v3551 = vunpack.c.h.b16 %v465
    %v3552 = vunpack.c.l.b16 %v466
    %v3553 = vunpack.c.h.b16 %v466
    %v3554 = vunpack.c.l.b16 %v467
    %v3555 = vunpack.c.h.b16 %v467
    %v3556 = vunpack.c.l.b16 %v468
    %v3557 = vunpack.c.h.b16 %v468
    %v3558 = vunpack.c.l.b16 %v469
    %v3559 = vunpack.c.h.b16 %v469
    %v3560 = vunpack.c.l.b16 %v470
    %v3561 = vunpack.c.h.b16 %v470
    %v3562 = vunpack.c.l.b16 %v471
    %v3563 = vunpack.c.h.b16 %v471
    %v3564 = vunpack.c.l.b16 %v472
    %v3565 = vunpack.c.h.b16 %v472
    %v3566 = vunpack.c.l.b16 %v473
    %v3567 = vunpack.c.h.b16 %v473
    %v3568 = vunpack.c.l.b16 %v474
    %v3569 = vunpack.c.h.b16 %v474
    %v3570 = vunpack.c.l.b16 %v475
    %v3571 = vunpack.c.h.b16 %v475
    %v3572 = vunpack.c.l.b16 %v476
    %v3573 = vunpack.c.h.b16 %v476
    %v3574 = vunpack.c.l.b16 %v477
    %v3575 = vunpack.c.h.b16 %v477
    %v3576 = vunpack.c.l.b16 %v478
    %v3577 = vunpack.c.h.b16 %v478
    %v3578 = vunpack.c.l.b16 %v479
    %v3579 = vunpack.c.h.b16 %v479
    %v3580 = vunpack.c.l.b16 %v480
    %v3581 = vunpack.c.h.b16 %v480
    %v3582 = vunpack.c.l.b16 %v481
    %v3583 = vunpack.c.h.b16 %v481
    %v3584 = vunpack.c.l.b16 %v482
    %v3585 = vunpack.c.h.b16 %v482
    %v3586 = vunpack.c.l.b16 %v483
    %v3587 = vunpack.c.h.b16 %v483
    %v3588 = vunpack.c.l.b16 %v484
    %v3589 = vunpack.c.h.b16 %v484
    %v3590 = vunpack.c.l.b16 %v485
    %v3591 = vunpack.c.h.b16 %v485
    %v3592 = vunpack.c.l.b16 %v486
    %v3593 = vunpack.c.h.b16 %v486
    %v3594 = vunpack.c.l.b16 %v487
    %v3595 = vunpack.c.h.b16 %v487
    %v3596 = vunpack.c.l.b16 %v488
    %v3597 = vunpack.c.h.b16 %v488
    %v3598 = vunpack.c.l.b16 %v489
    %v3599 = vunpack.c.h.b16 %v489
    %v3600 = vunpack.c.l.b16 %v490
    %v3601 = vunpack.c.h.b16 %v490
    %v3602 = vunpack.c.l.b16 %v491
    %v3603 = vunpack.c.h.b16 %v491
    %v3604 = vunpack.c.l.b16 %v492
    %v3605 = vunpack.c.h.b16 %v492
    %v3606 = vunpack.c.l.b16 %v493
    %v3607 = vunpack.c.h.b16 %v493
    %v3608 = vunpack.c.l.b16 %v494
    %v3609 = vunpack.c.h.b16 %v494
    %v3610 = vunpack.c.l.b16 %v495
    %v3611 = vunpack.c.h.b16 %v495
    %v3612 = vunpack.c.l.b16 %v496
    %v3613 = vunpack.c.h.b16 %v496
    %v3614 = vunpack.c.l.b16 %v497
    %v3615 = vunpack.c.h.b16 %v497
    %v3616 = vunpack.c.l.b16 %v498
    %v3617 = vunpack.c.h.b16 %v498
    %v3618 = vunpack.c.l.b16 %v499
    %v3619 = vunpack.c.h.b16 %v499
    %v3620 = vunpack.c.l.b16 %v500
    %v3621 = vunpack.c.h.b16 %v500
    %v3622 = vunpack.c.l.b16 %v501
    %v3623 = vunpack.c.h.b16 %v501
    %v3624 = vunpack.c.l.b16 %v502
    %v3625 = vunpack.c.h.b16 %v502
    %v3626 = vunpack.c.l.b16 %v503
    %v3627 = vunpack.c.h.b16 %v503
    %v3628 = vunpack.c.l.b16 %v504
    %v3629 = vunpack.c.h.b16 %v504
    %v3630 = vunpack.c.l.b16 %v505
    %v3631 = vunpack.c.h.b16 %v505
    %v3632 = vunpack.c.l.b16 %v506
    %v3633 = vunpack.c.h.b16 %v506
    %v3634 = vunpack.c.l.b16 %v507
    %v3635 = vunpack.c.h.b16 %v507
    %v3636 = vunpack.c.l.b16 %v508
    %v3637 = vunpack.c.h.b16 %v508
    %v3638 = vunpack.c.l.b16 %v509
    %v3639 = vunpack.c.h.b16 %v509
    %v3640 = vunpack.c.l.b16 %v510
    %v3641 = vunpack.c.h.b16 %v510
    %v3642 = vunpack.c.l.b16 %v511
    %v3643 = vunpack.c.h.b16 %v511
    %v3644 = vunpack.c.l.b16 %v512
    %v3645 = vunpack.c.h.b16 %v512
    %v3646 = vunpack.c.l.b16 %v513
    %v3647 = vunpack.c.h.b16 %v513
    %v3648 = vunpack.c.l.b16 %v514
    %v3649 = vunpack.c.h.b16 %v514
    %v3650 = vunpack.c.l.b16 %v515
    %v3651 = vunpack.c.h.b16 %v515
    %v3652 = vunpack.c.l.b16 %v516
    %v3653 = vunpack.c.h.b16 %v516
    %v3654 = vunpack.c.l.b16 %v517
    %v3655 = vunpack.c.h.b16 %v517
    %v3656 = vunpack.c.l.b16 %v518
    %v3657 = vunpack.c.h.b16 %v518
    %v3658 = vunpack.c.l.b16 %v519
    %v3659 = vunpack.c.h.b16 %v519
    %v3660 = vunpack.c.l.b16 %v520
    %v3661 = vunpack.c.h.b16 %v520
    %v3662 = vunpack.c.l.b16 %v521
    %v3663 = vunpack.c.h.b16 %v521
    %v3664 = vunpack.c.l.b16 %v522
    %v3665 = vunpack.c.h.b16 %v522
    %v3666 = vunpack.c.l.b16 %v523
    %v3667 = vunpack.c.h.b16 %v523
    %v3668 = vunpack.c.l.b16 %v524
    %v3669 = vunpack.c.h.b16 %v524
    %v3670 = vunpack.c.l.b16 %v525
    %v3671 = vunpack.c.h.b16 %v525
    %v3672 = vunpack.c.l.b16 %v526
    %v3673 = vunpack.c.h.b16 %v526
    %v3674 = vunpack.c.l.b16 %v527
    %v3675 = vunpack.c.h.b16 %v527
    %v3676 = vunpack.c.l.b16 %v528
    %v3677 = vunpack.c.h.b16 %v528
    %v3678 = vunpack.c.l.b16 %v529
    %v3679 = vunpack.c.h.b16 %v529
    %v3680 = vunpack.c.l.b16 %v530
    %v3681 = vunpack.c.h.b16 %v530
    %v3682 = vunpack.c.l.b16 %v531
    %v3683 = vunpack.c.h.b16 %v531
    %v3684 = vunpack.c.l.b16 %v532
    %v3685 = vunpack.c.h.b16 %v532
    %v3686 = vunpack.c.l.b16 %v533
    %v3687 = vunpack.c.h.b16 %v533
    %v3688 = vunpack.c.l.b16 %v534
    %v3689 = vunpack.c.h.b16 %v534
    %v3690 = vunpack.c.l.b16 %v535
    %v3691 = vunpack.c.h.b16 %v535
    %v3692 = vunpack.c.l.b16 %v536
    %v3693 = vunpack.c.h.b16 %v536
    %v3694 = vunpack.c.l.b16 %v537
    %v3695 = vunpack.c.h.b16 %v537
    %v3696 = vunpack.c.l.b16 %v538
    %v3697 = vunpack.c.h.b16 %v538
    %v3698 = vunpack.c.l.b16 %v539
    %v3699 = vunpack.c.h.b16 %v539
    %v3700 = vunpack.c.l.b16 %v540
    %v3701 = vunpack.c.h.b16 %v540
    %v3702 = vunpack.c.l.b16 %v541
    %v3703 = vunpack.c.h.b16 %v541
    %v3704 = vunpack.c.l.b16 %v542
    %v3705 = vunpack.c.h.b16 %v542
    %v3706 = vunpack.c.l.b16 %v543
    %v3707 = vunpack.c.h.b16 %v543
    %v3708 = vunpack.c.l.b16 %v544
    %v3709 = vunpack.c.h.b16 %v544
    %v3710 = vunpack.c.l.b16 %v545
    %v3711 = vunpack.c.h.b16 %v545
    %v3712 = vunpack.c.l.b16 %v546
    %v3713 = vunpack.c.h.b16 %v546
    %v3714 = vunpack.c.l.b16 %v547
    %v3715 = vunpack.c.h.b16 %v547
    %v3716 = vunpack.c.l.b16 %v548
    %v3717 = vunpack.c.h.b16 %v548
    %v3718 = vunpack.c.l.b16 %v549
    %v3719 = vunpack.c.h.b16 %v549
    %v3720 = vunpack.c.l.b16 %v550
    %v3721 = vunpack.c.h.b16 %v550
    %v3722 = vunpack.c.l.b16 %v551
    %v3723 = vunpack.c.h.b16 %v551
    %v3724 = vunpack.c.l.b16 %v552
    %v3725 = vunpack.c.h.b16 %v552
    %v3726 = vunpack.c.l.b16 %v553
    %v3727 = vunpack.c.h.b16 %v553
    %v3728 = vunpack.c.l.b16 %v554
    %v3729 = vunpack.c.h.b16 %v554
    %v3730 = vunpack.c.l.b16 %v555
    %v3731 = vunpack.c.h.b16 %v555
    %v3732 = vunpack.c.l.b16 %v556
    %v3733 = vunpack.c.h.b16 %v556
    %v3734 = vunpack.c.l.b16 %v557
    %v3735 = vunpack.c.h.b16 %v557
    %v3736 = vunpack.c.l.b16 %v558
    %v3737 = vunpack.c.h.b16 %v558
    %v3738 = vunpack.c.l.b16 %v559
    %v3739 = vunpack.c.h.b16 %v559
    %v3740 = vunpack.c.l.b16 %v560
    %v3741 = vunpack.c.h.b16 %v560
    %v3742 = vunpack.c.l.b16 %v561
    %v3743 = vunpack.c.h.b16 %v561
    %v3744 = vunpack.c.l.b16 %v562
    %v3745 = vunpack.c.h.b16 %v562
    %v3746 = vunpack.c.l.b16 %v563
    %v3747 = vunpack.c.h.b16 %v563
    %v3748 = vunpack.c.l.b16 %v564
    %v3749 = vunpack.c.h.b16 %v564
    %v3750 = vunpack.c.l.b16 %v565
    %v3751 = vunpack.c.h.b16 %v565
    %v3752 = vunpack.c.l.b16 %v566
    %v3753 = vunpack.c.h.b16 %v566
    %v3754 = vunpack.c.l.b16 %v567
    %v3755 = vunpack.c.h.b16 %v567
    %v3756 = vunpack.c.l.b16 %v568
    %v3757 = vunpack.c.h.b16 %v568
    %v3758 = vunpack.c.l.b16 %v569
    %v3759 = vunpack.c.h.b16 %v569
    %v3760 = vunpack.c.l.b16 %v570
    %v3761 = vunpack.c.h.b16 %v570
    %v3762 = vunpack.c.l.b16 %v571
    %v3763 = vunpack.c.h.b16 %v571
    %v3764 = vunpack.c.l.b16 %v572
    %v3765 = vunpack.c.h.b16 %v572
    %v3766 = vunpack.c.l.b16 %v573
    %v3767 = vunpack.c.h.b16 %v573
    %v3768 = vunpack.c.l.b16 %v574
    %v3769 = vunpack.c.h.b16 %v574
    %v3770 = vunpack.c.l.b16 %v575
    %v3771 = vunpack.c.h.b16 %v575
    %v3772 = vunpack.c.l.b16 %v576
    %v3773 = vunpack.c.h.b16 %v576
    %v3774 = vunpack.c.l.b16 %v577
    %v3775 = vunpack.c.h.b16 %v577
    %v3776 = vunpack.c.l.b16 %v578
    %v3777 = vunpack.c.h.b16 %v578
    %v3778 = vunpack.c.l.b16 %v579
    %v3779 = vunpack.c.h.b16 %v579
    %v3780 = vunpack.c.l.b16 %v580
    %v3781 = vunpack.c.h.b16 %v580
    %v3782 = vunpack.c.l.b16 %v581
    %v3783 = vunpack.c.h.b16 %v581
    %v3784 = vunpack.c.l.b16 %v582
    %v3785 = vunpack.c.h.b16 %v582
    %v3786 = vunpack.c.l.b16 %v583
    %v3787 = vunpack.c.h.b16 %v583
    %v3788 = vunpack.c.l.b16 %v584
    %v3789 = vunpack.c.h.b16 %v584
    %v3790 = vunpack.c.l.b16 %v585
    %v3791 = vunpack.c.h.b16 %v585
    %v3792 = vunpack.c.l.b16 %v586
    %v3793 = vunpack.c.h.b16 %v586
    %v3794 = vunpack.c.l.b16 %v587
    %v3795 = vunpack.c.h.b16 %v587
    %v3796 = vunpack.c.l.b16 %v588
    %v3797 = vunpack.c.h.b16 %v588
    %v3798 = vunpack.c.l.b16 %v589
    %v3799 = vunpack.c.h.b16 %v589
    %v3800 = vunpack.c.l.b16 %v590
    %v3801 = vunpack.c.h.b16 %v590
    %v3802 = vunpack.c.l.b16 %v591
    %v3803 = vunpack.c.h.b16 %v591
    %v3804 = vunpack.c.l.b16 %v592
    %v3805 = vunpack.c.h.b16 %v592
    %v3806 = vunpack.c.l.b16 %v593
    %v3807 = vunpack.c.h.b16 %v593
    %v3808 = vunpack.c.l.b16 %v594
    %v3809 = vunpack.c.h.b16 %v594
    %v3810 = vunpack.c.l.b16 %v595
    %v3811 = vunpack.c.h.b16 %v595
    %v3812 = vunpack.c.l.b16 %v596
    %v3813 = vunpack.c.h.b16 %v596
    %v3814 = vunpack.c.l.b16 %v597
    %v3815 = vunpack.c.h.b16 %v597
    %v3816 = vunpack.c.l.b16 %v598
    %v3817 = vunpack.c.h.b16 %v598
    %v3818 = vunpack.c.l.b16 %v599
    %v3819 = vunpack.c.h.b16 %v599
    %v3820 = vunpack.c.l.b16 %v600
    %v3821 = vunpack.c.h.b16 %v600
    %v3822 = vunpack.c.l.b16 %v601
    %v3823 = vunpack.c.h.b16 %v601
    %v3824 = vunpack.c.l.b16 %v602
    %v3825 = vunpack.c.h.b16 %v602
    %v3826 = vunpack.c.l.b16 %v603
    %v3827 = vunpack.c.h.b16 %v603
    %v3828 = vunpack.c.l.b16 %v604
    %v3829 = vunpack.c.h.b16 %v604
    %v3830 = vunpack.c.l.b16 %v605
    %v3831 = vunpack.c.h.b16 %v605
    %v3832 = vunpack.c.l.b16 %v606
    %v3833 = vunpack.c.h.b16 %v606
    %v3834 = vunpack.c.l.b16 %v607
    %v3835 = vunpack.c.h.b16 %v607
    %v3836 = vunpack.c.l.b16 %v608
    %v3837 = vunpack.c.h.b16 %v608
    %v3838 = vunpack.c.l.b16 %v609
    %v3839 = vunpack.c.h.b16 %v609
    %v3840 = vunpack.c.l.b16 %v610
    %v3841 = vunpack.c.h.b16 %v610
    %v3842 = vunpack.c.l.b16 %v611
    %v3843 = vunpack.c.h.b16 %v611
    %v3844 = vunpack.c.l.b16 %v612
    %v3845 = vunpack.c.h.b16 %v612
    %v3846 = vunpack.c.l.b16 %v613
    %v3847 = vunpack.c.h.b16 %v613
    %v3848 = vunpack.c.l.b16 %v614
    %v3849 = vunpack.c.h.b16 %v614
    %v3850 = vunpack.c.l.b16 %v615
    %v3851 = vunpack.c.h.b16 %v615
    %v3852 = vunpack.c.l.b16 %v616
    %v3853 = vunpack.c.h.b16 %v616
    %v3854 = vunpack.c.l.b16 %v617
    %v3855 = vunpack.c.h.b16 %v617
    %v3856 = vunpack.c.l.b16 %v618
    %v3857 = vunpack.c.h.b16 %v618
    %v3858 = vunpack.c.l.b16 %v619
    %v3859 = vunpack.c.h.b16 %v619
    %v3860 = vunpack.c.l.b16 %v620
    %v3861 = vunpack.c.h.b16 %v620
    %v3862 = vunpack.c.l.b16 %v621
    %v3863 = vunpack.c.h.b16 %v621
    %v3864 = vunpack.c.l.b16 %v622
    %v3865 = vunpack.c.h.b16 %v622
    %v3866 = vunpack.c.l.b16 %v623
    %v3867 = vunpack.c.h.b16 %v623
    %v3868 = vunpack.c.l.b16 %v624
    %v3869 = vunpack.c.h.b16 %v624
    %v3870 = vunpack.c.l.b16 %v625
    %v3871 = vunpack.c.h.b16 %v625
    %v3872 = vunpack.c.l.b16 %v626
    %v3873 = vunpack.c.h.b16 %v626
    %v3874 = vunpack.c.l.b16 %v627
    %v3875 = vunpack.c.h.b16 %v627
    %v3876 = vunpack.c.l.b16 %v628
    %v3877 = vunpack.c.h.b16 %v628
    %v3878 = vunpack.c.l.b16 %v629
    %v3879 = vunpack.c.h.b16 %v629
    %v3880 = vunpack.c.l.b16 %v630
    %v3881 = vunpack.c.h.b16 %v630
    %v3882 = vunpack.c.l.b16 %v631
    %v3883 = vunpack.c.h.b16 %v631
    %v3884 = vunpack.c.l.b16 %v632
    %v3885 = vunpack.c.h.b16 %v632
    %v3886 = vunpack.c.l.b16 %v633
    %v3887 = vunpack.c.h.b16 %v633
    %v3888 = vunpack.c.l.b16 %v634
    %v3889 = vunpack.c.h.b16 %v634
    %v3890 = vunpack.c.l.b16 %v635
    %v3891 = vunpack.c.h.b16 %v635
    %v3892 = vunpack.c.l.b16 %v636
    %v3893 = vunpack.c.h.b16 %v636
    %v3894 = vunpack.c.l.b16 %v637
    %v3895 = vunpack.c.h.b16 %v637
    %v3896 = vunpack.c.l.b16 %v638
    %v3897 = vunpack.c.h.b16 %v638
    %v3898 = vunpack.c.l.b16 %v639
    %v3899 = vunpack.c.h.b16 %v639
    %v3900 = vunpack.c.l.b16 %v640
    %v3901 = vunpack.c.h.b16 %v640
    %v3902 = vunpack.c.l.b16 %v641
    %v3903 = vunpack.c.h.b16 %v641
    %v3904 = vunpack.c.l.b16 %v642
    %v3905 = vunpack.c.h.b16 %v642
    %v3906 = vunpack.c.l.b16 %v643
    %v3907 = vunpack.c.h.b16 %v643
    %v3908 = vunpack.c.l.b16 %v644
    %v3909 = vunpack.c.h.b16 %v644
    %v3910 = vunpack.c.l.b16 %v645
    %v3911 = vunpack.c.h.b16 %v645
    %v3912 = vunpack.c.l.b16 %v646
    %v3913 = vunpack.c.h.b16 %v646
    %v3914 = vunpack.c.l.b16 %v647
    %v3915 = vunpack.c.h.b16 %v647
    %v3916 = vunpack.c.l.b16 %v648
    %v3917 = vunpack.c.h.b16 %v648
    %v3918 = vunpack.c.l.b16 %v649
    %v3919 = vunpack.c.h.b16 %v649
    %v3920 = vunpack.c.l.b16 %v650
    %v3921 = vunpack.c.h.b16 %v650
    %v3922 = vunpack.c.l.b16 %v651
    %v3923 = vunpack.c.h.b16 %v651
    %v3924 = vunpack.c.l.b16 %v652
    %v3925 = vunpack.c.h.b16 %v652
    %v3926 = vunpack.c.l.b16 %v653
    %v3927 = vunpack.c.h.b16 %v653
    %v3928 = vunpack.c.l.b16 %v654
    %v3929 = vunpack.c.h.b16 %v654
    %v3930 = vunpack.c.l.b16 %v655
    %v3931 = vunpack.c.h.b16 %v655
    %v3932 = vunpack.c.l.b16 %v656
    %v3933 = vunpack.c.h.b16 %v656
    %v3934 = vunpack.c.l.b16 %v657
    %v3935 = vunpack.c.h.b16 %v657
    %v3936 = vunpack.c.l.b16 %v658
    %v3937 = vunpack.c.h.b16 %v658
    %v3938 = vunpack.c.l.b16 %v659
    %v3939 = vunpack.c.h.b16 %v659
    %v3940 = vunpack.c.l.b16 %v660
    %v3941 = vunpack.c.h.b16 %v660
    %v3942 = vunpack.c.l.b16 %v661
    %v3943 = vunpack.c.h.b16 %v661
    %v3944 = vunpack.c.l.b16 %v662
    %v3945 = vunpack.c.h.b16 %v662
    %v3946 = vunpack.c.l.b16 %v663
    %v3947 = vunpack.c.h.b16 %v663
    %v3948 = vunpack.c.l.b16 %v664
    %v3949 = vunpack.c.h.b16 %v664
    %v3950 = vunpack.c.l.b16 %v665
    %v3951 = vunpack.c.h.b16 %v665
    %v3952 = vunpack.c.l.b16 %v666
    %v3953 = vunpack.c.h.b16 %v666
    %v3954 = vunpack.c.l.b16 %v667
    %v3955 = vunpack.c.h.b16 %v667
    %v3956 = vunpack.c.l.b16 %v668
    %v3957 = vunpack.c.h.b16 %v668
    %v3958 = vunpack.c.l.b16 %v669
    %v3959 = vunpack.c.h.b16 %v669
    %v3960 = vunpack.c.l.b16 %v670
    %v3961 = vunpack.c.h.b16 %v670
    %v3962 = vunpack.c.l.b16 %v671
    %v3963 = vunpack.c.h.b16 %v671
    %v3964 = vunpack.c.l.b16 %v672
    %v3965 = vunpack.c.h.b16 %v672
    %v3966 = vunpack.c.l.b16 %v673
    %v3967 = vunpack.c.h.b16 %v673
    %v3968 = vunpack.c.l.b16 %v674
    %v3969 = vunpack.c.h.b16 %v674
    %v3970 = vunpack.c.l.b16 %v675
    %v3971 = vunpack.c.h.b16 %v675
    %v3972 = vunpack.c.l.b16 %v676
    %v3973 = vunpack.c.h.b16 %v676
    %v3974 = vunpack.c.l.b16 %v677
    %v3975 = vunpack.c.h.b16 %v677
    %v3976 = vunpack.c.l.b16 %v678
    %v3977 = vunpack.c.h.b16 %v678
    %v3978 = vunpack.c.l.b16 %v679
    %v3979 = vunpack.c.h.b16 %v679
    %v3980 = vunpack.c.l.b16 %v680
    %v3981 = vunpack.c.h.b16 %v680
    %v3982 = vunpack.c.l.b16 %v681
    %v3983 = vunpack.c.h.b16 %v681
    %v3984 = vunpack.c.l.b16 %v682
    %v3985 = vunpack.c.h.b16 %v682
    %v3986 = vunpack.c.l.b16 %v683
    %v3987 = vunpack.c.h.b16 %v683
    %v3988 = vunpack.c.l.b16 %v684
    %v3989 = vunpack.c.h.b16 %v684
    %v3990 = vunpack.c.l.b16 %v685
    %v3991 = vunpack.c.h.b16 %v685
    %v3992 = vunpack.c.l.b16 %v686
    %v3993 = vunpack.c.h.b16 %v686
    %v3994 = vunpack.c.l.b16 %v687
    %v3995 = vunpack.c.h.b16 %v687
    %v3996 = vunpack.c.l.b16 %v688
    %v3997 = vunpack.c.h.b16 %v688
    %v3998 = vunpack.c.l.b16 %v689
    %v3999 = vunpack.c.h.b16 %v689
    %v4000 = vunpack.c.l.b16 %v690
    %v4001 = vunpack.c.h.b16 %v690
    %v4002 = vunpack.c.l.b16 %v691
    %v4003 = vunpack.c.h.b16 %v691
    %v4004 = vunpack.c.l.b16 %v692
    %v4005 = vunpack.c.h.b16 %v692
    %v4006 = vunpack.c.l.b16 %v693
    %v4007 = vunpack.c.h.b16 %v693
    %v4008 = vunpack.c.l.b16 %v694
    %v4009 = vunpack.c.h.b16 %v694
    %v4010 = vunpack.c.l.b16 %v695
    %v4011 = vunpack.c.h.b16 %v695
    %v4012 = vunpack.c.l.b16 %v696
    %v4013 = vunpack.c.h.b16 %v696
    %v4014 = vunpack.c.l.b16 %v697
    %v4015 = vunpack.c.h.b16 %v697
    %v4016 = vunpack.c.l.b16 %v698
    %v4017 = vunpack.c.h.b16 %v698
    %v4018 = vunpack.c.l.b16 %v699
    %v4019 = vunpack.c.h.b16 %v699
    %v4020 = vunpack.c.l.b16 %v700
    %v4021 = vunpack.c.h.b16 %v700
    %v4022 = vunpack.c.l.b16 %v701
    %v4023 = vunpack.c.h.b16 %v701
    %v4024 = vunpack.c.l.b16 %v702
    %v4025 = vunpack.c.h.b16 %v702
    %v4026 = vunpack.c.l.b16 %v703
    %v4027 = vunpack.c.h.b16 %v703
    %v4028 = vunpack.c.l.b16 %v704
    %v4029 = vunpack.c.h.b16 %v704
    %v4030 = vunpack.c.l.b16 %v705
    %v4031 = vunpack.c.h.b16 %v705
    %v4032 = vunpack.c.l.b16 %v706
    %v4033 = vunpack.c.h.b16 %v706
    %v4034 = vunpack.c.l.b16 %v707
    %v4035 = vunpack.c.h.b16 %v707
    %v4036 = vunpack.c.l.b16 %v708
    %v4037 = vunpack.c.h.b16 %v708
    %v4038 = vunpack.c.l.b16 %v709
    %v4039 = vunpack.c.h.b16 %v709
    %v4040 = vunpack.c.l.b16 %v710
    %v4041 = vunpack.c.h.b16 %v710
    %v4042 = vunpack.c.l.b16 %v711
    %v4043 = vunpack.c.h.b16 %v711
    %v4044 = vunpack.c.l.b16 %v712
    %v4045 = vunpack.c.h.b16 %v712
    %v4046 = vunpack.c.l.b16 %v713
    %v4047 = vunpack.c.h.b16 %v713
    %v4048 = vunpack.c.l.b16 %v714
    %v4049 = vunpack.c.h.b16 %v714
    %v4050 = vunpack.c.l.b16 %v715
    %v4051 = vunpack.c.h.b16 %v715
    %v4052 = vunpack.c.l.b16 %v716
    %v4053 = vunpack.c.h.b16 %v716
    %v4054 = vunpack.c.l.b16 %v717
    %v4055 = vunpack.c.h.b16 %v717
    %v4056 = vunpack.c.l.b16 %v718
    %v4057 = vunpack.c.h.b16 %v718
    %v4058 = vunpack.c.l.b16 %v719
    %v4059 = vunpack.c.h.b16 %v719
    %v4060 = vunpack.c.l.b16 %v720
    %v4061 = vunpack.c.h.b16 %v720
    %v4062 = vunpack.c.l.b16 %v721
    %v4063 = vunpack.c.h.b16 %v721
    %v4064 = vunpack.c.l.b16 %v722
    %v4065 = vunpack.c.h.b16 %v722
    %v4066 = vunpack.c.l.b16 %v723
    %v4067 = vunpack.c.h.b16 %v723
    %v4068 = vunpack.c.l.b16 %v724
    %v4069 = vunpack.c.h.b16 %v724
    %v4070 = vunpack.c.l.b16 %v725
    %v4071 = vunpack.c.h.b16 %v725
    %v4072 = vunpack.c.l.b16 %v726
    %v4073 = vunpack.c.h.b16 %v726
    %v4074 = vunpack.c.l.b16 %v727
    %v4075 = vunpack.c.h.b16 %v727
    %v4076 = vunpack.c.l.b16 %v728
    %v4077 = vunpack.c.h.b16 %v728
    %v4078 = vunpack.c.l.b16 %v729
    %v4079 = vunpack.c.h.b16 %v729
    %v4080 = vunpack.c.l.b16 %v730
    %v4081 = vunpack.c.h.b16 %v730
    %v4082 = vunpack.c.l.b16 %v731
    %v4083 = vunpack.c.h.b16 %v731
    %v4084 = vunpack.c.l.b16 %v732
    %v4085 = vunpack.c.h.b16 %v732
    %v4086 = vunpack.c.l.b16 %v733
    %v4087 = vunpack.c.h.b16 %v733
    %v4088 = vunpack.c.l.b16 %v734
    %v4089 = vunpack.c.h.b16 %v734
    %v4090 = vunpack.c.l.b16 %v735
    %v4091 = vunpack.c.h.b16 %v735
    %v4092 = vunpack.c.l.b16 %v736
    %v4093 = vunpack.c.h.b16 %v736
    %v4094 = vunpack.c.l.b16 %v737
    %v4095 = vunpack.c.h.b16 %v737
    %v4096 = vunpack.c.l.b16 %v738
    %v4097 = vunpack.c.h.b16 %v738
    %v4098 = vunpack.c.l.b16 %v739
    %v4099 = vunpack.c.h.b16 %v739
    %v4100 = vunpack.c.l.b16 %v740
    %v4101 = vunpack.c.h.b16 %v740
    %v4102 = vunpack.c.l.b16 %v741
    %v4103 = vunpack.c.h.b16 %v741
    %v4104 = vunpack.c.l.b16 %v742
    %v4105 = vunpack.c.h.b16 %v742
    %v4106 = vunpack.c.l.b16 %v743
    %v4107 = vunpack.c.h.b16 %v743
    %v4108 = vunpack.c.l.b16 %v744
    %v4109 = vunpack.c.h.b16 %v744
    %v4110 = vunpack.c.l.b16 %v745
    %v4111 = vunpack.c.h.b16 %v745
    %v4112 = vunpack.c.l.b16 %v746
    %v4113 = vunpack.c.h.b16 %v746
    %v4114 = vunpack.c.l.b16 %v747
    %v4115 = vunpack.c.h.b16 %v747
    %v4116 = vunpack.c.l.b16 %v748
    %v4117 = vunpack.c.h.b16 %v748
    %v4118 = vunpack.c.l.b16 %v749
    %v4119 = vunpack.c.h.b16 %v749
    %v4120 = vunpack.c.l.b16 %v750
    %v4121 = vunpack.c.h.b16 %v750
    %v4122 = vunpack.c.l.b16 %v751
    %v4123 = vunpack.c.h.b16 %v751
    %v4124 = vunpack.c.l.b16 %v752
    %v4125 = vunpack.c.h.b16 %v752
    %v4126 = vunpack.c.l.b16 %v753
    %v4127 = vunpack.c.h.b16 %v753
    %v4128 = vunpack.c.l.b16 %v754
    %v4129 = vunpack.c.h.b16 %v754
    %v4130 = vunpack.c.l.b16 %v755
    %v4131 = vunpack.c.h.b16 %v755
    %v4132 = vunpack.c.l.b16 %v756
    %v4133 = vunpack.c.h.b16 %v756
    %v4134 = vunpack.c.l.b16 %v757
    %v4135 = vunpack.c.h.b16 %v757
    %v4136 = vunpack.c.l.b16 %v758
    %v4137 = vunpack.c.h.b16 %v758
    %v4138 = vunpack.c.l.b16 %v759
    %v4139 = vunpack.c.h.b16 %v759
    %v4140 = vunpack.c.l.b16 %v760
    %v4141 = vunpack.c.h.b16 %v760
    %v4142 = vunpack.c.l.b16 %v761
    %v4143 = vunpack.c.h.b16 %v761
    %v4144 = vunpack.c.l.b16 %v762
    %v4145 = vunpack.c.h.b16 %v762
    %v4146 = vunpack.c.l.b16 %v763
    %v4147 = vunpack.c.h.b16 %v763
    %v4148 = vunpack.c.l.b16 %v764
    %v4149 = vunpack.c.h.b16 %v764
    %v4150 = vunpack.c.l.b16 %v765
    %v4151 = vunpack.c.h.b16 %v765
    %v4152 = vunpack.c.l.b16 %v766
    %v4153 = vunpack.c.h.b16 %v766
    %v4154 = vunpack.c.l.b16 %v767
    %v4155 = vunpack.c.h.b16 %v767
    %v4156 = vunpack.c.l.b16 %v768
    %v4157 = vunpack.c.h.b16 %v768
    %v4158 = vunpack.c.l.b16 %v769
    %v4159 = vunpack.c.h.b16 %v769
    %v4160 = vunpack.c.l.b16 %v770
    %v4161 = vunpack.c.h.b16 %v770
    %v4162 = vunpack.c.l.b16 %v771
    %v4163 = vunpack.c.h.b16 %v771
    %v4164 = vunpack.c.l.b16 %v772
    %v4165 = vunpack.c.h.b16 %v772
    %v4166 = vunpack.c.l.b16 %v773
    %v4167 = vunpack.c.h.b16 %v773
    %v4168 = vunpack.c.l.b16 %v774
    %v4169 = vunpack.c.h.b16 %v774
    %v4170 = vunpack.c.l.b16 %v775
    %v4171 = vunpack.c.h.b16 %v775
    %v4172 = vunpack.c.l.b16 %v776
    %v4173 = vunpack.c.h.b16 %v776
    %v4174 = vunpack.c.l.b16 %v777
    %v4175 = vunpack.c.h.b16 %v777
    %v4176 = vunpack.c.l.b16 %v778
    %v4177 = vunpack.c.h.b16 %v778
    %v4178 = vunpack.c.l.b16 %v779
    %v4179 = vunpack.c.h.b16 %v779
    %v4180 = vunpack.c.l.b16 %v780
    %v4181 = vunpack.c.h.b16 %v780
    %v4182 = vunpack.c.l.b16 %v781
    %v4183 = vunpack.c.h.b16 %v781
    %v4184 = vunpack.c.l.b16 %v782
    %v4185 = vunpack.c.h.b16 %v782
    %v4186 = vunpack.c.l.b16 %v783
    %v4187 = vunpack.c.h.b16 %v783
    %v4188 = vunpack.c.l.b16 %v784
    %v4189 = vunpack.c.h.b16 %v784
    %v4190 = vunpack.c.l.b16 %v785
    %v4191 = vunpack.c.h.b16 %v785
    %v4192 = vunpack.c.l.b16 %v786
    %v4193 = vunpack.c.h.b16 %v786
    %v4194 = vunpack.c.l.b16 %v787
    %v4195 = vunpack.c.h.b16 %v787
    %v4196 = vunpack.c.l.b16 %v788
    %v4197 = vunpack.c.h.b16 %v788
    %v4198 = vunpack.c.l.b16 %v789
    %v4199 = vunpack.c.h.b16 %v789
    %v4200 = vunpack.c.l.b16 %v790
    %v4201 = vunpack.c.h.b16 %v790
    %v4202 = vunpack.c.l.b16 %v791
    %v4203 = vunpack.c.h.b16 %v791
    %v4204 = vunpack.c.l.b16 %v792
    %v4205 = vunpack.c.h.b16 %v792
    %v4206 = vunpack.c.l.b16 %v793
    %v4207 = vunpack.c.h.b16 %v793
    %v4208 = vunpack.c.l.b16 %v794
    %v4209 = vunpack.c.h.b16 %v794
    %v4210 = vunpack.c.l.b16 %v795
    %v4211 = vunpack.c.h.b16 %v795
    %v4212 = vunpack.c.l.b16 %v796
    %v4213 = vunpack.c.h.b16 %v796
    %v4214 = vunpack.c.l.b16 %v797
    %v4215 = vunpack.c.h.b16 %v797
    %v4216 = vunpack.c.l.b16 %v798
    %v4217 = vunpack.c.h.b16 %v798
    %v4218 = vunpack.c.l.b16 %v799
    %v4219 = vunpack.c.h.b16 %v799
    %v4220 = vunpack.c.l.b16 %v800
    %v4221 = vunpack.c.h.b16 %v800
    %v4222 = vunpack.c.l.b16 %v801
    %v4223 = vunpack.c.h.b16 %v801
    %v4224 = vunpack.c.l.b16 %v802
    %v4225 = vunpack.c.h.b16 %v802
    %v4226 = vunpack.c.l.b16 %v803
    %v4227 = vunpack.c.h.b16 %v803
    %v4228 = vunpack.c.l.b16 %v804
    %v4229 = vunpack.c.h.b16 %v804
    %v4230 = vunpack.c.l.b16 %v805
    %v4231 = vunpack.c.h.b16 %v805
    %v4232 = vunpack.c.l.b16 %v806
    %v4233 = vunpack.c.h.b16 %v806
    %v4234 = vunpack.c.l.b16 %v807
    %v4235 = vunpack.c.h.b16 %v807
    %v4236 = vunpack.c.l.b16 %v808
    %v4237 = vunpack.c.h.b16 %v808
    %v4238 = vunpack.c.l.b16 %v809
    %v4239 = vunpack.c.h.b16 %v809
    %v4240 = vunpack.c.l.b16 %v810
    %v4241 = vunpack.c.h.b16 %v810
    %v4242 = vunpack.c.l.b16 %v811
    %v4243 = vunpack.c.h.b16 %v811
    %v4244 = vunpack.c.l.b16 %v812
    %v4245 = vunpack.c.h.b16 %v812
    %v4246 = vunpack.c.l.b16 %v813
    %v4247 = vunpack.c.h.b16 %v813
    %v4248 = vunpack.c.l.b16 %v814
    %v4249 = vunpack.c.h.b16 %v814
    %v4250 = vunpack.c.l.b16 %v815
    %v4251 = vunpack.c.h.b16 %v815
    %v4252 = vunpack.c.l.b16 %v816
    %v4253 = vunpack.c.h.b16 %v816
    %v4254 = vunpack.c.l.b16 %v817
    %v4255 = vunpack.c.h.b16 %v817
    %v4256 = vunpack.c.l.b16 %v818
    %v4257 = vunpack.c.h.b16 %v818
    %v4258 = vunpack.c.l.b16 %v819
    %v4259 = vunpack.c.h.b16 %v819
    %v4260 = vunpack.c.l.b16 %v820
    %v4261 = vunpack.c.h.b16 %v820
    %v4262 = vunpack.c.l.b16 %v821
    %v4263 = vunpack.c.h.b16 %v821
    %v4264 = vunpack.c.l.b16 %v822
    %v4265 = vunpack.c.h.b16 %v822
    %v4266 = vunpack.c.l.b16 %v823
    %v4267 = vunpack.c.h.b16 %v823
    %v4268 = vunpack.c.l.b16 %v824
    %v4269 = vunpack.c.h.b16 %v824
    %v4270 = vunpack.c.l.b16 %v825
    %v4271 = vunpack.c.h.b16 %v825
    %v4272 = vunpack.c.l.b16 %v826
    %v4273 = vunpack.c.h.b16 %v826
    %v4274 = vunpack.c.l.b16 %v827
    %v4275 = vunpack.c.h.b16 %v827
    %v4276 = vunpack.c.l.b16 %v828
    %v4277 = vunpack.c.h.b16 %v828
    %v4278 = vunpack.c.l.b16 %v829
    %v4279 = vunpack.c.h.b16 %v829
    %v4280 = vunpack.c.l.b16 %v830
    %v4281 = vunpack.c.h.b16 %v830
    %v4282 = vunpack.c.l.b16 %v831
    %v4283 = vunpack.c.h.b16 %v831
    %v4284 = vunpack.c.l.b16 %v832
    %v4285 = vunpack.c.h.b16 %v832
    %v4286 = vunpack.c.l.b16 %v833
    %v4287 = vunpack.c.h.b16 %v833
    %v4288 = vunpack.c.l.b16 %v834
    %v4289 = vunpack.c.h.b16 %v834
    %v4290 = vunpack.c.l.b16 %v835
    %v4291 = vunpack.c.h.b16 %v835
    %v4292 = vunpack.c.l.b16 %v836
    %v4293 = vunpack.c.h.b16 %v836
    %v4294 = vunpack.c.l.b16 %v837
    %v4295 = vunpack.c.h.b16 %v837
    %v4296 = vunpack.c.l.b16 %v838
    %v4297 = vunpack.c.h.b16 %v838
    %v4298 = vunpack.c.l.b16 %v839
    %v4299 = vunpack.c.h.b16 %v839
    %v4300 = vunpack.c.l.b16 %v840
    %v4301 = vunpack.c.h.b16 %v840
    %v4302 = vunpack.c.l.b16 %v841
    %v4303 = vunpack.c.h.b16 %v841
    %v4304 = vunpack.c.l.b16 %v842
    %v4305 = vunpack.c.h.b16 %v842
    %v4306 = vunpack.c.l.b16 %v843
    %v4307 = vunpack.c.h.b16 %v843
    %v4308 = vunpack.c.l.b16 %v844
    %v4309 = vunpack.c.h.b16 %v844
    %v4310 = vunpack.c.l.b16 %v845
    %v4311 = vunpack.c.h.b16 %v845
    %v4312 = vunpack.c.l.b16 %v846
    %v4313 = vunpack.c.h.b16 %v846
    %v4314 = vunpack.c.l.b16 %v847
    %v4315 = vunpack.c.h.b16 %v847
    %v4316 = vunpack.c.l.b16 %v848
    %v4317 = vunpack.c.h.b16 %v848
    %v4318 = vunpack.c.l.b16 %v849
    %v4319 = vunpack.c.h.b16 %v849
    %v4320 = vunpack.c.l.b16 %v850
    %v4321 = vunpack.c.h.b16 %v850
    %v4322 = vunpack.c.l.b16 %v851
    %v4323 = vunpack.c.h.b16 %v851
    %v4324 = vunpack.c.l.b16 %v852
    %v4325 = vunpack.c.h.b16 %v852
    %v4326 = vunpack.c.l.b16 %v853
    %v4327 = vunpack.c.h.b16 %v853
    %v4328 = vunpack.c.l.b16 %v854
    %v4329 = vunpack.c.h.b16 %v854
    %v4330 = vunpack.c.l.b16 %v855
    %v4331 = vunpack.c.h.b16 %v855
    %v4332 = vunpack.c.l.b16 %v856
    %v4333 = vunpack.c.h.b16 %v856
    %v4334 = vunpack.c.l.b16 %v857
    %v4335 = vunpack.c.h.b16 %v857
    %v4336 = vunpack.c.l.b16 %v858
    %v4337 = vunpack.c.h.b16 %v858
    %v4338 = vunpack.c.l.b16 %v859
    %v4339 = vunpack.c.h.b16 %v859
    %v4340 = vunpack.c.l.b16 %v860
    %v4341 = vunpack.c.h.b16 %v860
    %v4342 = vunpack.c.l.b16 %v861
    %v4343 = vunpack.c.h.b16 %v861
    %v4344 = vunpack.c.l.b16 %v862
    %v4345 = vunpack.c.h.b16 %v862
    %v4346 = vunpack.c.l.b16 %v863
    %v4347 = vunpack.c.h.b16 %v863
    %v4348 = vunpack.c.l.b16 %v864
    %v4349 = vunpack.c.h.b16 %v864
    %v4350 = vunpack.c.l.b16 %v865
    %v4351 = vunpack.c.h.b16 %v865
    %v4352 = vunpack.c.l.b16 %v866
    %v4353 = vunpack.c.h.b16 %v866
    %v4354 = vunpack.c.l.b16 %v867
    %v4355 = vunpack.c.h.b16 %v867
    %v4356 = vunpack.c.l.b16 %v868
    %v4357 = vunpack.c.h.b16 %v868
    %v4358 = vunpack.c.l.b16 %v869
    %v4359 = vunpack.c.h.b16 %v869
    %v4360 = vunpack.c.l.b16 %v870
    %v4361 = vunpack.c.h.b16 %v870
    %v4362 = vunpack.c.l.b16 %v871
    %v4363 = vunpack.c.h.b16 %v871
    %v4364 = vunpack.c.l.b16 %v872
    %v4365 = vunpack.c.h.b16 %v872
    %v4366 = vunpack.c.l.b16 %v873
    %v4367 = vunpack.c.h.b16 %v873
    %v4368 = vunpack.c.l.b16 %v874
    %v4369 = vunpack.c.h.b16 %v874
    %v4370 = vunpack.c.l.b16 %v875
    %v4371 = vunpack.c.h.b16 %v875
    %v4372 = vunpack.c.l.b16 %v876
    %v4373 = vunpack.c.h.b16 %v876
    %v4374 = vunpack.c.l.b16 %v877
    %v4375 = vunpack.c.h.b16 %v877
    %v4376 = vunpack.c.l.b16 %v878
    %v4377 = vunpack.c.h.b16 %v878
    %v4378 = vunpack.c.l.b16 %v879
    %v4379 = vunpack.c.h.b16 %v879
    %v4380 = vunpack.c.l.b16 %v880
    %v4381 = vunpack.c.h.b16 %v880
    %v4382 = vunpack.c.l.b16 %v881
    %v4383 = vunpack.c.h.b16 %v881
    %v4384 = vunpack.c.l.b16 %v882
    %v4385 = vunpack.c.h.b16 %v882
    %v4386 = vunpack.c.l.b16 %v883
    %v4387 = vunpack.c.h.b16 %v883
    %v4388 = vunpack.c.l.b16 %v884
    %v4389 = vunpack.c.h.b16 %v884
    %v4390 = vunpack.c.l.b16 %v885
    %v4391 = vunpack.c.h.b16 %v885
    %v4392 = vunpack.c.l.b16 %v886
    %v4393 = vunpack.c.h.b16 %v886
    %v4394 = vunpack.c.l.b16 %v887
    %v4395 = vunpack.c.h.b16 %v887
    %v4396 = vunpack.c.l.b16 %v888
    %v4397 = vunpack.c.h.b16 %v888
    %v4398 = vunpack.c.l.b16 %v889
    %v4399 = vunpack.c.h.b16 %v889
    %v4400 = vunpack.c.l.b16 %v890
    %v4401 = vunpack.c.h.b16 %v890
    %v4402 = vunpack.c.l.b16 %v891
    %v4403 = vunpack.c.h.b16 %v891
    %v4404 = vunpack.c.l.b16 %v892
    %v4405 = vunpack.c.h.b16 %v892
    %v4406 = vunpack.c.l.b16 %v893
    %v4407 = vunpack.c.h.b16 %v893
    %v4408 = vunpack.c.l.b16 %v894
    %v4409 = vunpack.c.h.b16 %v894
    %v4410 = vunpack.c.l.b16 %v895
    %v4411 = vunpack.c.h.b16 %v895
    %v4412 = vunpack.c.l.b16 %v896
    %v4413 = vunpack.c.h.b16 %v896
    %v4414 = vunpack.c.l.b16 %v897
    %v4415 = vunpack.c.h.b16 %v897
    %v4416 = vunpack.c.l.b16 %v898
    %v4417 = vunpack.c.h.b16 %v898
    %v4418 = vunpack.c.l.b16 %v899
    %v4419 = vunpack.c.h.b16 %v899
    %v4420 = vunpack.c.l.b16 %v900
    %v4421 = vunpack.c.h.b16 %v900
    %v4422 = vunpack.c.l.b16 %v901
    %v4423 = vunpack.c.h.b16 %v901
    %v4424 = vunpack.c.l.b16 %v902
    %v4425 = vunpack.c.h.b16 %v902
    %v4426 = vunpack.c.l.b16 %v903
    %v4427 = vunpack.c.h.b16 %v903
    %v4428 = vunpack.c.l.b16 %v904
    %v4429 = vunpack.c.h.b16 %v904
    %v4430 = vunpack.c.l.b16 %v905
    %v4431 = vunpack.c.h.b16 %v905
    %v4432 = vunpack.c.l.b16 %v906
    %v4433 = vunpack.c.h.b16 %v906
    %v4434 = vunpack.c.l.b16 %v907
    %v4435 = vunpack.c.h.b16 %v907
    %v4436 = vunpack.c.l.b16 %v908
    %v4437 = vunpack.c.h.b16 %v908
    %v4438 = vunpack.c.l.b16 %v909
    %v4439 = vunpack.c.h.b16 %v909
    %v4440 = vunpack.c.l.b16 %v910
    %v4441 = vunpack.c.h.b16 %v910
    %v4442 = vunpack.c.l.b16 %v911
    %v4443 = vunpack.c.h.b16 %v911
    %v4444 = vunpack.c.l.b16 %v912
    %v4445 = vunpack.c.h.b16 %v912
    %v4446 = vunpack.c.l.b16 %v913
    %v4447 = vunpack.c.h.b16 %v913
    %v4448 = vunpack.c.l.b16 %v914
    %v4449 = vunpack.c.h.b16 %v914
    %v4450 = vunpack.c.l.b16 %v915
    %v4451 = vunpack.c.h.b16 %v915
    %v4452 = vunpack.c.l.b16 %v916
    %v4453 = vunpack.c.h.b16 %v916
    %v4454 = vunpack.c.l.b16 %v917
    %v4455 = vunpack.c.h.b16 %v917
    %v4456 = vunpack.c.l.b16 %v918
    %v4457 = vunpack.c.h.b16 %v918
    %v4458 = vunpack.c.l.b16 %v919
    %v4459 = vunpack.c.h.b16 %v919
    %v4460 = vunpack.c.l.b16 %v920
    %v4461 = vunpack.c.h.b16 %v920
    %v4462 = vunpack.c.l.b16 %v921
    %v4463 = vunpack.c.h.b16 %v921
    %v4464 = vunpack.c.l.b16 %v922
    %v4465 = vunpack.c.h.b16 %v922
    %v4466 = vunpack.c.l.b16 %v923
    %v4467 = vunpack.c.h.b16 %v923
    %v4468 = vunpack.c.l.b16 %v924
    %v4469 = vunpack.c.h.b16 %v924
    %v4470 = vunpack.c.l.b16 %v925
    %v4471 = vunpack.c.h.b16 %v925
    %v4472 = vunpack.c.l.b16 %v926
    %v4473 = vunpack.c.h.b16 %v926
    %v4474 = vunpack.c.l.b16 %v927
    %v4475 = vunpack.c.h.b16 %v927
    %v4476 = vunpack.c.l.b16 %v928
    %v4477 = vunpack.c.h.b16 %v928
    %v4478 = vunpack.c.l.b16 %v929
    %v4479 = vunpack.c.h.b16 %v929
    %v4480 = vunpack.c.l.b16 %v930
    %v4481 = vunpack.c.h.b16 %v930
    %v4482 = vunpack.c.l.b16 %v931
    %v4483 = vunpack.c.h.b16 %v931
    %v4484 = vunpack.c.l.b16 %v932
    %v4485 = vunpack.c.h.b16 %v932
    %v4486 = vunpack.c.l.b16 %v933
    %v4487 = vunpack.c.h.b16 %v933
    %v4488 = vunpack.c.l.b16 %v934
    %v4489 = vunpack.c.h.b16 %v934
    %v4490 = vunpack.c.l.b16 %v935
    %v4491 = vunpack.c.h.b16 %v935
    %v4492 = vunpack.c.l.b16 %v936
    %v4493 = vunpack.c.h.b16 %v936
    %v4494 = vunpack.c.l.b16 %v937
    %v4495 = vunpack.c.h.b16 %v937
    %v4496 = vunpack.c.l.b16 %v938
    %v4497 = vunpack.c.h.b16 %v938
    %v4498 = vunpack.c.l.b16 %v939
    %v4499 = vunpack.c.h.b16 %v939
    %v4500 = vunpack.c.l.b16 %v940
    %v4501 = vunpack.c.h.b16 %v940
    %v4502 = vunpack.c.l.b16 %v941
    %v4503 = vunpack.c.h.b16 %v941
    %v4504 = vunpack.c.l.b16 %v942
    %v4505 = vunpack.c.h.b16 %v942
    %v4506 = vunpack.c.l.b16 %v943
    %v4507 = vunpack.c.h.b16 %v943
    %v4508 = vunpack.c.l.b16 %v944
    %v4509 = vunpack.c.h.b16 %v944
    %v4510 = vunpack.c.l.b16 %v945
    %v4511 = vunpack.c.h.b16 %v945
    %v4512 = vunpack.c.l.b16 %v946
    %v4513 = vunpack.c.h.b16 %v946
    %v4514 = vunpack.c.l.b16 %v947
    %v4515 = vunpack.c.h.b16 %v947
    %v4516 = vunpack.c.l.b16 %v948
    %v4517 = vunpack.c.h.b16 %v948
    %v4518 = vunpack.c.l.b16 %v949
    %v4519 = vunpack.c.h.b16 %v949
    %v4520 = vunpack.c.l.b16 %v950
    %v4521 = vunpack.c.h.b16 %v950
    %v4522 = vunpack.c.l.b16 %v951
    %v4523 = vunpack.c.h.b16 %v951
    %v4524 = vunpack.c.l.b16 %v952
    %v4525 = vunpack.c.h.b16 %v952
    %v4526 = vunpack.c.l.b16 %v953
    %v4527 = vunpack.c.h.b16 %v953
    %v4528 = vunpack.c.l.b16 %v954
    %v4529 = vunpack.c.h.b16 %v954
    %v4530 = vunpack.c.l.b16 %v955
    %v4531 = vunpack.c.h.b16 %v955
    %v4532 = vunpack.c.l.b16 %v956
    %v4533 = vunpack.c.h.b16 %v956
    %v4534 = vunpack.c.l.b16 %v957
    %v4535 = vunpack.c.h.b16 %v957
    %v4536 = vunpack.c.l.b16 %v958
    %v4537 = vunpack.c.h.b16 %v958
    %v4538 = vunpack.c.l.b16 %v959
    %v4539 = vunpack.c.h.b16 %v959
    %v4540 = vunpack.c.l.b16 %v960
    %v4541 = vunpack.c.h.b16 %v960
    %v4542 = vunpack.c.l.b16 %v961
    %v4543 = vunpack.c.h.b16 %v961
    %v4544 = vunpack.c.l.b16 %v962
    %v4545 = vunpack.c.h.b16 %v962
    %v4546 = vunpack.c.l.b16 %v963
    %v4547 = vunpack.c.h.b16 %v963
    %v4548 = vunpack.c.l.b16 %v964
    %v4549 = vunpack.c.h.b16 %v964
    %v4550 = vunpack.c.l.b16 %v965
    %v4551 = vunpack.c.h.b16 %v965
    %v4552 = vunpack.c.l.b16 %v966
    %v4553 = vunpack.c.h.b16 %v966
    %v4554 = vunpack.c.l.b16 %v967
    %v4555 = vunpack.c.h.b16 %v967
    %v4556 = vunpack.c.l.b16 %v968
    %v4557 = vunpack.c.h.b16 %v968
    %v4558 = vunpack.c.l.b16 %v969
    %v4559 = vunpack.c.h.b16 %v969
    %v4560 = vunpack.c.l.b16 %v970
    %v4561 = vunpack.c.h.b16 %v970
    %v4562 = vunpack.c.l.b16 %v971
    %v4563 = vunpack.c.h.b16 %v971
    %v4564 = vunpack.c.l.b16 %v972
    %v4565 = vunpack.c.h.b16 %v972
    %v4566 = vunpack.c.l.b16 %v973
    %v4567 = vunpack.c.h.b16 %v973
    %v4568 = vunpack.c.l.b16 %v974
    %v4569 = vunpack.c.h.b16 %v974
    %v4570 = vunpack.c.l.b16 %v975
    %v4571 = vunpack.c.h.b16 %v975
    %v4572 = vunpack.c.l.b16 %v976
    %v4573 = vunpack.c.h.b16 %v976
    %v4574 = vunpack.c.l.b16 %v977
    %v4575 = vunpack.c.h.b16 %v977
    %v4576 = vunpack.c.l.b16 %v978
    %v4577 = vunpack.c.h.b16 %v978
    %v4578 = vunpack.c.l.b16 %v979
    %v4579 = vunpack.c.h.b16 %v979
    %v4580 = vunpack.c.l.b16 %v980
    %v4581 = vunpack.c.h.b16 %v980
    %v4582 = vunpack.c.l.b16 %v981
    %v4583 = vunpack.c.h.b16 %v981
    %v4584 = vunpack.c.l.b16 %v982
    %v4585 = vunpack.c.h.b16 %v982
    %v4586 = vunpack.c.l.b16 %v983
    %v4587 = vunpack.c.h.b16 %v983
    %v4588 = vunpack.c.l.b16 %v984
    %v4589 = vunpack.c.h.b16 %v984
    %v4590 = vunpack.c.l.b16 %v985
    %v4591 = vunpack.c.h.b16 %v985
    %v4592 = vunpack.c.l.b16 %v986
    %v4593 = vunpack.c.h.b16 %v986
    %v4594 = vunpack.c.l.b16 %v987
    %v4595 = vunpack.c.h.b16 %v987
    %v4596 = vunpack.c.l.b16 %v988
    %v4597 = vunpack.c.h.b16 %v988
    %v4598 = vunpack.c.l.b16 %v989
    %v4599 = vunpack.c.h.b16 %v989
    %v4600 = vunpack.c.l.b16 %v990
    %v4601 = vunpack.c.h.b16 %v990
    %v4602 = vunpack.c.l.b16 %v991
    %v4603 = vunpack.c.h.b16 %v991
    %v4604 = vunpack.c.l.b16 %v992
    %v4605 = vunpack.c.h.b16 %v992
    %v4606 = vunpack.c.l.b16 %v993
    %v4607 = vunpack.c.h.b16 %v993
    %v4608 = vunpack.c.l.b16 %v994
    %v4609 = vunpack.c.h.b16 %v994
    %v4610 = vunpack.c.l.b16 %v995
    %v4611 = vunpack.c.h.b16 %v995
    %v4612 = vunpack.c.l.b16 %v996
    %v4613 = vunpack.c.h.b16 %v996
    %v4614 = vunpack.c.l.b16 %v997
    %v4615 = vunpack.c.h.b16 %v997
    %v4616 = vunpack.c.l.b16 %v998
    %v4617 = vunpack.c.h.b16 %v998
    %v4618 = vunpack.c.l.b16 %v999
    %v4619 = vunpack.c.h.b16 %v999
    %v4620 = vunpack.c.l.b16 %v1000
    %v4621 = vunpack.c.h.b16 %v1000
    %v4622 = vunpack.c.l.b16 %v1001
    %v4623 = vunpack.c.h.b16 %v1001
    %v4624 = vunpack.c.l.b16 %v1002
    %v4625 = vunpack.c.h.b16 %v1002
    %v4626 = vunpack.c.l.b16 %v1003
    %v4627 = vunpack.c.h.b16 %v1003
    %v4628 = vunpack.c.l.b16 %v1004
    %v4629 = vunpack.c.h.b16 %v1004
    %v4630 = vunpack.c.l.b16 %v1005
    %v4631 = vunpack.c.h.b16 %v1005
    %v4632 = vunpack.c.l.b16 %v1006
    %v4633 = vunpack.c.h.b16 %v1006
    %v4634 = vunpack.c.l.b16 %v1007
    %v4635 = vunpack.c.h.b16 %v1007
    %v4636 = vunpack.c.l.b16 %v1008
    %v4637 = vunpack.c.h.b16 %v1008
    %v4638 = vunpack.c.l.b16 %v1009
    %v4639 = vunpack.c.h.b16 %v1009
    %v4640 = vunpack.c.l.b16 %v1010
    %v4641 = vunpack.c.h.b16 %v1010
    %v4642 = vunpack.c.l.b16 %v1011
    %v4643 = vunpack.c.h.b16 %v1011
    %v4644 = vunpack.c.l.b16 %v1012
    %v4645 = vunpack.c.h.b16 %v1012
    %v4646 = vunpack.c.l.b16 %v1013
    %v4647 = vunpack.c.h.b16 %v1013
    %v4648 = vunpack.c.l.b16 %v1014
    %v4649 = vunpack.c.h.b16 %v1014
    %v4650 = vunpack.c.l.b16 %v1015
    %v4651 = vunpack.c.h.b16 %v1015
    %v4652 = vunpack.c.l.b16 %v1016
    %v4653 = vunpack.c.h.b16 %v1016
    %v4654 = vunpack.c.l.b16 %v1017
    %v4655 = vunpack.c.h.b16 %v1017
    %v4656 = vunpack.c.l.b16 %v1018
    %v4657 = vunpack.c.h.b16 %v1018
    %v4658 = vunpack.c.l.b16 %v1019
    %v4659 = vunpack.c.h.b16 %v1019
    %v4660 = vunpack.c.l.b16 %v1020
    %v4661 = vunpack.c.h.b16 %v1020
    %v4662 = vunpack.c.l.b16 %v1021
    %v4663 = vunpack.c.h.b16 %v1021
    %v4664 = vunpack.c.l.b16 %v1022
    %v4665 = vunpack.c.h.b16 %v1022
    %v4666 = vunpack.c.l.b16 %v1023
    %v4667 = vunpack.c.h.b16 %v1023
    %v4668 = vunpack.c.l.b16 %v1024
    %v4669 = vunpack.c.h.b16 %v1024
    %v4670 = vunpack.c.l.b16 %v1025
    %v4671 = vunpack.c.h.b16 %v1025
    %v4672 = vunpack.c.l.b16 %v1026
    %v4673 = vunpack.c.h.b16 %v1026
    %v4674 = vunpack.c.l.b16 %v1027
    %v4675 = vunpack.c.h.b16 %v1027
    %v4676 = vunpack.c.l.b16 %v1028
    %v4677 = vunpack.c.h.b16 %v1028
    %v4678 = vunpack.c.l.b16 %v1029
    %v4679 = vunpack.c.h.b16 %v1029
    %v4680 = vunpack.c.l.b16 %v1030
    %v4681 = vunpack.c.h.b16 %v1030
    %v4682 = vunpack.c.l.b16 %v1031
    %v4683 = vunpack.c.h.b16 %v1031
    %v4684 = vunpack.c.l.b16 %v1032
    %v4685 = vunpack.c.h.b16 %v1032
    %v4686 = vunpack.c.l.b16 %v1033
    %v4687 = vunpack.c.h.b16 %v1033
    %v4688 = vunpack.c.l.b16 %v1034
    %v4689 = vunpack.c.h.b16 %v1034
    %v4690 = vunpack.c.l.b16 %v1035
    %v4691 = vunpack.c.h.b16 %v1035
    %v4692 = vunpack.c.l.b16 %v1036
    %v4693 = vunpack.c.h.b16 %v1036
    %v4694 = vunpack.c.l.b16 %v1037
    %v4695 = vunpack.c.h.b16 %v1037
    %v4696 = vunpack.c.l.b16 %v1038
    %v4697 = vunpack.c.h.b16 %v1038
    %v4698 = vunpack.c.l.b16 %v1039
    %v4699 = vunpack.c.h.b16 %v1039
    %v4700 = vunpack.c.l.b16 %v1040
    %v4701 = vunpack.c.h.b16 %v1040
    %v4702 = vunpack.c.l.b16 %v1041
    %v4703 = vunpack.c.h.b16 %v1041
    %v4704 = vunpack.c.l.b16 %v1042
    %v4705 = vunpack.c.h.b16 %v1042
    %v4706 = vunpack.c.l.b16 %v1043
    %v4707 = vunpack.c.h.b16 %v1043
    %v4708 = vunpack.c.l.b16 %v1044
    %v4709 = vunpack.c.h.b16 %v1044
    %v4710 = vunpack.c.l.b16 %v1045
    %v4711 = vunpack.c.h.b16 %v1045
    %v4712 = vunpack.c.l.b16 %v1046
    %v4713 = vunpack.c.h.b16 %v1046
    %v4714 = vunpack.c.l.b16 %v1047
    %v4715 = vunpack.c.h.b16 %v1047
    %v4716 = vunpack.c.l.b16 %v1048
    %v4717 = vunpack.c.h.b16 %v1048
    %v4718 = vunpack.c.l.b16 %v1049
    %v4719 = vunpack.c.h.b16 %v1049
    %v4720 = vunpack.c.l.b16 %v1050
    %v4721 = vunpack.c.h.b16 %v1050
    %v4722 = vunpack.c.l.b16 %v1051
    %v4723 = vunpack.c.h.b16 %v1051
    %v4724 = vunpack.c.l.b16 %v1052
    %v4725 = vunpack.c.h.b16 %v1052
    %v4726 = vunpack.c.l.b16 %v1053
    %v4727 = vunpack.c.h.b16 %v1053
    %v4728 = vunpack.c.l.b16 %v1054
    %v4729 = vunpack.c.h.b16 %v1054
    %v4730 = vunpack.c.l.b16 %v1055
    %v4731 = vunpack.c.h.b16 %v1055
    %v4732 = vunpack.c.l.b16 %v1056
    %v4733 = vunpack.c.h.b16 %v1056
    %v4734 = vunpack.c.l.b16 %v1057
    %v4735 = vunpack.c.h.b16 %v1057
    %v4736 = vunpack.c.l.b16 %v1058
    %v4737 = vunpack.c.h.b16 %v1058
    %v4738 = vunpack.c.l.b16 %v1059
    %v4739 = vunpack.c.h.b16 %v1059
    %v4740 = vunpack.c.l.b16 %v1060
    %v4741 = vunpack.c.h.b16 %v1060
    %v4742 = vunpack.c.l.b16 %v1061
    %v4743 = vunpack.c.h.b16 %v1061
    %v4744 = vunpack.c.l.b16 %v1062
    %v4745 = vunpack.c.h.b16 %v1062
    %v4746 = vunpack.c.l.b16 %v1063
    %v4747 = vunpack.c.h.b16 %v1063
    %v4748 = vunpack.c.l.b16 %v1064
    %v4749 = vunpack.c.h.b16 %v1064
    %v4750 = vunpack.c.l.b16 %v1065
    %v4751 = vunpack.c.h.b16 %v1065
    %v4752 = vunpack.c.l.b16 %v1066
    %v4753 = vunpack.c.h.b16 %v1066
    %v4754 = vunpack.c.l.b16 %v1067
    %v4755 = vunpack.c.h.b16 %v1067
    %v4756 = vunpack.c.l.b16 %v1068
    %v4757 = vunpack.c.h.b16 %v1068
    %v4758 = vunpack.c.l.b16 %v1069
    %v4759 = vunpack.c.h.b16 %v1069
    %v4760 = vunpack.c.l.b16 %v1070
    %v4761 = vunpack.c.h.b16 %v1070
    %v4762 = vunpack.c.l.b16 %v1071
    %v4763 = vunpack.c.h.b16 %v1071
    %v4764 = vunpack.c.l.b16 %v1072
    %v4765 = vunpack.c.h.b16 %v1072
    %v4766 = vunpack.c.l.b16 %v1073
    %v4767 = vunpack.c.h.b16 %v1073
    %v4768 = vunpack.c.l.b16 %v1074
    %v4769 = vunpack.c.h.b16 %v1074
    %v4770 = vunpack.c.l.b16 %v1075
    %v4771 = vunpack.c.h.b16 %v1075
    %v4772 = vunpack.c.l.b16 %v1076
    %v4773 = vunpack.c.h.b16 %v1076
    %v4774 = vunpack.c.l.b16 %v1077
    %v4775 = vunpack.c.h.b16 %v1077
    %v4776 = vunpack.c.l.b16 %v1078
    %v4777 = vunpack.c.h.b16 %v1078
    %v4778 = vunpack.c.l.b16 %v1079
    %v4779 = vunpack.c.h.b16 %v1079
    %v4780 = vunpack.c.l.b16 %v1080
    %v4781 = vunpack.c.h.b16 %v1080
    %v4782 = vunpack.c.l.b16 %v1081
    %v4783 = vunpack.c.h.b16 %v1081
    %v4784 = vunpack.c.l.b16 %v1082
    %v4785 = vunpack.c.h.b16 %v1082
    %v4786 = vunpack.c.l.b16 %v1083
    %v4787 = vunpack.c.h.b16 %v1083
    %v4788 = vunpack.c.l.b16 %v1084
    %v4789 = vunpack.c.h.b16 %v1084
    %v4790 = vunpack.c.l.b16 %v1085
    %v4791 = vunpack.c.h.b16 %v1085
    %v4792 = vunpack.c.l.b16 %v1086
    %v4793 = vunpack.c.h.b16 %v1086
    %v4794 = vunpack.c.l.b16 %v1087
    %v4795 = vunpack.c.h.b16 %v1087
    %v4796 = vunpack.c.l.b16 %v1088
    %v4797 = vunpack.c.h.b16 %v1088
    %v4798 = vunpack.c.l.b16 %v1089
    %v4799 = vunpack.c.h.b16 %v1089
    %v4800 = vunpack.c.l.b16 %v1090
    %v4801 = vunpack.c.h.b16 %v1090
    %v4802 = vunpack.c.l.b16 %v1091
    %v4803 = vunpack.c.h.b16 %v1091
    %v4804 = vunpack.c.l.b16 %v1092
    %v4805 = vunpack.c.h.b16 %v1092
    %v4806 = vunpack.c.l.b16 %v1093
    %v4807 = vunpack.c.h.b16 %v1093
    %v4808 = vunpack.c.l.b16 %v1094
    %v4809 = vunpack.c.h.b16 %v1094
    %v4810 = vunpack.c.l.b16 %v1095
    %v4811 = vunpack.c.h.b16 %v1095
    %v4812 = vunpack.c.l.b16 %v1096
    %v4813 = vunpack.c.h.b16 %v1096
    %v4814 = vunpack.c.l.b16 %v1097
    %v4815 = vunpack.c.h.b16 %v1097
    %v4816 = vunpack.c.l.b16 %v1098
    %v4817 = vunpack.c.h.b16 %v1098
    %v4818 = vunpack.c.l.b16 %v1099
    %v4819 = vunpack.c.h.b16 %v1099
    %v4820 = vunpack.c.l.b16 %v1100
    %v4821 = vunpack.c.h.b16 %v1100
    %v4822 = vunpack.c.l.b16 %v1101
    %v4823 = vunpack.c.h.b16 %v1101
    %v4824 = vunpack.c.l.b16 %v1102
    %v4825 = vunpack.c.h.b16 %v1102
    %v4826 = vunpack.c.l.b16 %v1103
    %v4827 = vunpack.c.h.b16 %v1103
    %v4828 = vunpack.c.l.b16 %v1104
    %v4829 = vunpack.c.h.b16 %v1104
    %v4830 = vunpack.c.l.b16 %v1105
    %v4831 = vunpack.c.h.b16 %v1105
    %v4832 = vunpack.c.l.b16 %v1106
    %v4833 = vunpack.c.h.b16 %v1106
    %v4834 = vunpack.c.l.b16 %v1107
    %v4835 = vunpack.c.h.b16 %v1107
    %v4836 = vunpack.c.l.b16 %v1108
    %v4837 = vunpack.c.h.b16 %v1108
    %v4838 = vunpack.c.l.b16 %v1109
    %v4839 = vunpack.c.h.b16 %v1109
    %v4840 = vunpack.c.l.b16 %v1110
    %v4841 = vunpack.c.h.b16 %v1110
    %v4842 = vunpack.c.l.b16 %v1111
    %v4843 = vunpack.c.h.b16 %v1111
    %v4844 = vunpack.c.l.b16 %v1112
    %v4845 = vunpack.c.h.b16 %v1112
    %v4846 = vunpack.c.l.b16 %v1113
    %v4847 = vunpack.c.h.b16 %v1113
    %v4848 = vunpack.c.l.b16 %v1114
    %v4849 = vunpack.c.h.b16 %v1114
    %v4850 = vunpack.c.l.b16 %v1115
    %v4851 = vunpack.c.h.b16 %v1115
    %v4852 = vunpack.c.l.b16 %v1116
    %v4853 = vunpack.c.h.b16 %v1116
    %v4854 = vunpack.c.l.b16 %v1117
    %v4855 = vunpack.c.h.b16 %v1117
    %v4856 = vunpack.c.l.b16 %v1118
    %v4857 = vunpack.c.h.b16 %v1118
    %v4858 = vunpack.c.l.b16 %v1119
    %v4859 = vunpack.c.h.b16 %v1119
    %v4860 = vunpack.c.l.b16 %v1120
    %v4861 = vunpack.c.h.b16 %v1120
    %v4862 = vunpack.c.l.b16 %v1121
    %v4863 = vunpack.c.h.b16 %v1121
    %v4864 = vunpack.c.l.b16 %v1122
    %v4865 = vunpack.c.h.b16 %v1122
    %v4866 = vunpack.c.l.b16 %v1123
    %v4867 = vunpack.c.h.b16 %v1123
    %v4868 = vunpack.c.l.b16 %v1124
    %v4869 = vunpack.c.h.b16 %v1124
    %v4870 = vunpack.c.l.b16 %v1125
    %v4871 = vunpack.c.h.b16 %v1125
    %v4872 = vunpack.c.l.b16 %v1126
    %v4873 = vunpack.c.h.b16 %v1126
    %v4874 = vunpack.c.l.b16 %v1127
    %v4875 = vunpack.c.h.b16 %v1127
    %v4876 = vunpack.c.l.b16 %v1128
    %v4877 = vunpack.c.h.b16 %v1128
    %v4878 = vunpack.c.l.b16 %v1129
    %v4879 = vunpack.c.h.b16 %v1129
    %v4880 = vunpack.c.l.b16 %v1130
    %v4881 = vunpack.c.h.b16 %v1130
    %v4882 = vunpack.c.l.b16 %v1131
    %v4883 = vunpack.c.h.b16 %v1131
    %v4884 = vunpack.c.l.b16 %v1132
    %v4885 = vunpack.c.h.b16 %v1132
    %v4886 = vunpack.c.l.b16 %v1133
    %v4887 = vunpack.c.h.b16 %v1133
    %v4888 = vunpack.c.l.b16 %v1134
    %v4889 = vunpack.c.h.b16 %v1134
    %v4890 = vunpack.c.l.b16 %v1135
    %v4891 = vunpack.c.h.b16 %v1135
    %v4892 = vunpack.c.l.b16 %v1136
    %v4893 = vunpack.c.h.b16 %v1136
    %v4894 = vunpack.c.l.b16 %v1137
    %v4895 = vunpack.c.h.b16 %v1137
    %v4896 = vunpack.c.l.b16 %v1138
    %v4897 = vunpack.c.h.b16 %v1138
    %v4898 = vunpack.c.l.b16 %v1139
    %v4899 = vunpack.c.h.b16 %v1139
    %v4900 = vunpack.c.l.b16 %v1140
    %v4901 = vunpack.c.h.b16 %v1140
    %v4902 = vunpack.c.l.b16 %v1141
    %v4903 = vunpack.c.h.b16 %v1141
    %v4904 = vunpack.c.l.b16 %v1142
    %v4905 = vunpack.c.h.b16 %v1142
    %v4906 = vunpack.c.l.b16 %v1143
    %v4907 = vunpack.c.h.b16 %v1143
    %v4908 = vunpack.c.l.b16 %v1144
    %v4909 = vunpack.c.h.b16 %v1144
    %v4910 = vunpack.c.l.b16 %v1145
    %v4911 = vunpack.c.h.b16 %v1145
    %v4912 = vunpack.c.l.b16 %v1146
    %v4913 = vunpack.c.h.b16 %v1146
    %v4914 = vunpack.c.l.b16 %v1147
    %v4915 = vunpack.c.h.b16 %v1147
    %v4916 = vunpack.c.l.b16 %v1148
    %v4917 = vunpack.c.h.b16 %v1148
    %v4918 = vunpack.c.l.b16 %v1149
    %v4919 = vunpack.c.h.b16 %v1149
    %v4920 = vunpack.c.l.b16 %v1150
    %v4921 = vunpack.c.h.b16 %v1150
    %v4922 = vunpack.c.l.b16 %v1151
    %v4923 = vunpack.c.h.b16 %v1151
    %v4924 = vunpack.c.l.b16 %v1152
    %v4925 = vunpack.c.h.b16 %v1152
    %v4926 = vunpack.c.l.b16 %v1153
    %v4927 = vunpack.c.h.b16 %v1153
    %v4928 = vunpack.c.l.b16 %v1154
    %v4929 = vunpack.c.h.b16 %v1154
    %v4930 = vunpack.c.l.b16 %v1155
    %v4931 = vunpack.c.h.b16 %v1155
    %v4932 = vunpack.c.l.b16 %v1156
    %v4933 = vunpack.c.h.b16 %v1156
    %v4934 = vunpack.c.l.b16 %v1157
    %v4935 = vunpack.c.h.b16 %v1157
    %v4936 = vunpack.c.l.b16 %v1158
    %v4937 = vunpack.c.h.b16 %v1158
    %v4938 = vunpack.c.l.b16 %v1159
    %v4939 = vunpack.c.h.b16 %v1159
    %v4940 = vunpack.c.l.b16 %v1160
    %v4941 = vunpack.c.h.b16 %v1160
    %v4942 = vunpack.c.l.b16 %v1161
    %v4943 = vunpack.c.h.b16 %v1161
    %v4944 = vunpack.c.l.b16 %v1162
    %v4945 = vunpack.c.h.b16 %v1162
    %v4946 = vunpack.c.l.b16 %v1163
    %v4947 = vunpack.c.h.b16 %v1163
    %v4948 = vunpack.c.l.b16 %v1164
    %v4949 = vunpack.c.h.b16 %v1164
    %v4950 = vunpack.c.l.b16 %v1165
    %v4951 = vunpack.c.h.b16 %v1165
    %v4952 = vunpack.c.l.b16 %v1166
    %v4953 = vunpack.c.h.b16 %v1166
    %v4954 = vunpack.c.l.b16 %v1167
    %v4955 = vunpack.c.h.b16 %v1167
    %v4956 = vunpack.c.l.b16 %v1168
    %v4957 = vunpack.c.h.b16 %v1168
    %v4958 = vunpack.c.l.b16 %v1169
    %v4959 = vunpack.c.h.b16 %v1169
    %v4960 = vunpack.c.l.b16 %v1170
    %v4961 = vunpack.c.h.b16 %v1170
    %v4962 = vunpack.c.l.b16 %v1171
    %v4963 = vunpack.c.h.b16 %v1171
    %v4964 = vunpack.c.l.b16 %v1172
    %v4965 = vunpack.c.h.b16 %v1172
    %v4966 = vunpack.c.l.b16 %v1173
    %v4967 = vunpack.c.h.b16 %v1173
    %v4968 = vunpack.c.l.b16 %v1174
    %v4969 = vunpack.c.h.b16 %v1174
    %v4970 = vunpack.c.l.b16 %v1175
    %v4971 = vunpack.c.h.b16 %v1175
    %v4972 = vunpack.c.l.b16 %v1176
    %v4973 = vunpack.c.h.b16 %v1176
    %v4974 = vunpack.c.l.b16 %v1177
    %v4975 = vunpack.c.h.b16 %v1177
    %v4976 = vunpack.c.l.b16 %v1178
    %v4977 = vunpack.c.h.b16 %v1178
    %v4978 = vunpack.c.l.b16 %v1179
    %v4979 = vunpack.c.h.b16 %v1179
    %v4980 = vunpack.c.l.b16 %v1180
    %v4981 = vunpack.c.h.b16 %v1180
    %v4982 = vunpack.c.l.b16 %v1181
    %v4983 = vunpack.c.h.b16 %v1181
    %v4984 = vunpack.c.l.b16 %v1182
    %v4985 = vunpack.c.h.b16 %v1182
    %v4986 = vunpack.c.l.b16 %v1183
    %v4987 = vunpack.c.h.b16 %v1183
    %v4988 = vunpack.c.l.b16 %v1184
    %v4989 = vunpack.c.h.b16 %v1184
    %v4990 = vunpack.c.l.b16 %v1185
    %v4991 = vunpack.c.h.b16 %v1185
    %v4992 = vunpack.c.l.b16 %v1186
    %v4993 = vunpack.c.h.b16 %v1186
    %v4994 = vunpack.c.l.b16 %v1187
    %v4995 = vunpack.c.h.b16 %v1187
    %v4996 = vunpack.c.l.b16 %v1188
    %v4997 = vunpack.c.h.b16 %v1188
    %v4998 = vunpack.c.l.b16 %v1189
    %v4999 = vunpack.c.h.b16 %v1189
    %v5000 = vunpack.c.l.b16 %v1190
    %v5001 = vunpack.c.h.b16 %v1190
    %v5002 = vunpack.c.l.b16 %v1191
    %v5003 = vunpack.c.h.b16 %v1191
    %v5004 = vunpack.c.l.b16 %v1192
    %v5005 = vunpack.c.h.b16 %v1192
    %v5006 = vunpack.c.l.b16 %v1193
    %v5007 = vunpack.c.h.b16 %v1193
    %v5008 = vunpack.c.l.b16 %v1194
    %v5009 = vunpack.c.h.b16 %v1194
    %v5010 = vunpack.c.l.b16 %v1195
    %v5011 = vunpack.c.h.b16 %v1195
    %v5012 = vunpack.c.l.b16 %v1196
    %v5013 = vunpack.c.h.b16 %v1196
    %v5014 = vunpack.c.l.b16 %v1197
    %v5015 = vunpack.c.h.b16 %v1197
    %v5016 = vunpack.c.l.b16 %v1198
    %v5017 = vunpack.c.h.b16 %v1198
    %v5018 = vunpack.c.l.b16 %v1199
    %v5019 = vunpack.c.h.b16 %v1199
    %v5020 = vunpack.c.l.b16 %v1200
    %v5021 = vunpack.c.h.b16 %v1200
    %v5022 = vunpack.c.l.b16 %v1201
    %v5023 = vunpack.c.h.b16 %v1201
    %v5024 = vunpack.c.l.b16 %v1202
    %v5025 = vunpack.c.h.b16 %v1202
    %v5026 = vunpack.c.l.b16 %v1203
    %v5027 = vunpack.c.h.b16 %v1203
    %v5028 = vunpack.c.l.b16 %v1204
    %v5029 = vunpack.c.h.b16 %v1204
    %v5030 = vunpack.c.l.b16 %v1205
    %v5031 = vunpack.c.h.b16 %v1205
    %v5032 = vunpack.c.l.b16 %v1206
    %v5033 = vunpack.c.h.b16 %v1206
    %v5034 = vunpack.c.l.b16 %v1207
    %v5035 = vunpack.c.h.b16 %v1207
    %v5036 = vunpack.c.l.b16 %v1208
    %v5037 = vunpack.c.h.b16 %v1208
    %v5038 = vunpack.c.l.b16 %v1209
    %v5039 = vunpack.c.h.b16 %v1209
    %v5040 = vunpack.c.l.b16 %v1210
    %v5041 = vunpack.c.h.b16 %v1210
    %v5042 = vunpack.c.l.b16 %v1211
    %v5043 = vunpack.c.h.b16 %v1211
    %v5044 = vunpack.c.l.b16 %v1212
    %v5045 = vunpack.c.h.b16 %v1212
    %v5046 = vunpack.c.l.b16 %v1213
    %v5047 = vunpack.c.h.b16 %v1213
    %v5048 = vunpack.c.l.b16 %v1214
    %v5049 = vunpack.c.h.b16 %v1214
    %v5050 = vunpack.c.l.b16 %v1215
    %v5051 = vunpack.c.h.b16 %v1215
    %v5052 = vunpack.c.l.b16 %v1216
    %v5053 = vunpack.c.h.b16 %v1216
    %v5054 = vunpack.c.l.b16 %v1217
    %v5055 = vunpack.c.h.b16 %v1217
    %v5056 = vunpack.c.l.b16 %v1218
    %v5057 = vunpack.c.h.b16 %v1218
    %v5058 = vunpack.c.l.b16 %v1219
    %v5059 = vunpack.c.h.b16 %v1219
    %v5060 = vunpack.c.l.b16 %v1220
    %v5061 = vunpack.c.h.b16 %v1220
    %v5062 = vunpack.c.l.b16 %v1221
    %v5063 = vunpack.c.h.b16 %v1221
    %v5064 = vunpack.c.l.b16 %v1222
    %v5065 = vunpack.c.h.b16 %v1222
    %v5066 = vunpack.c.l.b16 %v1223
    %v5067 = vunpack.c.h.b16 %v1223
    %v5068 = vunpack.c.l.b16 %v1224
    %v5069 = vunpack.c.h.b16 %v1224
    %v5070 = vunpack.c.l.b16 %v1225
    %v5071 = vunpack.c.h.b16 %v1225
    %v5072 = vunpack.c.l.b16 %v1226
    %v5073 = vunpack.c.h.b16 %v1226
    %v5074 = vunpack.c.l.b16 %v1227
    %v5075 = vunpack.c.h.b16 %v1227
    %v5076 = vunpack.c.l.b16 %v1228
    %v5077 = vunpack.c.h.b16 %v1228
    %v5078 = vunpack.c.l.b16 %v1229
    %v5079 = vunpack.c.h.b16 %v1229
    %v5080 = vunpack.c.l.b16 %v1230
    %v5081 = vunpack.c.h.b16 %v1230
    %v5082 = vunpack.c.l.b16 %v1231
    %v5083 = vunpack.c.h.b16 %v1231
    %v5084 = vunpack.c.l.b16 %v1232
    %v5085 = vunpack.c.h.b16 %v1232
    %v5086 = vunpack.c.l.b16 %v1233
    %v5087 = vunpack.c.h.b16 %v1233
    %v5088 = vunpack.c.l.b16 %v1234
    %v5089 = vunpack.c.h.b16 %v1234
    %v5090 = vunpack.c.l.b16 %v1235
    %v5091 = vunpack.c.h.b16 %v1235
    %v5092 = vunpack.c.l.b16 %v1236
    %v5093 = vunpack.c.h.b16 %v1236
    %v5094 = vunpack.c.l.b16 %v1237
    %v5095 = vunpack.c.h.b16 %v1237
    %v5096 = vunpack.c.l.b16 %v1238
    %v5097 = vunpack.c.h.b16 %v1238
    %v5098 = vunpack.c.l.b16 %v1239
    %v5099 = vunpack.c.h.b16 %v1239
    %v5100 = vunpack.c.l.b16 %v1240
    %v5101 = vunpack.c.h.b16 %v1240
    %v5102 = vunpack.c.l.b16 %v1241
    %v5103 = vunpack.c.h.b16 %v1241
    %v5104 = vunpack.c.l.b16 %v1242
    %v5105 = vunpack.c.h.b16 %v1242
    %v5106 = vunpack.c.l.b16 %v1243
    %v5107 = vunpack.c.h.b16 %v1243
    %v5108 = vunpack.c.l.b16 %v1244
    %v5109 = vunpack.c.h.b16 %v1244
    %v5110 = vunpack.c.l.b16 %v1245
    %v5111 = vunpack.c.h.b16 %v1245
    %v5112 = vunpack.c.l.b16 %v1246
    %v5113 = vunpack.c.h.b16 %v1246
    %v5114 = vunpack.c.l.b16 %v1247
    %v5115 = vunpack.c.h.b16 %v1247
    %v5116 = vunpack.c.l.b16 %v1248
    %v5117 = vunpack.c.h.b16 %v1248
    %v5118 = vunpack.c.l.b16 %v1249
    %v5119 = vunpack.c.h.b16 %v1249
    %v5120 = vunpack.c.l.b16 %v1250
    %v5121 = vunpack.c.h.b16 %v1250
    %v5122 = vunpack.c.l.b16 %v1251
    %v5123 = vunpack.c.h.b16 %v1251
    %v5124 = vunpack.c.l.b16 %v1252
    %v5125 = vunpack.c.h.b16 %v1252
    %v5126 = vunpack.c.l.b16 %v1253
    %v5127 = vunpack.c.h.b16 %v1253
    %v5128 = vunpack.c.l.b16 %v1254
    %v5129 = vunpack.c.h.b16 %v1254
    %v5130 = vunpack.c.l.b16 %v1255
    %v5131 = vunpack.c.h.b16 %v1255
    %v5132 = vunpack.c.l.b16 %v1256
    %v5133 = vunpack.c.h.b16 %v1256
    %v5134 = vunpack.c.l.b16 %v1257
    %v5135 = vunpack.c.h.b16 %v1257
    %v5136 = vunpack.c.l.b16 %v1258
    %v5137 = vunpack.c.h.b16 %v1258
    %v5138 = vunpack.c.l.b16 %v1259
    %v5139 = vunpack.c.h.b16 %v1259
    %v5140 = vunpack.c.l.b16 %v1260
    %v5141 = vunpack.c.h.b16 %v1260
    %v5142 = vunpack.c.l.b16 %v1261
    %v5143 = vunpack.c.h.b16 %v1261
    %v5144 = vunpack.c.l.b16 %v1262
    %v5145 = vunpack.c.h.b16 %v1262
    %v5146 = vunpack.c.l.b16 %v1263
    %v5147 = vunpack.c.h.b16 %v1263
    %v5148 = vunpack.c.l.b16 %v1264
    %v5149 = vunpack.c.h.b16 %v1264
    %v5150 = vunpack.c.l.b16 %v1265
    %v5151 = vunpack.c.h.b16 %v1265
    %v5152 = vunpack.c.l.b16 %v1266
    %v5153 = vunpack.c.h.b16 %v1266
    %v5154 = vunpack.c.l.b16 %v1267
    %v5155 = vunpack.c.h.b16 %v1267
    %v5156 = vunpack.c.l.b16 %v1268
    %v5157 = vunpack.c.h.b16 %v1268
    %v5158 = vunpack.c.l.b16 %v1269
    %v5159 = vunpack.c.h.b16 %v1269
    %v5160 = vunpack.c.l.b16 %v1270
    %v5161 = vunpack.c.h.b16 %v1270
    %v5162 = vunpack.c.l.b16 %v1271
    %v5163 = vunpack.c.h.b16 %v1271
    %v5164 = vunpack.c.l.b16 %v1272
    %v5165 = vunpack.c.h.b16 %v1272
    %v5166 = vunpack.c.l.b16 %v1273
    %v5167 = vunpack.c.h.b16 %v1273
    %v5168 = vunpack.c.l.b16 %v1274
    %v5169 = vunpack.c.h.b16 %v1274
    %v5170 = vunpack.c.l.b16 %v1275
    %v5171 = vunpack.c.h.b16 %v1275
    %v5172 = vunpack.c.l.b16 %v1276
    %v5173 = vunpack.c.h.b16 %v1276
    %v5174 = vunpack.c.l.b16 %v1277
    %v5175 = vunpack.c.h.b16 %v1277
    %v5176 = vunpack.c.l.b16 %v1278
    %v5177 = vunpack.c.h.b16 %v1278
    %v5178 = vunpack.c.l.b16 %v1279
    %v5179 = vunpack.c.h.b16 %v1279
    %v5180 = vunpack.c.l.b16 %v1280
    %v5181 = vunpack.c.h.b16 %v1280
    %v5182 = vunpack.c.l.b16 %v1281
    %v5183 = vunpack.c.h.b16 %v1281
    %v5184 = vunpack.c.l.b16 %v1282
    %v5185 = vunpack.c.h.b16 %v1282
    %v5186 = vunpack.c.l.b16 %v1283
    %v5187 = vunpack.c.h.b16 %v1283
    %v5188 = vunpack.c.l.b16 %v1284
    %v5189 = vunpack.c.h.b16 %v1284
    %v5190 = vunpack.c.l.b16 %v1285
    %v5191 = vunpack.c.h.b16 %v1285
    %v5192 = vunpack.c.l.b16 %v1286
    %v5193 = vunpack.c.h.b16 %v1286
    %v5194 = vunpack.c.l.b16 %v1287
    %v5195 = vunpack.c.h.b16 %v1287
    %v5196 = vunpack.c.l.b16 %v1288
    %v5197 = vunpack.c.h.b16 %v1288
    %v5198 = vunpack.c.l.b16 %v1289
    %v5199 = vunpack.c.h.b16 %v1289
    %v5200 = vunpack.c.l.b16 %v1290
    %v5201 = vunpack.c.h.b16 %v1290
    %v5202 = vunpack.c.l.b16 %v1291
    %v5203 = vunpack.c.h.b16 %v1291
    %v5204 = vunpack.c.l.b16 %v1292
    %v5205 = vunpack.c.h.b16 %v1292
    %v5206 = vunpack.c.l.b16 %v1293
    %v5207 = vunpack.c.h.b16 %v1293
    %v5208 = vunpack.c.l.b16 %v1294
    %v5209 = vunpack.c.h.b16 %v1294
    %v5210 = vunpack.c.l.b16 %v1295
    %v5211 = vunpack.c.h.b16 %v1295
    %v5212 = vunpack.c.l.b16 %v1296
    %v5213 = vunpack.c.h.b16 %v1296
    %v5214 = vunpack.c.l.b16 %v1297
    %v5215 = vunpack.c.h.b16 %v1297
    %v5216 = vunpack.c.l.b16 %v1298
    %v5217 = vunpack.c.h.b16 %v1298
    %v5218 = vunpack.c.l.b16 %v1299
    %v5219 = vunpack.c.h.b16 %v1299
    %v5220 = vunpack.c.l.b16 %v1300
    %v5221 = vunpack.c.h.b16 %v1300
    %v5222 = vunpack.c.l.b16 %v1301
    %v5223 = vunpack.c.h.b16 %v1301
    %v5224 = vunpack.c.l.b16 %v1302
    %v5225 = vunpack.c.h.b16 %v1302
    %v5226 = vunpack.c.l.b16 %v1303
    %v5227 = vunpack.c.h.b16 %v1303
    %v5228 = vunpack.c.l.b16 %v1304
    %v5229 = vunpack.c.h.b16 %v1304
    %v5230 = vunpack.c.l.b16 %v1305
    %v5231 = vunpack.c.h.b16 %v1305
    %v5232 = vunpack.c.l.b16 %v1306
    %v5233 = vunpack.c.h.b16 %v1306
    %v5234 = vunpack.c.l.b16 %v1307
    %v5235 = vunpack.c.h.b16 %v1307
    %v5236 = vunpack.c.l.b16 %v1308
    %v5237 = vunpack.c.h.b16 %v1308
    %v5238 = vunpack.c.l.b16 %v1309
    %v5239 = vunpack.c.h.b16 %v1309
    %v5240 = vunpack.c.l.b16 %v1310
    %v5241 = vunpack.c.h.b16 %v1310
    %v5242 = vunpack.c.l.b16 %v1311
    %v5243 = vunpack.c.h.b16 %v1311
    %v5244 = vunpack.c.l.b16 %v1312
    %v5245 = vunpack.c.h.b16 %v1312
    %v5246 = vunpack.c.l.b16 %v1313
    %v5247 = vunpack.c.h.b16 %v1313
    %v5248 = vunpack.c.l.b16 %v1314
    %v5249 = vunpack.c.h.b16 %v1314
    %v5250 = vunpack.c.l.b16 %v1315
    %v5251 = vunpack.c.h.b16 %v1315
    %v5252 = vunpack.c.l.b16 %v1316
    %v5253 = vunpack.c.h.b16 %v1316
    %v5254 = vunpack.c.l.b16 %v1317
    %v5255 = vunpack.c.h.b16 %v1317
    %v5256 = vunpack.c.l.b16 %v1318
    %v5257 = vunpack.c.h.b16 %v1318
    %v5258 = vunpack.c.l.b16 %v1319
    %v5259 = vunpack.c.h.b16 %v1319
    %v5260 = vunpack.c.l.b16 %v1320
    %v5261 = vunpack.c.h.b16 %v1320
    %v5262 = vunpack.c.l.b16 %v1321
    %v5263 = vunpack.c.h.b16 %v1321
    %v5264 = vunpack.c.l.b16 %v1322
    %v5265 = vunpack.c.h.b16 %v1322
    %v5266 = vunpack.c.l.b16 %v1323
    %v5267 = vunpack.c.h.b16 %v1323
    %v5268 = vunpack.c.l.b16 %v1324
    %v5269 = vunpack.c.h.b16 %v1324
    %v5270 = vunpack.c.l.b16 %v1325
    %v5271 = vunpack.c.h.b16 %v1325
    %v5272 = vunpack.c.l.b16 %v1326
    %v5273 = vunpack.c.h.b16 %v1326
    %v5274 = vunpack.c.l.b16 %v1327
    %v5275 = vunpack.c.h.b16 %v1327
    %v5276 = vunpack.c.l.b16 %v1328
    %v5277 = vunpack.c.h.b16 %v1328
    %v5278 = vunpack.c.l.b16 %v1329
    %v5279 = vunpack.c.h.b16 %v1329
    %v5280 = vunpack.c.l.b16 %v1330
    %v5281 = vunpack.c.h.b16 %v1330
    %v5282 = vunpack.c.l.b16 %v1331
    %v5283 = vunpack.c.h.b16 %v1331
    %v5284 = vunpack.c.l.b16 %v1332
    %v5285 = vunpack.c.h.b16 %v1332
    %v5286 = vunpack.c.l.b16 %v1333
    %v5287 = vunpack.c.h.b16 %v1333
    %v5288 = vunpack.c.l.b16 %v1334
    %v5289 = vunpack.c.h.b16 %v1334
    %v5290 = vunpack.c.l.b16 %v1335
    %v5291 = vunpack.c.h.b16 %v1335
    %v5292 = vunpack.c.l.b16 %v1336
    %v5293 = vunpack.c.h.b16 %v1336
    %v5294 = vunpack.c.l.b16 %v1337
    %v5295 = vunpack.c.h.b16 %v1337
    %v5296 = vunpack.c.l.b16 %v1338
    %v5297 = vunpack.c.h.b16 %v1338
    %v5298 = vunpack.c.l.b16 %v1339
    %v5299 = vunpack.c.h.b16 %v1339
    %v5300 = vunpack.c.l.b16 %v1340
    %v5301 = vunpack.c.h.b16 %v1340
    %v5302 = vunpack.c.l.b16 %v1341
    %v5303 = vunpack.c.h.b16 %v1341
    %v5304 = vunpack.c.l.b16 %v1342
    %v5305 = vunpack.c.h.b16 %v1342
    %v5306 = vunpack.c.l.b16 %v1343
    %v5307 = vunpack.c.h.b16 %v1343
    %v5308 = vunpack.c.l.b16 %v1344
    %v5309 = vunpack.c.h.b16 %v1344
    %v5310 = vunpack.c.l.b16 %v1345
    %v5311 = vunpack.c.h.b16 %v1345
    %v5312 = vunpack.c.l.b16 %v1346
    %v5313 = vunpack.c.h.b16 %v1346
    %v5314 = vunpack.c.l.b16 %v1347
    %v5315 = vunpack.c.h.b16 %v1347
    %v5316 = vunpack.c.l.b16 %v1348
    %v5317 = vunpack.c.h.b16 %v1348
    %v5318 = vunpack.c.l.b16 %v1349
    %v5319 = vunpack.c.h.b16 %v1349
    %v5320 = vunpack.c.l.b16 %v1350
    %v5321 = vunpack.c.h.b16 %v1350
    %v5322 = vunpack.c.l.b16 %v1351
    %v5323 = vunpack.c.h.b16 %v1351
    %v5324 = vunpack.c.l.b16 %v1352
    %v5325 = vunpack.c.h.b16 %v1352
    %v5326 = vunpack.c.l.b16 %v1353
    %v5327 = vunpack.c.h.b16 %v1353
    %v5328 = vunpack.c.l.b16 %v1354
    %v5329 = vunpack.c.h.b16 %v1354
    %v5330 = vunpack.c.l.b16 %v1355
    %v5331 = vunpack.c.h.b16 %v1355
    %v5332 = vunpack.c.l.b16 %v1356
    %v5333 = vunpack.c.h.b16 %v1356
    %v5334 = vunpack.c.l.b16 %v1357
    %v5335 = vunpack.c.h.b16 %v1357
    %v5336 = vunpack.c.l.b16 %v1358
    %v5337 = vunpack.c.h.b16 %v1358
    %v5338 = vunpack.c.l.b16 %v1359
    %v5339 = vunpack.c.h.b16 %v1359
    %v5340 = vunpack.c.l.b16 %v1360
    %v5341 = vunpack.c.h.b16 %v1360
    %v5342 = vunpack.c.l.b16 %v1361
    %v5343 = vunpack.c.h.b16 %v1361
    %v5344 = vunpack.c.l.b16 %v1362
    %v5345 = vunpack.c.h.b16 %v1362
    %v5346 = vunpack.c.l.b16 %v1363
    %v5347 = vunpack.c.h.b16 %v1363
    %v5348 = vunpack.c.l.b16 %v1364
    %v5349 = vunpack.c.h.b16 %v1364
    %v5350 = vunpack.c.l.b16 %v1365
    %v5351 = vunpack.c.h.b16 %v1365
    %v5352 = vunpack.c.l.b16 %v1366
    %v5353 = vunpack.c.h.b16 %v1366
    %v5354 = vunpack.c.l.b16 %v1367
    %v5355 = vunpack.c.h.b16 %v1367
    %v5356 = vunpack.c.l.b16 %v1368
    %v5357 = vunpack.c.h.b16 %v1368
    %v5358 = vunpack.c.l.b16 %v1369
    %v5359 = vunpack.c.h.b16 %v1369
    %v5360 = vunpack.c.l.b16 %v1370
    %v5361 = vunpack.c.h.b16 %v1370
    %v5362 = vunpack.c.l.b16 %v1371
    %v5363 = vunpack.c.h.b16 %v1371
    %v5364 = vunpack.c.l.b16 %v1372
    %v5365 = vunpack.c.h.b16 %v1372
    %v5366 = vunpack.c.l.b16 %v1373
    %v5367 = vunpack.c.h.b16 %v1373
    %v5368 = vunpack.c.l.b16 %v1374
    %v5369 = vunpack.c.h.b16 %v1374
    %v5370 = vunpack.c.l.b16 %v1375
    %v5371 = vunpack.c.h.b16 %v1375
    %v5372 = vunpack.c.l.b16 %v1376
    %v5373 = vunpack.c.h.b16 %v1376
    %v5374 = vunpack.c.l.b16 %v1377
    %v5375 = vunpack.c.h.b16 %v1377
    %v5376 = vunpack.c.l.b16 %v1378
    %v5377 = vunpack.c.h.b16 %v1378
    %v5378 = vunpack.c.l.b16 %v1379
    %v5379 = vunpack.c.h.b16 %v1379
    %v5380 = vunpack.c.l.b16 %v1380
    %v5381 = vunpack.c.h.b16 %v1380
    %v5382 = vunpack.c.l.b16 %v1381
    %v5383 = vunpack.c.h.b16 %v1381
    %v5384 = vunpack.c.l.b16 %v1382
    %v5385 = vunpack.c.h.b16 %v1382
    %v5386 = vunpack.c.l.b16 %v1383
    %v5387 = vunpack.c.h.b16 %v1383
    %v5388 = vunpack.c.l.b16 %v1384
    %v5389 = vunpack.c.h.b16 %v1384
    %v5390 = vunpack.c.l.b16 %v1385
    %v5391 = vunpack.c.h.b16 %v1385
    %v5392 = vunpack.c.l.b16 %v1386
    %v5393 = vunpack.c.h.b16 %v1386
    %v5394 = vunpack.c.l.b16 %v1387
    %v5395 = vunpack.c.h.b16 %v1387
    %v5396 = vunpack.c.l.b16 %v1388
    %v5397 = vunpack.c.h.b16 %v1388
    %v5398 = vunpack.c.l.b16 %v1389
    %v5399 = vunpack.c.h.b16 %v1389
    %v5400 = vunpack.c.l.b16 %v1390
    %v5401 = vunpack.c.h.b16 %v1390
    %v5402 = vunpack.c.l.b16 %v1391
    %v5403 = vunpack.c.h.b16 %v1391
    %v5404 = vunpack.c.l.b16 %v1392
    %v5405 = vunpack.c.h.b16 %v1392
    %v5406 = vunpack.c.l.b16 %v1393
    %v5407 = vunpack.c.h.b16 %v1393
    %v5408 = vunpack.c.l.b16 %v1394
    %v5409 = vunpack.c.h.b16 %v1394
    %v5410 = vunpack.c.l.b16 %v1395
    %v5411 = vunpack.c.h.b16 %v1395
    %v5412 = vunpack.c.l.b16 %v1396
    %v5413 = vunpack.c.h.b16 %v1396
    %v5414 = vunpack.c.l.b16 %v1397
    %v5415 = vunpack.c.h.b16 %v1397
    %v5416 = vunpack.c.l.b16 %v1398
    %v5417 = vunpack.c.h.b16 %v1398
    %v5418 = vunpack.c.l.b16 %v1399
    %v5419 = vunpack.c.h.b16 %v1399
    %v5420 = vunpack.c.l.b16 %v1400
    %v5421 = vunpack.c.h.b16 %v1400
    %v5422 = vunpack.c.l.b16 %v1401
    %v5423 = vunpack.c.h.b16 %v1401
    %v5424 = vunpack.c.l.b16 %v1402
    %v5425 = vunpack.c.h.b16 %v1402
    %v5426 = vunpack.c.l.b16 %v1403
    %v5427 = vunpack.c.h.b16 %v1403
    %v5428 = vunpack.c.l.b16 %v1404
    %v5429 = vunpack.c.h.b16 %v1404
    %v5430 = vunpack.c.l.b16 %v1405
    %v5431 = vunpack.c.h.b16 %v1405
    %v5432 = vunpack.c.l.b16 %v1406
    %v5433 = vunpack.c.h.b16 %v1406
    %v5434 = vunpack.c.l.b16 %v1407
    %v5435 = vunpack.c.h.b16 %v1407
    %v5436 = vunpack.c.l.b16 %v1408
    %v5437 = vunpack.c.h.b16 %v1408
    %v5438 = vunpack.c.l.b16 %v1409
    %v5439 = vunpack.c.h.b16 %v1409
    %v5440 = vunpack.c.l.b16 %v1410
    %v5441 = vunpack.c.h.b16 %v1410
    %v5442 = vunpack.c.l.b16 %v1411
    %v5443 = vunpack.c.h.b16 %v1411
    %v5444 = vunpack.c.l.b16 %v1412
    %v5445 = vunpack.c.h.b16 %v1412
    %v5446 = vunpack.c.l.b16 %v1413
    %v5447 = vunpack.c.h.b16 %v1413
    %v5448 = vunpack.c.l.b16 %v1414
    %v5449 = vunpack.c.h.b16 %v1414
    %v5450 = vunpack.c.l.b16 %v1415
    %v5451 = vunpack.c.h.b16 %v1415
    %v5452 = vunpack.c.l.b16 %v1416
    %v5453 = vunpack.c.h.b16 %v1416
    %v5454 = vunpack.c.l.b16 %v1417
    %v5455 = vunpack.c.h.b16 %v1417
    %v5456 = vunpack.c.l.b16 %v1418
    %v5457 = vunpack.c.h.b16 %v1418
    %v5458 = vunpack.c.l.b16 %v1419
    %v5459 = vunpack.c.h.b16 %v1419
    %v5460 = vunpack.c.l.b16 %v1420
    %v5461 = vunpack.c.h.b16 %v1420
    %v5462 = vunpack.c.l.b16 %v1421
    %v5463 = vunpack.c.h.b16 %v1421
    %v5464 = vunpack.c.l.b16 %v1422
    %v5465 = vunpack.c.h.b16 %v1422
    %v5466 = vunpack.c.l.b16 %v1423
    %v5467 = vunpack.c.h.b16 %v1423
    %v5468 = vunpack.c.l.b16 %v1424
    %v5469 = vunpack.c.h.b16 %v1424
    %v5470 = vunpack.c.l.b16 %v1425
    %v5471 = vunpack.c.h.b16 %v1425
    %v5472 = vunpack.c.l.b16 %v1426
    %v5473 = vunpack.c.h.b16 %v1426
    %v5474 = vunpack.c.l.b16 %v1427
    %v5475 = vunpack.c.h.b16 %v1427
    %v5476 = vunpack.c.l.b16 %v1428
    %v5477 = vunpack.c.h.b16 %v1428
    %v5478 = vunpack.c.l.b16 %v1429
    %v5479 = vunpack.c.h.b16 %v1429
    %v5480 = vunpack.c.l.b16 %v1430
    %v5481 = vunpack.c.h.b16 %v1430
    %v5482 = vunpack.c.l.b16 %v1431
    %v5483 = vunpack.c.h.b16 %v1431
    %v5484 = vunpack.c.l.b16 %v1432
    %v5485 = vunpack.c.h.b16 %v1432
    %v5486 = vunpack.c.l.b16 %v1433
    %v5487 = vunpack.c.h.b16 %v1433
    %v5488 = vunpack.c.l.b16 %v1434
    %v5489 = vunpack.c.h.b16 %v1434
    %v5490 = vunpack.c.l.b16 %v1435
    %v5491 = vunpack.c.h.b16 %v1435
    %v5492 = vunpack.c.l.b16 %v1436
    %v5493 = vunpack.c.h.b16 %v1436
    %v5494 = vunpack.c.l.b16 %v1437
    %v5495 = vunpack.c.h.b16 %v1437
    %v5496 = vunpack.c.l.b16 %v1438
    %v5497 = vunpack.c.h.b16 %v1438
    %v5498 = vunpack.c.l.b16 %v1439
    %v5499 = vunpack.c.h.b16 %v1439
    %v5500 = vunpack.c.l.b16 %v1440
    %v5501 = vunpack.c.h.b16 %v1440
    %v5502 = vunpack.c.l.b16 %v1441
    %v5503 = vunpack.c.h.b16 %v1441
    %v5504 = vunpack.c.l.b16 %v1442
    %v5505 = vunpack.c.h.b16 %v1442
    %v5506 = vunpack.c.l.b16 %v1443
    %v5507 = vunpack.c.h.b16 %v1443
    %v5508 = vunpack.c.l.b16 %v1444
    %v5509 = vunpack.c.h.b16 %v1444
    %v5510 = vunpack.c.l.b16 %v1445
    %v5511 = vunpack.c.h.b16 %v1445
    %v5512 = vunpack.c.l.b16 %v1446
    %v5513 = vunpack.c.h.b16 %v1446
    %v5514 = vunpack.c.l.b16 %v1447
    %v5515 = vunpack.c.h.b16 %v1447
    %v5516 = vunpack.c.l.b16 %v1448
    %v5517 = vunpack.c.h.b16 %v1448
    %v5518 = vunpack.c.l.b16 %v1449
    %v5519 = vunpack.c.h.b16 %v1449
    %v5520 = vunpack.c.l.b16 %v1450
    %v5521 = vunpack.c.h.b16 %v1450
    %v5522 = vunpack.c.l.b16 %v1451
    %v5523 = vunpack.c.h.b16 %v1451
    %v5524 = vunpack.c.l.b16 %v1452
    %v5525 = vunpack.c.h.b16 %v1452
    %v5526 = vunpack.c.l.b16 %v1453
    %v5527 = vunpack.c.h.b16 %v1453
    %v5528 = vunpack.c.l.b16 %v1454
    %v5529 = vunpack.c.h.b16 %v1454
    %v5530 = vunpack.c.l.b16 %v1455
    %v5531 = vunpack.c.h.b16 %v1455
    %v5532 = vunpack.c.l.b16 %v1456
    %v5533 = vunpack.c.h.b16 %v1456
    %v5534 = vunpack.c.l.b16 %v1457
    %v5535 = vunpack.c.h.b16 %v1457
    %v5536 = vunpack.c.l.b16 %v1458
    %v5537 = vunpack.c.h.b16 %v1458
    %v5538 = vunpack.c.l.b16 %v1459
    %v5539 = vunpack.c.h.b16 %v1459
    %v5540 = vunpack.c.l.b16 %v1460
    %v5541 = vunpack.c.h.b16 %v1460
    %v5542 = vunpack.c.l.b16 %v1461
    %v5543 = vunpack.c.h.b16 %v1461
    %v5544 = vunpack.c.l.b16 %v1462
    %v5545 = vunpack.c.h.b16 %v1462
    %v5546 = vunpack.c.l.b16 %v1463
    %v5547 = vunpack.c.h.b16 %v1463
    %v5548 = vunpack.c.l.b16 %v1464
    %v5549 = vunpack.c.h.b16 %v1464
    %v5550 = vunpack.c.l.b16 %v1465
    %v5551 = vunpack.c.h.b16 %v1465
    %v5552 = vunpack.c.l.b16 %v1466
    %v5553 = vunpack.c.h.b16 %v1466
    %v5554 = vunpack.c.l.b16 %v1467
    %v5555 = vunpack.c.h.b16 %v1467
    %v5556 = vunpack.c.l.b16 %v1468
    %v5557 = vunpack.c.h.b16 %v1468
    %v5558 = vunpack.c.l.b16 %v1469
    %v5559 = vunpack.c.h.b16 %v1469
    %v5560 = vunpack.c.l.b16 %v1470
    %v5561 = vunpack.c.h.b16 %v1470
    %v5562 = vunpack.c.l.b16 %v1471
    %v5563 = vunpack.c.h.b16 %v1471
    %v5564 = vunpack.c.l.b16 %v1472
    %v5565 = vunpack.c.h.b16 %v1472
    %v5566 = vunpack.c.l.b16 %v1473
    %v5567 = vunpack.c.h.b16 %v1473
    %v5568 = vunpack.c.l.b16 %v1474
    %v5569 = vunpack.c.h.b16 %v1474
    %v5570 = vunpack.c.l.b16 %v1475
    %v5571 = vunpack.c.h.b16 %v1475
    %v5572 = vunpack.c.l.b16 %v1476
    %v5573 = vunpack.c.h.b16 %v1476
    %v5574 = vunpack.c.l.b16 %v1477
    %v5575 = vunpack.c.h.b16 %v1477
    %v5576 = vunpack.c.l.b16 %v1478
    %v5577 = vunpack.c.h.b16 %v1478
    %v5578 = vunpack.c.l.b16 %v1479
    %v5579 = vunpack.c.h.b16 %v1479
    %v5580 = vunpack.c.l.b16 %v1480
    %v5581 = vunpack.c.h.b16 %v1480
    %v5582 = vunpack.c.l.b16 %v1481
    %v5583 = vunpack.c.h.b16 %v1481
    %v5584 = vunpack.c.l.b16 %v1482
    %v5585 = vunpack.c.h.b16 %v1482
    %v5586 = vunpack.c.l.b16 %v1483
    %v5587 = vunpack.c.h.b16 %v1483
    %v5588 = vunpack.c.l.b16 %v1484
    %v5589 = vunpack.c.h.b16 %v1484
    %v5590 = vunpack.c.l.b16 %v1485
    %v5591 = vunpack.c.h.b16 %v1485
    %v5592 = vunpack.c.l.b16 %v1486
    %v5593 = vunpack.c.h.b16 %v1486
    %v5594 = vunpack.c.l.b16 %v1487
    %v5595 = vunpack.c.h.b16 %v1487
    %v5596 = vunpack.c.l.b16 %v1488
    %v5597 = vunpack.c.h.b16 %v1488
    %v5598 = vunpack.c.l.b16 %v1489
    %v5599 = vunpack.c.h.b16 %v1489
    %v5600 = vunpack.c.l.b16 %v1490
    %v5601 = vunpack.c.h.b16 %v1490
    %v5602 = vunpack.c.l.b16 %v1491
    %v5603 = vunpack.c.h.b16 %v1491
    %v5604 = vunpack.c.l.b16 %v1492
    %v5605 = vunpack.c.h.b16 %v1492
    %v5606 = vunpack.c.l.b16 %v1493
    %v5607 = vunpack.c.h.b16 %v1493
    %v5608 = vunpack.c.l.b16 %v1494
    %v5609 = vunpack.c.h.b16 %v1494
    %v5610 = vunpack.c.l.b16 %v1495
    %v5611 = vunpack.c.h.b16 %v1495
    %v5612 = vunpack.c.l.b16 %v1496
    %v5613 = vunpack.c.h.b16 %v1496
    %v5614 = vunpack.c.l.b16 %v1497
    %v5615 = vunpack.c.h.b16 %v1497
    %v5616 = vunpack.c.l.b16 %v1498
    %v5617 = vunpack.c.h.b16 %v1498
    %v5618 = vunpack.c.l.b16 %v1499
    %v5619 = vunpack.c.h.b16 %v1499
    %v5620 = vunpack.c.l.b16 %v1500
    %v5621 = vunpack.c.h.b16 %v1500
    %v5622 = vunpack.c.l.b16 %v1501
    %v5623 = vunpack.c.h.b16 %v1501
    %v5624 = vunpack.c.l.b16 %v1502
    %v5625 = vunpack.c.h.b16 %v1502
    %v5626 = vunpack.c.l.b16 %v1503
    %v5627 = vunpack.c.h.b16 %v1503
    %v5628 = vunpack.c.l.b16 %v1504
    %v5629 = vunpack.c.h.b16 %v1504
    %v5630 = vunpack.c.l.b16 %v1505
    %v5631 = vunpack.c.h.b16 %v1505
    %v5632 = vunpack.c.l.b16 %v1506
    %v5633 = vunpack.c.h.b16 %v1506
    %v5634 = vunpack.c.l.b16 %v1507
    %v5635 = vunpack.c.h.b16 %v1507
    %v5636 = vunpack.c.l.b16 %v1508
    %v5637 = vunpack.c.h.b16 %v1508
    %v5638 = vunpack.c.l.b16 %v1509
    %v5639 = vunpack.c.h.b16 %v1509
    %v5640 = vunpack.c.l.b16 %v1510
    %v5641 = vunpack.c.h.b16 %v1510
    %v5642 = vunpack.c.l.b16 %v1511
    %v5643 = vunpack.c.h.b16 %v1511
    %v5644 = vunpack.c.l.b16 %v1512
    %v5645 = vunpack.c.h.b16 %v1512
    %v5646 = vunpack.c.l.b16 %v1513
    %v5647 = vunpack.c.h.b16 %v1513
    %v5648 = vunpack.c.l.b16 %v1514
    %v5649 = vunpack.c.h.b16 %v1514
    %v5650 = vunpack.c.l.b16 %v1515
    %v5651 = vunpack.c.h.b16 %v1515
    %v5652 = vunpack.c.l.b16 %v1516
    %v5653 = vunpack.c.h.b16 %v1516
    %v5654 = vunpack.c.l.b16 %v1517
    %v5655 = vunpack.c.h.b16 %v1517
    %v5656 = vunpack.c.l.b16 %v1518
    %v5657 = vunpack.c.h.b16 %v1518
    %v5658 = vunpack.c.l.b16 %v1519
    %v5659 = vunpack.c.h.b16 %v1519
    %v5660 = vunpack.c.l.b16 %v1520
    %v5661 = vunpack.c.h.b16 %v1520
    %v5662 = vunpack.c.l.b16 %v1521
    %v5663 = vunpack.c.h.b16 %v1521
    %v5664 = vunpack.c.l.b16 %v1522
    %v5665 = vunpack.c.h.b16 %v1522
    %v5666 = vunpack.c.l.b16 %v1523
    %v5667 = vunpack.c.h.b16 %v1523
    %v5668 = vunpack.c.l.b16 %v1524
    %v5669 = vunpack.c.h.b16 %v1524
    %v5670 = vunpack.c.l.b16 %v1525
    %v5671 = vunpack.c.h.b16 %v1525
    %v5672 = vunpack.c.l.b16 %v1526
    %v5673 = vunpack.c.h.b16 %v1526
    %v5674 = vunpack.c.l.b16 %v1527
    %v5675 = vunpack.c.h.b16 %v1527
    %v5676 = vunpack.c.l.b16 %v1528
    %v5677 = vunpack.c.h.b16 %v1528
    %v5678 = vunpack.c.l.b16 %v1529
    %v5679 = vunpack.c.h.b16 %v1529
    %v5680 = vunpack.c.l.b16 %v1530
    %v5681 = vunpack.c.h.b16 %v1530
    %v5682 = vunpack.c.l.b16 %v1531
    %v5683 = vunpack.c.h.b16 %v1531
    %v5684 = vunpack.c.l.b16 %v1532
    %v5685 = vunpack.c.h.b16 %v1532
    %v5686 = vunpack.c.l.b16 %v1533
    %v5687 = vunpack.c.h.b16 %v1533
    %v5688 = vunpack.c.l.b16 %v1534
    %v5689 = vunpack.c.h.b16 %v1534
    %v5690 = vunpack.c.l.b16 %v1535
    %v5691 = vunpack.c.h.b16 %v1535
    %v5692 = vunpack.c.l.b16 %v1536
    %v5693 = vunpack.c.h.b16 %v1536
    %v5694 = vunpack.c.l.b16 %v1537
    %v5695 = vunpack.c.h.b16 %v1537
    %v5696 = vunpack.c.l.b16 %v1538
    %v5697 = vunpack.c.h.b16 %v1538
    %v5698 = vunpack.c.l.b16 %v1539
    %v5699 = vunpack.c.h.b16 %v1539
    %v5700 = vunpack.c.l.b16 %v1540
    %v5701 = vunpack.c.h.b16 %v1540
    %v5702 = vunpack.c.l.b16 %v1541
    %v5703 = vunpack.c.h.b16 %v1541
    %v5704 = vunpack.c.l.b16 %v1542
    %v5705 = vunpack.c.h.b16 %v1542
    %v5706 = vunpack.c.l.b16 %v1543
    %v5707 = vunpack.c.h.b16 %v1543
    %v5708 = vunpack.c.l.b16 %v1544
    %v5709 = vunpack.c.h.b16 %v1544
    %v5710 = vunpack.c.l.b16 %v1545
    %v5711 = vunpack.c.h.b16 %v1545
    %v5712 = vunpack.c.l.b16 %v1546
    %v5713 = vunpack.c.h.b16 %v1546
    %v5714 = vunpack.c.l.b16 %v1547
    %v5715 = vunpack.c.h.b16 %v1547
    %v5716 = vunpack.c.l.b16 %v1548
    %v5717 = vunpack.c.h.b16 %v1548
    %v5718 = vunpack.c.l.b16 %v1549
    %v5719 = vunpack.c.h.b16 %v1549
    %v5720 = vunpack.c.l.b16 %v1550
    %v5721 = vunpack.c.h.b16 %v1550
    %v5722 = vunpack.c.l.b16 %v1551
    %v5723 = vunpack.c.h.b16 %v1551
    %v5724 = vunpack.c.l.b16 %v1552
    %v5725 = vunpack.c.h.b16 %v1552
    %v5726 = vunpack.c.l.b16 %v1553
    %v5727 = vunpack.c.h.b16 %v1553
    %v5728 = vunpack.c.l.b16 %v1554
    %v5729 = vunpack.c.h.b16 %v1554
    %v5730 = vunpack.c.l.b16 %v1555
    %v5731 = vunpack.c.h.b16 %v1555
    %v5732 = vunpack.c.l.b16 %v1556
    %v5733 = vunpack.c.h.b16 %v1556
    %v5734 = vunpack.c.l.b16 %v1557
    %v5735 = vunpack.c.h.b16 %v1557
    %v5736 = vunpack.c.l.b16 %v1558
    %v5737 = vunpack.c.h.b16 %v1558
    %v5738 = vunpack.c.l.b16 %v1559
    %v5739 = vunpack.c.h.b16 %v1559
    %v5740 = vunpack.c.l.b16 %v1560
    %v5741 = vunpack.c.h.b16 %v1560
    %v5742 = vunpack.c.l.b16 %v1561
    %v5743 = vunpack.c.h.b16 %v1561
    %v5744 = vunpack.c.l.b16 %v1562
    %v5745 = vunpack.c.h.b16 %v1562
    %v5746 = vunpack.c.l.b16 %v1563
    %v5747 = vunpack.c.h.b16 %v1563
    %v5748 = vunpack.c.l.b16 %v1564
    %v5749 = vunpack.c.h.b16 %v1564
    %v5750 = vunpack.c.l.b16 %v1565
    %v5751 = vunpack.c.h.b16 %v1565
    %v5752 = vunpack.c.l.b16 %v1566
    %v5753 = vunpack.c.h.b16 %v1566
    %v5754 = vunpack.c.l.b16 %v1567
    %v5755 = vunpack.c.h.b16 %v1567
    %v5756 = vunpack.c.l.b16 %v1568
    %v5757 = vunpack.c.h.b16 %v1568
    %v5758 = vunpack.c.l.b16 %v1569
    %v5759 = vunpack.c.h.b16 %v1569
    %v5760 = vunpack.c.l.b16 %v1570
    %v5761 = vunpack.c.h.b16 %v1570
    %v5762 = vunpack.c.l.b16 %v1571
    %v5763 = vunpack.c.h.b16 %v1571
    %v5764 = vunpack.c.l.b16 %v1572
    %v5765 = vunpack.c.h.b16 %v1572
    %v5766 = vunpack.c.l.b16 %v1573
    %v5767 = vunpack.c.h.b16 %v1573
    %v5768 = vunpack.c.l.b16 %v1574
    %v5769 = vunpack.c.h.b16 %v1574
    %v5770 = vunpack.c.l.b16 %v1575
    %v5771 = vunpack.c.h.b16 %v1575
    %v5772 = vunpack.c.l.b16 %v1576
    %v5773 = vunpack.c.h.b16 %v1576
    %v5774 = vunpack.c.l.b16 %v1577
    %v5775 = vunpack.c.h.b16 %v1577
    %v5776 = vunpack.c.l.b16 %v1578
    %v5777 = vunpack.c.h.b16 %v1578
    %v5778 = vunpack.c.l.b16 %v1579
    %v5779 = vunpack.c.h.b16 %v1579
    %v5780 = vunpack.c.l.b16 %v1580
    %v5781 = vunpack.c.h.b16 %v1580
    %v5782 = vunpack.c.l.b16 %v1581
    %v5783 = vunpack.c.h.b16 %v1581
    %v5784 = vunpack.c.l.b16 %v1582
    %v5785 = vunpack.c.h.b16 %v1582
    %v5786 = vunpack.c.l.b16 %v1583
    %v5787 = vunpack.c.h.b16 %v1583
    %v5788 = vunpack.c.l.b16 %v1584
    %v5789 = vunpack.c.h.b16 %v1584
    %v5790 = vunpack.c.l.b16 %v1585
    %v5791 = vunpack.c.h.b16 %v1585
    %v5792 = vunpack.c.l.b16 %v1586
    %v5793 = vunpack.c.h.b16 %v1586
    %v5794 = vunpack.c.l.b16 %v1587
    %v5795 = vunpack.c.h.b16 %v1587
    %v5796 = vunpack.c.l.b16 %v1588
    %v5797 = vunpack.c.h.b16 %v1588
    %v5798 = vunpack.c.l.b16 %v1589
    %v5799 = vunpack.c.h.b16 %v1589
    %v5800 = vunpack.c.l.b16 %v1590
    %v5801 = vunpack.c.h.b16 %v1590
    %v5802 = vunpack.c.l.b16 %v1591
    %v5803 = vunpack.c.h.b16 %v1591
    %v5804 = vunpack.c.l.b16 %v1592
    %v5805 = vunpack.c.h.b16 %v1592
    %v5806 = vunpack.c.l.b16 %v1593
    %v5807 = vunpack.c.h.b16 %v1593
    %v5808 = vunpack.c.l.b16 %v1594
    %v5809 = vunpack.c.h.b16 %v1594
    %v5810 = vunpack.c.l.b16 %v1595
    %v5811 = vunpack.c.h.b16 %v1595
    %v5812 = vunpack.c.l.b16 %v1596
    %v5813 = vunpack.c.h.b16 %v1596
    %v5814 = vunpack.c.l.b16 %v1597
    %v5815 = vunpack.c.h.b16 %v1597
    %v5816 = vunpack.c.l.b16 %v1598
    %v5817 = vunpack.c.h.b16 %v1598
    %v5818 = vunpack.c.l.b16 %v1599
    %v5819 = vunpack.c.h.b16 %v1599
    %v5820 = vunpack.c.l.b16 %v1600
    %v5821 = vunpack.c.h.b16 %v1600
    %v5822 = vunpack.c.l.b16 %v1601
    %v5823 = vunpack.c.h.b16 %v1601
    %v5824 = vunpack.c.l.b16 %v1602
    %v5825 = vunpack.c.h.b16 %v1602
    %v5826 = vunpack.c.l.b16 %v1603
    %v5827 = vunpack.c.h.b16 %v1603
    %v5828 = vunpack.c.l.b16 %v1604
    %v5829 = vunpack.c.h.b16 %v1604
    %v5830 = vunpack.c.l.b16 %v1605
    %v5831 = vunpack.c.h.b16 %v1605
    %v5832 = vunpack.c.l.b16 %v1606
    %v5833 = vunpack.c.h.b16 %v1606
    %v5834 = vunpack.c.l.b16 %v1607
    %v5835 = vunpack.c.h.b16 %v1607
    %v5836 = vunpack.c.l.b16 %v1608
    %v5837 = vunpack.c.h.b16 %v1608
    %v5838 = vunpack.c.l.b16 %v1609
    %v5839 = vunpack.c.h.b16 %v1609
    %v5840 = vunpack.c.l.b16 %v1610
    %v5841 = vunpack.c.h.b16 %v1610
    %v5842 = vunpack.c.l.b16 %v1611
    %v5843 = vunpack.c.h.b16 %v1611
    %v5844 = vunpack.c.l.b16 %v1612
    %v5845 = vunpack.c.h.b16 %v1612
    %v5846 = vunpack.c.l.b16 %v1613
    %v5847 = vunpack.c.h.b16 %v1613
    %v5848 = vunpack.c.l.b16 %v1614
    %v5849 = vunpack.c.h.b16 %v1614
    %v5850 = vunpack.c.l.b16 %v1615
    %v5851 = vunpack.c.h.b16 %v1615
    %v5852 = vunpack.c.l.b16 %v1616
    %v5853 = vunpack.c.h.b16 %v1616
    %v5854 = vunpack.c.l.b16 %v1617
    %v5855 = vunpack.c.h.b16 %v1617
    %v5856 = vunpack.c.l.b16 %v1618
    %v5857 = vunpack.c.h.b16 %v1618
    %v5858 = vunpack.c.l.b16 %v1619
    %v5859 = vunpack.c.h.b16 %v1619
    %v5860 = vunpack.c.l.b16 %v1620
    %v5861 = vunpack.c.h.b16 %v1620
    %v5862 = vunpack.c.l.b16 %v1621
    %v5863 = vunpack.c.h.b16 %v1621
    %v5864 = vunpack.c.l.b16 %v1622
    %v5865 = vunpack.c.h.b16 %v1622
    %v5866 = vunpack.c.l.b16 %v1623
    %v5867 = vunpack.c.h.b16 %v1623
    %v5868 = vunpack.c.l.b16 %v1624
    %v5869 = vunpack.c.h.b16 %v1624
    %v5870 = vunpack.c.l.b16 %v1625
    %v5871 = vunpack.c.h.b16 %v1625
    %v5872 = vunpack.c.l.b16 %v1626
    %v5873 = vunpack.c.h.b16 %v1626
    %v5874 = vunpack.c.l.b16 %v1627
    %v5875 = vunpack.c.h.b16 %v1627
    %v5876 = vunpack.c.l.b16 %v1628
    %v5877 = vunpack.c.h.b16 %v1628
    %v5878 = vunpack.c.l.b16 %v1629
    %v5879 = vunpack.c.h.b16 %v1629
    %v5880 = vunpack.c.l.b16 %v1630
    %v5881 = vunpack.c.h.b16 %v1630
    %v5882 = vunpack.c.l.b16 %v1631
    %v5883 = vunpack.c.h.b16 %v1631
    %v5884 = vunpack.c.l.b16 %v1632
    %v5885 = vunpack.c.h.b16 %v1632
    %v5886 = vunpack.c.l.b16 %v1633
    %v5887 = vunpack.c.h.b16 %v1633
    %v5888 = vunpack.c.l.b16 %v1634
    %v5889 = vunpack.c.h.b16 %v1634
    %v5890 = vunpack.c.l.b16 %v1635
    %v5891 = vunpack.c.h.b16 %v1635
    %v5892 = vunpack.c.l.b16 %v1636
    %v5893 = vunpack.c.h.b16 %v1636
    %v5894 = vunpack.c.l.b16 %v1637
    %v5895 = vunpack.c.h.b16 %v1637
    %v5896 = vunpack.c.l.b16 %v1638
    %v5897 = vunpack.c.h.b16 %v1638
    %v5898 = vunpack.c.l.b16 %v1639
    %v5899 = vunpack.c.h.b16 %v1639
    %v5900 = vunpack.c.l.b16 %v1640
    %v5901 = vunpack.c.h.b16 %v1640
    %v5902 = vunpack.c.l.b16 %v1641
    %v5903 = vunpack.c.h.b16 %v1641
    %v5904 = vunpack.c.l.b16 %v1642
    %v5905 = vunpack.c.h.b16 %v1642
    %v5906 = vunpack.c.l.b16 %v1643
    %v5907 = vunpack.c.h.b16 %v1643
    %v5908 = vunpack.c.l.b16 %v1644
    %v5909 = vunpack.c.h.b16 %v1644
    %v5910 = vunpack.c.l.b16 %v1645
    %v5911 = vunpack.c.h.b16 %v1645
    %v5912 = vunpack.c.l.b16 %v1646
    %v5913 = vunpack.c.h.b16 %v1646
    %v5914 = vunpack.c.l.b16 %v1647
    %v5915 = vunpack.c.h.b16 %v1647
    %v5916 = vunpack.c.l.b16 %v1648
    %v5917 = vunpack.c.h.b16 %v1648
    %v5918 = vunpack.c.l.b16 %v1649
    %v5919 = vunpack.c.h.b16 %v1649
    %v5920 = vunpack.c.l.b16 %v1650
    %v5921 = vunpack.c.h.b16 %v1650
    %v5922 = vunpack.c.l.b16 %v1651
    %v5923 = vunpack.c.h.b16 %v1651
    %v5924 = vunpack.c.l.b16 %v1652
    %v5925 = vunpack.c.h.b16 %v1652
    %v5926 = vunpack.c.l.b16 %v1653
    %v5927 = vunpack.c.h.b16 %v1653
    %v5928 = vunpack.c.l.b16 %v1654
    %v5929 = vunpack.c.h.b16 %v1654
    %v5930 = vunpack.c.l.b16 %v1655
    %v5931 = vunpack.c.h.b16 %v1655
    %v5932 = vunpack.c.l.b16 %v1656
    %v5933 = vunpack.c.h.b16 %v1656
    %v5934 = vunpack.c.l.b16 %v1657
    %v5935 = vunpack.c.h.b16 %v1657
    %v5936 = vunpack.c.l.b16 %v1658
    %v5937 = vunpack.c.h.b16 %v1658
    %v5938 = vunpack.c.l.b16 %v1659
    %v5939 = vunpack.c.h.b16 %v1659
    %v5940 = vunpack.c.l.b16 %v1660
    %v5941 = vunpack.c.h.b16 %v1660
    %v5942 = vunpack.c.l.b16 %v1661
    %v5943 = vunpack.c.h.b16 %v1661
    %v5944 = vunpack.c.l.b16 %v1662
    %v5945 = vunpack.c.h.b16 %v1662
    %v5946 = vunpack.c.l.b16 %v1663
    %v5947 = vunpack.c.h.b16 %v1663
    %v5948 = vunpack.c.l.b16 %v1664
    %v5949 = vunpack.c.h.b16 %v1664
    %v5950 = vunpack.c.l.b16 %v1665
    %v5951 = vunpack.c.h.b16 %v1665
    %v5952 = vunpack.c.l.b16 %v1666
    %v5953 = vunpack.c.h.b16 %v1666
    %v5954 = vunpack.c.l.b16 %v1667
    %v5955 = vunpack.c.h.b16 %v1667
    %v5956 = vunpack.c.l.b16 %v1668
    %v5957 = vunpack.c.h.b16 %v1668
    %v5958 = vunpack.c.l.b16 %v1669
    %v5959 = vunpack.c.h.b16 %v1669
    %v5960 = vunpack.c.l.b16 %v1670
    %v5961 = vunpack.c.h.b16 %v1670
    %v5962 = vunpack.c.l.b16 %v1671
    %v5963 = vunpack.c.h.b16 %v1671
    %v5964 = vunpack.c.l.b16 %v1672
    %v5965 = vunpack.c.h.b16 %v1672
    %v5966 = vunpack.c.l.b16 %v1673
    %v5967 = vunpack.c.h.b16 %v1673
    %v5968 = vunpack.c.l.b16 %v1674
    %v5969 = vunpack.c.h.b16 %v1674
    %v5970 = vunpack.c.l.b16 %v1675
    %v5971 = vunpack.c.h.b16 %v1675
    %v5972 = vunpack.c.l.b16 %v1676
    %v5973 = vunpack.c.h.b16 %v1676
    %v5974 = vunpack.c.l.b16 %v1677
    %v5975 = vunpack.c.h.b16 %v1677
    %v5976 = vunpack.c.l.b16 %v1678
    %v5977 = vunpack.c.h.b16 %v1678
    %v5978 = vunpack.c.l.b16 %v1679
    %v5979 = vunpack.c.h.b16 %v1679
    %v5980 = vunpack.c.l.b16 %v1680
    %v5981 = vunpack.c.h.b16 %v1680
    %v5982 = vunpack.c.l.b16 %v1681
    %v5983 = vunpack.c.h.b16 %v1681
    %v5984 = vunpack.c.l.b16 %v1682
    %v5985 = vunpack.c.h.b16 %v1682
    %v5986 = vunpack.c.l.b16 %v1683
    %v5987 = vunpack.c.h.b16 %v1683
    %v5988 = vunpack.c.l.b16 %v1684
    %v5989 = vunpack.c.h.b16 %v1684
    %v5990 = vunpack.c.l.b16 %v1685
    %v5991 = vunpack.c.h.b16 %v1685
    %v5992 = vunpack.c.l.b16 %v1686
    %v5993 = vunpack.c.h.b16 %v1686
    %v5994 = vunpack.c.l.b16 %v1687
    %v5995 = vunpack.c.h.b16 %v1687
    %v5996 = vunpack.c.l.b16 %v1688
    %v5997 = vunpack.c.h.b16 %v1688
    %v5998 = vunpack.c.l.b16 %v1689
    %v5999 = vunpack.c.h.b16 %v1689
    %v6000 = vunpack.c.l.b16 %v1690
    %v6001 = vunpack.c.h.b16 %v1690
    %v6002 = vunpack.c.l.b16 %v1691
    %v6003 = vunpack.c.h.b16 %v1691
    %v6004 = vunpack.c.l.b16 %v1692
    %v6005 = vunpack.c.h.b16 %v1692
    %v6006 = vunpack.c.l.b16 %v1693
    %v6007 = vunpack.c.h.b16 %v1693
    %v6008 = vunpack.c.l.b16 %v1694
    %v6009 = vunpack.c.h.b16 %v1694
    %v6010 = vunpack.c.l.b16 %v1695
    %v6011 = vunpack.c.h.b16 %v1695
    %v6012 = vunpack.c.l.b16 %v1696
    %v6013 = vunpack.c.h.b16 %v1696
    %v6014 = vunpack.c.l.b16 %v1697
    %v6015 = vunpack.c.h.b16 %v1697
    %v6016 = vunpack.c.l.b16 %v1698
    %v6017 = vunpack.c.h.b16 %v1698
    %v6018 = vunpack.c.l.b16 %v1699
    %v6019 = vunpack.c.h.b16 %v1699
    %v6020 = vunpack.c.l.b16 %v1700
    %v6021 = vunpack.c.h.b16 %v1700
    %v6022 = vunpack.c.l.b16 %v1701
    %v6023 = vunpack.c.h.b16 %v1701
    %v6024 = vunpack.c.l.b16 %v1702
    %v6025 = vunpack.c.h.b16 %v1702
    %v6026 = vunpack.c.l.b16 %v1703
    %v6027 = vunpack.c.h.b16 %v1703
    %v6028 = vunpack.c.l.b16 %v1704
    %v6029 = vunpack.c.h.b16 %v1704
    %v6030 = vunpack.c.l.b16 %v1705
    %v6031 = vunpack.c.h.b16 %v1705
    %v6032 = vunpack.c.l.b16 %v1706
    %v6033 = vunpack.c.h.b16 %v1706
    %v6034 = vunpack.c.l.b16 %v1707
    %v6035 = vunpack.c.h.b16 %v1707
    %v6036 = vunpack.c.l.b16 %v1708
    %v6037 = vunpack.c.h.b16 %v1708
    %v6038 = vunpack.c.l.b16 %v1709
    %v6039 = vunpack.c.h.b16 %v1709
    %v6040 = vunpack.c.l.b16 %v1710
    %v6041 = vunpack.c.h.b16 %v1710
    %v6042 = vunpack.c.l.b16 %v1711
    %v6043 = vunpack.c.h.b16 %v1711
    %v6044 = vunpack.c.l.b16 %v1712
    %v6045 = vunpack.c.h.b16 %v1712
    %v6046 = vunpack.c.l.b16 %v1713
    %v6047 = vunpack.c.h.b16 %v1713
    %v6048 = vunpack.c.l.b16 %v1714
    %v6049 = vunpack.c.h.b16 %v1714
    %v6050 = vunpack.c.l.b16 %v1715
    %v6051 = vunpack.c.h.b16 %v1715
    %v6052 = vunpack.c.l.b16 %v1716
    %v6053 = vunpack.c.h.b16 %v1716
    %v6054 = vunpack.c.l.b16 %v1717
    %v6055 = vunpack.c.h.b16 %v1717
    %v6056 = vunpack.c.l.b16 %v1718
    %v6057 = vunpack.c.h.b16 %v1718
    %v6058 = vunpack.c.l.b16 %v1719
    %v6059 = vunpack.c.h.b16 %v1719
    %v6060 = vunpack.c.l.b16 %v1720
    %v6061 = vunpack.c.h.b16 %v1720
    %v6062 = vunpack.c.l.b16 %v1721
    %v6063 = vunpack.c.h.b16 %v1721
    %v6064 = vunpack.c.l.b16 %v1722
    %v6065 = vunpack.c.h.b16 %v1722
    %v6066 = vunpack.c.l.b16 %v1723
    %v6067 = vunpack.c.h.b16 %v1723
    %v6068 = vunpack.c.l.b16 %v1724
    %v6069 = vunpack.c.h.b16 %v1724
    %v6070 = vunpack.c.l.b16 %v1725
    %v6071 = vunpack.c.h.b16 %v1725
    %v6072 = vunpack.c.l.b16 %v1726
    %v6073 = vunpack.c.h.b16 %v1726
    %v6074 = vunpack.c.l.b16 %v1727
    %v6075 = vunpack.c.h.b16 %v1727
    %v6076 = vunpack.c.l.b16 %v1728
    %v6077 = vunpack.c.h.b16 %v1728
    %v6078 = vunpack.c.l.b16 %v1729
    %v6079 = vunpack.c.h.b16 %v1729
    %v6080 = vunpack.c.l.b16 %v1730
    %v6081 = vunpack.c.h.b16 %v1730
    %v6082 = vunpack.c.l.b16 %v1731
    %v6083 = vunpack.c.h.b16 %v1731
    %v6084 = vunpack.c.l.b16 %v1732
    %v6085 = vunpack.c.h.b16 %v1732
    %v6086 = vunpack.c.l.b16 %v1733
    %v6087 = vunpack.c.h.b16 %v1733
    %v6088 = vunpack.c.l.b16 %v1734
    %v6089 = vunpack.c.h.b16 %v1734
    %v6090 = vunpack.c.l.b16 %v1735
    %v6091 = vunpack.c.h.b16 %v1735
    %v6092 = vunpack.c.l.b16 %v1736
    %v6093 = vunpack.c.h.b16 %v1736
    %v6094 = vunpack.c.l.b16 %v1737
    %v6095 = vunpack.c.h.b16 %v1737
    %v6096 = vunpack.c.l.b16 %v1738
    %v6097 = vunpack.c.h.b16 %v1738
    %v6098 = vunpack.c.l.b16 %v1739
    %v6099 = vunpack.c.h.b16 %v1739
    %v6100 = vunpack.c.l.b16 %v1740
    %v6101 = vunpack.c.h.b16 %v1740
    %v6102 = vunpack.c.l.b16 %v1741
    %v6103 = vunpack.c.h.b16 %v1741
    %v6104 = vunpack.c.l.b16 %v1742
    %v6105 = vunpack.c.h.b16 %v1742
    %v6106 = vunpack.c.l.b16 %v1743
    %v6107 = vunpack.c.h.b16 %v1743
    %v6108 = vunpack.c.l.b16 %v1744
    %v6109 = vunpack.c.h.b16 %v1744
    %v6110 = vunpack.c.l.b16 %v1745
    %v6111 = vunpack.c.h.b16 %v1745
    %v6112 = vunpack.c.l.b16 %v1746
    %v6113 = vunpack.c.h.b16 %v1746
    %v6114 = vunpack.c.l.b16 %v1747
    %v6115 = vunpack.c.h.b16 %v1747
    %v6116 = vunpack.c.l.b16 %v1748
    %v6117 = vunpack.c.h.b16 %v1748
    %v6118 = vunpack.c.l.b16 %v1749
    %v6119 = vunpack.c.h.b16 %v1749
    %v6120 = vunpack.c.l.b16 %v1750
    %v6121 = vunpack.c.h.b16 %v1750
    %v6122 = vunpack.c.l.b16 %v1751
    %v6123 = vunpack.c.h.b16 %v1751
    %v6124 = vunpack.c.l.b16 %v1752
    %v6125 = vunpack.c.h.b16 %v1752
    %v6126 = vunpack.c.l.b16 %v1753
    %v6127 = vunpack.c.h.b16 %v1753
    %v6128 = vpack.c.b16 %v3266, %v3212
    %v6129 = vpack.c.b16 %v3267, %v3213
    %v6130 = vpack.c.b16 %v3268, %v3214
    %v6131 = vpack.c.b16 %v3269, %v3215
    %v6132 = vpack.c.b16 %v3270, %v3216
    %v6133 = vpack.c.b16 %v3271, %v3217
    %v6134 = vpack.c.b16 %v3272, %v3218
    %v6135 = vpack.c.b16 %v3273, %v3219
    %v6136 = vpack.c.b16 %v3274, %v3220
    %v6137 = vpack.c.b16 %v3275, %v3221
    %v6138 = vpack.c.b16 %v3276, %v3222
    %v6139 = vpack.c.b16 %v3277, %v3223
    %v6140 = vpack.c.b16 %v3278, %v3224
    %v6141 = vpack.c.b16 %v3279, %v3225
    %v6142 = vpack.c.b16 %v3280, %v3226
    %v6143 = vpack.c.b16 %v3281, %v3227
    %v6144 = vpack.c.b16 %v3282, %v3228
    %v6145 = vpack.c.b16 %v3283, %v3229
    %v6146 = vpack.c.b16 %v3284, %v3230
    %v6147 = vpack.c.b16 %v3285, %v3231
    %v6148 = vpack.c.b16 %v3286, %v3232
    %v6149 = vpack.c.b16 %v3287, %v3233
    %v6150 = vpack.c.b16 %v3288, %v3234
    %v6151 = vpack.c.b16 %v3289, %v3235
    %v6152 = vpack.c.b16 %v3290, %v3236
    %v6153 = vpack.c.b16 %v3291, %v3237
    %v6154 = vpack.c.b16 %v3292, %v3238
    %v6155 = vpack.c.b16 %v3293, %v3239
    %v6156 = vpack.c.b16 %v3294, %v3240
    %v6157 = vpack.c.b16 %v3295, %v3241
    %v6158 = vpack.c.b16 %v3296, %v3242
    %v6159 = vpack.c.b16 %v3297, %v3243
    %v6160 = vpack.c.b16 %v3298, %v3244
    %v6161 = vpack.c.b16 %v3299, %v3245
    %v6162 = vpack.c.b16 %v3300, %v3246
    %v6163 = vpack.c.b16 %v3301, %v3247
    %v6164 = vpack.c.b16 %v3302, %v3248
    %v6165 = vpack.c.b16 %v3303, %v3249
    %v6166 = vpack.c.b16 %v3304, %v3250
    %v6167 = vpack.c.b16 %v3305, %v3251
    %v6168 = vpack.c.b16 %v3306, %v3252
    %v6169 = vpack.c.b16 %v3307, %v3253
    %v6170 = vpack.c.b16 %v3308, %v3254
    %v6171 = vpack.c.b16 %v3309, %v3255
    %v6172 = vpack.c.b16 %v3310, %v3256
    %v6173 = vpack.c.b16 %v3311, %v3257
    %v6174 = vpack.c.b16 %v3312, %v3258
    %v6175 = vpack.c.b16 %v3313, %v3259
    %v6176 = vpack.c.b16 %v3314, %v3260
    %v6177 = vpack.c.b16 %v3315, %v3261
    %v6178 = vpack.c.b16 %v3316, %v3262
    %v6179 = vpack.c.b16 %v3317, %v3263
    %v6180 = vpack.c.b16 %v3318, %v3264
    %v6181 = vpack.c.b16 %v3319, %v3265
    %v6182 = vpack.c.b16 %v3374, %v3320
    %v6183 = vpack.c.b16 %v3375, %v3321
    %v6184 = vpack.c.b16 %v3376, %v3322
    %v6185 = vpack.c.b16 %v3377, %v3323
    %v6186 = vpack.c.b16 %v3378, %v3324
    %v6187 = vpack.c.b16 %v3379, %v3325
    %v6188 = vpack.c.b16 %v3380, %v3326
    %v6189 = vpack.c.b16 %v3381, %v3327
    %v6190 = vpack.c.b16 %v3382, %v3328
    %v6191 = vpack.c.b16 %v3383, %v3329
    %v6192 = vpack.c.b16 %v3384, %v3330
    %v6193 = vpack.c.b16 %v3385, %v3331
    %v6194 = vpack.c.b16 %v3386, %v3332
    %v6195 = vpack.c.b16 %v3387, %v3333
    %v6196 = vpack.c.b16 %v3388, %v3334
    %v6197 = vpack.c.b16 %v3389, %v3335
    %v6198 = vpack.c.b16 %v3390, %v3336
    %v6199 = vpack.c.b16 %v3391, %v3337
    %v6200 = vpack.c.b16 %v3392, %v3338
    %v6201 = vpack.c.b16 %v3393, %v3339
    %v6202 = vpack.c.b16 %v3394, %v3340
    %v6203 = vpack.c.b16 %v3395, %v3341
    %v6204 = vpack.c.b16 %v3396, %v3342
    %v6205 = vpack.c.b16 %v3397, %v3343
    %v6206 = vpack.c.b16 %v3398, %v3344
    %v6207 = vpack.c.b16 %v3399, %v3345
    %v6208 = vpack.c.b16 %v3400, %v3346
    %v6209 = vpack.c.b16 %v3401, %v3347
    %v6210 = vpack.c.b16 %v3402, %v3348
    %v6211 = vpack.c.b16 %v3403, %v3349
    %v6212 = vpack.c.b16 %v3404, %v3350
    %v6213 = vpack.c.b16 %v3405, %v3351
    %v6214 = vpack.c.b16 %v3406, %v3352
    %v6215 = vpack.c.b16 %v3407, %v3353
    %v6216 = vpack.c.b16 %v3408, %v3354
    %v6217 = vpack.c.b16 %v3409, %v3355
    %v6218 = vpack.c.b16 %v3410, %v3356
    %v6219 = vpack.c.b16 %v3411, %v3357
    %v6220 = vpack.c.b16 %v3412, %v3358
    %v6221 = vpack.c.b16 %v3413, %v3359
    %v6222 = vpack.c.b16 %v3414, %v3360
    %v6223 = vpack.c.b16 %v3415, %v3361
    %v6224 = vpack.c.b16 %v3416, %v3362
    %v6225 = vpack.c.b16 %v3417, %v3363
    %v6226 = vpack.c.b16 %v3418, %v3364
    %v6227 = vpack.c.b16 %v3419, %v3365
    %v6228 = vpack.c.b16 %v3420, %v3366
    %v6229 = vpack.c.b16 %v3421, %v3367
    %v6230 = vpack.c.b16 %v3422, %v3368
    %v6231 = vpack.c.b16 %v3423, %v3369
    %v6232 = vpack.c.b16 %v3424, %v3370
    %v6233 = vpack.c.b16 %v3425, %v3371
    %v6234 = vpack.c.b16 %v3426, %v3372
    %v6235 = vpack.c.b16 %v3427, %v3373
    %v6236 = vpack.c.b16 %v3482, %v3428
    %v6237 = vpack.c.b16 %v3483, %v3429
    %v6238 = vpack.c.b16 %v3484, %v3430
    %v6239 = vpack.c.b16 %v3485, %v3431
    %v6240 = vpack.c.b16 %v3486, %v3432
    %v6241 = vpack.c.b16 %v3487, %v3433
    %v6242 = vpack.c.b16 %v3488, %v3434
    %v6243 = vpack.c.b16 %v3489, %v3435
    %v6244 = vpack.c.b16 %v3490, %v3436
    %v6245 = vpack.c.b16 %v3491, %v3437
    %v6246 = vpack.c.b16 %v3492, %v3438
    %v6247 = vpack.c.b16 %v3493, %v3439
    %v6248 = vpack.c.b16 %v3494, %v3440
    %v6249 = vpack.c.b16 %v3495, %v3441
    %v6250 = vpack.c.b16 %v3496, %v3442
    %v6251 = vpack.c.b16 %v3497, %v3443
    %v6252 = vpack.c.b16 %v3498, %v3444
    %v6253 = vpack.c.b16 %v3499, %v3445
    %v6254 = vpack.c.b16 %v3500, %v3446
    %v6255 = vpack.c.b16 %v3501, %v3447
    %v6256 = vpack.c.b16 %v3502, %v3448
    %v6257 = vpack.c.b16 %v3503, %v3449
    %v6258 = vpack.c.b16 %v3504, %v3450
    %v6259 = vpack.c.b16 %v3505, %v3451
    %v6260 = vpack.c.b16 %v3506, %v3452
    %v6261 = vpack.c.b16 %v3507, %v3453
    %v6262 = vpack.c.b16 %v3508, %v3454
    %v6263 = vpack.c.b16 %v3509, %v3455
    %v6264 = vpack.c.b16 %v3510, %v3456
    %v6265 = vpack.c.b16 %v3511, %v3457
    %v6266 = vpack.c.b16 %v3512, %v3458
    %v6267 = vpack.c.b16 %v3513, %v3459
    %v6268 = vpack.c.b16 %v3514, %v3460
    %v6269 = vpack.c.b16 %v3515, %v3461
    %v6270 = vpack.c.b16 %v3516, %v3462
    %v6271 = vpack.c.b16 %v3517, %v3463
    %v6272 = vpack.c.b16 %v3518, %v3464
    %v6273 = vpack.c.b16 %v3519, %v3465
    %v6274 = vpack.c.b16 %v3520, %v3466
    %v6275 = vpack.c.b16 %v3521, %v3467
    %v6276 = vpack.c.b16 %v3522, %v3468
    %v6277 = vpack.c.b16 %v3523, %v3469
    %v6278 = vpack.c.b16 %v3524, %v3470
    %v6279 = vpack.c.b16 %v3525, %v3471
    %v6280 = vpack.c.b16 %v3526, %v3472
    %v6281 = vpack.c.b16 %v3527, %v3473
    %v6282 = vpack.c.b16 %v3528, %v3474
    %v6283 = vpack.c.b16 %v3529, %v3475
    %v6284 = vpack.c.b16 %v3530, %v3476
    %v6285 = vpack.c.b16 %v3531, %v3477
    %v6286 = vpack.c.b16 %v3532, %v3478
    %v6287 = vpack.c.b16 %v3533, %v3479
    %v6288 = vpack.c.b16 %v3534, %v3480
    %v6289 = vpack.c.b16 %v3535, %v3481
    %v6290 = vpack.c.b16 %v3590, %v3536
    %v6291 = vpack.c.b16 %v3591, %v3537
    %v6292 = vpack.c.b16 %v3592, %v3538
    %v6293 = vpack.c.b16 %v3593, %v3539
    %v6294 = vpack.c.b16 %v3594, %v3540
    %v6295 = vpack.c.b16 %v3595, %v3541
    %v6296 = vpack.c.b16 %v3596, %v3542
    %v6297 = vpack.c.b16 %v3597, %v3543
    %v6298 = vpack.c.b16 %v3598, %v3544
    %v6299 = vpack.c.b16 %v3599, %v3545
    %v6300 = vpack.c.b16 %v3600, %v3546
    %v6301 = vpack.c.b16 %v3601, %v3547
    %v6302 = vpack.c.b16 %v3602, %v3548
    %v6303 = vpack.c.b16 %v3603, %v3549
    %v6304 = vpack.c.b16 %v3604, %v3550
    %v6305 = vpack.c.b16 %v3605, %v3551
    %v6306 = vpack.c.b16 %v3606, %v3552
    %v6307 = vpack.c.b16 %v3607, %v3553
    %v6308 = vpack.c.b16 %v3608, %v3554
    %v6309 = vpack.c.b16 %v3609, %v3555
    %v6310 = vpack.c.b16 %v3610, %v3556
    %v6311 = vpack.c.b16 %v3611, %v3557
    %v6312 = vpack.c.b16 %v3612, %v3558
    %v6313 = vpack.c.b16 %v3613, %v3559
    %v6314 = vpack.c.b16 %v3614, %v3560
    %v6315 = vpack.c.b16 %v3615, %v3561
    %v6316 = vpack.c.b16 %v3616, %v3562
    %v6317 = vpack.c.b16 %v3617, %v3563
    %v6318 = vpack.c.b16 %v3618, %v3564
    %v6319 = vpack.c.b16 %v3619, %v3565
    %v6320 = vpack.c.b16 %v3620, %v3566
    %v6321 = vpack.c.b16 %v3621, %v3567
    %v6322 = vpack.c.b16 %v3622, %v3568
    %v6323 = vpack.c.b16 %v3623, %v3569
    %v6324 = vpack.c.b16 %v3624, %v3570
    %v6325 = vpack.c.b16 %v3625, %v3571
    %v6326 = vpack.c.b16 %v3626, %v3572
    %v6327 = vpack.c.b16 %v3627, %v3573
    %v6328 = vpack.c.b16 %v3628, %v3574
    %v6329 = vpack.c.b16 %v3629, %v3575
    %v6330 = vpack.c.b16 %v3630, %v3576
    %v6331 = vpack.c.b16 %v3631, %v3577
    %v6332 = vpack.c.b16 %v3632, %v3578
    %v6333 = vpack.c.b16 %v3633, %v3579
    %v6334 = vpack.c.b16 %v3634, %v3580
    %v6335 = vpack.c.b16 %v3635, %v3581
    %v6336 = vpack.c.b16 %v3636, %v3582
    %v6337 = vpack.c.b16 %v3637, %v3583
    %v6338 = vpack.c.b16 %v3638, %v3584
    %v6339 = vpack.c.b16 %v3639, %v3585
    %v6340 = vpack.c.b16 %v3640, %v3586
    %v6341 = vpack.c.b16 %v3641, %v3587
    %v6342 = vpack.c.b16 %v3642, %v3588
    %v6343 = vpack.c.b16 %v3643, %v3589
    %v6344 = vpack.c.b16 %v3698, %v3644
    %v6345 = vpack.c.b16 %v3699, %v3645
    %v6346 = vpack.c.b16 %v3700, %v3646
    %v6347 = vpack.c.b16 %v3701, %v3647
    %v6348 = vpack.c.b16 %v3702, %v3648
    %v6349 = vpack.c.b16 %v3703, %v3649
    %v6350 = vpack.c.b16 %v3704, %v3650
    %v6351 = vpack.c.b16 %v3705, %v3651
    %v6352 = vpack.c.b16 %v3706, %v3652
    %v6353 = vpack.c.b16 %v3707, %v3653
    %v6354 = vpack.c.b16 %v3708, %v3654
    %v6355 = vpack.c.b16 %v3709, %v3655
    %v6356 = vpack.c.b16 %v3710, %v3656
    %v6357 = vpack.c.b16 %v3711, %v3657
    %v6358 = vpack.c.b16 %v3712, %v3658
    %v6359 = vpack.c.b16 %v3713, %v3659
    %v6360 = vpack.c.b16 %v3714, %v3660
    %v6361 = vpack.c.b16 %v3715, %v3661
    %v6362 = vpack.c.b16 %v3716, %v3662
    %v6363 = vpack.c.b16 %v3717, %v3663
    %v6364 = vpack.c.b16 %v3718, %v3664
    %v6365 = vpack.c.b16 %v3719, %v3665
    %v6366 = vpack.c.b16 %v3720, %v3666
    %v6367 = vpack.c.b16 %v3721, %v3667
    %v6368 = vpack.c.b16 %v3722, %v3668
    %v6369 = vpack.c.b16 %v3723, %v3669
    %v6370 = vpack.c.b16 %v3724, %v3670
    %v6371 = vpack.c.b16 %v3725, %v3671
    %v6372 = vpack.c.b16 %v3726, %v3672
    %v6373 = vpack.c.b16 %v3727, %v3673
    %v6374 = vpack.c.b16 %v3728, %v3674
    %v6375 = vpack.c.b16 %v3729, %v3675
    %v6376 = vpack.c.b16 %v3730, %v3676
    %v6377 = vpack.c.b16 %v3731, %v3677
    %v6378 = vpack.c.b16 %v3732, %v3678
    %v6379 = vpack.c.b16 %v3733, %v3679
    %v6380 = vpack.c.b16 %v3734, %v3680
    %v6381 = vpack.c.b16 %v3735, %v3681
    %v6382 = vpack.c.b16 %v3736, %v3682
    %v6383 = vpack.c.b16 %v3737, %v3683
    %v6384 = vpack.c.b16 %v3738, %v3684
    %v6385 = vpack.c.b16 %v3739, %v3685
    %v6386 = vpack.c.b16 %v3740, %v3686
    %v6387 = vpack.c.b16 %v3741, %v3687
    %v6388 = vpack.c.b16 %v3742, %v3688
    %v6389 = vpack.c.b16 %v3743, %v3689
    %v6390 = vpack.c.b16 %v3744, %v3690
    %v6391 = vpack.c.b16 %v3745, %v3691
    %v6392 = vpack.c.b16 %v3746, %v3692
    %v6393 = vpack.c.b16 %v3747, %v3693
    %v6394 = vpack.c.b16 %v3748, %v3694
    %v6395 = vpack.c.b16 %v3749, %v3695
    %v6396 = vpack.c.b16 %v3750, %v3696
    %v6397 = vpack.c.b16 %v3751, %v3697
    %v6398 = vpack.c.b16 %v3806, %v3752
    %v6399 = vpack.c.b16 %v3807, %v3753
    %v6400 = vpack.c.b16 %v3808, %v3754
    %v6401 = vpack.c.b16 %v3809, %v3755
    %v6402 = vpack.c.b16 %v3810, %v3756
    %v6403 = vpack.c.b16 %v3811, %v3757
    %v6404 = vpack.c.b16 %v3812, %v3758
    %v6405 = vpack.c.b16 %v3813, %v3759
    %v6406 = vpack.c.b16 %v3814, %v3760
    %v6407 = vpack.c.b16 %v3815, %v3761
    %v6408 = vpack.c.b16 %v3816, %v3762
    %v6409 = vpack.c.b16 %v3817, %v3763
    %v6410 = vpack.c.b16 %v3818, %v3764
    %v6411 = vpack.c.b16 %v3819, %v3765
    %v6412 = vpack.c.b16 %v3820, %v3766
    %v6413 = vpack.c.b16 %v3821, %v3767
    %v6414 = vpack.c.b16 %v3822, %v3768
    %v6415 = vpack.c.b16 %v3823, %v3769
    %v6416 = vpack.c.b16 %v3824, %v3770
    %v6417 = vpack.c.b16 %v3825, %v3771
    %v6418 = vpack.c.b16 %v3826, %v3772
    %v6419 = vpack.c.b16 %v3827, %v3773
    %v6420 = vpack.c.b16 %v3828, %v3774
    %v6421 = vpack.c.b16 %v3829, %v3775
    %v6422 = vpack.c.b16 %v3830, %v3776
    %v6423 = vpack.c.b16 %v3831, %v3777
    %v6424 = vpack.c.b16 %v3832, %v3778
    %v6425 = vpack.c.b16 %v3833, %v3779
    %v6426 = vpack.c.b16 %v3834, %v3780
    %v6427 = vpack.c.b16 %v3835, %v3781
    %v6428 = vpack.c.b16 %v3836, %v3782
    %v6429 = vpack.c.b16 %v3837, %v3783
    %v6430 = vpack.c.b16 %v3838, %v3784
    %v6431 = vpack.c.b16 %v3839, %v3785
    %v6432 = vpack.c.b16 %v3840, %v3786
    %v6433 = vpack.c.b16 %v3841, %v3787
    %v6434 = vpack.c.b16 %v3842, %v3788
    %v6435 = vpack.c.b16 %v3843, %v3789
    %v6436 = vpack.c.b16 %v3844, %v3790
    %v6437 = vpack.c.b16 %v3845, %v3791
    %v6438 = vpack.c.b16 %v3846, %v3792
    %v6439 = vpack.c.b16 %v3847, %v3793
    %v6440 = vpack.c.b16 %v3848, %v3794
    %v6441 = vpack.c.b16 %v3849, %v3795
    %v6442 = vpack.c.b16 %v3850, %v3796
    %v6443 = vpack.c.b16 %v3851, %v3797
    %v6444 = vpack.c.b16 %v3852, %v3798
    %v6445 = vpack.c.b16 %v3853, %v3799
    %v6446 = vpack.c.b16 %v3854, %v3800
    %v6447 = vpack.c.b16 %v3855, %v3801
    %v6448 = vpack.c.b16 %v3856, %v3802
    %v6449 = vpack.c.b16 %v3857, %v3803
    %v6450 = vpack.c.b16 %v3858, %v3804
    %v6451 = vpack.c.b16 %v3859, %v3805
    %v6452 = vpack.c.b16 %v3914, %v3860
    %v6453 = vpack.c.b16 %v3915, %v3861
    %v6454 = vpack.c.b16 %v3916, %v3862
    %v6455 = vpack.c.b16 %v3917, %v3863
    %v6456 = vpack.c.b16 %v3918, %v3864
    %v6457 = vpack.c.b16 %v3919, %v3865
    %v6458 = vpack.c.b16 %v3920, %v3866
    %v6459 = vpack.c.b16 %v3921, %v3867
    %v6460 = vpack.c.b16 %v3922, %v3868
    %v6461 = vpack.c.b16 %v3923, %v3869
    %v6462 = vpack.c.b16 %v3924, %v3870
    %v6463 = vpack.c.b16 %v3925, %v3871
    %v6464 = vpack.c.b16 %v3926, %v3872
    %v6465 = vpack.c.b16 %v3927, %v3873
    %v6466 = vpack.c.b16 %v3928, %v3874
    %v6467 = vpack.c.b16 %v3929, %v3875
    %v6468 = vpack.c.b16 %v3930, %v3876
    %v6469 = vpack.c.b16 %v3931, %v3877
    %v6470 = vpack.c.b16 %v3932, %v3878
    %v6471 = vpack.c.b16 %v3933, %v3879
    %v6472 = vpack.c.b16 %v3934, %v3880
    %v6473 = vpack.c.b16 %v3935, %v3881
    %v6474 = vpack.c.b16 %v3936, %v3882
    %v6475 = vpack.c.b16 %v3937, %v3883
    %v6476 = vpack.c.b16 %v3938, %v3884
    %v6477 = vpack.c.b16 %v3939, %v3885
    %v6478 = vpack.c.b16 %v3940, %v3886
    %v6479 = vpack.c.b16 %v3941, %v3887
    %v6480 = vpack.c.b16 %v3942, %v3888
    %v6481 = vpack.c.b16 %v3943, %v3889
    %v6482 = vpack.c.b16 %v3944, %v3890
    %v6483 = vpack.c.b16 %v3945, %v3891
    %v6484 = vpack.c.b16 %v3946, %v3892
    %v6485 = vpack.c.b16 %v3947, %v3893
    %v6486 = vpack.c.b16 %v3948, %v3894
    %v6487 = vpack.c.b16 %v3949, %v3895
    %v6488 = vpack.c.b16 %v3950, %v3896
    %v6489 = vpack.c.b16 %v3951, %v3897
    %v6490 = vpack.c.b16 %v3952, %v3898
    %v6491 = vpack.c.b16 %v3953, %v3899
    %v6492 = vpack.c.b16 %v3954, %v3900
    %v6493 = vpack.c.b16 %v3955, %v3901
    %v6494 = vpack.c.b16 %v3956, %v3902
    %v6495 = vpack.c.b16 %v3957, %v3903
    %v6496 = vpack.c.b16 %v3958, %v3904
    %v6497 = vpack.c.b16 %v3959, %v3905
    %v6498 = vpack.c.b16 %v3960, %v3906
    %v6499 = vpack.c.b16 %v3961, %v3907
    %v6500 = vpack.c.b16 %v3962, %v3908
    %v6501 = vpack.c.b16 %v3963, %v3909
    %v6502 = vpack.c.b16 %v3964, %v3910
    %v6503 = vpack.c.b16 %v3965, %v3911
    %v6504 = vpack.c.b16 %v3966, %v3912
    %v6505 = vpack.c.b16 %v3967, %v3913
    %v6506 = vpack.c.b16 %v4022, %v3968
    %v6507 = vpack.c.b16 %v4023, %v3969
    %v6508 = vpack.c.b16 %v4024, %v3970
    %v6509 = vpack.c.b16 %v4025, %v3971
    %v6510 = vpack.c.b16 %v4026, %v3972
    %v6511 = vpack.c.b16 %v4027, %v3973
    %v6512 = vpack.c.b16 %v4028, %v3974
    %v6513 = vpack.c.b16 %v4029, %v3975
    %v6514 = vpack.c.b16 %v4030, %v3976
    %v6515 = vpack.c.b16 %v4031, %v3977
    %v6516 = vpack.c.b16 %v4032, %v3978
    %v6517 = vpack.c.b16 %v4033, %v3979
    %v6518 = vpack.c.b16 %v4034, %v3980
    %v6519 = vpack.c.b16 %v4035, %v3981
    %v6520 = vpack.c.b16 %v4036, %v3982
    %v6521 = vpack.c.b16 %v4037, %v3983
    %v6522 = vpack.c.b16 %v4038, %v3984
    %v6523 = vpack.c.b16 %v4039, %v3985
    %v6524 = vpack.c.b16 %v4040, %v3986
    %v6525 = vpack.c.b16 %v4041, %v3987
    %v6526 = vpack.c.b16 %v4042, %v3988
    %v6527 = vpack.c.b16 %v4043, %v3989
    %v6528 = vpack.c.b16 %v4044, %v3990
    %v6529 = vpack.c.b16 %v4045, %v3991
    %v6530 = vpack.c.b16 %v4046, %v3992
    %v6531 = vpack.c.b16 %v4047, %v3993
    %v6532 = vpack.c.b16 %v4048, %v3994
    %v6533 = vpack.c.b16 %v4049, %v3995
    %v6534 = vpack.c.b16 %v4050, %v3996
    %v6535 = vpack.c.b16 %v4051, %v3997
    %v6536 = vpack.c.b16 %v4052, %v3998
    %v6537 = vpack.c.b16 %v4053, %v3999
    %v6538 = vpack.c.b16 %v4054, %v4000
    %v6539 = vpack.c.b16 %v4055, %v4001
    %v6540 = vpack.c.b16 %v4056, %v4002
    %v6541 = vpack.c.b16 %v4057, %v4003
    %v6542 = vpack.c.b16 %v4058, %v4004
    %v6543 = vpack.c.b16 %v4059, %v4005
    %v6544 = vpack.c.b16 %v4060, %v4006
    %v6545 = vpack.c.b16 %v4061, %v4007
    %v6546 = vpack.c.b16 %v4062, %v4008
    %v6547 = vpack.c.b16 %v4063, %v4009
    %v6548 = vpack.c.b16 %v4064, %v4010
    %v6549 = vpack.c.b16 %v4065, %v4011
    %v6550 = vpack.c.b16 %v4066, %v4012
    %v6551 = vpack.c.b16 %v4067, %v4013
    %v6552 = vpack.c.b16 %v4068, %v4014
    %v6553 = vpack.c.b16 %v4069, %v4015
    %v6554 = vpack.c.b16 %v4070, %v4016
    %v6555 = vpack.c.b16 %v4071, %v4017
    %v6556 = vpack.c.b16 %v4072, %v4018
    %v6557 = vpack.c.b16 %v4073, %v4019
    %v6558 = vpack.c.b16 %v4074, %v4020
    %v6559 = vpack.c.b16 %v4075, %v4021
    %v6560 = vpack.c.b16 %v4130, %v4076
    %v6561 = vpack.c.b16 %v4131, %v4077
    %v6562 = vpack.c.b16 %v4132, %v4078
    %v6563 = vpack.c.b16 %v4133, %v4079
    %v6564 = vpack.c.b16 %v4134, %v4080
    %v6565 = vpack.c.b16 %v4135, %v4081
    %v6566 = vpack.c.b16 %v4136, %v4082
    %v6567 = vpack.c.b16 %v4137, %v4083
    %v6568 = vpack.c.b16 %v4138, %v4084
    %v6569 = vpack.c.b16 %v4139, %v4085
    %v6570 = vpack.c.b16 %v4140, %v4086
    %v6571 = vpack.c.b16 %v4141, %v4087
    %v6572 = vpack.c.b16 %v4142, %v4088
    %v6573 = vpack.c.b16 %v4143, %v4089
    %v6574 = vpack.c.b16 %v4144, %v4090
    %v6575 = vpack.c.b16 %v4145, %v4091
    %v6576 = vpack.c.b16 %v4146, %v4092
    %v6577 = vpack.c.b16 %v4147, %v4093
    %v6578 = vpack.c.b16 %v4148, %v4094
    %v6579 = vpack.c.b16 %v4149, %v4095
    %v6580 = vpack.c.b16 %v4150, %v4096
    %v6581 = vpack.c.b16 %v4151, %v4097
    %v6582 = vpack.c.b16 %v4152, %v4098
    %v6583 = vpack.c.b16 %v4153, %v4099
    %v6584 = vpack.c.b16 %v4154, %v4100
    %v6585 = vpack.c.b16 %v4155, %v4101
    %v6586 = vpack.c.b16 %v4156, %v4102
    %v6587 = vpack.c.b16 %v4157, %v4103
    %v6588 = vpack.c.b16 %v4158, %v4104
    %v6589 = vpack.c.b16 %v4159, %v4105
    %v6590 = vpack.c.b16 %v4160, %v4106
    %v6591 = vpack.c.b16 %v4161, %v4107
    %v6592 = vpack.c.b16 %v4162, %v4108
    %v6593 = vpack.c.b16 %v4163, %v4109
    %v6594 = vpack.c.b16 %v4164, %v4110
    %v6595 = vpack.c.b16 %v4165, %v4111
    %v6596 = vpack.c.b16 %v4166, %v4112
    %v6597 = vpack.c.b16 %v4167, %v4113
    %v6598 = vpack.c.b16 %v4168, %v4114
    %v6599 = vpack.c.b16 %v4169, %v4115
    %v6600 = vpack.c.b16 %v4170, %v4116
    %v6601 = vpack.c.b16 %v4171, %v4117
    %v6602 = vpack.c.b16 %v4172, %v4118
    %v6603 = vpack.c.b16 %v4173, %v4119
    %v6604 = vpack.c.b16 %v4174, %v4120
    %v6605 = vpack.c.b16 %v4175, %v4121
    %v6606 = vpack.c.b16 %v4176, %v4122
    %v6607 = vpack.c.b16 %v4177, %v4123
    %v6608 = vpack.c.b16 %v4178, %v4124
    %v6609 = vpack.c.b16 %v4179, %v4125
    %v6610 = vpack.c.b16 %v4180, %v4126
    %v6611 = vpack.c.b16 %v4181, %v4127
    %v6612 = vpack.c.b16 %v4182, %v4128
    %v6613 = vpack.c.b16 %v4183, %v4129
    %v6614 = vpack.c.b16 %v4238, %v4184
    %v6615 = vpack.c.b16 %v4239, %v4185
    %v6616 = vpack.c.b16 %v4240, %v4186
    %v6617 = vpack.c.b16 %v4241, %v4187
    %v6618 = vpack.c.b16 %v4242, %v4188
    %v6619 = vpack.c.b16 %v4243, %v4189
    %v6620 = vpack.c.b16 %v4244, %v4190
    %v6621 = vpack.c.b16 %v4245, %v4191
    %v6622 = vpack.c.b16 %v4246, %v4192
    %v6623 = vpack.c.b16 %v4247, %v4193
    %v6624 = vpack.c.b16 %v4248, %v4194
    %v6625 = vpack.c.b16 %v4249, %v4195
    %v6626 = vpack.c.b16 %v4250, %v4196
    %v6627 = vpack.c.b16 %v4251, %v4197
    %v6628 = vpack.c.b16 %v4252, %v4198
    %v6629 = vpack.c.b16 %v4253, %v4199
    %v6630 = vpack.c.b16 %v4254, %v4200
    %v6631 = vpack.c.b16 %v4255, %v4201
    %v6632 = vpack.c.b16 %v4256, %v4202
    %v6633 = vpack.c.b16 %v4257, %v4203
    %v6634 = vpack.c.b16 %v4258, %v4204
    %v6635 = vpack.c.b16 %v4259, %v4205
    %v6636 = vpack.c.b16 %v4260, %v4206
    %v6637 = vpack.c.b16 %v4261, %v4207
    %v6638 = vpack.c.b16 %v4262, %v4208
    %v6639 = vpack.c.b16 %v4263, %v4209
    %v6640 = vpack.c.b16 %v4264, %v4210
    %v6641 = vpack.c.b16 %v4265, %v4211
    %v6642 = vpack.c.b16 %v4266, %v4212
    %v6643 = vpack.c.b16 %v4267, %v4213
    %v6644 = vpack.c.b16 %v4268, %v4214
    %v6645 = vpack.c.b16 %v4269, %v4215
    %v6646 = vpack.c.b16 %v4270, %v4216
    %v6647 = vpack.c.b16 %v4271, %v4217
    %v6648 = vpack.c.b16 %v4272, %v4218
    %v6649 = vpack.c.b16 %v4273, %v4219
    %v6650 = vpack.c.b16 %v4274, %v4220
    %v6651 = vpack.c.b16 %v4275, %v4221
    %v6652 = vpack.c.b16 %v4276, %v4222
    %v6653 = vpack.c.b16 %v4277, %v4223
    %v6654 = vpack.c.b16 %v4278, %v4224
    %v6655 = vpack.c.b16 %v4279, %v4225
    %v6656 = vpack.c.b16 %v4280, %v4226
    %v6657 = vpack.c.b16 %v4281, %v4227
    %v6658 = vpack.c.b16 %v4282, %v4228
    %v6659 = vpack.c.b16 %v4283, %v4229
    %v6660 = vpack.c.b16 %v4284, %v4230
    %v6661 = vpack.c.b16 %v4285, %v4231
    %v6662 = vpack.c.b16 %v4286, %v4232
    %v6663 = vpack.c.b16 %v4287, %v4233
    %v6664 = vpack.c.b16 %v4288, %v4234
    %v6665 = vpack.c.b16 %v4289, %v4235
    %v6666 = vpack.c.b16 %v4290, %v4236
    %v6667 = vpack.c.b16 %v4291, %v4237
    %v6668 = vpack.c.b16 %v4346, %v4292
    %v6669 = vpack.c.b16 %v4347, %v4293
    %v6670 = vpack.c.b16 %v4348, %v4294
    %v6671 = vpack.c.b16 %v4349, %v4295
    %v6672 = vpack.c.b16 %v4350, %v4296
    %v6673 = vpack.c.b16 %v4351, %v4297
    %v6674 = vpack.c.b16 %v4352, %v4298
    %v6675 = vpack.c.b16 %v4353, %v4299
    %v6676 = vpack.c.b16 %v4354, %v4300
    %v6677 = vpack.c.b16 %v4355, %v4301
    %v6678 = vpack.c.b16 %v4356, %v4302
    %v6679 = vpack.c.b16 %v4357, %v4303
    %v6680 = vpack.c.b16 %v4358, %v4304
    %v6681 = vpack.c.b16 %v4359, %v4305
    %v6682 = vpack.c.b16 %v4360, %v4306
    %v6683 = vpack.c.b16 %v4361, %v4307
    %v6684 = vpack.c.b16 %v4362, %v4308
    %v6685 = vpack.c.b16 %v4363, %v4309
    %v6686 = vpack.c.b16 %v4364, %v4310
    %v6687 = vpack.c.b16 %v4365, %v4311
    %v6688 = vpack.c.b16 %v4366, %v4312
    %v6689 = vpack.c.b16 %v4367, %v4313
    %v6690 = vpack.c.b16 %v4368, %v4314
    %v6691 = vpack.c.b16 %v4369, %v4315
    %v6692 = vpack.c.b16 %v4370, %v4316
    %v6693 = vpack.c.b16 %v4371, %v4317
    %v6694 = vpack.c.b16 %v4372, %v4318
    %v6695 = vpack.c.b16 %v4373, %v4319
    %v6696 = vpack.c.b16 %v4374, %v4320
    %v6697 = vpack.c.b16 %v4375, %v4321
    %v6698 = vpack.c.b16 %v4376, %v4322
    %v6699 = vpack.c.b16 %v4377, %v4323
    %v6700 = vpack.c.b16 %v4378, %v4324
    %v6701 = vpack.c.b16 %v4379, %v4325
    %v6702 = vpack.c.b16 %v4380, %v4326
    %v6703 = vpack.c.b16 %v4381, %v4327
    %v6704 = vpack.c.b16 %v4382, %v4328
    %v6705 = vpack.c.b16 %v4383, %v4329
    %v6706 = vpack.c.b16 %v4384, %v4330
    %v6707 = vpack.c.b16 %v4385, %v4331
    %v6708 = vpack.c.b16 %v4386, %v4332
    %v6709 = vpack.c.b16 %v4387, %v4333
    %v6710 = vpack.c.b16 %v4388, %v4334
    %v6711 = vpack.c.b16 %v4389, %v4335
    %v6712 = vpack.c.b16 %v4390, %v4336
    %v6713 = vpack.c.b16 %v4391, %v4337
    %v6714 = vpack.c.b16 %v4392, %v4338
    %v6715 = vpack.c.b16 %v4393, %v4339
    %v6716 = vpack.c.b16 %v4394, %v4340
    %v6717 = vpack.c.b16 %v4395, %v4341
    %v6718 = vpack.c.b16 %v4396, %v4342
    %v6719 = vpack.c.b16 %v4397, %v4343
    %v6720 = vpack.c.b16 %v4398, %v4344
    %v6721 = vpack.c.b16 %v4399, %v4345
    %v6722 = vpack.c.b16 %v4454, %v4400
    %v6723 = vpack.c.b16 %v4455, %v4401
    %v6724 = vpack.c.b16 %v4456, %v4402
    %v6725 = vpack.c.b16 %v4457, %v4403
    %v6726 = vpack.c.b16 %v4458, %v4404
    %v6727 = vpack.c.b16 %v4459, %v4405
    %v6728 = vpack.c.b16 %v4460, %v4406
    %v6729 = vpack.c.b16 %v4461, %v4407
    %v6730 = vpack.c.b16 %v4462, %v4408
    %v6731 = vpack.c.b16 %v4463, %v4409
    %v6732 = vpack.c.b16 %v4464, %v4410
    %v6733 = vpack.c.b16 %v4465, %v4411
    %v6734 = vpack.c.b16 %v4466, %v4412
    %v6735 = vpack.c.b16 %v4467, %v4413
    %v6736 = vpack.c.b16 %v4468, %v4414
    %v6737 = vpack.c.b16 %v4469, %v4415
    %v6738 = vpack.c.b16 %v4470, %v4416
    %v6739 = vpack.c.b16 %v4471, %v4417
    %v6740 = vpack.c.b16 %v4472, %v4418
    %v6741 = vpack.c.b16 %v4473, %v4419
    %v6742 = vpack.c.b16 %v4474, %v4420
    %v6743 = vpack.c.b16 %v4475, %v4421
    %v6744 = vpack.c.b16 %v4476, %v4422
    %v6745 = vpack.c.b16 %v4477, %v4423
    %v6746 = vpack.c.b16 %v4478, %v4424
    %v6747 = vpack.c.b16 %v4479, %v4425
    %v6748 = vpack.c.b16 %v4480, %v4426
    %v6749 = vpack.c.b16 %v4481, %v4427
    %v6750 = vpack.c.b16 %v4482, %v4428
    %v6751 = vpack.c.b16 %v4483, %v4429
    %v6752 = vpack.c.b16 %v4484, %v4430
    %v6753 = vpack.c.b16 %v4485, %v4431
    %v6754 = vpack.c.b16 %v4486, %v4432
    %v6755 = vpack.c.b16 %v4487, %v4433
    %v6756 = vpack.c.b16 %v4488, %v4434
    %v6757 = vpack.c.b16 %v4489, %v4435
    %v6758 = vpack.c.b16 %v4490, %v4436
    %v6759 = vpack.c.b16 %v4491, %v4437
    %v6760 = vpack.c.b16 %v4492, %v4438
    %v6761 = vpack.c.b16 %v4493, %v4439
    %v6762 = vpack.c.b16 %v4494, %v4440
    %v6763 = vpack.c.b16 %v4495, %v4441
    %v6764 = vpack.c.b16 %v4496, %v4442
    %v6765 = vpack.c.b16 %v4497, %v4443
    %v6766 = vpack.c.b16 %v4498, %v4444
    %v6767 = vpack.c.b16 %v4499, %v4445
    %v6768 = vpack.c.b16 %v4500, %v4446
    %v6769 = vpack.c.b16 %v4501, %v4447
    %v6770 = vpack.c.b16 %v4502, %v4448
    %v6771 = vpack.c.b16 %v4503, %v4449
    %v6772 = vpack.c.b16 %v4504, %v4450
    %v6773 = vpack.c.b16 %v4505, %v4451
    %v6774 = vpack.c.b16 %v4506, %v4452
    %v6775 = vpack.c.b16 %v4507, %v4453
    %v6776 = vpack.c.b16 %v4562, %v4508
    %v6777 = vpack.c.b16 %v4563, %v4509
    %v6778 = vpack.c.b16 %v4564, %v4510
    %v6779 = vpack.c.b16 %v4565, %v4511
    %v6780 = vpack.c.b16 %v4566, %v4512
    %v6781 = vpack.c.b16 %v4567, %v4513
    %v6782 = vpack.c.b16 %v4568, %v4514
    %v6783 = vpack.c.b16 %v4569, %v4515
    %v6784 = vpack.c.b16 %v4570, %v4516
    %v6785 = vpack.c.b16 %v4571, %v4517
    %v6786 = vpack.c.b16 %v4572, %v4518
    %v6787 = vpack.c.b16 %v4573, %v4519
    %v6788 = vpack.c.b16 %v4574, %v4520
    %v6789 = vpack.c.b16 %v4575, %v4521
    %v6790 = vpack.c.b16 %v4576, %v4522
    %v6791 = vpack.c.b16 %v4577, %v4523
    %v6792 = vpack.c.b16 %v4578, %v4524
    %v6793 = vpack.c.b16 %v4579, %v4525
    %v6794 = vpack.c.b16 %v4580, %v4526
    %v6795 = vpack.c.b16 %v4581, %v4527
    %v6796 = vpack.c.b16 %v4582, %v4528
    %v6797 = vpack.c.b16 %v4583, %v4529
    %v6798 = vpack.c.b16 %v4584, %v4530
    %v6799 = vpack.c.b16 %v4585, %v4531
    %v6800 = vpack.c.b16 %v4586, %v4532
    %v6801 = vpack.c.b16 %v4587, %v4533
    %v6802 = vpack.c.b16 %v4588, %v4534
    %v6803 = vpack.c.b16 %v4589, %v4535
    %v6804 = vpack.c.b16 %v4590, %v4536
    %v6805 = vpack.c.b16 %v4591, %v4537
    %v6806 = vpack.c.b16 %v4592, %v4538
    %v6807 = vpack.c.b16 %v4593, %v4539
    %v6808 = vpack.c.b16 %v4594, %v4540
    %v6809 = vpack.c.b16 %v4595, %v4541
    %v6810 = vpack.c.b16 %v4596, %v4542
    %v6811 = vpack.c.b16 %v4597, %v4543
    %v6812 = vpack.c.b16 %v4598, %v4544
    %v6813 = vpack.c.b16 %v4599, %v4545
    %v6814 = vpack.c.b16 %v4600, %v4546
    %v6815 = vpack.c.b16 %v4601, %v4547
    %v6816 = vpack.c.b16 %v4602, %v4548
    %v6817 = vpack.c.b16 %v4603, %v4549
    %v6818 = vpack.c.b16 %v4604, %v4550
    %v6819 = vpack.c.b16 %v4605, %v4551
    %v6820 = vpack.c.b16 %v4606, %v4552
    %v6821 = vpack.c.b16 %v4607, %v4553
    %v6822 = vpack.c.b16 %v4608, %v4554
    %v6823 = vpack.c.b16 %v4609, %v4555
    %v6824 = vpack.c.b16 %v4610, %v4556
    %v6825 = vpack.c.b16 %v4611, %v4557
    %v6826 = vpack.c.b16 %v4612, %v4558
    %v6827 = vpack.c.b16 %v4613, %v4559
    %v6828 = vpack.c.b16 %v4614, %v4560
    %v6829 = vpack.c.b16 %v4615, %v4561
    %v6830 = vpack.c.b16 %v4670, %v4616
    %v6831 = vpack.c.b16 %v4671, %v4617
    %v6832 = vpack.c.b16 %v4672, %v4618
    %v6833 = vpack.c.b16 %v4673, %v4619
    %v6834 = vpack.c.b16 %v4674, %v4620
    %v6835 = vpack.c.b16 %v4675, %v4621
    %v6836 = vpack.c.b16 %v4676, %v4622
    %v6837 = vpack.c.b16 %v4677, %v4623
    %v6838 = vpack.c.b16 %v4678, %v4624
    %v6839 = vpack.c.b16 %v4679, %v4625
    %v6840 = vpack.c.b16 %v4680, %v4626
    %v6841 = vpack.c.b16 %v4681, %v4627
    %v6842 = vpack.c.b16 %v4682, %v4628
    %v6843 = vpack.c.b16 %v4683, %v4629
    %v6844 = vpack.c.b16 %v4684, %v4630
    %v6845 = vpack.c.b16 %v4685, %v4631
    %v6846 = vpack.c.b16 %v4686, %v4632
    %v6847 = vpack.c.b16 %v4687, %v4633
    %v6848 = vpack.c.b16 %v4688, %v4634
    %v6849 = vpack.c.b16 %v4689, %v4635
    %v6850 = vpack.c.b16 %v4690, %v4636
    %v6851 = vpack.c.b16 %v4691, %v4637
    %v6852 = vpack.c.b16 %v4692, %v4638
    %v6853 = vpack.c.b16 %v4693, %v4639
    %v6854 = vpack.c.b16 %v4694, %v4640
    %v6855 = vpack.c.b16 %v4695, %v4641
    %v6856 = vpack.c.b16 %v4696, %v4642
    %v6857 = vpack.c.b16 %v4697, %v4643
    %v6858 = vpack.c.b16 %v4698, %v4644
    %v6859 = vpack.c.b16 %v4699, %v4645
    %v6860 = vpack.c.b16 %v4700, %v4646
    %v6861 = vpack.c.b16 %v4701, %v4647
    %v6862 = vpack.c.b16 %v4702, %v4648
    %v6863 = vpack.c.b16 %v4703, %v4649
    %v6864 = vpack.c.b16 %v4704, %v4650
    %v6865 = vpack.c.b16 %v4705, %v4651
    %v6866 = vpack.c.b16 %v4706, %v4652
    %v6867 = vpack.c.b16 %v4707, %v4653
    %v6868 = vpack.c.b16 %v4708, %v4654
    %v6869 = vpack.c.b16 %v4709, %v4655
    %v6870 = vpack.c.b16 %v4710, %v4656
    %v6871 = vpack.c.b16 %v4711, %v4657
    %v6872 = vpack.c.b16 %v4712, %v4658
    %v6873 = vpack.c.b16 %v4713, %v4659
    %v6874 = vpack.c.b16 %v4714, %v4660
    %v6875 = vpack.c.b16 %v4715, %v4661
    %v6876 = vpack.c.b16 %v4716, %v4662
    %v6877 = vpack.c.b16 %v4717, %v4663
    %v6878 = vpack.c.b16 %v4718, %v4664
    %v6879 = vpack.c.b16 %v4719, %v4665
    %v6880 = vpack.c.b16 %v4720, %v4666
    %v6881 = vpack.c.b16 %v4721, %v4667
    %v6882 = vpack.c.b16 %v4722, %v4668
    %v6883 = vpack.c.b16 %v4723, %v4669
    %v6884 = vpack.c.b16 %v4778, %v4724
    %v6885 = vpack.c.b16 %v4779, %v4725
    %v6886 = vpack.c.b16 %v4780, %v4726
    %v6887 = vpack.c.b16 %v4781, %v4727
    %v6888 = vpack.c.b16 %v4782, %v4728
    %v6889 = vpack.c.b16 %v4783, %v4729
    %v6890 = vpack.c.b16 %v4784, %v4730
    %v6891 = vpack.c.b16 %v4785, %v4731
    %v6892 = vpack.c.b16 %v4786, %v4732
    %v6893 = vpack.c.b16 %v4787, %v4733
    %v6894 = vpack.c.b16 %v4788, %v4734
    %v6895 = vpack.c.b16 %v4789, %v4735
    %v6896 = vpack.c.b16 %v4790, %v4736
    %v6897 = vpack.c.b16 %v4791, %v4737
    %v6898 = vpack.c.b16 %v4792, %v4738
    %v6899 = vpack.c.b16 %v4793, %v4739
    %v6900 = vpack.c.b16 %v4794, %v4740
    %v6901 = vpack.c.b16 %v4795, %v4741
    %v6902 = vpack.c.b16 %v4796, %v4742
    %v6903 = vpack.c.b16 %v4797, %v4743
    %v6904 = vpack.c.b16 %v4798, %v4744
    %v6905 = vpack.c.b16 %v4799, %v4745
    %v6906 = vpack.c.b16 %v4800, %v4746
    %v6907 = vpack.c.b16 %v4801, %v4747
    %v6908 = vpack.c.b16 %v4802, %v4748
    %v6909 = vpack.c.b16 %v4803, %v4749
    %v6910 = vpack.c.b16 %v4804, %v4750
    %v6911 = vpack.c.b16 %v4805, %v4751
    %v6912 = vpack.c.b16 %v4806, %v4752
    %v6913 = vpack.c.b16 %v4807, %v4753
    %v6914 = vpack.c.b16 %v4808, %v4754
    %v6915 = vpack.c.b16 %v4809, %v4755
    %v6916 = vpack.c.b16 %v4810, %v4756
    %v6917 = vpack.c.b16 %v4811, %v4757
    %v6918 = vpack.c.b16 %v4812, %v4758
    %v6919 = vpack.c.b16 %v4813, %v4759
    %v6920 = vpack.c.b16 %v4814, %v4760
    %v6921 = vpack.c.b16 %v4815, %v4761
    %v6922 = vpack.c.b16 %v4816, %v4762
    %v6923 = vpack.c.b16 %v4817, %v4763
    %v6924 = vpack.c.b16 %v4818, %v4764
    %v6925 = vpack.c.b16 %v4819, %v4765
    %v6926 = vpack.c.b16 %v4820, %v4766
    %v6927 = vpack.c.b16 %v4821, %v4767
    %v6928 = vpack.c.b16 %v4822, %v4768
    %v6929 = vpack.c.b16 %v4823, %v4769
    %v6930 = vpack.c.b16 %v4824, %v4770
    %v6931 = vpack.c.b16 %v4825, %v4771
    %v6932 = vpack.c.b16 %v4826, %v4772
    %v6933 = vpack.c.b16 %v4827, %v4773
    %v6934 = vpack.c.b16 %v4828, %v4774
    %v6935 = vpack.c.b16 %v4829, %v4775
    %v6936 = vpack.c.b16 %v4830, %v4776
    %v6937 = vpack.c.b16 %v4831, %v4777
    %v6938 = vpack.c.b16 %v4886, %v4832
    %v6939 = vpack.c.b16 %v4887, %v4833
    %v6940 = vpack.c.b16 %v4888, %v4834
    %v6941 = vpack.c.b16 %v4889, %v4835
    %v6942 = vpack.c.b16 %v4890, %v4836
    %v6943 = vpack.c.b16 %v4891, %v4837
    %v6944 = vpack.c.b16 %v4892, %v4838
    %v6945 = vpack.c.b16 %v4893, %v4839
    %v6946 = vpack.c.b16 %v4894, %v4840
    %v6947 = vpack.c.b16 %v4895, %v4841
    %v6948 = vpack.c.b16 %v4896, %v4842
    %v6949 = vpack.c.b16 %v4897, %v4843
    %v6950 = vpack.c.b16 %v4898, %v4844
    %v6951 = vpack.c.b16 %v4899, %v4845
    %v6952 = vpack.c.b16 %v4900, %v4846
    %v6953 = vpack.c.b16 %v4901, %v4847
    %v6954 = vpack.c.b16 %v4902, %v4848
    %v6955 = vpack.c.b16 %v4903, %v4849
    %v6956 = vpack.c.b16 %v4904, %v4850
    %v6957 = vpack.c.b16 %v4905, %v4851
    %v6958 = vpack.c.b16 %v4906, %v4852
    %v6959 = vpack.c.b16 %v4907, %v4853
    %v6960 = vpack.c.b16 %v4908, %v4854
    %v6961 = vpack.c.b16 %v4909, %v4855
    %v6962 = vpack.c.b16 %v4910, %v4856
    %v6963 = vpack.c.b16 %v4911, %v4857
    %v6964 = vpack.c.b16 %v4912, %v4858
    %v6965 = vpack.c.b16 %v4913, %v4859
    %v6966 = vpack.c.b16 %v4914, %v4860
    %v6967 = vpack.c.b16 %v4915, %v4861
    %v6968 = vpack.c.b16 %v4916, %v4862
    %v6969 = vpack.c.b16 %v4917, %v4863
    %v6970 = vpack.c.b16 %v4918, %v4864
    %v6971 = vpack.c.b16 %v4919, %v4865
    %v6972 = vpack.c.b16 %v4920, %v4866
    %v6973 = vpack.c.b16 %v4921, %v4867
    %v6974 = vpack.c.b16 %v4922, %v4868
    %v6975 = vpack.c.b16 %v4923, %v4869
    %v6976 = vpack.c.b16 %v4924, %v4870
    %v6977 = vpack.c.b16 %v4925, %v4871
    %v6978 = vpack.c.b16 %v4926, %v4872
    %v6979 = vpack.c.b16 %v4927, %v4873
    %v6980 = vpack.c.b16 %v4928, %v4874
    %v6981 = vpack.c.b16 %v4929, %v4875
    %v6982 = vpack.c.b16 %v4930, %v4876
    %v6983 = vpack.c.b16 %v4931, %v4877
    %v6984 = vpack.c.b16 %v4932, %v4878
    %v6985 = vpack.c.b16 %v4933, %v4879
    %v6986 = vpack.c.b16 %v4934, %v4880
    %v6987 = vpack.c.b16 %v4935, %v4881
    %v6988 = vpack.c.b16 %v4936, %v4882
    %v6989 = vpack.c.b16 %v4937, %v4883
    %v6990 = vpack.c.b16 %v4938, %v4884
    %v6991 = vpack.c.b16 %v4939, %v4885
    %v6992 = vpack.c.b16 %v4994, %v4940
    %v6993 = vpack.c.b16 %v4995, %v4941
    %v6994 = vpack.c.b16 %v4996, %v4942
    %v6995 = vpack.c.b16 %v4997, %v4943
    %v6996 = vpack.c.b16 %v4998, %v4944
    %v6997 = vpack.c.b16 %v4999, %v4945
    %v6998 = vpack.c.b16 %v5000, %v4946
    %v6999 = vpack.c.b16 %v5001, %v4947
    %v7000 = vpack.c.b16 %v5002, %v4948
    %v7001 = vpack.c.b16 %v5003, %v4949
    %v7002 = vpack.c.b16 %v5004, %v4950
    %v7003 = vpack.c.b16 %v5005, %v4951
    %v7004 = vpack.c.b16 %v5006, %v4952
    %v7005 = vpack.c.b16 %v5007, %v4953
    %v7006 = vpack.c.b16 %v5008, %v4954
    %v7007 = vpack.c.b16 %v5009, %v4955
    %v7008 = vpack.c.b16 %v5010, %v4956
    %v7009 = vpack.c.b16 %v5011, %v4957
    %v7010 = vpack.c.b16 %v5012, %v4958
    %v7011 = vpack.c.b16 %v5013, %v4959
    %v7012 = vpack.c.b16 %v5014, %v4960
    %v7013 = vpack.c.b16 %v5015, %v4961
    %v7014 = vpack.c.b16 %v5016, %v4962
    %v7015 = vpack.c.b16 %v5017, %v4963
    %v7016 = vpack.c.b16 %v5018, %v4964
    %v7017 = vpack.c.b16 %v5019, %v4965
    %v7018 = vpack.c.b16 %v5020, %v4966
    %v7019 = vpack.c.b16 %v5021, %v4967
    %v7020 = vpack.c.b16 %v5022, %v4968
    %v7021 = vpack.c.b16 %v5023, %v4969
    %v7022 = vpack.c.b16 %v5024, %v4970
    %v7023 = vpack.c.b16 %v5025, %v4971
    %v7024 = vpack.c.b16 %v5026, %v4972
    %v7025 = vpack.c.b16 %v5027, %v4973
    %v7026 = vpack.c.b16 %v5028, %v4974
    %v7027 = vpack.c.b16 %v5029, %v4975
    %v7028 = vpack.c.b16 %v5030, %v4976
    %v7029 = vpack.c.b16 %v5031, %v4977
    %v7030 = vpack.c.b16 %v5032, %v4978
    %v7031 = vpack.c.b16 %v5033, %v4979
    %v7032 = vpack.c.b16 %v5034, %v4980
    %v7033 = vpack.c.b16 %v5035, %v4981
    %v7034 = vpack.c.b16 %v5036, %v4982
    %v7035 = vpack.c.b16 %v5037, %v4983
    %v7036 = vpack.c.b16 %v5038, %v4984
    %v7037 = vpack.c.b16 %v5039, %v4985
    %v7038 = vpack.c.b16 %v5040, %v4986
    %v7039 = vpack.c.b16 %v5041, %v4987
    %v7040 = vpack.c.b16 %v5042, %v4988
    %v7041 = vpack.c.b16 %v5043, %v4989
    %v7042 = vpack.c.b16 %v5044, %v4990
    %v7043 = vpack.c.b16 %v5045, %v4991
    %v7044 = vpack.c.b16 %v5046, %v4992
    %v7045 = vpack.c.b16 %v5047, %v4993
    %v7046 = vpack.c.b16 %v5102, %v5048
    %v7047 = vpack.c.b16 %v5103, %v5049
    %v7048 = vpack.c.b16 %v5104, %v5050
    %v7049 = vpack.c.b16 %v5105, %v5051
    %v7050 = vpack.c.b16 %v5106, %v5052
    %v7051 = vpack.c.b16 %v5107, %v5053
    %v7052 = vpack.c.b16 %v5108, %v5054
    %v7053 = vpack.c.b16 %v5109, %v5055
    %v7054 = vpack.c.b16 %v5110, %v5056
    %v7055 = vpack.c.b16 %v5111, %v5057
    %v7056 = vpack.c.b16 %v5112, %v5058
    %v7057 = vpack.c.b16 %v5113, %v5059
    %v7058 = vpack.c.b16 %v5114, %v5060
    %v7059 = vpack.c.b16 %v5115, %v5061
    %v7060 = vpack.c.b16 %v5116, %v5062
    %v7061 = vpack.c.b16 %v5117, %v5063
    %v7062 = vpack.c.b16 %v5118, %v5064
    %v7063 = vpack.c.b16 %v5119, %v5065
    %v7064 = vpack.c.b16 %v5120, %v5066
    %v7065 = vpack.c.b16 %v5121, %v5067
    %v7066 = vpack.c.b16 %v5122, %v5068
    %v7067 = vpack.c.b16 %v5123, %v5069
    %v7068 = vpack.c.b16 %v5124, %v5070
    %v7069 = vpack.c.b16 %v5125, %v5071
    %v7070 = vpack.c.b16 %v5126, %v5072
    %v7071 = vpack.c.b16 %v5127, %v5073
    %v7072 = vpack.c.b16 %v5128, %v5074
    %v7073 = vpack.c.b16 %v5129, %v5075
    %v7074 = vpack.c.b16 %v5130, %v5076
    %v7075 = vpack.c.b16 %v5131, %v5077
    %v7076 = vpack.c.b16 %v5132, %v5078
    %v7077 = vpack.c.b16 %v5133, %v5079
    %v7078 = vpack.c.b16 %v5134, %v5080
    %v7079 = vpack.c.b16 %v5135, %v5081
    %v7080 = vpack.c.b16 %v5136, %v5082
    %v7081 = vpack.c.b16 %v5137, %v5083
    %v7082 = vpack.c.b16 %v5138, %v5084
    %v7083 = vpack.c.b16 %v5139, %v5085
    %v7084 = vpack.c.b16 %v5140, %v5086
    %v7085 = vpack.c.b16 %v5141, %v5087
    %v7086 = vpack.c.b16 %v5142, %v5088
    %v7087 = vpack.c.b16 %v5143, %v5089
    %v7088 = vpack.c.b16 %v5144, %v5090
    %v7089 = vpack.c.b16 %v5145, %v5091
    %v7090 = vpack.c.b16 %v5146, %v5092
    %v7091 = vpack.c.b16 %v5147, %v5093
    %v7092 = vpack.c.b16 %v5148, %v5094
    %v7093 = vpack.c.b16 %v5149, %v5095
    %v7094 = vpack.c.b16 %v5150, %v5096
    %v7095 = vpack.c.b16 %v5151, %v5097
    %v7096 = vpack.c.b16 %v5152, %v5098
    %v7097 = vpack.c.b16 %v5153, %v5099
    %v7098 = vpack.c.b16 %v5154, %v5100
    %v7099 = vpack.c.b16 %v5155, %v5101
    %v7100 = vpack.c.b16 %v5210, %v5156
    %v7101 = vpack.c.b16 %v5211, %v5157
    %v7102 = vpack.c.b16 %v5212, %v5158
    %v7103 = vpack.c.b16 %v5213, %v5159
    %v7104 = vpack.c.b16 %v5214, %v5160
    %v7105 = vpack.c.b16 %v5215, %v5161
    %v7106 = vpack.c.b16 %v5216, %v5162
    %v7107 = vpack.c.b16 %v5217, %v5163
    %v7108 = vpack.c.b16 %v5218, %v5164
    %v7109 = vpack.c.b16 %v5219, %v5165
    %v7110 = vpack.c.b16 %v5220, %v5166
    %v7111 = vpack.c.b16 %v5221, %v5167
    %v7112 = vpack.c.b16 %v5222, %v5168
    %v7113 = vpack.c.b16 %v5223, %v5169
    %v7114 = vpack.c.b16 %v5224, %v5170
    %v7115 = vpack.c.b16 %v5225, %v5171
    %v7116 = vpack.c.b16 %v5226, %v5172
    %v7117 = vpack.c.b16 %v5227, %v5173
    %v7118 = vpack.c.b16 %v5228, %v5174
    %v7119 = vpack.c.b16 %v5229, %v5175
    %v7120 = vpack.c.b16 %v5230, %v5176
    %v7121 = vpack.c.b16 %v5231, %v5177
    %v7122 = vpack.c.b16 %v5232, %v5178
    %v7123 = vpack.c.b16 %v5233, %v5179
    %v7124 = vpack.c.b16 %v5234, %v5180
    %v7125 = vpack.c.b16 %v5235, %v5181
    %v7126 = vpack.c.b16 %v5236, %v5182
    %v7127 = vpack.c.b16 %v5237, %v5183
    %v7128 = vpack.c.b16 %v5238, %v5184
    %v7129 = vpack.c.b16 %v5239, %v5185
    %v7130 = vpack.c.b16 %v5240, %v5186
    %v7131 = vpack.c.b16 %v5241, %v5187
    %v7132 = vpack.c.b16 %v5242, %v5188
    %v7133 = vpack.c.b16 %v5243, %v5189
    %v7134 = vpack.c.b16 %v5244, %v5190
    %v7135 = vpack.c.b16 %v5245, %v5191
    %v7136 = vpack.c.b16 %v5246, %v5192
    %v7137 = vpack.c.b16 %v5247, %v5193
    %v7138 = vpack.c.b16 %v5248, %v5194
    %v7139 = vpack.c.b16 %v5249, %v5195
    %v7140 = vpack.c.b16 %v5250, %v5196
    %v7141 = vpack.c.b16 %v5251, %v5197
    %v7142 = vpack.c.b16 %v5252, %v5198
    %v7143 = vpack.c.b16 %v5253, %v5199
    %v7144 = vpack.c.b16 %v5254, %v5200
    %v7145 = vpack.c.b16 %v5255, %v5201
    %v7146 = vpack.c.b16 %v5256, %v5202
    %v7147 = vpack.c.b16 %v5257, %v5203
    %v7148 = vpack.c.b16 %v5258, %v5204
    %v7149 = vpack.c.b16 %v5259, %v5205
    %v7150 = vpack.c.b16 %v5260, %v5206
    %v7151 = vpack.c.b16 %v5261, %v5207
    %v7152 = vpack.c.b16 %v5262, %v5208
    %v7153 = vpack.c.b16 %v5263, %v5209
    %v7154 = vpack.c.b16 %v5318, %v5264
    %v7155 = vpack.c.b16 %v5319, %v5265
    %v7156 = vpack.c.b16 %v5320, %v5266
    %v7157 = vpack.c.b16 %v5321, %v5267
    %v7158 = vpack.c.b16 %v5322, %v5268
    %v7159 = vpack.c.b16 %v5323, %v5269
    %v7160 = vpack.c.b16 %v5324, %v5270
    %v7161 = vpack.c.b16 %v5325, %v5271
    %v7162 = vpack.c.b16 %v5326, %v5272
    %v7163 = vpack.c.b16 %v5327, %v5273
    %v7164 = vpack.c.b16 %v5328, %v5274
    %v7165 = vpack.c.b16 %v5329, %v5275
    %v7166 = vpack.c.b16 %v5330, %v5276
    %v7167 = vpack.c.b16 %v5331, %v5277
    %v7168 = vpack.c.b16 %v5332, %v5278
    %v7169 = vpack.c.b16 %v5333, %v5279
    %v7170 = vpack.c.b16 %v5334, %v5280
    %v7171 = vpack.c.b16 %v5335, %v5281
    %v7172 = vpack.c.b16 %v5336, %v5282
    %v7173 = vpack.c.b16 %v5337, %v5283
    %v7174 = vpack.c.b16 %v5338, %v5284
    %v7175 = vpack.c.b16 %v5339, %v5285
    %v7176 = vpack.c.b16 %v5340, %v5286
    %v7177 = vpack.c.b16 %v5341, %v5287
    %v7178 = vpack.c.b16 %v5342, %v5288
    %v7179 = vpack.c.b16 %v5343, %v5289
    %v7180 = vpack.c.b16 %v5344, %v5290
    %v7181 = vpack.c.b16 %v5345, %v5291
    %v7182 = vpack.c.b16 %v5346, %v5292
    %v7183 = vpack.c.b16 %v5347, %v5293
    %v7184 = vpack.c.b16 %v5348, %v5294
    %v7185 = vpack.c.b16 %v5349, %v5295
    %v7186 = vpack.c.b16 %v5350, %v5296
    %v7187 = vpack.c.b16 %v5351, %v5297
    %v7188 = vpack.c.b16 %v5352, %v5298
    %v7189 = vpack.c.b16 %v5353, %v5299
    %v7190 = vpack.c.b16 %v5354, %v5300
    %v7191 = vpack.c.b16 %v5355, %v5301
    %v7192 = vpack.c.b16 %v5356, %v5302
    %v7193 = vpack.c.b16 %v5357, %v5303
    %v7194 = vpack.c.b16 %v5358, %v5304
    %v7195 = vpack.c.b16 %v5359, %v5305
    %v7196 = vpack.c.b16 %v5360, %v5306
    %v7197 = vpack.c.b16 %v5361, %v5307
    %v7198 = vpack.c.b16 %v5362, %v5308
    %v7199 = vpack.c.b16 %v5363, %v5309
    %v7200 = vpack.c.b16 %v5364, %v5310
    %v7201 = vpack.c.b16 %v5365, %v5311
    %v7202 = vpack.c.b16 %v5366, %v5312
    %v7203 = vpack.c.b16 %v5367, %v5313
    %v7204 = vpack.c.b16 %v5368, %v5314
    %v7205 = vpack.c.b16 %v5369, %v5315
    %v7206 = vpack.c.b16 %v5370, %v5316
    %v7207 = vpack.c.b16 %v5371, %v5317
    %v7208 = vpack.c.b16 %v5426, %v5372
    %v7209 = vpack.c.b16 %v5427, %v5373
    %v7210 = vpack.c.b16 %v5428, %v5374
    %v7211 = vpack.c.b16 %v5429, %v5375
    %v7212 = vpack.c.b16 %v5430, %v5376
    %v7213 = vpack.c.b16 %v5431, %v5377
    %v7214 = vpack.c.b16 %v5432, %v5378
    %v7215 = vpack.c.b16 %v5433, %v5379
    %v7216 = vpack.c.b16 %v5434, %v5380
    %v7217 = vpack.c.b16 %v5435, %v5381
    %v7218 = vpack.c.b16 %v5436, %v5382
    %v7219 = vpack.c.b16 %v5437, %v5383
    %v7220 = vpack.c.b16 %v5438, %v5384
    %v7221 = vpack.c.b16 %v5439, %v5385
    %v7222 = vpack.c.b16 %v5440, %v5386
    %v7223 = vpack.c.b16 %v5441, %v5387
    %v7224 = vpack.c.b16 %v5442, %v5388
    %v7225 = vpack.c.b16 %v5443, %v5389
    %v7226 = vpack.c.b16 %v5444, %v5390
    %v7227 = vpack.c.b16 %v5445, %v5391
    %v7228 = vpack.c.b16 %v5446, %v5392
    %v7229 = vpack.c.b16 %v5447, %v5393
    %v7230 = vpack.c.b16 %v5448, %v5394
    %v7231 = vpack.c.b16 %v5449, %v5395
    %v7232 = vpack.c.b16 %v5450, %v5396
    %v7233 = vpack.c.b16 %v5451, %v5397
    %v7234 = vpack.c.b16 %v5452, %v5398
    %v7235 = vpack.c.b16 %v5453, %v5399
    %v7236 = vpack.c.b16 %v5454, %v5400
    %v7237 = vpack.c.b16 %v5455, %v5401
    %v7238 = vpack.c.b16 %v5456, %v5402
    %v7239 = vpack.c.b16 %v5457, %v5403
    %v7240 = vpack.c.b16 %v5458, %v5404
    %v7241 = vpack.c.b16 %v5459, %v5405
    %v7242 = vpack.c.b16 %v5460, %v5406
    %v7243 = vpack.c.b16 %v5461, %v5407
    %v7244 = vpack.c.b16 %v5462, %v5408
    %v7245 = vpack.c.b16 %v5463, %v5409
    %v7246 = vpack.c.b16 %v5464, %v5410
    %v7247 = vpack.c.b16 %v5465, %v5411
    %v7248 = vpack.c.b16 %v5466, %v5412
    %v7249 = vpack.c.b16 %v5467, %v5413
    %v7250 = vpack.c.b16 %v5468, %v5414
    %v7251 = vpack.c.b16 %v5469, %v5415
    %v7252 = vpack.c.b16 %v5470, %v5416
    %v7253 = vpack.c.b16 %v5471, %v5417
    %v7254 = vpack.c.b16 %v5472, %v5418
    %v7255 = vpack.c.b16 %v5473, %v5419
    %v7256 = vpack.c.b16 %v5474, %v5420
    %v7257 = vpack.c.b16 %v5475, %v5421
    %v7258 = vpack.c.b16 %v5476, %v5422
    %v7259 = vpack.c.b16 %v5477, %v5423
    %v7260 = vpack.c.b16 %v5478, %v5424
    %v7261 = vpack.c.b16 %v5479, %v5425
    %v7262 = vpack.c.b16 %v5534, %v5480
    %v7263 = vpack.c.b16 %v5535, %v5481
    %v7264 = vpack.c.b16 %v5536, %v5482
    %v7265 = vpack.c.b16 %v5537, %v5483
    %v7266 = vpack.c.b16 %v5538, %v5484
    %v7267 = vpack.c.b16 %v5539, %v5485
    %v7268 = vpack.c.b16 %v5540, %v5486
    %v7269 = vpack.c.b16 %v5541, %v5487
    %v7270 = vpack.c.b16 %v5542, %v5488
    %v7271 = vpack.c.b16 %v5543, %v5489
    %v7272 = vpack.c.b16 %v5544, %v5490
    %v7273 = vpack.c.b16 %v5545, %v5491
    %v7274 = vpack.c.b16 %v5546, %v5492
    %v7275 = vpack.c.b16 %v5547, %v5493
    %v7276 = vpack.c.b16 %v5548, %v5494
    %v7277 = vpack.c.b16 %v5549, %v5495
    %v7278 = vpack.c.b16 %v5550, %v5496
    %v7279 = vpack.c.b16 %v5551, %v5497
    %v7280 = vpack.c.b16 %v5552, %v5498
    %v7281 = vpack.c.b16 %v5553, %v5499
    %v7282 = vpack.c.b16 %v5554, %v5500
    %v7283 = vpack.c.b16 %v5555, %v5501
    %v7284 = vpack.c.b16 %v5556, %v5502
    %v7285 = vpack.c.b16 %v5557, %v5503
    %v7286 = vpack.c.b16 %v5558, %v5504
    %v7287 = vpack.c.b16 %v5559, %v5505
    %v7288 = vpack.c.b16 %v5560, %v5506
    %v7289 = vpack.c.b16 %v5561, %v5507
    %v7290 = vpack.c.b16 %v5562, %v5508
    %v7291 = vpack.c.b16 %v5563, %v5509
    %v7292 = vpack.c.b16 %v5564, %v5510
    %v7293 = vpack.c.b16 %v5565, %v5511
    %v7294 = vpack.c.b16 %v5566, %v5512
    %v7295 = vpack.c.b16 %v5567, %v5513
    %v7296 = vpack.c.b16 %v5568, %v5514
    %v7297 = vpack.c.b16 %v5569, %v5515
    %v7298 = vpack.c.b16 %v5570, %v5516
    %v7299 = vpack.c.b16 %v5571, %v5517
    %v7300 = vpack.c.b16 %v5572, %v5518
    %v7301 = vpack.c.b16 %v5573, %v5519
    %v7302 = vpack.c.b16 %v5574, %v5520
    %v7303 = vpack.c.b16 %v5575, %v5521
    %v7304 = vpack.c.b16 %v5576, %v5522
    %v7305 = vpack.c.b16 %v5577, %v5523
    %v7306 = vpack.c.b16 %v5578, %v5524
    %v7307 = vpack.c.b16 %v5579, %v5525
    %v7308 = vpack.c.b16 %v5580, %v5526
    %v7309 = vpack.c.b16 %v5581, %v5527
    %v7310 = vpack.c.b16 %v5582, %v5528
    %v7311 = vpack.c.b16 %v5583, %v5529
    %v7312 = vpack.c.b16 %v5584, %v5530
    %v7313 = vpack.c.b16 %v5585, %v5531
    %v7314 = vpack.c.b16 %v5586, %v5532
    %v7315 = vpack.c.b16 %v5587, %v5533
    %v7316 = vpack.c.b16 %v5642, %v5588
    %v7317 = vpack.c.b16 %v5643, %v5589
    %v7318 = vpack.c.b16 %v5644, %v5590
    %v7319 = vpack.c.b16 %v5645, %v5591
    %v7320 = vpack.c.b16 %v5646, %v5592
    %v7321 = vpack.c.b16 %v5647, %v5593
    %v7322 = vpack.c.b16 %v5648, %v5594
    %v7323 = vpack.c.b16 %v5649, %v5595
    %v7324 = vpack.c.b16 %v5650, %v5596
    %v7325 = vpack.c.b16 %v5651, %v5597
    %v7326 = vpack.c.b16 %v5652, %v5598
    %v7327 = vpack.c.b16 %v5653, %v5599
    %v7328 = vpack.c.b16 %v5654, %v5600
    %v7329 = vpack.c.b16 %v5655, %v5601
    %v7330 = vpack.c.b16 %v5656, %v5602
    %v7331 = vpack.c.b16 %v5657, %v5603
    %v7332 = vpack.c.b16 %v5658, %v5604
    %v7333 = vpack.c.b16 %v5659, %v5605
    %v7334 = vpack.c.b16 %v5660, %v5606
    %v7335 = vpack.c.b16 %v5661, %v5607
    %v7336 = vpack.c.b16 %v5662, %v5608
    %v7337 = vpack.c.b16 %v5663, %v5609
    %v7338 = vpack.c.b16 %v5664, %v5610
    %v7339 = vpack.c.b16 %v5665, %v5611
    %v7340 = vpack.c.b16 %v5666, %v5612
    %v7341 = vpack.c.b16 %v5667, %v5613
    %v7342 = vpack.c.b16 %v5668, %v5614
    %v7343 = vpack.c.b16 %v5669, %v5615
    %v7344 = vpack.c.b16 %v5670, %v5616
    %v7345 = vpack.c.b16 %v5671, %v5617
    %v7346 = vpack.c.b16 %v5672, %v5618
    %v7347 = vpack.c.b16 %v5673, %v5619
    %v7348 = vpack.c.b16 %v5674, %v5620
    %v7349 = vpack.c.b16 %v5675, %v5621
    %v7350 = vpack.c.b16 %v5676, %v5622
    %v7351 = vpack.c.b16 %v5677, %v5623
    %v7352 = vpack.c.b16 %v5678, %v5624
    %v7353 = vpack.c.b16 %v5679, %v5625
    %v7354 = vpack.c.b16 %v5680, %v5626
    %v7355 = vpack.c.b16 %v5681, %v5627
    %v7356 = vpack.c.b16 %v5682, %v5628
    %v7357 = vpack.c.b16 %v5683, %v5629
    %v7358 = vpack.c.b16 %v5684, %v5630
    %v7359 = vpack.c.b16 %v5685, %v5631
    %v7360 = vpack.c.b16 %v5686, %v5632
    %v7361 = vpack.c.b16 %v5687, %v5633
    %v7362 = vpack.c.b16 %v5688, %v5634
    %v7363 = vpack.c.b16 %v5689, %v5635
    %v7364 = vpack.c.b16 %v5690, %v5636
    %v7365 = vpack.c.b16 %v5691, %v5637
    %v7366 = vpack.c.b16 %v5692, %v5638
    %v7367 = vpack.c.b16 %v5693, %v5639
    %v7368 = vpack.c.b16 %v5694, %v5640
    %v7369 = vpack.c.b16 %v5695, %v5641
    %v7370 = vpack.c.b16 %v5750, %v5696
    %v7371 = vpack.c.b16 %v5751, %v5697
    %v7372 = vpack.c.b16 %v5752, %v5698
    %v7373 = vpack.c.b16 %v5753, %v5699
    %v7374 = vpack.c.b16 %v5754, %v5700
    %v7375 = vpack.c.b16 %v5755, %v5701
    %v7376 = vpack.c.b16 %v5756, %v5702
    %v7377 = vpack.c.b16 %v5757, %v5703
    %v7378 = vpack.c.b16 %v5758, %v5704
    %v7379 = vpack.c.b16 %v5759, %v5705
    %v7380 = vpack.c.b16 %v5760, %v5706
    %v7381 = vpack.c.b16 %v5761, %v5707
    %v7382 = vpack.c.b16 %v5762, %v5708
    %v7383 = vpack.c.b16 %v5763, %v5709
    %v7384 = vpack.c.b16 %v5764, %v5710
    %v7385 = vpack.c.b16 %v5765, %v5711
    %v7386 = vpack.c.b16 %v5766, %v5712
    %v7387 = vpack.c.b16 %v5767, %v5713
    %v7388 = vpack.c.b16 %v5768, %v5714
    %v7389 = vpack.c.b16 %v5769, %v5715
    %v7390 = vpack.c.b16 %v5770, %v5716
    %v7391 = vpack.c.b16 %v5771, %v5717
    %v7392 = vpack.c.b16 %v5772, %v5718
    %v7393 = vpack.c.b16 %v5773, %v5719
    %v7394 = vpack.c.b16 %v5774, %v5720
    %v7395 = vpack.c.b16 %v5775, %v5721
    %v7396 = vpack.c.b16 %v5776, %v5722
    %v7397 = vpack.c.b16 %v5777, %v5723
    %v7398 = vpack.c.b16 %v5778, %v5724
    %v7399 = vpack.c.b16 %v5779, %v5725
    %v7400 = vpack.c.b16 %v5780, %v5726
    %v7401 = vpack.c.b16 %v5781, %v5727
    %v7402 = vpack.c.b16 %v5782, %v5728
    %v7403 = vpack.c.b16 %v5783, %v5729
    %v7404 = vpack.c.b16 %v5784, %v5730
    %v7405 = vpack.c.b16 %v5785, %v5731
    %v7406 = vpack.c.b16 %v5786, %v5732
    %v7407 = vpack.c.b16 %v5787, %v5733
    %v7408 = vpack.c.b16 %v5788, %v5734
    %v7409 = vpack.c.b16 %v5789, %v5735
    %v7410 = vpack.c.b16 %v5790, %v5736
    %v7411 = vpack.c.b16 %v5791, %v5737
    %v7412 = vpack.c.b16 %v5792, %v5738
    %v7413 = vpack.c.b16 %v5793, %v5739
    %v7414 = vpack.c.b16 %v5794, %v5740
    %v7415 = vpack.c.b16 %v5795, %v5741
    %v7416 = vpack.c.b16 %v5796, %v5742
    %v7417 = vpack.c.b16 %v5797, %v5743
    %v7418 = vpack.c.b16 %v5798, %v5744
    %v7419 = vpack.c.b16 %v5799, %v5745
    %v7420 = vpack.c.b16 %v5800, %v5746
    %v7421 = vpack.c.b16 %v5801, %v5747
    %v7422 = vpack.c.b16 %v5802, %v5748
    %v7423 = vpack.c.b16 %v5803, %v5749
    %v7424 = vpack.c.b16 %v5858, %v5804
    %v7425 = vpack.c.b16 %v5859, %v5805
    %v7426 = vpack.c.b16 %v5860, %v5806
    %v7427 = vpack.c.b16 %v5861, %v5807
    %v7428 = vpack.c.b16 %v5862, %v5808
    %v7429 = vpack.c.b16 %v5863, %v5809
    %v7430 = vpack.c.b16 %v5864, %v5810
    %v7431 = vpack.c.b16 %v5865, %v5811
    %v7432 = vpack.c.b16 %v5866, %v5812
    %v7433 = vpack.c.b16 %v5867, %v5813
    %v7434 = vpack.c.b16 %v5868, %v5814
    %v7435 = vpack.c.b16 %v5869, %v5815
    %v7436 = vpack.c.b16 %v5870, %v5816
    %v7437 = vpack.c.b16 %v5871, %v5817
    %v7438 = vpack.c.b16 %v5872, %v5818
    %v7439 = vpack.c.b16 %v5873, %v5819
    %v7440 = vpack.c.b16 %v5874, %v5820
    %v7441 = vpack.c.b16 %v5875, %v5821
    %v7442 = vpack.c.b16 %v5876, %v5822
    %v7443 = vpack.c.b16 %v5877, %v5823
    %v7444 = vpack.c.b16 %v5878, %v5824
    %v7445 = vpack.c.b16 %v5879, %v5825
    %v7446 = vpack.c.b16 %v5880, %v5826
    %v7447 = vpack.c.b16 %v5881, %v5827
    %v7448 = vpack.c.b16 %v5882, %v5828
    %v7449 = vpack.c.b16 %v5883, %v5829
    %v7450 = vpack.c.b16 %v5884, %v5830
    %v7451 = vpack.c.b16 %v5885, %v5831
    %v7452 = vpack.c.b16 %v5886, %v5832
    %v7453 = vpack.c.b16 %v5887, %v5833
    %v7454 = vpack.c.b16 %v5888, %v5834
    %v7455 = vpack.c.b16 %v5889, %v5835
    %v7456 = vpack.c.b16 %v5890, %v5836
    %v7457 = vpack.c.b16 %v5891, %v5837
    %v7458 = vpack.c.b16 %v5892, %v5838
    %v7459 = vpack.c.b16 %v5893, %v5839
    %v7460 = vpack.c.b16 %v5894, %v5840
    %v7461 = vpack.c.b16 %v5895, %v5841
    %v7462 = vpack.c.b16 %v5896, %v5842
    %v7463 = vpack.c.b16 %v5897, %v5843
    %v7464 = vpack.c.b16 %v5898, %v5844
    %v7465 = vpack.c.b16 %v5899, %v5845
    %v7466 = vpack.c.b16 %v5900, %v5846
    %v7467 = vpack.c.b16 %v5901, %v5847
    %v7468 = vpack.c.b16 %v5902, %v5848
    %v7469 = vpack.c.b16 %v5903, %v5849
    %v7470 = vpack.c.b16 %v5904, %v5850
    %v7471 = vpack.c.b16 %v5905, %v5851
    %v7472 = vpack.c.b16 %v5906, %v5852
    %v7473 = vpack.c.b16 %v5907, %v5853
    %v7474 = vpack.c.b16 %v5908, %v5854
    %v7475 = vpack.c.b16 %v5909, %v5855
    %v7476 = vpack.c.b16 %v5910, %v5856
    %v7477 = vpack.c.b16 %v5911, %v5857
    %v7478 = vpack.c.b16 %v5966, %v5912
    %v7479 = vpack.c.b16 %v5967, %v5913
    %v7480 = vpack.c.b16 %v5968, %v5914
    %v7481 = vpack.c.b16 %v5969, %v5915
    %v7482 = vpack.c.b16 %v5970, %v5916
    %v7483 = vpack.c.b16 %v5971, %v5917
    %v7484 = vpack.c.b16 %v5972, %v5918
    %v7485 = vpack.c.b16 %v5973, %v5919
    %v7486 = vpack.c.b16 %v5974, %v5920
    %v7487 = vpack.c.b16 %v5975, %v5921
    %v7488 = vpack.c.b16 %v5976, %v5922
    %v7489 = vpack.c.b16 %v5977, %v5923
    %v7490 = vpack.c.b16 %v5978, %v5924
    %v7491 = vpack.c.b16 %v5979, %v5925
    %v7492 = vpack.c.b16 %v5980, %v5926
    %v7493 = vpack.c.b16 %v5981, %v5927
    %v7494 = vpack.c.b16 %v5982, %v5928
    %v7495 = vpack.c.b16 %v5983, %v5929
    %v7496 = vpack.c.b16 %v5984, %v5930
    %v7497 = vpack.c.b16 %v5985, %v5931
    %v7498 = vpack.c.b16 %v5986, %v5932
    %v7499 = vpack.c.b16 %v5987, %v5933
    %v7500 = vpack.c.b16 %v5988, %v5934
    %v7501 = vpack.c.b16 %v5989, %v5935
    %v7502 = vpack.c.b16 %v5990, %v5936
    %v7503 = vpack.c.b16 %v5991, %v5937
    %v7504 = vpack.c.b16 %v5992, %v5938
    %v7505 = vpack.c.b16 %v5993, %v5939
    %v7506 = vpack.c.b16 %v5994, %v5940
    %v7507 = vpack.c.b16 %v5995, %v5941
    %v7508 = vpack.c.b16 %v5996, %v5942
    %v7509 = vpack.c.b16 %v5997, %v5943
    %v7510 = vpack.c.b16 %v5998, %v5944
    %v7511 = vpack.c.b16 %v5999, %v5945
    %v7512 = vpack.c.b16 %v6000, %v5946
    %v7513 = vpack.c.b16 %v6001, %v5947
    %v7514 = vpack.c.b16 %v6002, %v5948
    %v7515 = vpack.c.b16 %v6003, %v5949
    %v7516 = vpack.c.b16 %v6004, %v5950
    %v7517 = vpack.c.b16 %v6005, %v5951
    %v7518 = vpack.c.b16 %v6006, %v5952
    %v7519 = vpack.c.b16 %v6007, %v5953
    %v7520 = vpack.c.b16 %v6008, %v5954
    %v7521 = vpack.c.b16 %v6009, %v5955
    %v7522 = vpack.c.b16 %v6010, %v5956
    %v7523 = vpack.c.b16 %v6011, %v5957
    %v7524 = vpack.c.b16 %v6012, %v5958
    %v7525 = vpack.c.b16 %v6013, %v5959
    %v7526 = vpack.c.b16 %v6014, %v5960
    %v7527 = vpack.c.b16 %v6015, %v5961
    %v7528 = vpack.c.b16 %v6016, %v5962
    %v7529 = vpack.c.b16 %v6017, %v5963
    %v7530 = vpack.c.b16 %v6018, %v5964
    %v7531 = vpack.c.b16 %v6019, %v5965
    %v7532 = vpack.c.b16 %v6074, %v6020
    %v7533 = vpack.c.b16 %v6075, %v6021
    %v7534 = vpack.c.b16 %v6076, %v6022
    %v7535 = vpack.c.b16 %v6077, %v6023
    %v7536 = vpack.c.b16 %v6078, %v6024
    %v7537 = vpack.c.b16 %v6079, %v6025
    %v7538 = vpack.c.b16 %v6080, %v6026
    %v7539 = vpack.c.b16 %v6081, %v6027
    %v7540 = vpack.c.b16 %v6082, %v6028
    %v7541 = vpack.c.b16 %v6083, %v6029
    %v7542 = vpack.c.b16 %v6084, %v6030
    %v7543 = vpack.c.b16 %v6085, %v6031
    %v7544 = vpack.c.b16 %v6086, %v6032
    %v7545 = vpack.c.b16 %v6087, %v6033
    %v7546 = vpack.c.b16 %v6088, %v6034
    %v7547 = vpack.c.b16 %v6089, %v6035
    %v7548 = vpack.c.b16 %v6090, %v6036
    %v7549 = vpack.c.b16 %v6091, %v6037
    %v7550 = vpack.c.b16 %v6092, %v6038
    %v7551 = vpack.c.b16 %v6093, %v6039
    %v7552 = vpack.c.b16 %v6094, %v6040
    %v7553 = vpack.c.b16 %v6095, %v6041
    %v7554 = vpack.c.b16 %v6096, %v6042
    %v7555 = vpack.c.b16 %v6097, %v6043
    %v7556 = vpack.c.b16 %v6098, %v6044
    %v7557 = vpack.c.b16 %v6099, %v6045
    %v7558 = vpack.c.b16 %v6100, %v6046
    %v7559 = vpack.c.b16 %v6101, %v6047
    %v7560 = vpack.c.b16 %v6102, %v6048
    %v7561 = vpack.c.b16 %v6103, %v6049
    %v7562 = vpack.c.b16 %v6104, %v6050
    %v7563 = vpack.c.b16 %v6105, %v6051
    %v7564 = vpack.c.b16 %v6106, %v6052
    %v7565 = vpack.c.b16 %v6107, %v6053
    %v7566 = vpack.c.b16 %v6108, %v6054
    %v7567 = vpack.c.b16 %v6109, %v6055
    %v7568 = vpack.c.b16 %v6110, %v6056
    %v7569 = vpack.c.b16 %v6111, %v6057
    %v7570 = vpack.c.b16 %v6112, %v6058
    %v7571 = vpack.c.b16 %v6113, %v6059
    %v7572 = vpack.c.b16 %v6114, %v6060
    %v7573 = vpack.c.b16 %v6115, %v6061
    %v7574 = vpack.c.b16 %v6116, %v6062
    %v7575 = vpack.c.b16 %v6117, %v6063
    %v7576 = vpack.c.b16 %v6118, %v6064
    %v7577 = vpack.c.b16 %v6119, %v6065
    %v7578 = vpack.c.b16 %v6120, %v6066
    %v7579 = vpack.c.b16 %v6121, %v6067
    %v7580 = vpack.c.b16 %v6122, %v6068
    %v7581 = vpack.c.b16 %v6123, %v6069
    %v7582 = vpack.c.b16 %v6124, %v6070
    %v7583 = vpack.c.b16 %v6125, %v6071
    %v7584 = vpack.c.b16 %v6126, %v6072
    %v7585 = vpack.c.b16 %v6127, %v6073
    %v8991 = vsel %vm285, %v295, 0
    %vm8993 = vcmask 1046528
    %vm8994 = vcmask 1047552
    %v8995 = vsel %vm8993, 4294967295, 65535
    %v8996 = vsel %vm8994, %v8995, 0
    %v8998 = vand.u32 %v7532, %v8996
    %v9001 = vand.u32 %v7533, %v8996
    %v9004 = vand.u32 %v7534, %v8996
    %v9007 = vand.u32 %v7535, %v8996
    %v9010 = vand.u32 %v7536, %v8996
    %v9013 = vand.u32 %v7537, %v8996
    %v9016 = vand.u32 %v7538, %v8996
    %v9019 = vand.u32 %v7539, %v8996
    %v9022 = vand.u32 %v7540, %v8996
    %v9025 = vand.u32 %v7541, %v8996
    %v9028 = vand.u32 %v7542, %v8996
    %v9031 = vand.u32 %v7543, %v8996
    %v9034 = vand.u32 %v7544, %v8996
    %v9037 = vand.u32 %v7545, %v8996
    %v9040 = vand.u32 %v7546, %v8996
    %v9043 = vand.u32 %v7547, %v8996
    %v9046 = vand.u32 %v7548, %v8996
    %v9049 = vand.u32 %v7549, %v8996
    %v9052 = vand.u32 %v7550, %v8996
    %v9055 = vand.u32 %v7551, %v8996
    %v9058 = vand.u32 %v7552, %v8996
    %v9061 = vand.u32 %v7553, %v8996
    %v9064 = vand.u32 %v7554, %v8996
    %v9067 = vand.u32 %v7555, %v8996
    %v9070 = vand.u32 %v7556, %v8996
    %v9073 = vand.u32 %v7557, %v8996
    %v9076 = vand.u32 %v7558, %v8996
    %v9079 = vand.u32 %v7559, %v8996
    %v9082 = vand.u32 %v7560, %v8996
    %v9085 = vand.u32 %v7561, %v8996
    %v9088 = vand.u32 %v7562, %v8996
    %v9091 = vand.u32 %v7563, %v8996
    %v9094 = vand.u32 %v7564, %v8996
    %v9097 = vand.u32 %v7565, %v8996
    %v9100 = vand.u32 %v7566, %v8996
    %v9103 = vand.u32 %v7567, %v8996
    %v9106 = vand.u32 %v7568, %v8996
    %v9109 = vand.u32 %v7569, %v8996
    %v9112 = vand.u32 %v7570, %v8996
    %v9115 = vand.u32 %v7571, %v8996
    %v9118 = vand.u32 %v7572, %v8996
    %v9121 = vand.u32 %v7573, %v8996
    %v9124 = vand.u32 %v7574, %v8996
    %v9127 = vand.u32 %v7575, %v8996
    %v9130 = vand.u32 %v7576, %v8996
    %v9133 = vand.u32 %v7577, %v8996
    %v9136 = vand.u32 %v7578, %v8996
    %v9139 = vand.u32 %v7579, %v8996
    %v9142 = vand.u32 %v7580, %v8996
    %v9145 = vand.u32 %v7581, %v8996
    %v9148 = vand.u32 %v7582, %v8996
    %v9151 = vand.u32 %v7583, %v8996
    %v9154 = vand.u32 %v7584, %v8996
    %v9157 = vand.u32 %v7585, %v8996
    %9159 = vmatprep.subr.bf16.mxu0 %v6507
    %9160 = vmatpush1.bf16.msra.mxu0 %v6506
    %9161 = vmatprep.subr.bf16.mxu0 %v6453
    %9162 = vmatpush1.bf16.msra.mxu0 %v6452
    %9163 = vmatprep.subr.bf16.mxu0 %v6399
    %9164 = vmatpush1.bf16.msra.mxu0 %v6398
    %9165 = vmatprep.subr.bf16.mxu0 %v6345
    %9166 = vmatpush1.bf16.msra.mxu0 %v6344
    %9167 = vmatprep.subr.bf16.mxu0 %v6291
    %9168 = vmatpush1.bf16.msra.mxu0 %v6290
    %9169 = vmatprep.subr.bf16.mxu0 %v6237
    %9170 = vmatpush1.bf16.msra.mxu0 %v6236
    %9171 = vmatprep.subr.bf16.mxu0 %v6183
    %9172 = vmatpush1.bf16.msra.mxu0 %v6182
    %9173 = vmatprep.subr.bf16.mxu0 %v6129
    %9174 = vmatpush1.bf16.msra.mxu0 %v6128
    %9175 = vmatprep.subr.bf16.mxu0 %v6939
    %9176 = vmatpush2.bf16.msra.mxu0 %v6938
    %9177 = vmatprep.subr.bf16.mxu0 %v6885
    %9178 = vmatpush2.bf16.msra.mxu0 %v6884
    %9179 = vmatprep.subr.bf16.mxu0 %v6831
    %9180 = vmatpush2.bf16.msra.mxu0 %v6830
    %9181 = vmatprep.subr.bf16.mxu0 %v6777
    %9182 = vmatpush2.bf16.msra.mxu0 %v6776
    %9183 = vmatprep.subr.bf16.mxu0 %v6723
    %9184 = vmatpush2.bf16.msra.mxu0 %v6722
    %9185 = vmatprep.subr.bf16.mxu0 %v6669
    %9186 = vmatpush2.bf16.msra.mxu0 %v6668
    %9187 = vmatprep.subr.bf16.mxu0 %v6615
    %9188 = vmatpush2.bf16.msra.mxu0 %v6614
    %9189 = vmatprep.subr.bf16.mxu0 %v6561
    %9190 = vmatpush2.bf16.msra.mxu0 %v6560
    %9191 = vmatprep.mubr.bf16.mxu0 %v293
    %9192 = vmatmul.mubr.bf16.gmra.mxu0 %v292
    %v9193 = vpop.f32.mrf.mxu0
    %v9194 = vadd.f32 0.0, %v9193
    %v9195 = vpop.f32.mrf.mxu0
    %v9196 = vadd.f32 0.0, %v9195
    %v9197 = vpop.f32.mrf.mxu0
    %v9198 = vadd.f32 0.0, %v9197
    %v9199 = vpop.f32.mrf.mxu0
    %v9200 = vadd.f32 0.0, %v9199
    %9201 = vdwg.mxu0
    %9202 = vmatprep.subr.bf16.mxu0 %v7371
    %9203 = vmatpush1.bf16.msra.mxu0 %v7370
    %9204 = vmatprep.subr.bf16.mxu0 %v7317
    %9205 = vmatpush1.bf16.msra.mxu0 %v7316
    %9206 = vmatprep.subr.bf16.mxu0 %v7263
    %9207 = vmatpush1.bf16.msra.mxu0 %v7262
    %9208 = vmatprep.subr.bf16.mxu0 %v7209
    %9209 = vmatpush1.bf16.msra.mxu0 %v7208
    %9210 = vmatprep.subr.bf16.mxu0 %v7155
    %9211 = vmatpush1.bf16.msra.mxu0 %v7154
    %9212 = vmatprep.subr.bf16.mxu0 %v7101
    %9213 = vmatpush1.bf16.msra.mxu0 %v7100
    %9214 = vmatprep.subr.bf16.mxu0 %v7047
    %9215 = vmatpush1.bf16.msra.mxu0 %v7046
    %9216 = vmatprep.subr.bf16.mxu0 %v6993
    %9217 = vmatpush1.bf16.msra.mxu0 %v6992
    %9218 = vmatprep.subr.bf16.mxu0 0
    %9219 = vmatpush2.bf16.msra.mxu0 0
    %9220 = vmatprep.subr.bf16.mxu0 0
    %9221 = vmatpush2.bf16.msra.mxu0 0
    %9222 = vmatprep.subr.bf16.mxu0 0
    %9223 = vmatpush2.bf16.msra.mxu0 0
    %9224 = vmatprep.subr.bf16.mxu0 0
    %9225 = vmatpush2.bf16.msra.mxu0 0
    %9226 = vmatprep.subr.bf16.mxu0 0
    %9227 = vmatpush2.bf16.msra.mxu0 0
    %9228 = vmatprep.subr.bf16.mxu0 %v9001
    %9229 = vmatpush2.bf16.msra.mxu0 %v8998
    %9230 = vmatprep.subr.bf16.mxu0 %v7479
    %9231 = vmatpush2.bf16.msra.mxu0 %v7478
    %9232 = vmatprep.subr.bf16.mxu0 %v7425
    %9233 = vmatpush2.bf16.msra.mxu0 %v7424
    %9234 = vmatprep.mubr.bf16.mxu0 %v8991
    %9235 = vmatmul.mubr.bf16.gmra.mxu0 %v294
    %v9236 = vpop.f32.mrf.mxu0
    %v9237 = vadd.f32 %v9194, %v9236
    %v9238 = vpop.f32.mrf.mxu0
    %v9239 = vadd.f32 %v9196, %v9238
    %v9240 = vpop.f32.mrf.mxu0
    %v9241 = vadd.f32 %v9198, %v9240
    %v9242 = vpop.f32.mrf.mxu0
    %v9243 = vadd.f32 %v9200, %v9242
    %9244 = vdwg.mxu0
    %9245 = vmatprep.subr.bf16.mxu0 %v6509
    %9246 = vmatpush1.bf16.msra.mxu0 %v6508
    %9247 = vmatprep.subr.bf16.mxu0 %v6455
    %9248 = vmatpush1.bf16.msra.mxu0 %v6454
    %9249 = vmatprep.subr.bf16.mxu0 %v6401
    %9250 = vmatpush1.bf16.msra.mxu0 %v6400
    %9251 = vmatprep.subr.bf16.mxu0 %v6347
    %9252 = vmatpush1.bf16.msra.mxu0 %v6346
    %9253 = vmatprep.subr.bf16.mxu0 %v6293
    %9254 = vmatpush1.bf16.msra.mxu0 %v6292
    %9255 = vmatprep.subr.bf16.mxu0 %v6239
    %9256 = vmatpush1.bf16.msra.mxu0 %v6238
    %9257 = vmatprep.subr.bf16.mxu0 %v6185
    %9258 = vmatpush1.bf16.msra.mxu0 %v6184
    %9259 = vmatprep.subr.bf16.mxu0 %v6131
    %9260 = vmatpush1.bf16.msra.mxu0 %v6130
    %9261 = vmatprep.subr.bf16.mxu0 %v6941
    %9262 = vmatpush2.bf16.msra.mxu0 %v6940
    %9263 = vmatprep.subr.bf16.mxu0 %v6887
    %9264 = vmatpush2.bf16.msra.mxu0 %v6886
    %9265 = vmatprep.subr.bf16.mxu0 %v6833
    %9266 = vmatpush2.bf16.msra.mxu0 %v6832
    %9267 = vmatprep.subr.bf16.mxu0 %v6779
    %9268 = vmatpush2.bf16.msra.mxu0 %v6778
    %9269 = vmatprep.subr.bf16.mxu0 %v6725
    %9270 = vmatpush2.bf16.msra.mxu0 %v6724
    %9271 = vmatprep.subr.bf16.mxu0 %v6671
    %9272 = vmatpush2.bf16.msra.mxu0 %v6670
    %9273 = vmatprep.subr.bf16.mxu0 %v6617
    %9274 = vmatpush2.bf16.msra.mxu0 %v6616
    %9275 = vmatprep.subr.bf16.mxu0 %v6563
    %9276 = vmatpush2.bf16.msra.mxu0 %v6562
    %9277 = vmatprep.mubr.bf16.mxu0 %v293
    %9278 = vmatmul.mubr.bf16.gmra.mxu0 %v292
    %v9279 = vpop.f32.mrf.mxu0
    %v9280 = vadd.f32 0.0, %v9279
    %v9281 = vpop.f32.mrf.mxu0
    %v9282 = vadd.f32 0.0, %v9281
    %v9283 = vpop.f32.mrf.mxu0
    %v9284 = vadd.f32 0.0, %v9283
    %v9285 = vpop.f32.mrf.mxu0
    %v9286 = vadd.f32 0.0, %v9285
    %9287 = vdwg.mxu0
    %9288 = vmatprep.subr.bf16.mxu0 %v7373
    %9289 = vmatpush1.bf16.msra.mxu0 %v7372
    %9290 = vmatprep.subr.bf16.mxu0 %v7319
    %9291 = vmatpush1.bf16.msra.mxu0 %v7318
    %9292 = vmatprep.subr.bf16.mxu0 %v7265
    %9293 = vmatpush1.bf16.msra.mxu0 %v7264
    %9294 = vmatprep.subr.bf16.mxu0 %v7211
    %9295 = vmatpush1.bf16.msra.mxu0 %v7210
    %9296 = vmatprep.subr.bf16.mxu0 %v7157
    %9297 = vmatpush1.bf16.msra.mxu0 %v7156
    %9298 = vmatprep.subr.bf16.mxu0 %v7103
    %9299 = vmatpush1.bf16.msra.mxu0 %v7102
    %9300 = vmatprep.subr.bf16.mxu0 %v7049
    %9301 = vmatpush1.bf16.msra.mxu0 %v7048
    %9302 = vmatprep.subr.bf16.mxu0 %v6995
    %9303 = vmatpush1.bf16.msra.mxu0 %v6994
    %9304 = vmatprep.subr.bf16.mxu0 0
    %9305 = vmatpush2.bf16.msra.mxu0 0
    %9306 = vmatprep.subr.bf16.mxu0 0
    %9307 = vmatpush2.bf16.msra.mxu0 0
    %9308 = vmatprep.subr.bf16.mxu0 0
    %9309 = vmatpush2.bf16.msra.mxu0 0
    %9310 = vmatprep.subr.bf16.mxu0 0
    %9311 = vmatpush2.bf16.msra.mxu0 0
    %9312 = vmatprep.subr.bf16.mxu0 0
    %9313 = vmatpush2.bf16.msra.mxu0 0
    %9314 = vmatprep.subr.bf16.mxu0 %v9007
    %9315 = vmatpush2.bf16.msra.mxu0 %v9004
    %9316 = vmatprep.subr.bf16.mxu0 %v7481
    %9317 = vmatpush2.bf16.msra.mxu0 %v7480
    %9318 = vmatprep.subr.bf16.mxu0 %v7427
    %9319 = vmatpush2.bf16.msra.mxu0 %v7426
    %9320 = vmatprep.mubr.bf16.mxu0 %v8991
    %9321 = vmatmul.mubr.bf16.gmra.mxu0 %v294
    %v9322 = vpop.f32.mrf.mxu0
    %v9323 = vadd.f32 %v9280, %v9322
    %v9324 = vpop.f32.mrf.mxu0
    %v9325 = vadd.f32 %v9282, %v9324
    %v9326 = vpop.f32.mrf.mxu0
    %v9327 = vadd.f32 %v9284, %v9326
    %v9328 = vpop.f32.mrf.mxu0
    %v9329 = vadd.f32 %v9286, %v9328
    %9330 = vdwg.mxu0
    %9331 = vmatprep.subr.bf16.mxu0 %v6511
    %9332 = vmatpush1.bf16.msra.mxu0 %v6510
    %9333 = vmatprep.subr.bf16.mxu0 %v6457
    %9334 = vmatpush1.bf16.msra.mxu0 %v6456
    %9335 = vmatprep.subr.bf16.mxu0 %v6403
    %9336 = vmatpush1.bf16.msra.mxu0 %v6402
    %9337 = vmatprep.subr.bf16.mxu0 %v6349
    %9338 = vmatpush1.bf16.msra.mxu0 %v6348
    %9339 = vmatprep.subr.bf16.mxu0 %v6295
    %9340 = vmatpush1.bf16.msra.mxu0 %v6294
    %9341 = vmatprep.subr.bf16.mxu0 %v6241
    %9342 = vmatpush1.bf16.msra.mxu0 %v6240
    %9343 = vmatprep.subr.bf16.mxu0 %v6187
    %9344 = vmatpush1.bf16.msra.mxu0 %v6186
    %9345 = vmatprep.subr.bf16.mxu0 %v6133
    %9346 = vmatpush1.bf16.msra.mxu0 %v6132
    %9347 = vmatprep.subr.bf16.mxu0 %v6943
    %9348 = vmatpush2.bf16.msra.mxu0 %v6942
    %9349 = vmatprep.subr.bf16.mxu0 %v6889
    %9350 = vmatpush2.bf16.msra.mxu0 %v6888
    %9351 = vmatprep.subr.bf16.mxu0 %v6835
    %9352 = vmatpush2.bf16.msra.mxu0 %v6834
    %9353 = vmatprep.subr.bf16.mxu0 %v6781
    %9354 = vmatpush2.bf16.msra.mxu0 %v6780
    %9355 = vmatprep.subr.bf16.mxu0 %v6727
    %9356 = vmatpush2.bf16.msra.mxu0 %v6726
    %9357 = vmatprep.subr.bf16.mxu0 %v6673
    %9358 = vmatpush2.bf16.msra.mxu0 %v6672
    %9359 = vmatprep.subr.bf16.mxu0 %v6619
    %9360 = vmatpush2.bf16.msra.mxu0 %v6618
    %9361 = vmatprep.subr.bf16.mxu0 %v6565
    %9362 = vmatpush2.bf16.msra.mxu0 %v6564
    %9363 = vmatprep.mubr.bf16.mxu0 %v293
    %9364 = vmatmul.mubr.bf16.gmra.mxu0 %v292
    %v9365 = vpop.f32.mrf.mxu0
    %v9366 = vadd.f32 0.0, %v9365
    %v9367 = vpop.f32.mrf.mxu0
    %v9368 = vadd.f32 0.0, %v9367
    %v9369 = vpop.f32.mrf.mxu0
    %v9370 = vadd.f32 0.0, %v9369
    %v9371 = vpop.f32.mrf.mxu0
    %v9372 = vadd.f32 0.0, %v9371
    %9373 = vdwg.mxu0
    %9374 = vmatprep.subr.bf16.mxu0 %v7375
    %9375 = vmatpush1.bf16.msra.mxu0 %v7374
    %9376 = vmatprep.subr.bf16.mxu0 %v7321
    %9377 = vmatpush1.bf16.msra.mxu0 %v7320
    %9378 = vmatprep.subr.bf16.mxu0 %v7267
    %9379 = vmatpush1.bf16.msra.mxu0 %v7266
    %9380 = vmatprep.subr.bf16.mxu0 %v7213
    %9381 = vmatpush1.bf16.msra.mxu0 %v7212
    %9382 = vmatprep.subr.bf16.mxu0 %v7159
    %9383 = vmatpush1.bf16.msra.mxu0 %v7158
    %9384 = vmatprep.subr.bf16.mxu0 %v7105
    %9385 = vmatpush1.bf16.msra.mxu0 %v7104
    %9386 = vmatprep.subr.bf16.mxu0 %v7051
    %9387 = vmatpush1.bf16.msra.mxu0 %v7050
    %9388 = vmatprep.subr.bf16.mxu0 %v6997
    %9389 = vmatpush1.bf16.msra.mxu0 %v6996
    %9390 = vmatprep.subr.bf16.mxu0 0
    %9391 = vmatpush2.bf16.msra.mxu0 0
    %9392 = vmatprep.subr.bf16.mxu0 0
    %9393 = vmatpush2.bf16.msra.mxu0 0
    %9394 = vmatprep.subr.bf16.mxu0 0
    %9395 = vmatpush2.bf16.msra.mxu0 0
    %9396 = vmatprep.subr.bf16.mxu0 0
    %9397 = vmatpush2.bf16.msra.mxu0 0
    %9398 = vmatprep.subr.bf16.mxu0 0
    %9399 = vmatpush2.bf16.msra.mxu0 0
    %9400 = vmatprep.subr.bf16.mxu0 %v9013
    %9401 = vmatpush2.bf16.msra.mxu0 %v9010
    %9402 = vmatprep.subr.bf16.mxu0 %v7483
    %9403 = vmatpush2.bf16.msra.mxu0 %v7482
    %9404 = vmatprep.subr.bf16.mxu0 %v7429
    %9405 = vmatpush2.bf16.msra.mxu0 %v7428
    %9406 = vmatprep.mubr.bf16.mxu0 %v8991
    %9407 = vmatmul.mubr.bf16.gmra.mxu0 %v294
    %v9408 = vpop.f32.mrf.mxu0
    %v9409 = vadd.f32 %v9366, %v9408
    %v9410 = vpop.f32.mrf.mxu0
    %v9411 = vadd.f32 %v9368, %v9410
    %v9412 = vpop.f32.mrf.mxu0
    %v9413 = vadd.f32 %v9370, %v9412
    %v9414 = vpop.f32.mrf.mxu0
    %v9415 = vadd.f32 %v9372, %v9414
    %9416 = vdwg.mxu0
    %9417 = vmatprep.subr.bf16.mxu0 %v6513
    %9418 = vmatpush1.bf16.msra.mxu0 %v6512
    %9419 = vmatprep.subr.bf16.mxu0 %v6459
    %9420 = vmatpush1.bf16.msra.mxu0 %v6458
    %9421 = vmatprep.subr.bf16.mxu0 %v6405
    %9422 = vmatpush1.bf16.msra.mxu0 %v6404
    %9423 = vmatprep.subr.bf16.mxu0 %v6351
    %9424 = vmatpush1.bf16.msra.mxu0 %v6350
    %9425 = vmatprep.subr.bf16.mxu0 %v6297
    %9426 = vmatpush1.bf16.msra.mxu0 %v6296
    %9427 = vmatprep.subr.bf16.mxu0 %v6243
    %9428 = vmatpush1.bf16.msra.mxu0 %v6242
    %9429 = vmatprep.subr.bf16.mxu0 %v6189
    %9430 = vmatpush1.bf16.msra.mxu0 %v6188
    %9431 = vmatprep.subr.bf16.mxu0 %v6135
    %9432 = vmatpush1.bf16.msra.mxu0 %v6134
    %9433 = vmatprep.subr.bf16.mxu0 %v6945
    %9434 = vmatpush2.bf16.msra.mxu0 %v6944
    %9435 = vmatprep.subr.bf16.mxu0 %v6891
    %9436 = vmatpush2.bf16.msra.mxu0 %v6890
    %9437 = vmatprep.subr.bf16.mxu0 %v6837
    %9438 = vmatpush2.bf16.msra.mxu0 %v6836
    %9439 = vmatprep.subr.bf16.mxu0 %v6783
    %9440 = vmatpush2.bf16.msra.mxu0 %v6782
    %9441 = vmatprep.subr.bf16.mxu0 %v6729
    %9442 = vmatpush2.bf16.msra.mxu0 %v6728
    %9443 = vmatprep.subr.bf16.mxu0 %v6675
    %9444 = vmatpush2.bf16.msra.mxu0 %v6674
    %9445 = vmatprep.subr.bf16.mxu0 %v6621
    %9446 = vmatpush2.bf16.msra.mxu0 %v6620
    %9447 = vmatprep.subr.bf16.mxu0 %v6567
    %9448 = vmatpush2.bf16.msra.mxu0 %v6566
    %9449 = vmatprep.mubr.bf16.mxu0 %v293
    %9450 = vmatmul.mubr.bf16.gmra.mxu0 %v292
    %v9451 = vpop.f32.mrf.mxu0
    %v9452 = vadd.f32 0.0, %v9451
    %v9453 = vpop.f32.mrf.mxu0
    %v9454 = vadd.f32 0.0, %v9453
    %v9455 = vpop.f32.mrf.mxu0
    %v9456 = vadd.f32 0.0, %v9455
    %v9457 = vpop.f32.mrf.mxu0
    %v9458 = vadd.f32 0.0, %v9457
    %9459 = vdwg.mxu0
    %9460 = vmatprep.subr.bf16.mxu0 %v7377
    %9461 = vmatpush1.bf16.msra.mxu0 %v7376
    %9462 = vmatprep.subr.bf16.mxu0 %v7323
    %9463 = vmatpush1.bf16.msra.mxu0 %v7322
    %9464 = vmatprep.subr.bf16.mxu0 %v7269
    %9465 = vmatpush1.bf16.msra.mxu0 %v7268
    %9466 = vmatprep.subr.bf16.mxu0 %v7215
    %9467 = vmatpush1.bf16.msra.mxu0 %v7214
    %9468 = vmatprep.subr.bf16.mxu0 %v7161
    %9469 = vmatpush1.bf16.msra.mxu0 %v7160
    %9470 = vmatprep.subr.bf16.mxu0 %v7107
    %9471 = vmatpush1.bf16.msra.mxu0 %v7106
    %9472 = vmatprep.subr.bf16.mxu0 %v7053
    %9473 = vmatpush1.bf16.msra.mxu0 %v7052
    %9474 = vmatprep.subr.bf16.mxu0 %v6999
    %9475 = vmatpush1.bf16.msra.mxu0 %v6998
    %9476 = vmatprep.subr.bf16.mxu0 0
    %9477 = vmatpush2.bf16.msra.mxu0 0
    %9478 = vmatprep.subr.bf16.mxu0 0
    %9479 = vmatpush2.bf16.msra.mxu0 0
    %9480 = vmatprep.subr.bf16.mxu0 0
    %9481 = vmatpush2.bf16.msra.mxu0 0
    %9482 = vmatprep.subr.bf16.mxu0 0
    %9483 = vmatpush2.bf16.msra.mxu0 0
    %9484 = vmatprep.subr.bf16.mxu0 0
    %9485 = vmatpush2.bf16.msra.mxu0 0
    %9486 = vmatprep.subr.bf16.mxu0 %v9019
    %9487 = vmatpush2.bf16.msra.mxu0 %v9016
    %9488 = vmatprep.subr.bf16.mxu0 %v7485
    %9489 = vmatpush2.bf16.msra.mxu0 %v7484
    %9490 = vmatprep.subr.bf16.mxu0 %v7431
    %9491 = vmatpush2.bf16.msra.mxu0 %v7430
    %9492 = vmatprep.mubr.bf16.mxu0 %v8991
    %9493 = vmatmul.mubr.bf16.gmra.mxu0 %v294
    %v9494 = vpop.f32.mrf.mxu0
    %v9495 = vadd.f32 %v9452, %v9494
    %v9496 = vpop.f32.mrf.mxu0
    %v9497 = vadd.f32 %v9454, %v9496
    %v9498 = vpop.f32.mrf.mxu0
    %v9499 = vadd.f32 %v9456, %v9498
    %v9500 = vpop.f32.mrf.mxu0
    %v9501 = vadd.f32 %v9458, %v9500
    %9502 = vdwg.mxu0
    %9503 = vmatprep.subr.bf16.mxu0 %v6515
    %9504 = vmatpush1.bf16.msra.mxu0 %v6514
    %9505 = vmatprep.subr.bf16.mxu0 %v6461
    %9506 = vmatpush1.bf16.msra.mxu0 %v6460
    %9507 = vmatprep.subr.bf16.mxu0 %v6407
    %9508 = vmatpush1.bf16.msra.mxu0 %v6406
    %9509 = vmatprep.subr.bf16.mxu0 %v6353
    %9510 = vmatpush1.bf16.msra.mxu0 %v6352
    %9511 = vmatprep.subr.bf16.mxu0 %v6299
    %9512 = vmatpush1.bf16.msra.mxu0 %v6298
    %9513 = vmatprep.subr.bf16.mxu0 %v6245
    %9514 = vmatpush1.bf16.msra.mxu0 %v6244
    %9515 = vmatprep.subr.bf16.mxu0 %v6191
    %9516 = vmatpush1.bf16.msra.mxu0 %v6190
    %9517 = vmatprep.subr.bf16.mxu0 %v6137
    %9518 = vmatpush1.bf16.msra.mxu0 %v6136
    %9519 = vmatprep.subr.bf16.mxu0 %v6947
    %9520 = vmatpush2.bf16.msra.mxu0 %v6946
    %9521 = vmatprep.subr.bf16.mxu0 %v6893
    %9522 = vmatpush2.bf16.msra.mxu0 %v6892
    %9523 = vmatprep.subr.bf16.mxu0 %v6839
    %9524 = vmatpush2.bf16.msra.mxu0 %v6838
    %9525 = vmatprep.subr.bf16.mxu0 %v6785
    %9526 = vmatpush2.bf16.msra.mxu0 %v6784
    %9527 = vmatprep.subr.bf16.mxu0 %v6731
    %9528 = vmatpush2.bf16.msra.mxu0 %v6730
    %9529 = vmatprep.subr.bf16.mxu0 %v6677
    %9530 = vmatpush2.bf16.msra.mxu0 %v6676
    %9531 = vmatprep.subr.bf16.mxu0 %v6623
    %9532 = vmatpush2.bf16.msra.mxu0 %v6622
    %9533 = vmatprep.subr.bf16.mxu0 %v6569
    %9534 = vmatpush2.bf16.msra.mxu0 %v6568
    %9535 = vmatprep.mubr.bf16.mxu0 %v293
    %9536 = vmatmul.mubr.bf16.gmra.mxu0 %v292
    %v9537 = vpop.f32.mrf.mxu0
    %v9538 = vadd.f32 0.0, %v9537
    %v9539 = vpop.f32.mrf.mxu0
    %v9540 = vadd.f32 0.0, %v9539
    %v9541 = vpop.f32.mrf.mxu0
    %v9542 = vadd.f32 0.0, %v9541
    %v9543 = vpop.f32.mrf.mxu0
    %v9544 = vadd.f32 0.0, %v9543
    %9545 = vdwg.mxu0
    %9546 = vmatprep.subr.bf16.mxu0 %v7379
    %9547 = vmatpush1.bf16.msra.mxu0 %v7378
    %9548 = vmatprep.subr.bf16.mxu0 %v7325
    %9549 = vmatpush1.bf16.msra.mxu0 %v7324
    %9550 = vmatprep.subr.bf16.mxu0 %v7271
    %9551 = vmatpush1.bf16.msra.mxu0 %v7270
    %9552 = vmatprep.subr.bf16.mxu0 %v7217
    %9553 = vmatpush1.bf16.msra.mxu0 %v7216
    %9554 = vmatprep.subr.bf16.mxu0 %v7163
    %9555 = vmatpush1.bf16.msra.mxu0 %v7162
    %9556 = vmatprep.subr.bf16.mxu0 %v7109
    %9557 = vmatpush1.bf16.msra.mxu0 %v7108
    %9558 = vmatprep.subr.bf16.mxu0 %v7055
    %9559 = vmatpush1.bf16.msra.mxu0 %v7054
    %9560 = vmatprep.subr.bf16.mxu0 %v7001
    %9561 = vmatpush1.bf16.msra.mxu0 %v7000
    %9562 = vmatprep.subr.bf16.mxu0 0
    %9563 = vmatpush2.bf16.msra.mxu0 0
    %9564 = vmatprep.subr.bf16.mxu0 0
    %9565 = vmatpush2.bf16.msra.mxu0 0
    %9566 = vmatprep.subr.bf16.mxu0 0
    %9567 = vmatpush2.bf16.msra.mxu0 0
    %9568 = vmatprep.subr.bf16.mxu0 0
    %9569 = vmatpush2.bf16.msra.mxu0 0
    %9570 = vmatprep.subr.bf16.mxu0 0
    %9571 = vmatpush2.bf16.msra.mxu0 0
    %9572 = vmatprep.subr.bf16.mxu0 %v9025
    %9573 = vmatpush2.bf16.msra.mxu0 %v9022
    %9574 = vmatprep.subr.bf16.mxu0 %v7487
    %9575 = vmatpush2.bf16.msra.mxu0 %v7486
    %9576 = vmatprep.subr.bf16.mxu0 %v7433
    %9577 = vmatpush2.bf16.msra.mxu0 %v7432
    %9578 = vmatprep.mubr.bf16.mxu0 %v8991
    %9579 = vmatmul.mubr.bf16.gmra.mxu0 %v294
    %v9580 = vpop.f32.mrf.mxu0
    %v9581 = vadd.f32 %v9538, %v9580
    %v9582 = vpop.f32.mrf.mxu0
    %v9583 = vadd.f32 %v9540, %v9582
    %v9584 = vpop.f32.mrf.mxu0
    %v9585 = vadd.f32 %v9542, %v9584
    %v9586 = vpop.f32.mrf.mxu0
    %v9587 = vadd.f32 %v9544, %v9586
    %9588 = vdwg.mxu0
    %9589 = vmatprep.subr.bf16.mxu0 %v6517
    %9590 = vmatpush1.bf16.msra.mxu0 %v6516
    %9591 = vmatprep.subr.bf16.mxu0 %v6463
    %9592 = vmatpush1.bf16.msra.mxu0 %v6462
    %9593 = vmatprep.subr.bf16.mxu0 %v6409
    %9594 = vmatpush1.bf16.msra.mxu0 %v6408
    %9595 = vmatprep.subr.bf16.mxu0 %v6355
    %9596 = vmatpush1.bf16.msra.mxu0 %v6354
    %9597 = vmatprep.subr.bf16.mxu0 %v6301
    %9598 = vmatpush1.bf16.msra.mxu0 %v6300
    %9599 = vmatprep.subr.bf16.mxu0 %v6247
    %9600 = vmatpush1.bf16.msra.mxu0 %v6246
    %9601 = vmatprep.subr.bf16.mxu0 %v6193
    %9602 = vmatpush1.bf16.msra.mxu0 %v6192
    %9603 = vmatprep.subr.bf16.mxu0 %v6139
    %9604 = vmatpush1.bf16.msra.mxu0 %v6138
    %9605 = vmatprep.subr.bf16.mxu0 %v6949
    %9606 = vmatpush2.bf16.msra.mxu0 %v6948
    %9607 = vmatprep.subr.bf16.mxu0 %v6895
    %9608 = vmatpush2.bf16.msra.mxu0 %v6894
    %9609 = vmatprep.subr.bf16.mxu0 %v6841
    %9610 = vmatpush2.bf16.msra.mxu0 %v6840
    %9611 = vmatprep.subr.bf16.mxu0 %v6787
    %9612 = vmatpush2.bf16.msra.mxu0 %v6786
    %9613 = vmatprep.subr.bf16.mxu0 %v6733
    %9614 = vmatpush2.bf16.msra.mxu0 %v6732
    %9615 = vmatprep.subr.bf16.mxu0 %v6679
    %9616 = vmatpush2.bf16.msra.mxu0 %v6678
    %9617 = vmatprep.subr.bf16.mxu0 %v6625
    %9618 = vmatpush2.bf16.msra.mxu0 %v6624
    %9619 = vmatprep.subr.bf16.mxu0 %v6571
    %9620 = vmatpush2.bf16.msra.mxu0 %v6570
    %9621 = vmatprep.mubr.bf16.mxu0 %v293
    %9622 = vmatmul.mubr.bf16.gmra.mxu0 %v292
    %v9623 = vpop.f32.mrf.mxu0
    %v9624 = vadd.f32 0.0, %v9623
    %v9625 = vpop.f32.mrf.mxu0
    %v9626 = vadd.f32 0.0, %v9625
    %v9627 = vpop.f32.mrf.mxu0
    %v9628 = vadd.f32 0.0, %v9627
    %v9629 = vpop.f32.mrf.mxu0
    %v9630 = vadd.f32 0.0, %v9629
    %9631 = vdwg.mxu0
    %9632 = vmatprep.subr.bf16.mxu0 %v7381
    %9633 = vmatpush1.bf16.msra.mxu0 %v7380
    %9634 = vmatprep.subr.bf16.mxu0 %v7327
    %9635 = vmatpush1.bf16.msra.mxu0 %v7326
    %9636 = vmatprep.subr.bf16.mxu0 %v7273
    %9637 = vmatpush1.bf16.msra.mxu0 %v7272
    %9638 = vmatprep.subr.bf16.mxu0 %v7219
    %9639 = vmatpush1.bf16.msra.mxu0 %v7218
    %9640 = vmatprep.subr.bf16.mxu0 %v7165
    %9641 = vmatpush1.bf16.msra.mxu0 %v7164
    %9642 = vmatprep.subr.bf16.mxu0 %v7111
    %9643 = vmatpush1.bf16.msra.mxu0 %v7110
    %9644 = vmatprep.subr.bf16.mxu0 %v7057
    %9645 = vmatpush1.bf16.msra.mxu0 %v7056
    %9646 = vmatprep.subr.bf16.mxu0 %v7003
    %9647 = vmatpush1.bf16.msra.mxu0 %v7002
    %9648 = vmatprep.subr.bf16.mxu0 0
    %9649 = vmatpush2.bf16.msra.mxu0 0
    %9650 = vmatprep.subr.bf16.mxu0 0
    %9651 = vmatpush2.bf16.msra.mxu0 0
    %9652 = vmatprep.subr.bf16.mxu0 0
    %9653 = vmatpush2.bf16.msra.mxu0 0
    %9654 = vmatprep.subr.bf16.mxu0 0
    %9655 = vmatpush2.bf16.msra.mxu0 0
    %9656 = vmatprep.subr.bf16.mxu0 0
    %9657 = vmatpush2.bf16.msra.mxu0 0
    %9658 = vmatprep.subr.bf16.mxu0 %v9031
    %9659 = vmatpush2.bf16.msra.mxu0 %v9028
    %9660 = vmatprep.subr.bf16.mxu0 %v7489
    %9661 = vmatpush2.bf16.msra.mxu0 %v7488
    %9662 = vmatprep.subr.bf16.mxu0 %v7435
    %9663 = vmatpush2.bf16.msra.mxu0 %v7434
    %9664 = vmatprep.mubr.bf16.mxu0 %v8991
    %9665 = vmatmul.mubr.bf16.gmra.mxu0 %v294
    %v9666 = vpop.f32.mrf.mxu0
    %v9667 = vadd.f32 %v9624, %v9666
    %v9668 = vpop.f32.mrf.mxu0
    %v9669 = vadd.f32 %v9626, %v9668
    %v9670 = vpop.f32.mrf.mxu0
    %v9671 = vadd.f32 %v9628, %v9670
    %v9672 = vpop.f32.mrf.mxu0
    %v9673 = vadd.f32 %v9630, %v9672
    %9674 = vdwg.mxu0
    %9675 = vmatprep.subr.bf16.mxu0 %v6519
    %9676 = vmatpush1.bf16.msra.mxu0 %v6518
    %9677 = vmatprep.subr.bf16.mxu0 %v6465
    %9678 = vmatpush1.bf16.msra.mxu0 %v6464
    %9679 = vmatprep.subr.bf16.mxu0 %v6411
    %9680 = vmatpush1.bf16.msra.mxu0 %v6410
    %9681 = vmatprep.subr.bf16.mxu0 %v6357
    %9682 = vmatpush1.bf16.msra.mxu0 %v6356
    %9683 = vmatprep.subr.bf16.mxu0 %v6303
    %9684 = vmatpush1.bf16.msra.mxu0 %v6302
    %9685 = vmatprep.subr.bf16.mxu0 %v6249
    %9686 = vmatpush1.bf16.msra.mxu0 %v6248
    %9687 = vmatprep.subr.bf16.mxu0 %v6195
    %9688 = vmatpush1.bf16.msra.mxu0 %v6194
    %9689 = vmatprep.subr.bf16.mxu0 %v6141
    %9690 = vmatpush1.bf16.msra.mxu0 %v6140
    %9691 = vmatprep.subr.bf16.mxu0 %v6951
    %9692 = vmatpush2.bf16.msra.mxu0 %v6950
    %9693 = vmatprep.subr.bf16.mxu0 %v6897
    %9694 = vmatpush2.bf16.msra.mxu0 %v6896
    %9695 = vmatprep.subr.bf16.mxu0 %v6843
    %9696 = vmatpush2.bf16.msra.mxu0 %v6842
    %9697 = vmatprep.subr.bf16.mxu0 %v6789
    %9698 = vmatpush2.bf16.msra.mxu0 %v6788
    %9699 = vmatprep.subr.bf16.mxu0 %v6735
    %9700 = vmatpush2.bf16.msra.mxu0 %v6734
    %9701 = vmatprep.subr.bf16.mxu0 %v6681
    %9702 = vmatpush2.bf16.msra.mxu0 %v6680
    %9703 = vmatprep.subr.bf16.mxu0 %v6627
    %9704 = vmatpush2.bf16.msra.mxu0 %v6626
    %9705 = vmatprep.subr.bf16.mxu0 %v6573
    %9706 = vmatpush2.bf16.msra.mxu0 %v6572
    %9707 = vmatprep.mubr.bf16.mxu0 %v293
    %9708 = vmatmul.mubr.bf16.gmra.mxu0 %v292
    %v9709 = vpop.f32.mrf.mxu0
    %v9710 = vadd.f32 0.0, %v9709
    %v9711 = vpop.f32.mrf.mxu0
    %v9712 = vadd.f32 0.0, %v9711
    %v9713 = vpop.f32.mrf.mxu0
    %v9714 = vadd.f32 0.0, %v9713
    %v9715 = vpop.f32.mrf.mxu0
    %v9716 = vadd.f32 0.0, %v9715
    %9717 = vdwg.mxu0
    %9718 = vmatprep.subr.bf16.mxu0 %v7383
    %9719 = vmatpush1.bf16.msra.mxu0 %v7382
    %9720 = vmatprep.subr.bf16.mxu0 %v7329
    %9721 = vmatpush1.bf16.msra.mxu0 %v7328
    %9722 = vmatprep.subr.bf16.mxu0 %v7275
    %9723 = vmatpush1.bf16.msra.mxu0 %v7274
    %9724 = vmatprep.subr.bf16.mxu0 %v7221
    %9725 = vmatpush1.bf16.msra.mxu0 %v7220
    %9726 = vmatprep.subr.bf16.mxu0 %v7167
    %9727 = vmatpush1.bf16.msra.mxu0 %v7166
    %9728 = vmatprep.subr.bf16.mxu0 %v7113
    %9729 = vmatpush1.bf16.msra.mxu0 %v7112
    %9730 = vmatprep.subr.bf16.mxu0 %v7059
    %9731 = vmatpush1.bf16.msra.mxu0 %v7058
    %9732 = vmatprep.subr.bf16.mxu0 %v7005
    %9733 = vmatpush1.bf16.msra.mxu0 %v7004
    %9734 = vmatprep.subr.bf16.mxu0 0
    %9735 = vmatpush2.bf16.msra.mxu0 0
    %9736 = vmatprep.subr.bf16.mxu0 0
    %9737 = vmatpush2.bf16.msra.mxu0 0
    %9738 = vmatprep.subr.bf16.mxu0 0
    %9739 = vmatpush2.bf16.msra.mxu0 0
    %9740 = vmatprep.subr.bf16.mxu0 0
    %9741 = vmatpush2.bf16.msra.mxu0 0
    %9742 = vmatprep.subr.bf16.mxu0 0
    %9743 = vmatpush2.bf16.msra.mxu0 0
    %9744 = vmatprep.subr.bf16.mxu0 %v9037
    %9745 = vmatpush2.bf16.msra.mxu0 %v9034
    %9746 = vmatprep.subr.bf16.mxu0 %v7491
    %9747 = vmatpush2.bf16.msra.mxu0 %v7490
    %9748 = vmatprep.subr.bf16.mxu0 %v7437
    %9749 = vmatpush2.bf16.msra.mxu0 %v7436
    %9750 = vmatprep.mubr.bf16.mxu0 %v8991
    %9751 = vmatmul.mubr.bf16.gmra.mxu0 %v294
    %v9752 = vpop.f32.mrf.mxu0
    %v9753 = vadd.f32 %v9710, %v9752
    %v9754 = vpop.f32.mrf.mxu0
    %v9755 = vadd.f32 %v9712, %v9754
    %v9756 = vpop.f32.mrf.mxu0
    %v9757 = vadd.f32 %v9714, %v9756
    %v9758 = vpop.f32.mrf.mxu0
    %v9759 = vadd.f32 %v9716, %v9758
    %9760 = vdwg.mxu0
    %9761 = vmatprep.subr.bf16.mxu0 %v6521
    %9762 = vmatpush1.bf16.msra.mxu0 %v6520
    %9763 = vmatprep.subr.bf16.mxu0 %v6467
    %9764 = vmatpush1.bf16.msra.mxu0 %v6466
    %9765 = vmatprep.subr.bf16.mxu0 %v6413
    %9766 = vmatpush1.bf16.msra.mxu0 %v6412
    %9767 = vmatprep.subr.bf16.mxu0 %v6359
    %9768 = vmatpush1.bf16.msra.mxu0 %v6358
    %9769 = vmatprep.subr.bf16.mxu0 %v6305
    %9770 = vmatpush1.bf16.msra.mxu0 %v6304
    %9771 = vmatprep.subr.bf16.mxu0 %v6251
    %9772 = vmatpush1.bf16.msra.mxu0 %v6250
    %9773 = vmatprep.subr.bf16.mxu0 %v6197
    %9774 = vmatpush1.bf16.msra.mxu0 %v6196
    %9775 = vmatprep.subr.bf16.mxu0 %v6143
    %9776 = vmatpush1.bf16.msra.mxu0 %v6142
    %9777 = vmatprep.subr.bf16.mxu0 %v6953
    %9778 = vmatpush2.bf16.msra.mxu0 %v6952
    %9779 = vmatprep.subr.bf16.mxu0 %v6899
    %9780 = vmatpush2.bf16.msra.mxu0 %v6898
    %9781 = vmatprep.subr.bf16.mxu0 %v6845
    %9782 = vmatpush2.bf16.msra.mxu0 %v6844
    %9783 = vmatprep.subr.bf16.mxu0 %v6791
    %9784 = vmatpush2.bf16.msra.mxu0 %v6790
    %9785 = vmatprep.subr.bf16.mxu0 %v6737
    %9786 = vmatpush2.bf16.msra.mxu0 %v6736
    %9787 = vmatprep.subr.bf16.mxu0 %v6683
    %9788 = vmatpush2.bf16.msra.mxu0 %v6682
    %9789 = vmatprep.subr.bf16.mxu0 %v6629
    %9790 = vmatpush2.bf16.msra.mxu0 %v6628
    %9791 = vmatprep.subr.bf16.mxu0 %v6575
    %9792 = vmatpush2.bf16.msra.mxu0 %v6574
    %9793 = vmatprep.mubr.bf16.mxu0 %v293
    %9794 = vmatmul.mubr.bf16.gmra.mxu0 %v292
    %v9795 = vpop.f32.mrf.mxu0
    %v9796 = vadd.f32 0.0, %v9795
    %v9797 = vpop.f32.mrf.mxu0
    %v9798 = vadd.f32 0.0, %v9797
    %v9799 = vpop.f32.mrf.mxu0
    %v9800 = vadd.f32 0.0, %v9799
    %v9801 = vpop.f32.mrf.mxu0
    %v9802 = vadd.f32 0.0, %v9801
    %9803 = vdwg.mxu0
    %9804 = vmatprep.subr.bf16.mxu0 %v7385
    %9805 = vmatpush1.bf16.msra.mxu0 %v7384
    %9806 = vmatprep.subr.bf16.mxu0 %v7331
    %9807 = vmatpush1.bf16.msra.mxu0 %v7330
    %9808 = vmatprep.subr.bf16.mxu0 %v7277
    %9809 = vmatpush1.bf16.msra.mxu0 %v7276
    %9810 = vmatprep.subr.bf16.mxu0 %v7223
    %9811 = vmatpush1.bf16.msra.mxu0 %v7222
    %9812 = vmatprep.subr.bf16.mxu0 %v7169
    %9813 = vmatpush1.bf16.msra.mxu0 %v7168
    %9814 = vmatprep.subr.bf16.mxu0 %v7115
    %9815 = vmatpush1.bf16.msra.mxu0 %v7114
    %9816 = vmatprep.subr.bf16.mxu0 %v7061
    %9817 = vmatpush1.bf16.msra.mxu0 %v7060
    %9818 = vmatprep.subr.bf16.mxu0 %v7007
    %9819 = vmatpush1.bf16.msra.mxu0 %v7006
    %9820 = vmatprep.subr.bf16.mxu0 0
    %9821 = vmatpush2.bf16.msra.mxu0 0
    %9822 = vmatprep.subr.bf16.mxu0 0
    %9823 = vmatpush2.bf16.msra.mxu0 0
    %9824 = vmatprep.subr.bf16.mxu0 0
    %9825 = vmatpush2.bf16.msra.mxu0 0
    %9826 = vmatprep.subr.bf16.mxu0 0
    %9827 = vmatpush2.bf16.msra.mxu0 0
    %9828 = vmatprep.subr.bf16.mxu0 0
    %9829 = vmatpush2.bf16.msra.mxu0 0
    %9830 = vmatprep.subr.bf16.mxu0 %v9043
    %9831 = vmatpush2.bf16.msra.mxu0 %v9040
    %9832 = vmatprep.subr.bf16.mxu0 %v7493
    %9833 = vmatpush2.bf16.msra.mxu0 %v7492
    %9834 = vmatprep.subr.bf16.mxu0 %v7439
    %9835 = vmatpush2.bf16.msra.mxu0 %v7438
    %9836 = vmatprep.mubr.bf16.mxu0 %v8991
    %9837 = vmatmul.mubr.bf16.gmra.mxu0 %v294
    %v9838 = vpop.f32.mrf.mxu0
    %v9839 = vadd.f32 %v9796, %v9838
    %v9840 = vpop.f32.mrf.mxu0
    %v9841 = vadd.f32 %v9798, %v9840
    %v9842 = vpop.f32.mrf.mxu0
    %v9843 = vadd.f32 %v9800, %v9842
    %v9844 = vpop.f32.mrf.mxu0
    %v9845 = vadd.f32 %v9802, %v9844
    %9846 = vdwg.mxu0
    %9847 = vmatprep.subr.bf16.mxu0 %v6523
    %9848 = vmatpush1.bf16.msra.mxu0 %v6522
    %9849 = vmatprep.subr.bf16.mxu0 %v6469
    %9850 = vmatpush1.bf16.msra.mxu0 %v6468
    %9851 = vmatprep.subr.bf16.mxu0 %v6415
    %9852 = vmatpush1.bf16.msra.mxu0 %v6414
    %9853 = vmatprep.subr.bf16.mxu0 %v6361
    %9854 = vmatpush1.bf16.msra.mxu0 %v6360
    %9855 = vmatprep.subr.bf16.mxu0 %v6307
    %9856 = vmatpush1.bf16.msra.mxu0 %v6306
    %9857 = vmatprep.subr.bf16.mxu0 %v6253
    %9858 = vmatpush1.bf16.msra.mxu0 %v6252
    %9859 = vmatprep.subr.bf16.mxu0 %v6199
    %9860 = vmatpush1.bf16.msra.mxu0 %v6198
    %9861 = vmatprep.subr.bf16.mxu0 %v6145
    %9862 = vmatpush1.bf16.msra.mxu0 %v6144
    %9863 = vmatprep.subr.bf16.mxu0 %v6955
    %9864 = vmatpush2.bf16.msra.mxu0 %v6954
    %9865 = vmatprep.subr.bf16.mxu0 %v6901
    %9866 = vmatpush2.bf16.msra.mxu0 %v6900
    %9867 = vmatprep.subr.bf16.mxu0 %v6847
    %9868 = vmatpush2.bf16.msra.mxu0 %v6846
    %9869 = vmatprep.subr.bf16.mxu0 %v6793
    %9870 = vmatpush2.bf16.msra.mxu0 %v6792
    %9871 = vmatprep.subr.bf16.mxu0 %v6739
    %9872 = vmatpush2.bf16.msra.mxu0 %v6738
    %9873 = vmatprep.subr.bf16.mxu0 %v6685
    %9874 = vmatpush2.bf16.msra.mxu0 %v6684
    %9875 = vmatprep.subr.bf16.mxu0 %v6631
    %9876 = vmatpush2.bf16.msra.mxu0 %v6630
    %9877 = vmatprep.subr.bf16.mxu0 %v6577
    %9878 = vmatpush2.bf16.msra.mxu0 %v6576
    %9879 = vmatprep.mubr.bf16.mxu0 %v293
    %9880 = vmatmul.mubr.bf16.gmra.mxu0 %v292
    %v9881 = vpop.f32.mrf.mxu0
    %v9882 = vadd.f32 0.0, %v9881
    %v9883 = vpop.f32.mrf.mxu0
    %v9884 = vadd.f32 0.0, %v9883
    %v9885 = vpop.f32.mrf.mxu0
    %v9886 = vadd.f32 0.0, %v9885
    %v9887 = vpop.f32.mrf.mxu0
    %v9888 = vadd.f32 0.0, %v9887
    %9889 = vdwg.mxu0
    %9890 = vmatprep.subr.bf16.mxu0 %v7387
    %9891 = vmatpush1.bf16.msra.mxu0 %v7386
    %9892 = vmatprep.subr.bf16.mxu0 %v7333
    %9893 = vmatpush1.bf16.msra.mxu0 %v7332
    %9894 = vmatprep.subr.bf16.mxu0 %v7279
    %9895 = vmatpush1.bf16.msra.mxu0 %v7278
    %9896 = vmatprep.subr.bf16.mxu0 %v7225
    %9897 = vmatpush1.bf16.msra.mxu0 %v7224
    %9898 = vmatprep.subr.bf16.mxu0 %v7171
    %9899 = vmatpush1.bf16.msra.mxu0 %v7170
    %9900 = vmatprep.subr.bf16.mxu0 %v7117
    %9901 = vmatpush1.bf16.msra.mxu0 %v7116
    %9902 = vmatprep.subr.bf16.mxu0 %v7063
    %9903 = vmatpush1.bf16.msra.mxu0 %v7062
    %9904 = vmatprep.subr.bf16.mxu0 %v7009
    %9905 = vmatpush1.bf16.msra.mxu0 %v7008
    %9906 = vmatprep.subr.bf16.mxu0 0
    %9907 = vmatpush2.bf16.msra.mxu0 0
    %9908 = vmatprep.subr.bf16.mxu0 0
    %9909 = vmatpush2.bf16.msra.mxu0 0
    %9910 = vmatprep.subr.bf16.mxu0 0
    %9911 = vmatpush2.bf16.msra.mxu0 0
    %9912 = vmatprep.subr.bf16.mxu0 0
    %9913 = vmatpush2.bf16.msra.mxu0 0
    %9914 = vmatprep.subr.bf16.mxu0 0
    %9915 = vmatpush2.bf16.msra.mxu0 0
    %9916 = vmatprep.subr.bf16.mxu0 %v9049
    %9917 = vmatpush2.bf16.msra.mxu0 %v9046
    %9918 = vmatprep.subr.bf16.mxu0 %v7495
    %9919 = vmatpush2.bf16.msra.mxu0 %v7494
    %9920 = vmatprep.subr.bf16.mxu0 %v7441
    %9921 = vmatpush2.bf16.msra.mxu0 %v7440
    %9922 = vmatprep.mubr.bf16.mxu0 %v8991
    %9923 = vmatmul.mubr.bf16.gmra.mxu0 %v294
    %v9924 = vpop.f32.mrf.mxu0
    %v9925 = vadd.f32 %v9882, %v9924
    %v9926 = vpop.f32.mrf.mxu0
    %v9927 = vadd.f32 %v9884, %v9926
    %v9928 = vpop.f32.mrf.mxu0
    %v9929 = vadd.f32 %v9886, %v9928
    %v9930 = vpop.f32.mrf.mxu0
    %v9931 = vadd.f32 %v9888, %v9930
    %9932 = vdwg.mxu0
    %9933 = vmatprep.subr.bf16.mxu0 %v6525
    %9934 = vmatpush1.bf16.msra.mxu0 %v6524
    %9935 = vmatprep.subr.bf16.mxu0 %v6471
    %9936 = vmatpush1.bf16.msra.mxu0 %v6470
    %9937 = vmatprep.subr.bf16.mxu0 %v6417
    %9938 = vmatpush1.bf16.msra.mxu0 %v6416
    %9939 = vmatprep.subr.bf16.mxu0 %v6363
    %9940 = vmatpush1.bf16.msra.mxu0 %v6362
    %9941 = vmatprep.subr.bf16.mxu0 %v6309
    %9942 = vmatpush1.bf16.msra.mxu0 %v6308
    %9943 = vmatprep.subr.bf16.mxu0 %v6255
    %9944 = vmatpush1.bf16.msra.mxu0 %v6254
    %9945 = vmatprep.subr.bf16.mxu0 %v6201
    %9946 = vmatpush1.bf16.msra.mxu0 %v6200
    %9947 = vmatprep.subr.bf16.mxu0 %v6147
    %9948 = vmatpush1.bf16.msra.mxu0 %v6146
    %9949 = vmatprep.subr.bf16.mxu0 %v6957
    %9950 = vmatpush2.bf16.msra.mxu0 %v6956
    %9951 = vmatprep.subr.bf16.mxu0 %v6903
    %9952 = vmatpush2.bf16.msra.mxu0 %v6902
    %9953 = vmatprep.subr.bf16.mxu0 %v6849
    %9954 = vmatpush2.bf16.msra.mxu0 %v6848
    %9955 = vmatprep.subr.bf16.mxu0 %v6795
    %9956 = vmatpush2.bf16.msra.mxu0 %v6794
    %9957 = vmatprep.subr.bf16.mxu0 %v6741
    %9958 = vmatpush2.bf16.msra.mxu0 %v6740
    %9959 = vmatprep.subr.bf16.mxu0 %v6687
    %9960 = vmatpush2.bf16.msra.mxu0 %v6686
    %9961 = vmatprep.subr.bf16.mxu0 %v6633
    %9962 = vmatpush2.bf16.msra.mxu0 %v6632
    %9963 = vmatprep.subr.bf16.mxu0 %v6579
    %9964 = vmatpush2.bf16.msra.mxu0 %v6578
    %9965 = vmatprep.mubr.bf16.mxu0 %v293
    %9966 = vmatmul.mubr.bf16.gmra.mxu0 %v292
    %v9967 = vpop.f32.mrf.mxu0
    %v9968 = vadd.f32 0.0, %v9967
    %v9969 = vpop.f32.mrf.mxu0
    %v9970 = vadd.f32 0.0, %v9969
    %v9971 = vpop.f32.mrf.mxu0
    %v9972 = vadd.f32 0.0, %v9971
    %v9973 = vpop.f32.mrf.mxu0
    %v9974 = vadd.f32 0.0, %v9973
    %9975 = vdwg.mxu0
    %9976 = vmatprep.subr.bf16.mxu0 %v7389
    %9977 = vmatpush1.bf16.msra.mxu0 %v7388
    %9978 = vmatprep.subr.bf16.mxu0 %v7335
    %9979 = vmatpush1.bf16.msra.mxu0 %v7334
    %9980 = vmatprep.subr.bf16.mxu0 %v7281
    %9981 = vmatpush1.bf16.msra.mxu0 %v7280
    %9982 = vmatprep.subr.bf16.mxu0 %v7227
    %9983 = vmatpush1.bf16.msra.mxu0 %v7226
    %9984 = vmatprep.subr.bf16.mxu0 %v7173
    %9985 = vmatpush1.bf16.msra.mxu0 %v7172
    %9986 = vmatprep.subr.bf16.mxu0 %v7119
    %9987 = vmatpush1.bf16.msra.mxu0 %v7118
    %9988 = vmatprep.subr.bf16.mxu0 %v7065
    %9989 = vmatpush1.bf16.msra.mxu0 %v7064
    %9990 = vmatprep.subr.bf16.mxu0 %v7011
    %9991 = vmatpush1.bf16.msra.mxu0 %v7010
    %9992 = vmatprep.subr.bf16.mxu0 0
    %9993 = vmatpush2.bf16.msra.mxu0 0
    %9994 = vmatprep.subr.bf16.mxu0 0
    %9995 = vmatpush2.bf16.msra.mxu0 0
    %9996 = vmatprep.subr.bf16.mxu0 0
    %9997 = vmatpush2.bf16.msra.mxu0 0
    %9998 = vmatprep.subr.bf16.mxu0 0
    %9999 = vmatpush2.bf16.msra.mxu0 0
    %10000 = vmatprep.subr.bf16.mxu0 0
    %10001 = vmatpush2.bf16.msra.mxu0 0
    %10002 = vmatprep.subr.bf16.mxu0 %v9055
    %10003 = vmatpush2.bf16.msra.mxu0 %v9052
    %10004 = vmatprep.subr.bf16.mxu0 %v7497
    %10005 = vmatpush2.bf16.msra.mxu0 %v7496
    %10006 = vmatprep.subr.bf16.mxu0 %v7443
    %10007 = vmatpush2.bf16.msra.mxu0 %v7442
    %10008 = vmatprep.mubr.bf16.mxu0 %v8991
    %10009 = vmatmul.mubr.bf16.gmra.mxu0 %v294
    %v10010 = vpop.f32.mrf.mxu0
    %v10011 = vadd.f32 %v9968, %v10010
    %v10012 = vpop.f32.mrf.mxu0
    %v10013 = vadd.f32 %v9970, %v10012
    %v10014 = vpop.f32.mrf.mxu0
    %v10015 = vadd.f32 %v9972, %v10014
    %v10016 = vpop.f32.mrf.mxu0
    %v10017 = vadd.f32 %v9974, %v10016
    %10018 = vdwg.mxu0
    %10019 = vmatprep.subr.bf16.mxu0 %v6527
    %10020 = vmatpush1.bf16.msra.mxu0 %v6526
    %10021 = vmatprep.subr.bf16.mxu0 %v6473
    %10022 = vmatpush1.bf16.msra.mxu0 %v6472
    %10023 = vmatprep.subr.bf16.mxu0 %v6419
    %10024 = vmatpush1.bf16.msra.mxu0 %v6418
    %10025 = vmatprep.subr.bf16.mxu0 %v6365
    %10026 = vmatpush1.bf16.msra.mxu0 %v6364
    %10027 = vmatprep.subr.bf16.mxu0 %v6311
    %10028 = vmatpush1.bf16.msra.mxu0 %v6310
    %10029 = vmatprep.subr.bf16.mxu0 %v6257
    %10030 = vmatpush1.bf16.msra.mxu0 %v6256
    %10031 = vmatprep.subr.bf16.mxu0 %v6203
    %10032 = vmatpush1.bf16.msra.mxu0 %v6202
    %10033 = vmatprep.subr.bf16.mxu0 %v6149
    %10034 = vmatpush1.bf16.msra.mxu0 %v6148
    %10035 = vmatprep.subr.bf16.mxu0 %v6959
    %10036 = vmatpush2.bf16.msra.mxu0 %v6958
    %10037 = vmatprep.subr.bf16.mxu0 %v6905
    %10038 = vmatpush2.bf16.msra.mxu0 %v6904
    %10039 = vmatprep.subr.bf16.mxu0 %v6851
    %10040 = vmatpush2.bf16.msra.mxu0 %v6850
    %10041 = vmatprep.subr.bf16.mxu0 %v6797
    %10042 = vmatpush2.bf16.msra.mxu0 %v6796
    %10043 = vmatprep.subr.bf16.mxu0 %v6743
    %10044 = vmatpush2.bf16.msra.mxu0 %v6742
    %10045 = vmatprep.subr.bf16.mxu0 %v6689
    %10046 = vmatpush2.bf16.msra.mxu0 %v6688
    %10047 = vmatprep.subr.bf16.mxu0 %v6635
    %10048 = vmatpush2.bf16.msra.mxu0 %v6634
    %10049 = vmatprep.subr.bf16.mxu0 %v6581
    %10050 = vmatpush2.bf16.msra.mxu0 %v6580
    %10051 = vmatprep.mubr.bf16.mxu0 %v293
    %10052 = vmatmul.mubr.bf16.gmra.mxu0 %v292
    %v10053 = vpop.f32.mrf.mxu0
    %v10054 = vadd.f32 0.0, %v10053
    %v10055 = vpop.f32.mrf.mxu0
    %v10056 = vadd.f32 0.0, %v10055
    %v10057 = vpop.f32.mrf.mxu0
    %v10058 = vadd.f32 0.0, %v10057
    %v10059 = vpop.f32.mrf.mxu0
    %v10060 = vadd.f32 0.0, %v10059
    %10061 = vdwg.mxu0
    %10062 = vmatprep.subr.bf16.mxu0 %v7391
    %10063 = vmatpush1.bf16.msra.mxu0 %v7390
    %10064 = vmatprep.subr.bf16.mxu0 %v7337
    %10065 = vmatpush1.bf16.msra.mxu0 %v7336
    %10066 = vmatprep.subr.bf16.mxu0 %v7283
    %10067 = vmatpush1.bf16.msra.mxu0 %v7282
    %10068 = vmatprep.subr.bf16.mxu0 %v7229
    %10069 = vmatpush1.bf16.msra.mxu0 %v7228
    %10070 = vmatprep.subr.bf16.mxu0 %v7175
    %10071 = vmatpush1.bf16.msra.mxu0 %v7174
    %10072 = vmatprep.subr.bf16.mxu0 %v7121
    %10073 = vmatpush1.bf16.msra.mxu0 %v7120
    %10074 = vmatprep.subr.bf16.mxu0 %v7067
    %10075 = vmatpush1.bf16.msra.mxu0 %v7066
    %10076 = vmatprep.subr.bf16.mxu0 %v7013
    %10077 = vmatpush1.bf16.msra.mxu0 %v7012
    %10078 = vmatprep.subr.bf16.mxu0 0
    %10079 = vmatpush2.bf16.msra.mxu0 0
    %10080 = vmatprep.subr.bf16.mxu0 0
    %10081 = vmatpush2.bf16.msra.mxu0 0
    %10082 = vmatprep.subr.bf16.mxu0 0
    %10083 = vmatpush2.bf16.msra.mxu0 0
    %10084 = vmatprep.subr.bf16.mxu0 0
    %10085 = vmatpush2.bf16.msra.mxu0 0
    %10086 = vmatprep.subr.bf16.mxu0 0
    %10087 = vmatpush2.bf16.msra.mxu0 0
    %10088 = vmatprep.subr.bf16.mxu0 %v9061
    %10089 = vmatpush2.bf16.msra.mxu0 %v9058
    %10090 = vmatprep.subr.bf16.mxu0 %v7499
    %10091 = vmatpush2.bf16.msra.mxu0 %v7498
    %10092 = vmatprep.subr.bf16.mxu0 %v7445
    %10093 = vmatpush2.bf16.msra.mxu0 %v7444
    %10094 = vmatprep.mubr.bf16.mxu0 %v8991
    %10095 = vmatmul.mubr.bf16.gmra.mxu0 %v294
    %v10096 = vpop.f32.mrf.mxu0
    %v10097 = vadd.f32 %v10054, %v10096
    %v10098 = vpop.f32.mrf.mxu0
    %v10099 = vadd.f32 %v10056, %v10098
    %v10100 = vpop.f32.mrf.mxu0
    %v10101 = vadd.f32 %v10058, %v10100
    %v10102 = vpop.f32.mrf.mxu0
    %v10103 = vadd.f32 %v10060, %v10102
    %10104 = vdwg.mxu0
    %10105 = vmatprep.subr.bf16.mxu0 %v6529
    %10106 = vmatpush1.bf16.msra.mxu0 %v6528
    %10107 = vmatprep.subr.bf16.mxu0 %v6475
    %10108 = vmatpush1.bf16.msra.mxu0 %v6474
    %10109 = vmatprep.subr.bf16.mxu0 %v6421
    %10110 = vmatpush1.bf16.msra.mxu0 %v6420
    %10111 = vmatprep.subr.bf16.mxu0 %v6367
    %10112 = vmatpush1.bf16.msra.mxu0 %v6366
    %10113 = vmatprep.subr.bf16.mxu0 %v6313
    %10114 = vmatpush1.bf16.msra.mxu0 %v6312
    %10115 = vmatprep.subr.bf16.mxu0 %v6259
    %10116 = vmatpush1.bf16.msra.mxu0 %v6258
    %10117 = vmatprep.subr.bf16.mxu0 %v6205
    %10118 = vmatpush1.bf16.msra.mxu0 %v6204
    %10119 = vmatprep.subr.bf16.mxu0 %v6151
    %10120 = vmatpush1.bf16.msra.mxu0 %v6150
    %10121 = vmatprep.subr.bf16.mxu0 %v6961
    %10122 = vmatpush2.bf16.msra.mxu0 %v6960
    %10123 = vmatprep.subr.bf16.mxu0 %v6907
    %10124 = vmatpush2.bf16.msra.mxu0 %v6906
    %10125 = vmatprep.subr.bf16.mxu0 %v6853
    %10126 = vmatpush2.bf16.msra.mxu0 %v6852
    %10127 = vmatprep.subr.bf16.mxu0 %v6799
    %10128 = vmatpush2.bf16.msra.mxu0 %v6798
    %10129 = vmatprep.subr.bf16.mxu0 %v6745
    %10130 = vmatpush2.bf16.msra.mxu0 %v6744
    %10131 = vmatprep.subr.bf16.mxu0 %v6691
    %10132 = vmatpush2.bf16.msra.mxu0 %v6690
    %10133 = vmatprep.subr.bf16.mxu0 %v6637
    %10134 = vmatpush2.bf16.msra.mxu0 %v6636
    %10135 = vmatprep.subr.bf16.mxu0 %v6583
    %10136 = vmatpush2.bf16.msra.mxu0 %v6582
    %10137 = vmatprep.mubr.bf16.mxu0 %v293
    %10138 = vmatmul.mubr.bf16.gmra.mxu0 %v292
    %v10139 = vpop.f32.mrf.mxu0
    %v10140 = vadd.f32 0.0, %v10139
    %v10141 = vpop.f32.mrf.mxu0
    %v10142 = vadd.f32 0.0, %v10141
    %v10143 = vpop.f32.mrf.mxu0
    %v10144 = vadd.f32 0.0, %v10143
    %v10145 = vpop.f32.mrf.mxu0
    %v10146 = vadd.f32 0.0, %v10145
    %10147 = vdwg.mxu0
    %10148 = vmatprep.subr.bf16.mxu0 %v7393
    %10149 = vmatpush1.bf16.msra.mxu0 %v7392
    %10150 = vmatprep.subr.bf16.mxu0 %v7339
    %10151 = vmatpush1.bf16.msra.mxu0 %v7338
    %10152 = vmatprep.subr.bf16.mxu0 %v7285
    %10153 = vmatpush1.bf16.msra.mxu0 %v7284
    %10154 = vmatprep.subr.bf16.mxu0 %v7231
    %10155 = vmatpush1.bf16.msra.mxu0 %v7230
    %10156 = vmatprep.subr.bf16.mxu0 %v7177
    %10157 = vmatpush1.bf16.msra.mxu0 %v7176
    %10158 = vmatprep.subr.bf16.mxu0 %v7123
    %10159 = vmatpush1.bf16.msra.mxu0 %v7122
    %10160 = vmatprep.subr.bf16.mxu0 %v7069
    %10161 = vmatpush1.bf16.msra.mxu0 %v7068
    %10162 = vmatprep.subr.bf16.mxu0 %v7015
    %10163 = vmatpush1.bf16.msra.mxu0 %v7014
    %10164 = vmatprep.subr.bf16.mxu0 0
    %10165 = vmatpush2.bf16.msra.mxu0 0
    %10166 = vmatprep.subr.bf16.mxu0 0
    %10167 = vmatpush2.bf16.msra.mxu0 0
    %10168 = vmatprep.subr.bf16.mxu0 0
    %10169 = vmatpush2.bf16.msra.mxu0 0
    %10170 = vmatprep.subr.bf16.mxu0 0
    %10171 = vmatpush2.bf16.msra.mxu0 0
    %10172 = vmatprep.subr.bf16.mxu0 0
    %10173 = vmatpush2.bf16.msra.mxu0 0
    %10174 = vmatprep.subr.bf16.mxu0 %v9067
    %10175 = vmatpush2.bf16.msra.mxu0 %v9064
    %10176 = vmatprep.subr.bf16.mxu0 %v7501
    %10177 = vmatpush2.bf16.msra.mxu0 %v7500
    %10178 = vmatprep.subr.bf16.mxu0 %v7447
    %10179 = vmatpush2.bf16.msra.mxu0 %v7446
    %10180 = vmatprep.mubr.bf16.mxu0 %v8991
    %10181 = vmatmul.mubr.bf16.gmra.mxu0 %v294
    %v10182 = vpop.f32.mrf.mxu0
    %v10183 = vadd.f32 %v10140, %v10182
    %v10184 = vpop.f32.mrf.mxu0
    %v10185 = vadd.f32 %v10142, %v10184
    %v10186 = vpop.f32.mrf.mxu0
    %v10187 = vadd.f32 %v10144, %v10186
    %v10188 = vpop.f32.mrf.mxu0
    %v10189 = vadd.f32 %v10146, %v10188
    %10190 = vdwg.mxu0
    %10191 = vmatprep.subr.bf16.mxu0 %v6531
    %10192 = vmatpush1.bf16.msra.mxu0 %v6530
    %10193 = vmatprep.subr.bf16.mxu0 %v6477
    %10194 = vmatpush1.bf16.msra.mxu0 %v6476
    %10195 = vmatprep.subr.bf16.mxu0 %v6423
    %10196 = vmatpush1.bf16.msra.mxu0 %v6422
    %10197 = vmatprep.subr.bf16.mxu0 %v6369
    %10198 = vmatpush1.bf16.msra.mxu0 %v6368
    %10199 = vmatprep.subr.bf16.mxu0 %v6315
    %10200 = vmatpush1.bf16.msra.mxu0 %v6314
    %10201 = vmatprep.subr.bf16.mxu0 %v6261
    %10202 = vmatpush1.bf16.msra.mxu0 %v6260
    %10203 = vmatprep.subr.bf16.mxu0 %v6207
    %10204 = vmatpush1.bf16.msra.mxu0 %v6206
    %10205 = vmatprep.subr.bf16.mxu0 %v6153
    %10206 = vmatpush1.bf16.msra.mxu0 %v6152
    %10207 = vmatprep.subr.bf16.mxu0 %v6963
    %10208 = vmatpush2.bf16.msra.mxu0 %v6962
    %10209 = vmatprep.subr.bf16.mxu0 %v6909
    %10210 = vmatpush2.bf16.msra.mxu0 %v6908
    %10211 = vmatprep.subr.bf16.mxu0 %v6855
    %10212 = vmatpush2.bf16.msra.mxu0 %v6854
    %10213 = vmatprep.subr.bf16.mxu0 %v6801
    %10214 = vmatpush2.bf16.msra.mxu0 %v6800
    %10215 = vmatprep.subr.bf16.mxu0 %v6747
    %10216 = vmatpush2.bf16.msra.mxu0 %v6746
    %10217 = vmatprep.subr.bf16.mxu0 %v6693
    %10218 = vmatpush2.bf16.msra.mxu0 %v6692
    %10219 = vmatprep.subr.bf16.mxu0 %v6639
    %10220 = vmatpush2.bf16.msra.mxu0 %v6638
    %10221 = vmatprep.subr.bf16.mxu0 %v6585
    %10222 = vmatpush2.bf16.msra.mxu0 %v6584
    %10223 = vmatprep.mubr.bf16.mxu0 %v293
    %10224 = vmatmul.mubr.bf16.gmra.mxu0 %v292
    %v10225 = vpop.f32.mrf.mxu0
    %v10226 = vadd.f32 0.0, %v10225
    %v10227 = vpop.f32.mrf.mxu0
    %v10228 = vadd.f32 0.0, %v10227
    %v10229 = vpop.f32.mrf.mxu0
    %v10230 = vadd.f32 0.0, %v10229
    %v10231 = vpop.f32.mrf.mxu0
    %v10232 = vadd.f32 0.0, %v10231
    %10233 = vdwg.mxu0
    %10234 = vmatprep.subr.bf16.mxu0 %v7395
    %10235 = vmatpush1.bf16.msra.mxu0 %v7394
    %10236 = vmatprep.subr.bf16.mxu0 %v7341
    %10237 = vmatpush1.bf16.msra.mxu0 %v7340
    %10238 = vmatprep.subr.bf16.mxu0 %v7287
    %10239 = vmatpush1.bf16.msra.mxu0 %v7286
    %10240 = vmatprep.subr.bf16.mxu0 %v7233
    %10241 = vmatpush1.bf16.msra.mxu0 %v7232
    %10242 = vmatprep.subr.bf16.mxu0 %v7179
    %10243 = vmatpush1.bf16.msra.mxu0 %v7178
    %10244 = vmatprep.subr.bf16.mxu0 %v7125
    %10245 = vmatpush1.bf16.msra.mxu0 %v7124
    %10246 = vmatprep.subr.bf16.mxu0 %v7071
    %10247 = vmatpush1.bf16.msra.mxu0 %v7070
    %10248 = vmatprep.subr.bf16.mxu0 %v7017
    %10249 = vmatpush1.bf16.msra.mxu0 %v7016
    %10250 = vmatprep.subr.bf16.mxu0 0
    %10251 = vmatpush2.bf16.msra.mxu0 0
    %10252 = vmatprep.subr.bf16.mxu0 0
    %10253 = vmatpush2.bf16.msra.mxu0 0
    %10254 = vmatprep.subr.bf16.mxu0 0
    %10255 = vmatpush2.bf16.msra.mxu0 0
    %10256 = vmatprep.subr.bf16.mxu0 0
    %10257 = vmatpush2.bf16.msra.mxu0 0
    %10258 = vmatprep.subr.bf16.mxu0 0
    %10259 = vmatpush2.bf16.msra.mxu0 0
    %10260 = vmatprep.subr.bf16.mxu0 %v9073
    %10261 = vmatpush2.bf16.msra.mxu0 %v9070
    %10262 = vmatprep.subr.bf16.mxu0 %v7503
    %10263 = vmatpush2.bf16.msra.mxu0 %v7502
    %10264 = vmatprep.subr.bf16.mxu0 %v7449
    %10265 = vmatpush2.bf16.msra.mxu0 %v7448
    %10266 = vmatprep.mubr.bf16.mxu0 %v8991
    %10267 = vmatmul.mubr.bf16.gmra.mxu0 %v294
    %v10268 = vpop.f32.mrf.mxu0
    %v10269 = vadd.f32 %v10226, %v10268
    %v10270 = vpop.f32.mrf.mxu0
    %v10271 = vadd.f32 %v10228, %v10270
    %v10272 = vpop.f32.mrf.mxu0
    %v10273 = vadd.f32 %v10230, %v10272
    %v10274 = vpop.f32.mrf.mxu0
    %v10275 = vadd.f32 %v10232, %v10274
    %10276 = vdwg.mxu0
    %10277 = vmatprep.subr.bf16.mxu0 %v6533
    %10278 = vmatpush1.bf16.msra.mxu0 %v6532
    %10279 = vmatprep.subr.bf16.mxu0 %v6479
    %10280 = vmatpush1.bf16.msra.mxu0 %v6478
    %10281 = vmatprep.subr.bf16.mxu0 %v6425
    %10282 = vmatpush1.bf16.msra.mxu0 %v6424
    %10283 = vmatprep.subr.bf16.mxu0 %v6371
    %10284 = vmatpush1.bf16.msra.mxu0 %v6370
    %10285 = vmatprep.subr.bf16.mxu0 %v6317
    %10286 = vmatpush1.bf16.msra.mxu0 %v6316
    %10287 = vmatprep.subr.bf16.mxu0 %v6263
    %10288 = vmatpush1.bf16.msra.mxu0 %v6262
    %10289 = vmatprep.subr.bf16.mxu0 %v6209
    %10290 = vmatpush1.bf16.msra.mxu0 %v6208
    %10291 = vmatprep.subr.bf16.mxu0 %v6155
    %10292 = vmatpush1.bf16.msra.mxu0 %v6154
    %10293 = vmatprep.subr.bf16.mxu0 %v6965
    %10294 = vmatpush2.bf16.msra.mxu0 %v6964
    %10295 = vmatprep.subr.bf16.mxu0 %v6911
    %10296 = vmatpush2.bf16.msra.mxu0 %v6910
    %10297 = vmatprep.subr.bf16.mxu0 %v6857
    %10298 = vmatpush2.bf16.msra.mxu0 %v6856
    %10299 = vmatprep.subr.bf16.mxu0 %v6803
    %10300 = vmatpush2.bf16.msra.mxu0 %v6802
    %10301 = vmatprep.subr.bf16.mxu0 %v6749
    %10302 = vmatpush2.bf16.msra.mxu0 %v6748
    %10303 = vmatprep.subr.bf16.mxu0 %v6695
    %10304 = vmatpush2.bf16.msra.mxu0 %v6694
    %10305 = vmatprep.subr.bf16.mxu0 %v6641
    %10306 = vmatpush2.bf16.msra.mxu0 %v6640
    %10307 = vmatprep.subr.bf16.mxu0 %v6587
    %10308 = vmatpush2.bf16.msra.mxu0 %v6586
    %10309 = vmatprep.mubr.bf16.mxu0 %v293
    %10310 = vmatmul.mubr.bf16.gmra.mxu0 %v292
    %v10311 = vpop.f32.mrf.mxu0
    %v10312 = vadd.f32 0.0, %v10311
    %v10313 = vpop.f32.mrf.mxu0
    %v10314 = vadd.f32 0.0, %v10313
    %v10315 = vpop.f32.mrf.mxu0
    %v10316 = vadd.f32 0.0, %v10315
    %v10317 = vpop.f32.mrf.mxu0
    %v10318 = vadd.f32 0.0, %v10317
    %10319 = vdwg.mxu0
    %10320 = vmatprep.subr.bf16.mxu0 %v7397
    %10321 = vmatpush1.bf16.msra.mxu0 %v7396
    %10322 = vmatprep.subr.bf16.mxu0 %v7343
    %10323 = vmatpush1.bf16.msra.mxu0 %v7342
    %10324 = vmatprep.subr.bf16.mxu0 %v7289
    %10325 = vmatpush1.bf16.msra.mxu0 %v7288
    %10326 = vmatprep.subr.bf16.mxu0 %v7235
    %10327 = vmatpush1.bf16.msra.mxu0 %v7234
    %10328 = vmatprep.subr.bf16.mxu0 %v7181
    %10329 = vmatpush1.bf16.msra.mxu0 %v7180
    %10330 = vmatprep.subr.bf16.mxu0 %v7127
    %10331 = vmatpush1.bf16.msra.mxu0 %v7126
    %10332 = vmatprep.subr.bf16.mxu0 %v7073
    %10333 = vmatpush1.bf16.msra.mxu0 %v7072
    %10334 = vmatprep.subr.bf16.mxu0 %v7019
    %10335 = vmatpush1.bf16.msra.mxu0 %v7018
    %10336 = vmatprep.subr.bf16.mxu0 0
    %10337 = vmatpush2.bf16.msra.mxu0 0
    %10338 = vmatprep.subr.bf16.mxu0 0
    %10339 = vmatpush2.bf16.msra.mxu0 0
    %10340 = vmatprep.subr.bf16.mxu0 0
    %10341 = vmatpush2.bf16.msra.mxu0 0
    %10342 = vmatprep.subr.bf16.mxu0 0
    %10343 = vmatpush2.bf16.msra.mxu0 0
    %10344 = vmatprep.subr.bf16.mxu0 0
    %10345 = vmatpush2.bf16.msra.mxu0 0
    %10346 = vmatprep.subr.bf16.mxu0 %v9079
    %10347 = vmatpush2.bf16.msra.mxu0 %v9076
    %10348 = vmatprep.subr.bf16.mxu0 %v7505
    %10349 = vmatpush2.bf16.msra.mxu0 %v7504
    %10350 = vmatprep.subr.bf16.mxu0 %v7451
    %10351 = vmatpush2.bf16.msra.mxu0 %v7450
    %10352 = vmatprep.mubr.bf16.mxu0 %v8991
    %10353 = vmatmul.mubr.bf16.gmra.mxu0 %v294
    %v10354 = vpop.f32.mrf.mxu0
    %v10355 = vadd.f32 %v10312, %v10354
    %v10356 = vpop.f32.mrf.mxu0
    %v10357 = vadd.f32 %v10314, %v10356
    %v10358 = vpop.f32.mrf.mxu0
    %v10359 = vadd.f32 %v10316, %v10358
    %v10360 = vpop.f32.mrf.mxu0
    %v10361 = vadd.f32 %v10318, %v10360
    %10362 = vdwg.mxu0
    %10363 = vmatprep.subr.bf16.mxu0 %v6535
    %10364 = vmatpush1.bf16.msra.mxu0 %v6534
    %10365 = vmatprep.subr.bf16.mxu0 %v6481
    %10366 = vmatpush1.bf16.msra.mxu0 %v6480
    %10367 = vmatprep.subr.bf16.mxu0 %v6427
    %10368 = vmatpush1.bf16.msra.mxu0 %v6426
    %10369 = vmatprep.subr.bf16.mxu0 %v6373
    %10370 = vmatpush1.bf16.msra.mxu0 %v6372
    %10371 = vmatprep.subr.bf16.mxu0 %v6319
    %10372 = vmatpush1.bf16.msra.mxu0 %v6318
    %10373 = vmatprep.subr.bf16.mxu0 %v6265
    %10374 = vmatpush1.bf16.msra.mxu0 %v6264
    %10375 = vmatprep.subr.bf16.mxu0 %v6211
    %10376 = vmatpush1.bf16.msra.mxu0 %v6210
    %10377 = vmatprep.subr.bf16.mxu0 %v6157
    %10378 = vmatpush1.bf16.msra.mxu0 %v6156
    %10379 = vmatprep.subr.bf16.mxu0 %v6967
    %10380 = vmatpush2.bf16.msra.mxu0 %v6966
    %10381 = vmatprep.subr.bf16.mxu0 %v6913
    %10382 = vmatpush2.bf16.msra.mxu0 %v6912
    %10383 = vmatprep.subr.bf16.mxu0 %v6859
    %10384 = vmatpush2.bf16.msra.mxu0 %v6858
    %10385 = vmatprep.subr.bf16.mxu0 %v6805
    %10386 = vmatpush2.bf16.msra.mxu0 %v6804
    %10387 = vmatprep.subr.bf16.mxu0 %v6751
    %10388 = vmatpush2.bf16.msra.mxu0 %v6750
    %10389 = vmatprep.subr.bf16.mxu0 %v6697
    %10390 = vmatpush2.bf16.msra.mxu0 %v6696
    %10391 = vmatprep.subr.bf16.mxu0 %v6643
    %10392 = vmatpush2.bf16.msra.mxu0 %v6642
    %10393 = vmatprep.subr.bf16.mxu0 %v6589
    %10394 = vmatpush2.bf16.msra.mxu0 %v6588
    %10395 = vmatprep.mubr.bf16.mxu0 %v293
    %10396 = vmatmul.mubr.bf16.gmra.mxu0 %v292
    %v10397 = vpop.f32.mrf.mxu0
    %v10398 = vadd.f32 0.0, %v10397
    %v10399 = vpop.f32.mrf.mxu0
    %v10400 = vadd.f32 0.0, %v10399
    %v10401 = vpop.f32.mrf.mxu0
    %v10402 = vadd.f32 0.0, %v10401
    %v10403 = vpop.f32.mrf.mxu0
    %v10404 = vadd.f32 0.0, %v10403
    %10405 = vdwg.mxu0
    %10406 = vmatprep.subr.bf16.mxu0 %v7399
    %10407 = vmatpush1.bf16.msra.mxu0 %v7398
    %10408 = vmatprep.subr.bf16.mxu0 %v7345
    %10409 = vmatpush1.bf16.msra.mxu0 %v7344
    %10410 = vmatprep.subr.bf16.mxu0 %v7291
    %10411 = vmatpush1.bf16.msra.mxu0 %v7290
    %10412 = vmatprep.subr.bf16.mxu0 %v7237
    %10413 = vmatpush1.bf16.msra.mxu0 %v7236
    %10414 = vmatprep.subr.bf16.mxu0 %v7183
    %10415 = vmatpush1.bf16.msra.mxu0 %v7182
    %10416 = vmatprep.subr.bf16.mxu0 %v7129
    %10417 = vmatpush1.bf16.msra.mxu0 %v7128
    %10418 = vmatprep.subr.bf16.mxu0 %v7075
    %10419 = vmatpush1.bf16.msra.mxu0 %v7074
    %10420 = vmatprep.subr.bf16.mxu0 %v7021
    %10421 = vmatpush1.bf16.msra.mxu0 %v7020
    %10422 = vmatprep.subr.bf16.mxu0 0
    %10423 = vmatpush2.bf16.msra.mxu0 0
    %10424 = vmatprep.subr.bf16.mxu0 0
    %10425 = vmatpush2.bf16.msra.mxu0 0
    %10426 = vmatprep.subr.bf16.mxu0 0
    %10427 = vmatpush2.bf16.msra.mxu0 0
    %10428 = vmatprep.subr.bf16.mxu0 0
    %10429 = vmatpush2.bf16.msra.mxu0 0
    %10430 = vmatprep.subr.bf16.mxu0 0
    %10431 = vmatpush2.bf16.msra.mxu0 0
    %10432 = vmatprep.subr.bf16.mxu0 %v9085
    %10433 = vmatpush2.bf16.msra.mxu0 %v9082
    %10434 = vmatprep.subr.bf16.mxu0 %v7507
    %10435 = vmatpush2.bf16.msra.mxu0 %v7506
    %10436 = vmatprep.subr.bf16.mxu0 %v7453
    %10437 = vmatpush2.bf16.msra.mxu0 %v7452
    %10438 = vmatprep.mubr.bf16.mxu0 %v8991
    %10439 = vmatmul.mubr.bf16.gmra.mxu0 %v294
    %v10440 = vpop.f32.mrf.mxu0
    %v10441 = vadd.f32 %v10398, %v10440
    %v10442 = vpop.f32.mrf.mxu0
    %v10443 = vadd.f32 %v10400, %v10442
    %v10444 = vpop.f32.mrf.mxu0
    %v10445 = vadd.f32 %v10402, %v10444
    %v10446 = vpop.f32.mrf.mxu0
    %v10447 = vadd.f32 %v10404, %v10446
    %10448 = vdwg.mxu0
    %10449 = vmatprep.subr.bf16.mxu0 %v6537
    %10450 = vmatpush1.bf16.msra.mxu0 %v6536
    %10451 = vmatprep.subr.bf16.mxu0 %v6483
    %10452 = vmatpush1.bf16.msra.mxu0 %v6482
    %10453 = vmatprep.subr.bf16.mxu0 %v6429
    %10454 = vmatpush1.bf16.msra.mxu0 %v6428
    %10455 = vmatprep.subr.bf16.mxu0 %v6375
    %10456 = vmatpush1.bf16.msra.mxu0 %v6374
    %10457 = vmatprep.subr.bf16.mxu0 %v6321
    %10458 = vmatpush1.bf16.msra.mxu0 %v6320
    %10459 = vmatprep.subr.bf16.mxu0 %v6267
    %10460 = vmatpush1.bf16.msra.mxu0 %v6266
    %10461 = vmatprep.subr.bf16.mxu0 %v6213
    %10462 = vmatpush1.bf16.msra.mxu0 %v6212
    %10463 = vmatprep.subr.bf16.mxu0 %v6159
    %10464 = vmatpush1.bf16.msra.mxu0 %v6158
    %10465 = vmatprep.subr.bf16.mxu0 %v6969
    %10466 = vmatpush2.bf16.msra.mxu0 %v6968
    %10467 = vmatprep.subr.bf16.mxu0 %v6915
    %10468 = vmatpush2.bf16.msra.mxu0 %v6914
    %10469 = vmatprep.subr.bf16.mxu0 %v6861
    %10470 = vmatpush2.bf16.msra.mxu0 %v6860
    %10471 = vmatprep.subr.bf16.mxu0 %v6807
    %10472 = vmatpush2.bf16.msra.mxu0 %v6806
    %10473 = vmatprep.subr.bf16.mxu0 %v6753
    %10474 = vmatpush2.bf16.msra.mxu0 %v6752
    %10475 = vmatprep.subr.bf16.mxu0 %v6699
    %10476 = vmatpush2.bf16.msra.mxu0 %v6698
    %10477 = vmatprep.subr.bf16.mxu0 %v6645
    %10478 = vmatpush2.bf16.msra.mxu0 %v6644
    %10479 = vmatprep.subr.bf16.mxu0 %v6591
    %10480 = vmatpush2.bf16.msra.mxu0 %v6590
    %10481 = vmatprep.mubr.bf16.mxu0 %v293
    %10482 = vmatmul.mubr.bf16.gmra.mxu0 %v292
    %v10483 = vpop.f32.mrf.mxu0
    %v10484 = vadd.f32 0.0, %v10483
    %v10485 = vpop.f32.mrf.mxu0
    %v10486 = vadd.f32 0.0, %v10485
    %v10487 = vpop.f32.mrf.mxu0
    %v10488 = vadd.f32 0.0, %v10487
    %v10489 = vpop.f32.mrf.mxu0
    %v10490 = vadd.f32 0.0, %v10489
    %10491 = vdwg.mxu0
    %10492 = vmatprep.subr.bf16.mxu0 %v7401
    %10493 = vmatpush1.bf16.msra.mxu0 %v7400
    %10494 = vmatprep.subr.bf16.mxu0 %v7347
    %10495 = vmatpush1.bf16.msra.mxu0 %v7346
    %10496 = vmatprep.subr.bf16.mxu0 %v7293
    %10497 = vmatpush1.bf16.msra.mxu0 %v7292
    %10498 = vmatprep.subr.bf16.mxu0 %v7239
    %10499 = vmatpush1.bf16.msra.mxu0 %v7238
    %10500 = vmatprep.subr.bf16.mxu0 %v7185
    %10501 = vmatpush1.bf16.msra.mxu0 %v7184
    %10502 = vmatprep.subr.bf16.mxu0 %v7131
    %10503 = vmatpush1.bf16.msra.mxu0 %v7130
    %10504 = vmatprep.subr.bf16.mxu0 %v7077
    %10505 = vmatpush1.bf16.msra.mxu0 %v7076
    %10506 = vmatprep.subr.bf16.mxu0 %v7023
    %10507 = vmatpush1.bf16.msra.mxu0 %v7022
    %10508 = vmatprep.subr.bf16.mxu0 0
    %10509 = vmatpush2.bf16.msra.mxu0 0
    %10510 = vmatprep.subr.bf16.mxu0 0
    %10511 = vmatpush2.bf16.msra.mxu0 0
    %10512 = vmatprep.subr.bf16.mxu0 0
    %10513 = vmatpush2.bf16.msra.mxu0 0
    %10514 = vmatprep.subr.bf16.mxu0 0
    %10515 = vmatpush2.bf16.msra.mxu0 0
    %10516 = vmatprep.subr.bf16.mxu0 0
    %10517 = vmatpush2.bf16.msra.mxu0 0
    %10518 = vmatprep.subr.bf16.mxu0 %v9091
    %10519 = vmatpush2.bf16.msra.mxu0 %v9088
    %10520 = vmatprep.subr.bf16.mxu0 %v7509
    %10521 = vmatpush2.bf16.msra.mxu0 %v7508
    %10522 = vmatprep.subr.bf16.mxu0 %v7455
    %10523 = vmatpush2.bf16.msra.mxu0 %v7454
    %10524 = vmatprep.mubr.bf16.mxu0 %v8991
    %10525 = vmatmul.mubr.bf16.gmra.mxu0 %v294
    %v10526 = vpop.f32.mrf.mxu0
    %v10527 = vadd.f32 %v10484, %v10526
    %v10528 = vpop.f32.mrf.mxu0
    %v10529 = vadd.f32 %v10486, %v10528
    %v10530 = vpop.f32.mrf.mxu0
    %v10531 = vadd.f32 %v10488, %v10530
    %v10532 = vpop.f32.mrf.mxu0
    %v10533 = vadd.f32 %v10490, %v10532
    %10534 = vdwg.mxu0
    %10535 = vmatprep.subr.bf16.mxu0 %v6539
    %10536 = vmatpush1.bf16.msra.mxu0 %v6538
    %10537 = vmatprep.subr.bf16.mxu0 %v6485
    %10538 = vmatpush1.bf16.msra.mxu0 %v6484
    %10539 = vmatprep.subr.bf16.mxu0 %v6431
    %10540 = vmatpush1.bf16.msra.mxu0 %v6430
    %10541 = vmatprep.subr.bf16.mxu0 %v6377
    %10542 = vmatpush1.bf16.msra.mxu0 %v6376
    %10543 = vmatprep.subr.bf16.mxu0 %v6323
    %10544 = vmatpush1.bf16.msra.mxu0 %v6322
    %10545 = vmatprep.subr.bf16.mxu0 %v6269
    %10546 = vmatpush1.bf16.msra.mxu0 %v6268
    %10547 = vmatprep.subr.bf16.mxu0 %v6215
    %10548 = vmatpush1.bf16.msra.mxu0 %v6214
    %10549 = vmatprep.subr.bf16.mxu0 %v6161
    %10550 = vmatpush1.bf16.msra.mxu0 %v6160
    %10551 = vmatprep.subr.bf16.mxu0 %v6971
    %10552 = vmatpush2.bf16.msra.mxu0 %v6970
    %10553 = vmatprep.subr.bf16.mxu0 %v6917
    %10554 = vmatpush2.bf16.msra.mxu0 %v6916
    %10555 = vmatprep.subr.bf16.mxu0 %v6863
    %10556 = vmatpush2.bf16.msra.mxu0 %v6862
    %10557 = vmatprep.subr.bf16.mxu0 %v6809
    %10558 = vmatpush2.bf16.msra.mxu0 %v6808
    %10559 = vmatprep.subr.bf16.mxu0 %v6755
    %10560 = vmatpush2.bf16.msra.mxu0 %v6754
    %10561 = vmatprep.subr.bf16.mxu0 %v6701
    %10562 = vmatpush2.bf16.msra.mxu0 %v6700
    %10563 = vmatprep.subr.bf16.mxu0 %v6647
    %10564 = vmatpush2.bf16.msra.mxu0 %v6646
    %10565 = vmatprep.subr.bf16.mxu0 %v6593
    %10566 = vmatpush2.bf16.msra.mxu0 %v6592
    %10567 = vmatprep.mubr.bf16.mxu0 %v293
    %10568 = vmatmul.mubr.bf16.gmra.mxu0 %v292
    %v10569 = vpop.f32.mrf.mxu0
    %v10570 = vadd.f32 0.0, %v10569
    %v10571 = vpop.f32.mrf.mxu0
    %v10572 = vadd.f32 0.0, %v10571
    %v10573 = vpop.f32.mrf.mxu0
    %v10574 = vadd.f32 0.0, %v10573
    %v10575 = vpop.f32.mrf.mxu0
    %v10576 = vadd.f32 0.0, %v10575
    %10577 = vdwg.mxu0
    %10578 = vmatprep.subr.bf16.mxu0 %v7403
    %10579 = vmatpush1.bf16.msra.mxu0 %v7402
    %10580 = vmatprep.subr.bf16.mxu0 %v7349
    %10581 = vmatpush1.bf16.msra.mxu0 %v7348
    %10582 = vmatprep.subr.bf16.mxu0 %v7295
    %10583 = vmatpush1.bf16.msra.mxu0 %v7294
    %10584 = vmatprep.subr.bf16.mxu0 %v7241
    %10585 = vmatpush1.bf16.msra.mxu0 %v7240
    %10586 = vmatprep.subr.bf16.mxu0 %v7187
    %10587 = vmatpush1.bf16.msra.mxu0 %v7186
    %10588 = vmatprep.subr.bf16.mxu0 %v7133
    %10589 = vmatpush1.bf16.msra.mxu0 %v7132
    %10590 = vmatprep.subr.bf16.mxu0 %v7079
    %10591 = vmatpush1.bf16.msra.mxu0 %v7078
    %10592 = vmatprep.subr.bf16.mxu0 %v7025
    %10593 = vmatpush1.bf16.msra.mxu0 %v7024
    %10594 = vmatprep.subr.bf16.mxu0 0
    %10595 = vmatpush2.bf16.msra.mxu0 0
    %10596 = vmatprep.subr.bf16.mxu0 0
    %10597 = vmatpush2.bf16.msra.mxu0 0
    %10598 = vmatprep.subr.bf16.mxu0 0
    %10599 = vmatpush2.bf16.msra.mxu0 0
    %10600 = vmatprep.subr.bf16.mxu0 0
    %10601 = vmatpush2.bf16.msra.mxu0 0
    %10602 = vmatprep.subr.bf16.mxu0 0
    %10603 = vmatpush2.bf16.msra.mxu0 0
    %10604 = vmatprep.subr.bf16.mxu0 %v9097
    %10605 = vmatpush2.bf16.msra.mxu0 %v9094
    %10606 = vmatprep.subr.bf16.mxu0 %v7511
    %10607 = vmatpush2.bf16.msra.mxu0 %v7510
    %10608 = vmatprep.subr.bf16.mxu0 %v7457
    %10609 = vmatpush2.bf16.msra.mxu0 %v7456
    %10610 = vmatprep.mubr.bf16.mxu0 %v8991
    %10611 = vmatmul.mubr.bf16.gmra.mxu0 %v294
    %v10612 = vpop.f32.mrf.mxu0
    %v10613 = vadd.f32 %v10570, %v10612
    %v10614 = vpop.f32.mrf.mxu0
    %v10615 = vadd.f32 %v10572, %v10614
    %v10616 = vpop.f32.mrf.mxu0
    %v10617 = vadd.f32 %v10574, %v10616
    %v10618 = vpop.f32.mrf.mxu0
    %v10619 = vadd.f32 %v10576, %v10618
    %10620 = vdwg.mxu0
    %10621 = vmatprep.subr.bf16.mxu0 %v6541
    %10622 = vmatpush1.bf16.msra.mxu0 %v6540
    %10623 = vmatprep.subr.bf16.mxu0 %v6487
    %10624 = vmatpush1.bf16.msra.mxu0 %v6486
    %10625 = vmatprep.subr.bf16.mxu0 %v6433
    %10626 = vmatpush1.bf16.msra.mxu0 %v6432
    %10627 = vmatprep.subr.bf16.mxu0 %v6379
    %10628 = vmatpush1.bf16.msra.mxu0 %v6378
    %10629 = vmatprep.subr.bf16.mxu0 %v6325
    %10630 = vmatpush1.bf16.msra.mxu0 %v6324
    %10631 = vmatprep.subr.bf16.mxu0 %v6271
    %10632 = vmatpush1.bf16.msra.mxu0 %v6270
    %10633 = vmatprep.subr.bf16.mxu0 %v6217
    %10634 = vmatpush1.bf16.msra.mxu0 %v6216
    %10635 = vmatprep.subr.bf16.mxu0 %v6163
    %10636 = vmatpush1.bf16.msra.mxu0 %v6162
    %10637 = vmatprep.subr.bf16.mxu0 %v6973
    %10638 = vmatpush2.bf16.msra.mxu0 %v6972
    %10639 = vmatprep.subr.bf16.mxu0 %v6919
    %10640 = vmatpush2.bf16.msra.mxu0 %v6918
    %10641 = vmatprep.subr.bf16.mxu0 %v6865
    %10642 = vmatpush2.bf16.msra.mxu0 %v6864
    %10643 = vmatprep.subr.bf16.mxu0 %v6811
    %10644 = vmatpush2.bf16.msra.mxu0 %v6810
    %10645 = vmatprep.subr.bf16.mxu0 %v6757
    %10646 = vmatpush2.bf16.msra.mxu0 %v6756
    %10647 = vmatprep.subr.bf16.mxu0 %v6703
    %10648 = vmatpush2.bf16.msra.mxu0 %v6702
    %10649 = vmatprep.subr.bf16.mxu0 %v6649
    %10650 = vmatpush2.bf16.msra.mxu0 %v6648
    %10651 = vmatprep.subr.bf16.mxu0 %v6595
    %10652 = vmatpush2.bf16.msra.mxu0 %v6594
    %10653 = vmatprep.mubr.bf16.mxu0 %v293
    %10654 = vmatmul.mubr.bf16.gmra.mxu0 %v292
    %v10655 = vpop.f32.mrf.mxu0
    %v10656 = vadd.f32 0.0, %v10655
    %v10657 = vpop.f32.mrf.mxu0
    %v10658 = vadd.f32 0.0, %v10657
    %v10659 = vpop.f32.mrf.mxu0
    %v10660 = vadd.f32 0.0, %v10659
    %v10661 = vpop.f32.mrf.mxu0
    %v10662 = vadd.f32 0.0, %v10661
    %10663 = vdwg.mxu0
    %10664 = vmatprep.subr.bf16.mxu0 %v7405
    %10665 = vmatpush1.bf16.msra.mxu0 %v7404
    %10666 = vmatprep.subr.bf16.mxu0 %v7351
    %10667 = vmatpush1.bf16.msra.mxu0 %v7350
    %10668 = vmatprep.subr.bf16.mxu0 %v7297
    %10669 = vmatpush1.bf16.msra.mxu0 %v7296
    %10670 = vmatprep.subr.bf16.mxu0 %v7243
    %10671 = vmatpush1.bf16.msra.mxu0 %v7242
    %10672 = vmatprep.subr.bf16.mxu0 %v7189
    %10673 = vmatpush1.bf16.msra.mxu0 %v7188
    %10674 = vmatprep.subr.bf16.mxu0 %v7135
    %10675 = vmatpush1.bf16.msra.mxu0 %v7134
    %10676 = vmatprep.subr.bf16.mxu0 %v7081
    %10677 = vmatpush1.bf16.msra.mxu0 %v7080
    %10678 = vmatprep.subr.bf16.mxu0 %v7027
    %10679 = vmatpush1.bf16.msra.mxu0 %v7026
    %10680 = vmatprep.subr.bf16.mxu0 0
    %10681 = vmatpush2.bf16.msra.mxu0 0
    %10682 = vmatprep.subr.bf16.mxu0 0
    %10683 = vmatpush2.bf16.msra.mxu0 0
    %10684 = vmatprep.subr.bf16.mxu0 0
    %10685 = vmatpush2.bf16.msra.mxu0 0
    %10686 = vmatprep.subr.bf16.mxu0 0
    %10687 = vmatpush2.bf16.msra.mxu0 0
    %10688 = vmatprep.subr.bf16.mxu0 0
    %10689 = vmatpush2.bf16.msra.mxu0 0
    %10690 = vmatprep.subr.bf16.mxu0 %v9103
    %10691 = vmatpush2.bf16.msra.mxu0 %v9100
    %10692 = vmatprep.subr.bf16.mxu0 %v7513
    %10693 = vmatpush2.bf16.msra.mxu0 %v7512
    %10694 = vmatprep.subr.bf16.mxu0 %v7459
    %10695 = vmatpush2.bf16.msra.mxu0 %v7458
    %10696 = vmatprep.mubr.bf16.mxu0 %v8991
    %10697 = vmatmul.mubr.bf16.gmra.mxu0 %v294
    %v10698 = vpop.f32.mrf.mxu0
    %v10699 = vadd.f32 %v10656, %v10698
    %v10700 = vpop.f32.mrf.mxu0
    %v10701 = vadd.f32 %v10658, %v10700
    %v10702 = vpop.f32.mrf.mxu0
    %v10703 = vadd.f32 %v10660, %v10702
    %v10704 = vpop.f32.mrf.mxu0
    %v10705 = vadd.f32 %v10662, %v10704
    %10706 = vdwg.mxu0
    %10707 = vmatprep.subr.bf16.mxu0 %v6543
    %10708 = vmatpush1.bf16.msra.mxu0 %v6542
    %10709 = vmatprep.subr.bf16.mxu0 %v6489
    %10710 = vmatpush1.bf16.msra.mxu0 %v6488
    %10711 = vmatprep.subr.bf16.mxu0 %v6435
    %10712 = vmatpush1.bf16.msra.mxu0 %v6434
    %10713 = vmatprep.subr.bf16.mxu0 %v6381
    %10714 = vmatpush1.bf16.msra.mxu0 %v6380
    %10715 = vmatprep.subr.bf16.mxu0 %v6327
    %10716 = vmatpush1.bf16.msra.mxu0 %v6326
    %10717 = vmatprep.subr.bf16.mxu0 %v6273
    %10718 = vmatpush1.bf16.msra.mxu0 %v6272
    %10719 = vmatprep.subr.bf16.mxu0 %v6219
    %10720 = vmatpush1.bf16.msra.mxu0 %v6218
    %10721 = vmatprep.subr.bf16.mxu0 %v6165
    %10722 = vmatpush1.bf16.msra.mxu0 %v6164
    %10723 = vmatprep.subr.bf16.mxu0 %v6975
    %10724 = vmatpush2.bf16.msra.mxu0 %v6974
    %10725 = vmatprep.subr.bf16.mxu0 %v6921
    %10726 = vmatpush2.bf16.msra.mxu0 %v6920
    %10727 = vmatprep.subr.bf16.mxu0 %v6867
    %10728 = vmatpush2.bf16.msra.mxu0 %v6866
    %10729 = vmatprep.subr.bf16.mxu0 %v6813
    %10730 = vmatpush2.bf16.msra.mxu0 %v6812
    %10731 = vmatprep.subr.bf16.mxu0 %v6759
    %10732 = vmatpush2.bf16.msra.mxu0 %v6758
    %10733 = vmatprep.subr.bf16.mxu0 %v6705
    %10734 = vmatpush2.bf16.msra.mxu0 %v6704
    %10735 = vmatprep.subr.bf16.mxu0 %v6651
    %10736 = vmatpush2.bf16.msra.mxu0 %v6650
    %10737 = vmatprep.subr.bf16.mxu0 %v6597
    %10738 = vmatpush2.bf16.msra.mxu0 %v6596
    %10739 = vmatprep.mubr.bf16.mxu0 %v293
    %10740 = vmatmul.mubr.bf16.gmra.mxu0 %v292
    %v10741 = vpop.f32.mrf.mxu0
    %v10742 = vadd.f32 0.0, %v10741
    %v10743 = vpop.f32.mrf.mxu0
    %v10744 = vadd.f32 0.0, %v10743
    %v10745 = vpop.f32.mrf.mxu0
    %v10746 = vadd.f32 0.0, %v10745
    %v10747 = vpop.f32.mrf.mxu0
    %v10748 = vadd.f32 0.0, %v10747
    %10749 = vdwg.mxu0
    %10750 = vmatprep.subr.bf16.mxu0 %v7407
    %10751 = vmatpush1.bf16.msra.mxu0 %v7406
    %10752 = vmatprep.subr.bf16.mxu0 %v7353
    %10753 = vmatpush1.bf16.msra.mxu0 %v7352
    %10754 = vmatprep.subr.bf16.mxu0 %v7299
    %10755 = vmatpush1.bf16.msra.mxu0 %v7298
    %10756 = vmatprep.subr.bf16.mxu0 %v7245
    %10757 = vmatpush1.bf16.msra.mxu0 %v7244
    %10758 = vmatprep.subr.bf16.mxu0 %v7191
    %10759 = vmatpush1.bf16.msra.mxu0 %v7190
    %10760 = vmatprep.subr.bf16.mxu0 %v7137
    %10761 = vmatpush1.bf16.msra.mxu0 %v7136
    %10762 = vmatprep.subr.bf16.mxu0 %v7083
    %10763 = vmatpush1.bf16.msra.mxu0 %v7082
    %10764 = vmatprep.subr.bf16.mxu0 %v7029
    %10765 = vmatpush1.bf16.msra.mxu0 %v7028
    %10766 = vmatprep.subr.bf16.mxu0 0
    %10767 = vmatpush2.bf16.msra.mxu0 0
    %10768 = vmatprep.subr.bf16.mxu0 0
    %10769 = vmatpush2.bf16.msra.mxu0 0
    %10770 = vmatprep.subr.bf16.mxu0 0
    %10771 = vmatpush2.bf16.msra.mxu0 0
    %10772 = vmatprep.subr.bf16.mxu0 0
    %10773 = vmatpush2.bf16.msra.mxu0 0
    %10774 = vmatprep.subr.bf16.mxu0 0
    %10775 = vmatpush2.bf16.msra.mxu0 0
    %10776 = vmatprep.subr.bf16.mxu0 %v9109
    %10777 = vmatpush2.bf16.msra.mxu0 %v9106
    %10778 = vmatprep.subr.bf16.mxu0 %v7515
    %10779 = vmatpush2.bf16.msra.mxu0 %v7514
    %10780 = vmatprep.subr.bf16.mxu0 %v7461
    %10781 = vmatpush2.bf16.msra.mxu0 %v7460
    %10782 = vmatprep.mubr.bf16.mxu0 %v8991
    %10783 = vmatmul.mubr.bf16.gmra.mxu0 %v294
    %v10784 = vpop.f32.mrf.mxu0
    %v10785 = vadd.f32 %v10742, %v10784
    %v10786 = vpop.f32.mrf.mxu0
    %v10787 = vadd.f32 %v10744, %v10786
    %v10788 = vpop.f32.mrf.mxu0
    %v10789 = vadd.f32 %v10746, %v10788
    %v10790 = vpop.f32.mrf.mxu0
    %v10791 = vadd.f32 %v10748, %v10790
    %10792 = vdwg.mxu0
    %10793 = vmatprep.subr.bf16.mxu0 %v6545
    %10794 = vmatpush1.bf16.msra.mxu0 %v6544
    %10795 = vmatprep.subr.bf16.mxu0 %v6491
    %10796 = vmatpush1.bf16.msra.mxu0 %v6490
    %10797 = vmatprep.subr.bf16.mxu0 %v6437
    %10798 = vmatpush1.bf16.msra.mxu0 %v6436
    %10799 = vmatprep.subr.bf16.mxu0 %v6383
    %10800 = vmatpush1.bf16.msra.mxu0 %v6382
    %10801 = vmatprep.subr.bf16.mxu0 %v6329
    %10802 = vmatpush1.bf16.msra.mxu0 %v6328
    %10803 = vmatprep.subr.bf16.mxu0 %v6275
    %10804 = vmatpush1.bf16.msra.mxu0 %v6274
    %10805 = vmatprep.subr.bf16.mxu0 %v6221
    %10806 = vmatpush1.bf16.msra.mxu0 %v6220
    %10807 = vmatprep.subr.bf16.mxu0 %v6167
    %10808 = vmatpush1.bf16.msra.mxu0 %v6166
    %10809 = vmatprep.subr.bf16.mxu0 %v6977
    %10810 = vmatpush2.bf16.msra.mxu0 %v6976
    %10811 = vmatprep.subr.bf16.mxu0 %v6923
    %10812 = vmatpush2.bf16.msra.mxu0 %v6922
    %10813 = vmatprep.subr.bf16.mxu0 %v6869
    %10814 = vmatpush2.bf16.msra.mxu0 %v6868
    %10815 = vmatprep.subr.bf16.mxu0 %v6815
    %10816 = vmatpush2.bf16.msra.mxu0 %v6814
    %10817 = vmatprep.subr.bf16.mxu0 %v6761
    %10818 = vmatpush2.bf16.msra.mxu0 %v6760
    %10819 = vmatprep.subr.bf16.mxu0 %v6707
    %10820 = vmatpush2.bf16.msra.mxu0 %v6706
    %10821 = vmatprep.subr.bf16.mxu0 %v6653
    %10822 = vmatpush2.bf16.msra.mxu0 %v6652
    %10823 = vmatprep.subr.bf16.mxu0 %v6599
    %10824 = vmatpush2.bf16.msra.mxu0 %v6598
    %10825 = vmatprep.mubr.bf16.mxu0 %v293
    %10826 = vmatmul.mubr.bf16.gmra.mxu0 %v292
    %v10827 = vpop.f32.mrf.mxu0
    %v10828 = vadd.f32 0.0, %v10827
    %v10829 = vpop.f32.mrf.mxu0
    %v10830 = vadd.f32 0.0, %v10829
    %v10831 = vpop.f32.mrf.mxu0
    %v10832 = vadd.f32 0.0, %v10831
    %v10833 = vpop.f32.mrf.mxu0
    %v10834 = vadd.f32 0.0, %v10833
    %10835 = vdwg.mxu0
    %10836 = vmatprep.subr.bf16.mxu0 %v7409
    %10837 = vmatpush1.bf16.msra.mxu0 %v7408
    %10838 = vmatprep.subr.bf16.mxu0 %v7355
    %10839 = vmatpush1.bf16.msra.mxu0 %v7354
    %10840 = vmatprep.subr.bf16.mxu0 %v7301
    %10841 = vmatpush1.bf16.msra.mxu0 %v7300
    %10842 = vmatprep.subr.bf16.mxu0 %v7247
    %10843 = vmatpush1.bf16.msra.mxu0 %v7246
    %10844 = vmatprep.subr.bf16.mxu0 %v7193
    %10845 = vmatpush1.bf16.msra.mxu0 %v7192
    %10846 = vmatprep.subr.bf16.mxu0 %v7139
    %10847 = vmatpush1.bf16.msra.mxu0 %v7138
    %10848 = vmatprep.subr.bf16.mxu0 %v7085
    %10849 = vmatpush1.bf16.msra.mxu0 %v7084
    %10850 = vmatprep.subr.bf16.mxu0 %v7031
    %10851 = vmatpush1.bf16.msra.mxu0 %v7030
    %10852 = vmatprep.subr.bf16.mxu0 0
    %10853 = vmatpush2.bf16.msra.mxu0 0
    %10854 = vmatprep.subr.bf16.mxu0 0
    %10855 = vmatpush2.bf16.msra.mxu0 0
    %10856 = vmatprep.subr.bf16.mxu0 0
    %10857 = vmatpush2.bf16.msra.mxu0 0
    %10858 = vmatprep.subr.bf16.mxu0 0
    %10859 = vmatpush2.bf16.msra.mxu0 0
    %10860 = vmatprep.subr.bf16.mxu0 0
    %10861 = vmatpush2.bf16.msra.mxu0 0
    %10862 = vmatprep.subr.bf16.mxu0 %v9115
    %10863 = vmatpush2.bf16.msra.mxu0 %v9112
    %10864 = vmatprep.subr.bf16.mxu0 %v7517
    %10865 = vmatpush2.bf16.msra.mxu0 %v7516
    %10866 = vmatprep.subr.bf16.mxu0 %v7463
    %10867 = vmatpush2.bf16.msra.mxu0 %v7462
    %10868 = vmatprep.mubr.bf16.mxu0 %v8991
    %10869 = vmatmul.mubr.bf16.gmra.mxu0 %v294
    %v10870 = vpop.f32.mrf.mxu0
    %v10871 = vadd.f32 %v10828, %v10870
    %v10872 = vpop.f32.mrf.mxu0
    %v10873 = vadd.f32 %v10830, %v10872
    %v10874 = vpop.f32.mrf.mxu0
    %v10875 = vadd.f32 %v10832, %v10874
    %v10876 = vpop.f32.mrf.mxu0
    %v10877 = vadd.f32 %v10834, %v10876
    %10878 = vdwg.mxu0
    %10879 = vmatprep.subr.bf16.mxu0 %v6547
    %10880 = vmatpush1.bf16.msra.mxu0 %v6546
    %10881 = vmatprep.subr.bf16.mxu0 %v6493
    %10882 = vmatpush1.bf16.msra.mxu0 %v6492
    %10883 = vmatprep.subr.bf16.mxu0 %v6439
    %10884 = vmatpush1.bf16.msra.mxu0 %v6438
    %10885 = vmatprep.subr.bf16.mxu0 %v6385
    %10886 = vmatpush1.bf16.msra.mxu0 %v6384
    %10887 = vmatprep.subr.bf16.mxu0 %v6331
    %10888 = vmatpush1.bf16.msra.mxu0 %v6330
    %10889 = vmatprep.subr.bf16.mxu0 %v6277
    %10890 = vmatpush1.bf16.msra.mxu0 %v6276
    %10891 = vmatprep.subr.bf16.mxu0 %v6223
    %10892 = vmatpush1.bf16.msra.mxu0 %v6222
    %10893 = vmatprep.subr.bf16.mxu0 %v6169
    %10894 = vmatpush1.bf16.msra.mxu0 %v6168
    %10895 = vmatprep.subr.bf16.mxu0 %v6979
    %10896 = vmatpush2.bf16.msra.mxu0 %v6978
    %10897 = vmatprep.subr.bf16.mxu0 %v6925
    %10898 = vmatpush2.bf16.msra.mxu0 %v6924
    %10899 = vmatprep.subr.bf16.mxu0 %v6871
    %10900 = vmatpush2.bf16.msra.mxu0 %v6870
    %10901 = vmatprep.subr.bf16.mxu0 %v6817
    %10902 = vmatpush2.bf16.msra.mxu0 %v6816
    %10903 = vmatprep.subr.bf16.mxu0 %v6763
    %10904 = vmatpush2.bf16.msra.mxu0 %v6762
    %10905 = vmatprep.subr.bf16.mxu0 %v6709
    %10906 = vmatpush2.bf16.msra.mxu0 %v6708
    %10907 = vmatprep.subr.bf16.mxu0 %v6655
    %10908 = vmatpush2.bf16.msra.mxu0 %v6654
    %10909 = vmatprep.subr.bf16.mxu0 %v6601
    %10910 = vmatpush2.bf16.msra.mxu0 %v6600
    %10911 = vmatprep.mubr.bf16.mxu0 %v293
    %10912 = vmatmul.mubr.bf16.gmra.mxu0 %v292
    %v10913 = vpop.f32.mrf.mxu0
    %v10914 = vadd.f32 0.0, %v10913
    %v10915 = vpop.f32.mrf.mxu0
    %v10916 = vadd.f32 0.0, %v10915
    %v10917 = vpop.f32.mrf.mxu0
    %v10918 = vadd.f32 0.0, %v10917
    %v10919 = vpop.f32.mrf.mxu0
    %v10920 = vadd.f32 0.0, %v10919
    %10921 = vdwg.mxu0
    %10922 = vmatprep.subr.bf16.mxu0 %v7411
    %10923 = vmatpush1.bf16.msra.mxu0 %v7410
    %10924 = vmatprep.subr.bf16.mxu0 %v7357
    %10925 = vmatpush1.bf16.msra.mxu0 %v7356
    %10926 = vmatprep.subr.bf16.mxu0 %v7303
    %10927 = vmatpush1.bf16.msra.mxu0 %v7302
    %10928 = vmatprep.subr.bf16.mxu0 %v7249
    %10929 = vmatpush1.bf16.msra.mxu0 %v7248
    %10930 = vmatprep.subr.bf16.mxu0 %v7195
    %10931 = vmatpush1.bf16.msra.mxu0 %v7194
    %10932 = vmatprep.subr.bf16.mxu0 %v7141
    %10933 = vmatpush1.bf16.msra.mxu0 %v7140
    %10934 = vmatprep.subr.bf16.mxu0 %v7087
    %10935 = vmatpush1.bf16.msra.mxu0 %v7086
    %10936 = vmatprep.subr.bf16.mxu0 %v7033
    %10937 = vmatpush1.bf16.msra.mxu0 %v7032
    %10938 = vmatprep.subr.bf16.mxu0 0
    %10939 = vmatpush2.bf16.msra.mxu0 0
    %10940 = vmatprep.subr.bf16.mxu0 0
    %10941 = vmatpush2.bf16.msra.mxu0 0
    %10942 = vmatprep.subr.bf16.mxu0 0
    %10943 = vmatpush2.bf16.msra.mxu0 0
    %10944 = vmatprep.subr.bf16.mxu0 0
    %10945 = vmatpush2.bf16.msra.mxu0 0
    %10946 = vmatprep.subr.bf16.mxu0 0
    %10947 = vmatpush2.bf16.msra.mxu0 0
    %10948 = vmatprep.subr.bf16.mxu0 %v9121
    %10949 = vmatpush2.bf16.msra.mxu0 %v9118
    %10950 = vmatprep.subr.bf16.mxu0 %v7519
    %10951 = vmatpush2.bf16.msra.mxu0 %v7518
    %10952 = vmatprep.subr.bf16.mxu0 %v7465
    %10953 = vmatpush2.bf16.msra.mxu0 %v7464
    %10954 = vmatprep.mubr.bf16.mxu0 %v8991
    %10955 = vmatmul.mubr.bf16.gmra.mxu0 %v294
    %v10956 = vpop.f32.mrf.mxu0
    %v10957 = vadd.f32 %v10914, %v10956
    %v10958 = vpop.f32.mrf.mxu0
    %v10959 = vadd.f32 %v10916, %v10958
    %v10960 = vpop.f32.mrf.mxu0
    %v10961 = vadd.f32 %v10918, %v10960
    %v10962 = vpop.f32.mrf.mxu0
    %v10963 = vadd.f32 %v10920, %v10962
    %10964 = vdwg.mxu0
    %10965 = vmatprep.subr.bf16.mxu0 %v6549
    %10966 = vmatpush1.bf16.msra.mxu0 %v6548
    %10967 = vmatprep.subr.bf16.mxu0 %v6495
    %10968 = vmatpush1.bf16.msra.mxu0 %v6494
    %10969 = vmatprep.subr.bf16.mxu0 %v6441
    %10970 = vmatpush1.bf16.msra.mxu0 %v6440
    %10971 = vmatprep.subr.bf16.mxu0 %v6387
    %10972 = vmatpush1.bf16.msra.mxu0 %v6386
    %10973 = vmatprep.subr.bf16.mxu0 %v6333
    %10974 = vmatpush1.bf16.msra.mxu0 %v6332
    %10975 = vmatprep.subr.bf16.mxu0 %v6279
    %10976 = vmatpush1.bf16.msra.mxu0 %v6278
    %10977 = vmatprep.subr.bf16.mxu0 %v6225
    %10978 = vmatpush1.bf16.msra.mxu0 %v6224
    %10979 = vmatprep.subr.bf16.mxu0 %v6171
    %10980 = vmatpush1.bf16.msra.mxu0 %v6170
    %10981 = vmatprep.subr.bf16.mxu0 %v6981
    %10982 = vmatpush2.bf16.msra.mxu0 %v6980
    %10983 = vmatprep.subr.bf16.mxu0 %v6927
    %10984 = vmatpush2.bf16.msra.mxu0 %v6926
    %10985 = vmatprep.subr.bf16.mxu0 %v6873
    %10986 = vmatpush2.bf16.msra.mxu0 %v6872
    %10987 = vmatprep.subr.bf16.mxu0 %v6819
    %10988 = vmatpush2.bf16.msra.mxu0 %v6818
    %10989 = vmatprep.subr.bf16.mxu0 %v6765
    %10990 = vmatpush2.bf16.msra.mxu0 %v6764
    %10991 = vmatprep.subr.bf16.mxu0 %v6711
    %10992 = vmatpush2.bf16.msra.mxu0 %v6710
    %10993 = vmatprep.subr.bf16.mxu0 %v6657
    %10994 = vmatpush2.bf16.msra.mxu0 %v6656
    %10995 = vmatprep.subr.bf16.mxu0 %v6603
    %10996 = vmatpush2.bf16.msra.mxu0 %v6602
    %10997 = vmatprep.mubr.bf16.mxu0 %v293
    %10998 = vmatmul.mubr.bf16.gmra.mxu0 %v292
    %v10999 = vpop.f32.mrf.mxu0
    %v11000 = vadd.f32 0.0, %v10999
    %v11001 = vpop.f32.mrf.mxu0
    %v11002 = vadd.f32 0.0, %v11001
    %v11003 = vpop.f32.mrf.mxu0
    %v11004 = vadd.f32 0.0, %v11003
    %v11005 = vpop.f32.mrf.mxu0
    %v11006 = vadd.f32 0.0, %v11005
    %11007 = vdwg.mxu0
    %11008 = vmatprep.subr.bf16.mxu0 %v7413
    %11009 = vmatpush1.bf16.msra.mxu0 %v7412
    %11010 = vmatprep.subr.bf16.mxu0 %v7359
    %11011 = vmatpush1.bf16.msra.mxu0 %v7358
    %11012 = vmatprep.subr.bf16.mxu0 %v7305
    %11013 = vmatpush1.bf16.msra.mxu0 %v7304
    %11014 = vmatprep.subr.bf16.mxu0 %v7251
    %11015 = vmatpush1.bf16.msra.mxu0 %v7250
    %11016 = vmatprep.subr.bf16.mxu0 %v7197
    %11017 = vmatpush1.bf16.msra.mxu0 %v7196
    %11018 = vmatprep.subr.bf16.mxu0 %v7143
    %11019 = vmatpush1.bf16.msra.mxu0 %v7142
    %11020 = vmatprep.subr.bf16.mxu0 %v7089
    %11021 = vmatpush1.bf16.msra.mxu0 %v7088
    %11022 = vmatprep.subr.bf16.mxu0 %v7035
    %11023 = vmatpush1.bf16.msra.mxu0 %v7034
    %11024 = vmatprep.subr.bf16.mxu0 0
    %11025 = vmatpush2.bf16.msra.mxu0 0
    %11026 = vmatprep.subr.bf16.mxu0 0
    %11027 = vmatpush2.bf16.msra.mxu0 0
    %11028 = vmatprep.subr.bf16.mxu0 0
    %11029 = vmatpush2.bf16.msra.mxu0 0
    %11030 = vmatprep.subr.bf16.mxu0 0
    %11031 = vmatpush2.bf16.msra.mxu0 0
    %11032 = vmatprep.subr.bf16.mxu0 0
    %11033 = vmatpush2.bf16.msra.mxu0 0
    %11034 = vmatprep.subr.bf16.mxu0 %v9127
    %11035 = vmatpush2.bf16.msra.mxu0 %v9124
    %11036 = vmatprep.subr.bf16.mxu0 %v7521
    %11037 = vmatpush2.bf16.msra.mxu0 %v7520
    %11038 = vmatprep.subr.bf16.mxu0 %v7467
    %11039 = vmatpush2.bf16.msra.mxu0 %v7466
    %11040 = vmatprep.mubr.bf16.mxu0 %v8991
    %11041 = vmatmul.mubr.bf16.gmra.mxu0 %v294
    %v11042 = vpop.f32.mrf.mxu0
    %v11043 = vadd.f32 %v11000, %v11042
    %v11044 = vpop.f32.mrf.mxu0
    %v11045 = vadd.f32 %v11002, %v11044
    %v11046 = vpop.f32.mrf.mxu0
    %v11047 = vadd.f32 %v11004, %v11046
    %v11048 = vpop.f32.mrf.mxu0
    %v11049 = vadd.f32 %v11006, %v11048
    %11050 = vdwg.mxu0
    %11051 = vmatprep.subr.bf16.mxu0 %v6551
    %11052 = vmatpush1.bf16.msra.mxu0 %v6550
    %11053 = vmatprep.subr.bf16.mxu0 %v6497
    %11054 = vmatpush1.bf16.msra.mxu0 %v6496
    %11055 = vmatprep.subr.bf16.mxu0 %v6443
    %11056 = vmatpush1.bf16.msra.mxu0 %v6442
    %11057 = vmatprep.subr.bf16.mxu0 %v6389
    %11058 = vmatpush1.bf16.msra.mxu0 %v6388
    %11059 = vmatprep.subr.bf16.mxu0 %v6335
    %11060 = vmatpush1.bf16.msra.mxu0 %v6334
    %11061 = vmatprep.subr.bf16.mxu0 %v6281
    %11062 = vmatpush1.bf16.msra.mxu0 %v6280
    %11063 = vmatprep.subr.bf16.mxu0 %v6227
    %11064 = vmatpush1.bf16.msra.mxu0 %v6226
    %11065 = vmatprep.subr.bf16.mxu0 %v6173
    %11066 = vmatpush1.bf16.msra.mxu0 %v6172
    %11067 = vmatprep.subr.bf16.mxu0 %v6983
    %11068 = vmatpush2.bf16.msra.mxu0 %v6982
    %11069 = vmatprep.subr.bf16.mxu0 %v6929
    %11070 = vmatpush2.bf16.msra.mxu0 %v6928
    %11071 = vmatprep.subr.bf16.mxu0 %v6875
    %11072 = vmatpush2.bf16.msra.mxu0 %v6874
    %11073 = vmatprep.subr.bf16.mxu0 %v6821
    %11074 = vmatpush2.bf16.msra.mxu0 %v6820
    %11075 = vmatprep.subr.bf16.mxu0 %v6767
    %11076 = vmatpush2.bf16.msra.mxu0 %v6766
    %11077 = vmatprep.subr.bf16.mxu0 %v6713
    %11078 = vmatpush2.bf16.msra.mxu0 %v6712
    %11079 = vmatprep.subr.bf16.mxu0 %v6659
    %11080 = vmatpush2.bf16.msra.mxu0 %v6658
    %11081 = vmatprep.subr.bf16.mxu0 %v6605
    %11082 = vmatpush2.bf16.msra.mxu0 %v6604
    %11083 = vmatprep.mubr.bf16.mxu0 %v293
    %11084 = vmatmul.mubr.bf16.gmra.mxu0 %v292
    %v11085 = vpop.f32.mrf.mxu0
    %v11086 = vadd.f32 0.0, %v11085
    %v11087 = vpop.f32.mrf.mxu0
    %v11088 = vadd.f32 0.0, %v11087
    %v11089 = vpop.f32.mrf.mxu0
    %v11090 = vadd.f32 0.0, %v11089
    %v11091 = vpop.f32.mrf.mxu0
    %v11092 = vadd.f32 0.0, %v11091
    %11093 = vdwg.mxu0
    %11094 = vmatprep.subr.bf16.mxu0 %v7415
    %11095 = vmatpush1.bf16.msra.mxu0 %v7414
    %11096 = vmatprep.subr.bf16.mxu0 %v7361
    %11097 = vmatpush1.bf16.msra.mxu0 %v7360
    %11098 = vmatprep.subr.bf16.mxu0 %v7307
    %11099 = vmatpush1.bf16.msra.mxu0 %v7306
    %11100 = vmatprep.subr.bf16.mxu0 %v7253
    %11101 = vmatpush1.bf16.msra.mxu0 %v7252
    %11102 = vmatprep.subr.bf16.mxu0 %v7199
    %11103 = vmatpush1.bf16.msra.mxu0 %v7198
    %11104 = vmatprep.subr.bf16.mxu0 %v7145
    %11105 = vmatpush1.bf16.msra.mxu0 %v7144
    %11106 = vmatprep.subr.bf16.mxu0 %v7091
    %11107 = vmatpush1.bf16.msra.mxu0 %v7090
    %11108 = vmatprep.subr.bf16.mxu0 %v7037
    %11109 = vmatpush1.bf16.msra.mxu0 %v7036
    %11110 = vmatprep.subr.bf16.mxu0 0
    %11111 = vmatpush2.bf16.msra.mxu0 0
    %11112 = vmatprep.subr.bf16.mxu0 0
    %11113 = vmatpush2.bf16.msra.mxu0 0
    %11114 = vmatprep.subr.bf16.mxu0 0
    %11115 = vmatpush2.bf16.msra.mxu0 0
    %11116 = vmatprep.subr.bf16.mxu0 0
    %11117 = vmatpush2.bf16.msra.mxu0 0
    %11118 = vmatprep.subr.bf16.mxu0 0
    %11119 = vmatpush2.bf16.msra.mxu0 0
    %11120 = vmatprep.subr.bf16.mxu0 %v9133
    %11121 = vmatpush2.bf16.msra.mxu0 %v9130
    %11122 = vmatprep.subr.bf16.mxu0 %v7523
    %11123 = vmatpush2.bf16.msra.mxu0 %v7522
    %11124 = vmatprep.subr.bf16.mxu0 %v7469
    %11125 = vmatpush2.bf16.msra.mxu0 %v7468
    %11126 = vmatprep.mubr.bf16.mxu0 %v8991
    %11127 = vmatmul.mubr.bf16.gmra.mxu0 %v294
    %v11128 = vpop.f32.mrf.mxu0
    %v11129 = vadd.f32 %v11086, %v11128
    %v11130 = vpop.f32.mrf.mxu0
    %v11131 = vadd.f32 %v11088, %v11130
    %v11132 = vpop.f32.mrf.mxu0
    %v11133 = vadd.f32 %v11090, %v11132
    %v11134 = vpop.f32.mrf.mxu0
    %v11135 = vadd.f32 %v11092, %v11134
    %11136 = vdwg.mxu0
    %11137 = vmatprep.subr.bf16.mxu0 %v6553
    %11138 = vmatpush1.bf16.msra.mxu0 %v6552
    %11139 = vmatprep.subr.bf16.mxu0 %v6499
    %11140 = vmatpush1.bf16.msra.mxu0 %v6498
    %11141 = vmatprep.subr.bf16.mxu0 %v6445
    %11142 = vmatpush1.bf16.msra.mxu0 %v6444
    %11143 = vmatprep.subr.bf16.mxu0 %v6391
    %11144 = vmatpush1.bf16.msra.mxu0 %v6390
    %11145 = vmatprep.subr.bf16.mxu0 %v6337
    %11146 = vmatpush1.bf16.msra.mxu0 %v6336
    %11147 = vmatprep.subr.bf16.mxu0 %v6283
    %11148 = vmatpush1.bf16.msra.mxu0 %v6282
    %11149 = vmatprep.subr.bf16.mxu0 %v6229
    %11150 = vmatpush1.bf16.msra.mxu0 %v6228
    %11151 = vmatprep.subr.bf16.mxu0 %v6175
    %11152 = vmatpush1.bf16.msra.mxu0 %v6174
    %11153 = vmatprep.subr.bf16.mxu0 %v6985
    %11154 = vmatpush2.bf16.msra.mxu0 %v6984
    %11155 = vmatprep.subr.bf16.mxu0 %v6931
    %11156 = vmatpush2.bf16.msra.mxu0 %v6930
    %11157 = vmatprep.subr.bf16.mxu0 %v6877
    %11158 = vmatpush2.bf16.msra.mxu0 %v6876
    %11159 = vmatprep.subr.bf16.mxu0 %v6823
    %11160 = vmatpush2.bf16.msra.mxu0 %v6822
    %11161 = vmatprep.subr.bf16.mxu0 %v6769
    %11162 = vmatpush2.bf16.msra.mxu0 %v6768
    %11163 = vmatprep.subr.bf16.mxu0 %v6715
    %11164 = vmatpush2.bf16.msra.mxu0 %v6714
    %11165 = vmatprep.subr.bf16.mxu0 %v6661
    %11166 = vmatpush2.bf16.msra.mxu0 %v6660
    %11167 = vmatprep.subr.bf16.mxu0 %v6607
    %11168 = vmatpush2.bf16.msra.mxu0 %v6606
    %11169 = vmatprep.mubr.bf16.mxu0 %v293
    %11170 = vmatmul.mubr.bf16.gmra.mxu0 %v292
    %v11171 = vpop.f32.mrf.mxu0
    %v11172 = vadd.f32 0.0, %v11171
    %v11173 = vpop.f32.mrf.mxu0
    %v11174 = vadd.f32 0.0, %v11173
    %v11175 = vpop.f32.mrf.mxu0
    %v11176 = vadd.f32 0.0, %v11175
    %v11177 = vpop.f32.mrf.mxu0
    %v11178 = vadd.f32 0.0, %v11177
    %11179 = vdwg.mxu0
    %11180 = vmatprep.subr.bf16.mxu0 %v7417
    %11181 = vmatpush1.bf16.msra.mxu0 %v7416
    %11182 = vmatprep.subr.bf16.mxu0 %v7363
    %11183 = vmatpush1.bf16.msra.mxu0 %v7362
    %11184 = vmatprep.subr.bf16.mxu0 %v7309
    %11185 = vmatpush1.bf16.msra.mxu0 %v7308
    %11186 = vmatprep.subr.bf16.mxu0 %v7255
    %11187 = vmatpush1.bf16.msra.mxu0 %v7254
    %11188 = vmatprep.subr.bf16.mxu0 %v7201
    %11189 = vmatpush1.bf16.msra.mxu0 %v7200
    %11190 = vmatprep.subr.bf16.mxu0 %v7147
    %11191 = vmatpush1.bf16.msra.mxu0 %v7146
    %11192 = vmatprep.subr.bf16.mxu0 %v7093
    %11193 = vmatpush1.bf16.msra.mxu0 %v7092
    %11194 = vmatprep.subr.bf16.mxu0 %v7039
    %11195 = vmatpush1.bf16.msra.mxu0 %v7038
    %11196 = vmatprep.subr.bf16.mxu0 0
    %11197 = vmatpush2.bf16.msra.mxu0 0
    %11198 = vmatprep.subr.bf16.mxu0 0
    %11199 = vmatpush2.bf16.msra.mxu0 0
    %11200 = vmatprep.subr.bf16.mxu0 0
    %11201 = vmatpush2.bf16.msra.mxu0 0
    %11202 = vmatprep.subr.bf16.mxu0 0
    %11203 = vmatpush2.bf16.msra.mxu0 0
    %11204 = vmatprep.subr.bf16.mxu0 0
    %11205 = vmatpush2.bf16.msra.mxu0 0
    %11206 = vmatprep.subr.bf16.mxu0 %v9139
    %11207 = vmatpush2.bf16.msra.mxu0 %v9136
    %11208 = vmatprep.subr.bf16.mxu0 %v7525
    %11209 = vmatpush2.bf16.msra.mxu0 %v7524
    %11210 = vmatprep.subr.bf16.mxu0 %v7471
    %11211 = vmatpush2.bf16.msra.mxu0 %v7470
    %11212 = vmatprep.mubr.bf16.mxu0 %v8991
    %11213 = vmatmul.mubr.bf16.gmra.mxu0 %v294
    %v11214 = vpop.f32.mrf.mxu0
    %v11215 = vadd.f32 %v11172, %v11214
    %v11216 = vpop.f32.mrf.mxu0
    %v11217 = vadd.f32 %v11174, %v11216
    %v11218 = vpop.f32.mrf.mxu0
    %v11219 = vadd.f32 %v11176, %v11218
    %v11220 = vpop.f32.mrf.mxu0
    %v11221 = vadd.f32 %v11178, %v11220
    %11222 = vdwg.mxu0
    %11223 = vmatprep.subr.bf16.mxu0 %v6555
    %11224 = vmatpush1.bf16.msra.mxu0 %v6554
    %11225 = vmatprep.subr.bf16.mxu0 %v6501
    %11226 = vmatpush1.bf16.msra.mxu0 %v6500
    %11227 = vmatprep.subr.bf16.mxu0 %v6447
    %11228 = vmatpush1.bf16.msra.mxu0 %v6446
    %11229 = vmatprep.subr.bf16.mxu0 %v6393
    %11230 = vmatpush1.bf16.msra.mxu0 %v6392
    %11231 = vmatprep.subr.bf16.mxu0 %v6339
    %11232 = vmatpush1.bf16.msra.mxu0 %v6338
    %11233 = vmatprep.subr.bf16.mxu0 %v6285
    %11234 = vmatpush1.bf16.msra.mxu0 %v6284
    %11235 = vmatprep.subr.bf16.mxu0 %v6231
    %11236 = vmatpush1.bf16.msra.mxu0 %v6230
    %11237 = vmatprep.subr.bf16.mxu0 %v6177
    %11238 = vmatpush1.bf16.msra.mxu0 %v6176
    %11239 = vmatprep.subr.bf16.mxu0 %v6987
    %11240 = vmatpush2.bf16.msra.mxu0 %v6986
    %11241 = vmatprep.subr.bf16.mxu0 %v6933
    %11242 = vmatpush2.bf16.msra.mxu0 %v6932
    %11243 = vmatprep.subr.bf16.mxu0 %v6879
    %11244 = vmatpush2.bf16.msra.mxu0 %v6878
    %11245 = vmatprep.subr.bf16.mxu0 %v6825
    %11246 = vmatpush2.bf16.msra.mxu0 %v6824
    %11247 = vmatprep.subr.bf16.mxu0 %v6771
    %11248 = vmatpush2.bf16.msra.mxu0 %v6770
    %11249 = vmatprep.subr.bf16.mxu0 %v6717
    %11250 = vmatpush2.bf16.msra.mxu0 %v6716
    %11251 = vmatprep.subr.bf16.mxu0 %v6663
    %11252 = vmatpush2.bf16.msra.mxu0 %v6662
    %11253 = vmatprep.subr.bf16.mxu0 %v6609
    %11254 = vmatpush2.bf16.msra.mxu0 %v6608
    %11255 = vmatprep.mubr.bf16.mxu0 %v293
    %11256 = vmatmul.mubr.bf16.gmra.mxu0 %v292
    %v11257 = vpop.f32.mrf.mxu0
    %v11258 = vadd.f32 0.0, %v11257
    %v11259 = vpop.f32.mrf.mxu0
    %v11260 = vadd.f32 0.0, %v11259
    %v11261 = vpop.f32.mrf.mxu0
    %v11262 = vadd.f32 0.0, %v11261
    %v11263 = vpop.f32.mrf.mxu0
    %v11264 = vadd.f32 0.0, %v11263
    %11265 = vdwg.mxu0
    %11266 = vmatprep.subr.bf16.mxu0 %v7419
    %11267 = vmatpush1.bf16.msra.mxu0 %v7418
    %11268 = vmatprep.subr.bf16.mxu0 %v7365
    %11269 = vmatpush1.bf16.msra.mxu0 %v7364
    %11270 = vmatprep.subr.bf16.mxu0 %v7311
    %11271 = vmatpush1.bf16.msra.mxu0 %v7310
    %11272 = vmatprep.subr.bf16.mxu0 %v7257
    %11273 = vmatpush1.bf16.msra.mxu0 %v7256
    %11274 = vmatprep.subr.bf16.mxu0 %v7203
    %11275 = vmatpush1.bf16.msra.mxu0 %v7202
    %11276 = vmatprep.subr.bf16.mxu0 %v7149
    %11277 = vmatpush1.bf16.msra.mxu0 %v7148
    %11278 = vmatprep.subr.bf16.mxu0 %v7095
    %11279 = vmatpush1.bf16.msra.mxu0 %v7094
    %11280 = vmatprep.subr.bf16.mxu0 %v7041
    %11281 = vmatpush1.bf16.msra.mxu0 %v7040
    %11282 = vmatprep.subr.bf16.mxu0 0
    %11283 = vmatpush2.bf16.msra.mxu0 0
    %11284 = vmatprep.subr.bf16.mxu0 0
    %11285 = vmatpush2.bf16.msra.mxu0 0
    %11286 = vmatprep.subr.bf16.mxu0 0
    %11287 = vmatpush2.bf16.msra.mxu0 0
    %11288 = vmatprep.subr.bf16.mxu0 0
    %11289 = vmatpush2.bf16.msra.mxu0 0
    %11290 = vmatprep.subr.bf16.mxu0 0
    %11291 = vmatpush2.bf16.msra.mxu0 0
    %11292 = vmatprep.subr.bf16.mxu0 %v9145
    %11293 = vmatpush2.bf16.msra.mxu0 %v9142
    %11294 = vmatprep.subr.bf16.mxu0 %v7527
    %11295 = vmatpush2.bf16.msra.mxu0 %v7526
    %11296 = vmatprep.subr.bf16.mxu0 %v7473
    %11297 = vmatpush2.bf16.msra.mxu0 %v7472
    %11298 = vmatprep.mubr.bf16.mxu0 %v8991
    %11299 = vmatmul.mubr.bf16.gmra.mxu0 %v294
    %v11300 = vpop.f32.mrf.mxu0
    %v11301 = vadd.f32 %v11258, %v11300
    %v11302 = vpop.f32.mrf.mxu0
    %v11303 = vadd.f32 %v11260, %v11302
    %v11304 = vpop.f32.mrf.mxu0
    %v11305 = vadd.f32 %v11262, %v11304
    %v11306 = vpop.f32.mrf.mxu0
    %v11307 = vadd.f32 %v11264, %v11306
    %11308 = vdwg.mxu0
    %11309 = vmatprep.subr.bf16.mxu0 %v6557
    %11310 = vmatpush1.bf16.msra.mxu0 %v6556
    %11311 = vmatprep.subr.bf16.mxu0 %v6503
    %11312 = vmatpush1.bf16.msra.mxu0 %v6502
    %11313 = vmatprep.subr.bf16.mxu0 %v6449
    %11314 = vmatpush1.bf16.msra.mxu0 %v6448
    %11315 = vmatprep.subr.bf16.mxu0 %v6395
    %11316 = vmatpush1.bf16.msra.mxu0 %v6394
    %11317 = vmatprep.subr.bf16.mxu0 %v6341
    %11318 = vmatpush1.bf16.msra.mxu0 %v6340
    %11319 = vmatprep.subr.bf16.mxu0 %v6287
    %11320 = vmatpush1.bf16.msra.mxu0 %v6286
    %11321 = vmatprep.subr.bf16.mxu0 %v6233
    %11322 = vmatpush1.bf16.msra.mxu0 %v6232
    %11323 = vmatprep.subr.bf16.mxu0 %v6179
    %11324 = vmatpush1.bf16.msra.mxu0 %v6178
    %11325 = vmatprep.subr.bf16.mxu0 %v6989
    %11326 = vmatpush2.bf16.msra.mxu0 %v6988
    %11327 = vmatprep.subr.bf16.mxu0 %v6935
    %11328 = vmatpush2.bf16.msra.mxu0 %v6934
    %11329 = vmatprep.subr.bf16.mxu0 %v6881
    %11330 = vmatpush2.bf16.msra.mxu0 %v6880
    %11331 = vmatprep.subr.bf16.mxu0 %v6827
    %11332 = vmatpush2.bf16.msra.mxu0 %v6826
    %11333 = vmatprep.subr.bf16.mxu0 %v6773
    %11334 = vmatpush2.bf16.msra.mxu0 %v6772
    %11335 = vmatprep.subr.bf16.mxu0 %v6719
    %11336 = vmatpush2.bf16.msra.mxu0 %v6718
    %11337 = vmatprep.subr.bf16.mxu0 %v6665
    %11338 = vmatpush2.bf16.msra.mxu0 %v6664
    %11339 = vmatprep.subr.bf16.mxu0 %v6611
    %11340 = vmatpush2.bf16.msra.mxu0 %v6610
    %11341 = vmatprep.mubr.bf16.mxu0 %v293
    %11342 = vmatmul.mubr.bf16.gmra.mxu0 %v292
    %v11343 = vpop.f32.mrf.mxu0
    %v11344 = vadd.f32 0.0, %v11343
    %v11345 = vpop.f32.mrf.mxu0
    %v11346 = vadd.f32 0.0, %v11345
    %v11347 = vpop.f32.mrf.mxu0
    %v11348 = vadd.f32 0.0, %v11347
    %v11349 = vpop.f32.mrf.mxu0
    %v11350 = vadd.f32 0.0, %v11349
    %11351 = vdwg.mxu0
    %11352 = vmatprep.subr.bf16.mxu0 %v7421
    %11353 = vmatpush1.bf16.msra.mxu0 %v7420
    %11354 = vmatprep.subr.bf16.mxu0 %v7367
    %11355 = vmatpush1.bf16.msra.mxu0 %v7366
    %11356 = vmatprep.subr.bf16.mxu0 %v7313
    %11357 = vmatpush1.bf16.msra.mxu0 %v7312
    %11358 = vmatprep.subr.bf16.mxu0 %v7259
    %11359 = vmatpush1.bf16.msra.mxu0 %v7258
    %11360 = vmatprep.subr.bf16.mxu0 %v7205
    %11361 = vmatpush1.bf16.msra.mxu0 %v7204
    %11362 = vmatprep.subr.bf16.mxu0 %v7151
    %11363 = vmatpush1.bf16.msra.mxu0 %v7150
    %11364 = vmatprep.subr.bf16.mxu0 %v7097
    %11365 = vmatpush1.bf16.msra.mxu0 %v7096
    %11366 = vmatprep.subr.bf16.mxu0 %v7043
    %11367 = vmatpush1.bf16.msra.mxu0 %v7042
    %11368 = vmatprep.subr.bf16.mxu0 0
    %11369 = vmatpush2.bf16.msra.mxu0 0
    %11370 = vmatprep.subr.bf16.mxu0 0
    %11371 = vmatpush2.bf16.msra.mxu0 0
    %11372 = vmatprep.subr.bf16.mxu0 0
    %11373 = vmatpush2.bf16.msra.mxu0 0
    %11374 = vmatprep.subr.bf16.mxu0 0
    %11375 = vmatpush2.bf16.msra.mxu0 0
    %11376 = vmatprep.subr.bf16.mxu0 0
    %11377 = vmatpush2.bf16.msra.mxu0 0
    %11378 = vmatprep.subr.bf16.mxu0 %v9151
    %11379 = vmatpush2.bf16.msra.mxu0 %v9148
    %11380 = vmatprep.subr.bf16.mxu0 %v7529
    %11381 = vmatpush2.bf16.msra.mxu0 %v7528
    %11382 = vmatprep.subr.bf16.mxu0 %v7475
    %11383 = vmatpush2.bf16.msra.mxu0 %v7474
    %11384 = vmatprep.mubr.bf16.mxu0 %v8991
    %11385 = vmatmul.mubr.bf16.gmra.mxu0 %v294
    %v11386 = vpop.f32.mrf.mxu0
    %v11387 = vadd.f32 %v11344, %v11386
    %v11388 = vpop.f32.mrf.mxu0
    %v11389 = vadd.f32 %v11346, %v11388
    %v11390 = vpop.f32.mrf.mxu0
    %v11391 = vadd.f32 %v11348, %v11390
    %v11392 = vpop.f32.mrf.mxu0
    %v11393 = vadd.f32 %v11350, %v11392
    %11394 = vdwg.mxu0
    %11395 = vmatprep.subr.bf16.mxu0 %v6559
    %11396 = vmatpush1.bf16.msra.mxu0 %v6558
    %11397 = vmatprep.subr.bf16.mxu0 %v6505
    %11398 = vmatpush1.bf16.msra.mxu0 %v6504
    %11399 = vmatprep.subr.bf16.mxu0 %v6451
    %11400 = vmatpush1.bf16.msra.mxu0 %v6450
    %11401 = vmatprep.subr.bf16.mxu0 %v6397
    %11402 = vmatpush1.bf16.msra.mxu0 %v6396
    %11403 = vmatprep.subr.bf16.mxu0 %v6343
    %11404 = vmatpush1.bf16.msra.mxu0 %v6342
    %11405 = vmatprep.subr.bf16.mxu0 %v6289
    %11406 = vmatpush1.bf16.msra.mxu0 %v6288
    %11407 = vmatprep.subr.bf16.mxu0 %v6235
    %11408 = vmatpush1.bf16.msra.mxu0 %v6234
    %11409 = vmatprep.subr.bf16.mxu0 %v6181
    %11410 = vmatpush1.bf16.msra.mxu0 %v6180
    %11411 = vmatprep.subr.bf16.mxu0 %v6991
    %11412 = vmatpush2.bf16.msra.mxu0 %v6990
    %11413 = vmatprep.subr.bf16.mxu0 %v6937
    %11414 = vmatpush2.bf16.msra.mxu0 %v6936
    %11415 = vmatprep.subr.bf16.mxu0 %v6883
    %11416 = vmatpush2.bf16.msra.mxu0 %v6882
    %11417 = vmatprep.subr.bf16.mxu0 %v6829
    %11418 = vmatpush2.bf16.msra.mxu0 %v6828
    %11419 = vmatprep.subr.bf16.mxu0 %v6775
    %11420 = vmatpush2.bf16.msra.mxu0 %v6774
    %11421 = vmatprep.subr.bf16.mxu0 %v6721
    %11422 = vmatpush2.bf16.msra.mxu0 %v6720
    %11423 = vmatprep.subr.bf16.mxu0 %v6667
    %11424 = vmatpush2.bf16.msra.mxu0 %v6666
    %11425 = vmatprep.subr.bf16.mxu0 %v6613
    %11426 = vmatpush2.bf16.msra.mxu0 %v6612
    %11427 = vmatprep.mubr.bf16.mxu0 %v293
    %11428 = vmatmul.mubr.bf16.gmra.mxu0 %v292
    %v11429 = vpop.f32.mrf.mxu0
    %v11430 = vadd.f32 0.0, %v11429
    %v11431 = vpop.f32.mrf.mxu0
    %v11432 = vadd.f32 0.0, %v11431
    %v11433 = vpop.f32.mrf.mxu0
    %v11434 = vadd.f32 0.0, %v11433
    %v11435 = vpop.f32.mrf.mxu0
    %v11436 = vadd.f32 0.0, %v11435
    %11437 = vdwg.mxu0
    %11438 = vmatprep.subr.bf16.mxu0 %v7423
    %11439 = vmatpush1.bf16.msra.mxu0 %v7422
    %11440 = vmatprep.subr.bf16.mxu0 %v7369
    %11441 = vmatpush1.bf16.msra.mxu0 %v7368
    %11442 = vmatprep.subr.bf16.mxu0 %v7315
    %11443 = vmatpush1.bf16.msra.mxu0 %v7314
    %11444 = vmatprep.subr.bf16.mxu0 %v7261
    %11445 = vmatpush1.bf16.msra.mxu0 %v7260
    %11446 = vmatprep.subr.bf16.mxu0 %v7207
    %11447 = vmatpush1.bf16.msra.mxu0 %v7206
    %11448 = vmatprep.subr.bf16.mxu0 %v7153
    %11449 = vmatpush1.bf16.msra.mxu0 %v7152
    %11450 = vmatprep.subr.bf16.mxu0 %v7099
    %11451 = vmatpush1.bf16.msra.mxu0 %v7098
    %11452 = vmatprep.subr.bf16.mxu0 %v7045
    %11453 = vmatpush1.bf16.msra.mxu0 %v7044
    %11454 = vmatprep.subr.bf16.mxu0 0
    %11455 = vmatpush2.bf16.msra.mxu0 0
    %11456 = vmatprep.subr.bf16.mxu0 0
    %11457 = vmatpush2.bf16.msra.mxu0 0
    %11458 = vmatprep.subr.bf16.mxu0 0
    %11459 = vmatpush2.bf16.msra.mxu0 0
    %11460 = vmatprep.subr.bf16.mxu0 0
    %11461 = vmatpush2.bf16.msra.mxu0 0
    %11462 = vmatprep.subr.bf16.mxu0 0
    %11463 = vmatpush2.bf16.msra.mxu0 0
    %11464 = vmatprep.subr.bf16.mxu0 %v9157
    %11465 = vmatpush2.bf16.msra.mxu0 %v9154
    %11466 = vmatprep.subr.bf16.mxu0 %v7531
    %11467 = vmatpush2.bf16.msra.mxu0 %v7530
    %11468 = vmatprep.subr.bf16.mxu0 %v7477
    %11469 = vmatpush2.bf16.msra.mxu0 %v7476
    %11470 = vmatprep.mubr.bf16.mxu0 %v8991
    %11471 = vmatmul.mubr.bf16.gmra.mxu0 %v294
    %v11472 = vpop.f32.mrf.mxu0
    %v11473 = vadd.f32 %v11430, %v11472
    %v11474 = vpop.f32.mrf.mxu0
    %v11475 = vadd.f32 %v11432, %v11474
    %v11476 = vpop.f32.mrf.mxu0
    %v11477 = vadd.f32 %v11434, %v11476
    %v11478 = vpop.f32.mrf.mxu0
    %v11479 = vadd.f32 %v11436, %v11478
    %11480 = vdwg.mxu0
    %11481 = vst [vmem:[#allocation7] sm:$0xff] %v9237
    %11482 = vst [vmem:[#allocation7 + $0x8] sm:$0xff] %v9239
    %11483 = vst [vmem:[#allocation7 + $0x10] sm:$0xff] %v9323
    %11484 = vst [vmem:[#allocation7 + $0x18] sm:$0xff] %v9325
    %11485 = vst [vmem:[#allocation7 + $0x20] sm:$0xff] %v9409
    %11486 = vst [vmem:[#allocation7 + $0x28] sm:$0xff] %v9411
    %11487 = vst [vmem:[#allocation7 + $0x30] sm:$0xff] %v9495
    %11488 = vst [vmem:[#allocation7 + $0x38] sm:$0xff] %v9497
    %11489 = vst [vmem:[#allocation7 + $0x40] sm:$0xff] %v9581
    %11490 = vst [vmem:[#allocation7 + $0x48] sm:$0xff] %v9583
    %11491 = vst [vmem:[#allocation7 + $0x50] sm:$0xff] %v9667
    %11492 = vst [vmem:[#allocation7 + $0x58] sm:$0xff] %v9669
    %11493 = vst [vmem:[#allocation7 + $0x60] sm:$0xff] %v9753
    %11494 = vst [vmem:[#allocation7 + $0x68] sm:$0xff] %v9755
    %11495 = vst [vmem:[#allocation7 + $0x70] sm:$0xff] %v9839
    %11496 = vst [vmem:[#allocation7 + $0x78] sm:$0xff] %v9841
    %11497 = vst [vmem:[#allocation7 + $0x80] sm:$0xff] %v9925
    %11498 = vst [vmem:[#allocation7 + $0x88] sm:$0xff] %v9927
    %11499 = vst [vmem:[#allocation7 + $0x90] sm:$0xff] %v10011
    %11500 = vst [vmem:[#allocation7 + $0x98] sm:$0xff] %v10013
    %11501 = vst [vmem:[#allocation7 + $0xa0] sm:$0xff] %v10097
    %11502 = vst [vmem:[#allocation7 + $0xa8] sm:$0xff] %v10099
    %11503 = vst [vmem:[#allocation7 + $0xb0] sm:$0xff] %v10183
    %11504 = vst [vmem:[#allocation7 + $0xb8] sm:$0xff] %v10185
    %11505 = vst [vmem:[#allocation7 + $0xc0] sm:$0xff] %v10269
    %11506 = vst [vmem:[#allocation7 + $0xc8] sm:$0xff] %v10271
    %11507 = vst [vmem:[#allocation7 + $0xd0] sm:$0xff] %v10355
    %11508 = vst [vmem:[#allocation7 + $0xd8] sm:$0xff] %v10357
    %11509 = vst [vmem:[#allocation7 + $0xe0] sm:$0xff] %v10441
    %11510 = vst [vmem:[#allocation7 + $0xe8] sm:$0xff] %v10443
    %11511 = vst [vmem:[#allocation7 + $0xf0] sm:$0xff] %v10527
    %11512 = vst [vmem:[#allocation7 + $0xf8] sm:$0xff] %v10529
    %11513 = vst [vmem:[#allocation7 + $0x100] sm:$0xff] %v10613
    %11514 = vst [vmem:[#allocation7 + $0x108] sm:$0xff] %v10615
    %11515 = vst [vmem:[#allocation7 + $0x110] sm:$0xff] %v10699
    %11516 = vst [vmem:[#allocation7 + $0x118] sm:$0xff] %v10701
    %11517 = vst [vmem:[#allocation7 + $0x120] sm:$0xff] %v10785
    %11518 = vst [vmem:[#allocation7 + $0x128] sm:$0xff] %v10787
    %11519 = vst [vmem:[#allocation7 + $0x130] sm:$0xff] %v10871
    %11520 = vst [vmem:[#allocation7 + $0x138] sm:$0xff] %v10873
    %11521 = vst [vmem:[#allocation7 + $0x140] sm:$0xff] %v10957
    %11522 = vst [vmem:[#allocation7 + $0x148] sm:$0xff] %v10959
    %11523 = vst [vmem:[#allocation7 + $0x150] sm:$0xff] %v11043
    %11524 = vst [vmem:[#allocation7 + $0x158] sm:$0xff] %v11045
    %11525 = vst [vmem:[#allocation7 + $0x160] sm:$0xff] %v11129
    %11526 = vst [vmem:[#allocation7 + $0x168] sm:$0xff] %v11131
    %11527 = vst [vmem:[#allocation7 + $0x170] sm:$0xff] %v11215
    %11528 = vst [vmem:[#allocation7 + $0x178] sm:$0xff] %v11217
    %11529 = vst [vmem:[#allocation7 + $0x180] sm:$0xff] %v11301
    %11530 = vst [vmem:[#allocation7 + $0x188] sm:$0xff] %v11303
    %11531 = vst [vmem:[#allocation7 + $0x190] sm:$0xff] %v11387
    %11532 = vst [vmem:[#allocation7 + $0x198] sm:$0xff] %v11389
    %11533 = vst [vmem:[#allocation7 + $0x1a0] sm:$0xff] %v11473
    %11534 = vst [vmem:[#allocation7 + $0x1a8] sm:$0xff] %v11475
    %11535 = vst [vmem:[#allocation7 + $0x1b0] sm:$0xf] %v9241
    %11536 = vst [vmem:[#allocation7 + $0x1b8] sm:$0xf] %v9243
    %11537 = vst [vmem:[#allocation7 + $0x1c0] sm:$0xf] %v9327
    %11538 = vst [vmem:[#allocation7 + $0x1c8] sm:$0xf] %v9329
    %11539 = vst [vmem:[#allocation7 + $0x1d0] sm:$0xf] %v9413
    %11540 = vst [vmem:[#allocation7 + $0x1d8] sm:$0xf] %v9415
    %11541 = vst [vmem:[#allocation7 + $0x1e0] sm:$0xf] %v9499
    %11542 = vst [vmem:[#allocation7 + $0x1e8] sm:$0xf] %v9501
    %11543 = vst [vmem:[#allocation7 + $0x1f0] sm:$0xf] %v9585
    %11544 = vst [vmem:[#allocation7 + $0x1f8] sm:$0xf] %v9587
    %11545 = vst [vmem:[#allocation7 + $0x200] sm:$0xf] %v9671
    %11546 = vst [vmem:[#allocation7 + $0x208] sm:$0xf] %v9673
    %11547 = vst [vmem:[#allocation7 + $0x210] sm:$0xf] %v9757
    %11548 = vst [vmem:[#allocation7 + $0x218] sm:$0xf] %v9759
    %11549 = vst [vmem:[#allocation7 + $0x220] sm:$0xf] %v9843
    %11550 = vst [vmem:[#allocation7 + $0x228] sm:$0xf] %v9845
    %11551 = vst [vmem:[#allocation7 + $0x230] sm:$0xf] %v9929
    %11552 = vst [vmem:[#allocation7 + $0x238] sm:$0xf] %v9931
    %11553 = vst [vmem:[#allocation7 + $0x240] sm:$0xf] %v10015
    %11554 = vst [vmem:[#allocation7 + $0x248] sm:$0xf] %v10017
    %11555 = vst [vmem:[#allocation7 + $0x250] sm:$0xf] %v10101
    %11556 = vst [vmem:[#allocation7 + $0x258] sm:$0xf] %v10103
    %11557 = vst [vmem:[#allocation7 + $0x260] sm:$0xf] %v10187
    %11558 = vst [vmem:[#allocation7 + $0x268] sm:$0xf] %v10189
    %11559 = vst [vmem:[#allocation7 + $0x270] sm:$0xf] %v10273
    %11560 = vst [vmem:[#allocation7 + $0x278] sm:$0xf] %v10275
    %11561 = vst [vmem:[#allocation7 + $0x280] sm:$0xf] %v10359
    %11562 = vst [vmem:[#allocation7 + $0x288] sm:$0xf] %v10361
    %11563 = vst [vmem:[#allocation7 + $0x290] sm:$0xf] %v10445
    %11564 = vst [vmem:[#allocation7 + $0x298] sm:$0xf] %v10447
    %11565 = vst [vmem:[#allocation7 + $0x2a0] sm:$0xf] %v10531
    %11566 = vst [vmem:[#allocation7 + $0x2a8] sm:$0xf] %v10533
    %11567 = vst [vmem:[#allocation7 + $0x2b0] sm:$0xf] %v10617
    %11568 = vst [vmem:[#allocation7 + $0x2b8] sm:$0xf] %v10619
    %11569 = vst [vmem:[#allocation7 + $0x2c0] sm:$0xf] %v10703
    %11570 = vst [vmem:[#allocation7 + $0x2c8] sm:$0xf] %v10705
    %11571 = vst [vmem:[#allocation7 + $0x2d0] sm:$0xf] %v10789
    %11572 = vst [vmem:[#allocation7 + $0x2d8] sm:$0xf] %v10791
    %11573 = vst [vmem:[#allocation7 + $0x2e0] sm:$0xf] %v10875
    %11574 = vst [vmem:[#allocation7 + $0x2e8] sm:$0xf] %v10877
    %11575 = vst [vmem:[#allocation7 + $0x2f0] sm:$0xf] %v10961
    %11576 = vst [vmem:[#allocation7 + $0x2f8] sm:$0xf] %v10963
    %11577 = vst [vmem:[#allocation7 + $0x300] sm:$0xf] %v11047
    %11578 = vst [vmem:[#allocation7 + $0x308] sm:$0xf] %v11049
    %11579 = vst [vmem:[#allocation7 + $0x310] sm:$0xf] %v11133
    %11580 = vst [vmem:[#allocation7 + $0x318] sm:$0xf] %v11135
    %11581 = vst [vmem:[#allocation7 + $0x320] sm:$0xf] %v11219
    %11582 = vst [vmem:[#allocation7 + $0x328] sm:$0xf] %v11221
    %11583 = vst [vmem:[#allocation7 + $0x330] sm:$0xf] %v11305
    %11584 = vst [vmem:[#allocation7 + $0x338] sm:$0xf] %v11307
    %11585 = vst [vmem:[#allocation7 + $0x340] sm:$0xf] %v11391
    %11586 = vst [vmem:[#allocation7 + $0x348] sm:$0xf] %v11393
    %11587 = vst [vmem:[#allocation7 + $0x350] sm:$0xf] %v11477
    %11588 = vst [vmem:[#allocation7 + $0x358] sm:$0xf] %v11479
    // Predicated region
    $region26: #{tpu_custom_call.1} parent=1 // pred_check
      _
    $region27: #{tpu_custom_call.1} parent=1 // pred_check_branch
      %11590 = sbr.rel (0) target = $region29
    $region28: #{tpu_custom_call.1} parent=1 // pred_region
      %s11592 = ssub.s32 13824, 13824
      %11593 = vsyncadd [#allocation4], %s11592
      %s11594 = sshll.u32 [#allocation7], 4
      %s11595 = int_to_ptr.vmem [resolvable:$true] %s11594
      %11600 = dma.vmem_to_hbm [thread:$0]  %s11595, 13824, %s4, [#allocation4], 6912, 6912, 432
    $region29: #{tpu_custom_call.1} parent=1 // pred_fallthru
      _
    // Predicated region
    $region30: #{tpu_custom_call.1} parent=1 // pred_check
      _
    $region31: #{tpu_custom_call.1} parent=1 // pred_check_branch
      %11602 = sbr.rel (0) target = $region33
    $region32: #{tpu_custom_call.1} parent=1 // pred_region
      %s11604 = ssub.s32 1024, 1024
      %11605 = vsyncadd [#allocation9], %s11604
      %s11606 = sshll.u32 [#allocation8], 4
      %s11607 = int_to_ptr.vmem [resolvable:$true] %s11606
      %11612 = dma.vmem_to_hbm [thread:$0]  %s11607, 1024, %s5, [#allocation9], 512, 512, 32
    $region33: #{tpu_custom_call.1} parent=1 // pred_fallthru
      _
    // Predicated region
    $region34: #{tpu_custom_call.1} parent=1 // pred_check
      _
    $region35: #{tpu_custom_call.1} parent=1 // pred_check_branch
      %11614 = sbr.rel (0) target = $region37
    $region36: #{tpu_custom_call.1} parent=1 // pred_region
      %11615 = dma.done [#allocation4], 13824
    $region37: #{tpu_custom_call.1} parent=1 // pred_fallthru
      _
    // Predicated region
    $region38: #{tpu_custom_call.1} parent=1 // pred_check
      _
    $region39: #{tpu_custom_call.1} parent=1 // pred_check_branch
      %11617 = sbr.rel (0) target = $region41
    $region40: #{tpu_custom_call.1} parent=1 // pred_region
      %11618 = dma.done [#allocation9], 1024
    $region41: #{tpu_custom_call.1} parent=1 // pred_fallthru
      _
    %11619 = vsyncpa [#allocation3], 1
    %11620 = vsyncpa [#allocation6], 1
    %11621 = vsyncpa [#allocation4], 1
    %11622 = vsyncpa [#allocation9], 1

</llo_original>
